<compile_context>
chip_gen: v5e
topology: v5e:2x2
jax: 0.10.0
libtpu: 0.0.40
codegen_flags: <defaults>
</compile_context>

<pallas_src>
import functools

import jax
import jax.numpy as jnp
from jax.experimental import pallas as pl
from jax.experimental.pallas import tpu as pltpu

NUM_HEADS = 4
_HI = jax.lax.Precision.HIGHEST
_NEG = -1e30  # additive mask for cross-batch key positions


# --------------------------------------------------------------------------- #
# wrapper-side helpers
# --------------------------------------------------------------------------- #
def _pack_rows(pieces):
    """Row-concat 2D arrays with identical #cols.  Each piece is padded to a
    multiple of 8 rows so every in-kernel slice starts on a sublane boundary.
    Returns (packed_array, {name: (row_offset, true_rows)})."""
    offs, chunks, r = {}, [], 0
    for name, a in pieces:
        n = a.shape[0]
        pad = (-n) % 8
        if pad:
            a = jnp.concatenate([a, jnp.zeros((pad, a.shape[1]), a.dtype)], axis=0)
        offs[name] = (r, n)
        chunks.append(a)
        r += n + pad
    return jnp.concatenate(chunks, axis=0), offs


def _seg(buf, offs, name):
    """Static row-slice of a loaded packed buffer (zero-cost view)."""
    s, n = offs[name]
    return buf[s:s + n, :]


def _block_mask(B, nq, nk):
    """(B*nq, B*nk) additive mask: 0 within a batch block, -1e30 across batches."""
    bq = jnp.arange(B * nq, dtype=jnp.int32) // nq
    bk = jnp.arange(B * nk, dtype=jnp.int32) // nk
    return jnp.where(bq[:, None] == bk[None, :], 0.0, _NEG).astype(jnp.float32)


def _expansion(B, nq, nk):
    """0/1 expansion matrices for the lane-packed cross attention.
    Packed column p <-> (b, i, j) = (p // (nq*nk), (p // nk) % nq, p % nk).
      eq : (B*nq, P)   eq[r, p]  = 1 iff r == b*nq + i   (query broadcast)
      ek : (B*nk, P)   ek[c, p]  = 1 iff c == b*nk + j   (key broadcast)
      ekt: (P, B*nk)   = ek.T                            (scores un-flatten)
    Built with exact int32 arithmetic."""
    p = jnp.arange(B * nq * nk, dtype=jnp.int32)
    b = p // (nq * nk)
    i = (p // nk) % nq
    j = p % nk
    rq = b * nq + i
    rk = b * nk + j
    eq = (rq[None, :] == jnp.arange(B * nq, dtype=jnp.int32)[:, None]).astype(jnp.float32)
    ek = (rk[None, :] == jnp.arange(B * nk, dtype=jnp.int32)[:, None]).astype(jnp.float32)
    return eq, ek, ek.T


# --------------------------------------------------------------------------- #
# Fused AttentionalGNN.forward: one pallas_call for the whole layer stack
# --------------------------------------------------------------------------- #
def gnn_forward(params, desc0, desc1, dist, *, layer_names, num_heads=NUM_HEADS):
    B, F, n0 = desc0.shape
    n1 = desc1.shape[-1]
    dh = F // num_heads
    N0, N1 = B * n0, B * n1
    P0, P1 = B * n0 * n1, B * n1 * n0
    last = len(layer_names) - 1
    scale = 1.0 / float(dh) ** 0.5

    cross_nonfinal = any(n == 'cross' for i, n in enumerate(layer_names) if i != last)
    self_nonfinal = any(n == 'self' for i, n in enumerate(layer_names) if i != last)
    any_cross = any(n == 'cross' for n in layer_names)

    inputs, index = [], {}

    def add(name, arr):
        index[name] = len(inputs)
        inputs.append(arr)

    # ---- pack batch into the lane axis (layout plumbing, outside the kernel) ----
    add('d0', jnp.transpose(desc0, (1, 0, 2)).reshape(F, N0))
    add('d1', jnp.transpose(desc1, (1, 0, 2)).reshape(F, N1))
    if cross_nonfinal:
        add('dist0', jnp.transpose(dist, (1, 0, 2, 3)).reshape(F, P0))
    if any_cross:
        add('dist1', jnp.transpose(dist, (1, 0, 3, 2)).reshape(F, P1))

    # ---- structural constants (shared across layers, DMA'd once) ---------------
    if self_nonfinal:
        add('m00', _block_mask(B, n0, n0))
        add('m11', _block_mask(B, n1, n1))
    if cross_nonfinal:
        eq0, ek0, ekt0 = _expansion(B, n0, n1)
        add('eq0', eq0); add('ek0', ek0); add('ekt0', ekt0)
        add('m01', _block_mask(B, n0, n1))
    if any_cross:
        eq1, ek1, ekt1 = _expansion(B, n1, n0)
        add('eq1', eq1); add('ek1', ek1)
        if cross_nonfinal:
            add('ekt1', ekt1); add('m10', _block_mask(B, n1, n0))

    # ---- per-layer weights: head-major permutation + row packing ---------------
    perm = jnp.arange(F).reshape(dh, num_heads).T.reshape(-1)
    layer_offs = []
    for li, (p, name) in enumerate(zip(params, layer_names)):
        is_last = li == last
        wp, bp = [], []
        if name == 'self':
            if is_last:  # score-only: q/k projections suffice
                wp += [('wqk', jnp.concatenate([p['wq'][perm], p['wk'][perm]], 0))]
                bp += [('bqk', jnp.concatenate([p['bq'][perm], p['bk'][perm]], 0))]
            else:
                wp += [('wqkv', jnp.concatenate(
                            [p['wq'][perm], p['wk'][perm], p['wv'][perm]], 0)),
                       ('wm', p['wm'][:, perm])]
                bp += [('bqkv', jnp.concatenate(
                            [p['bq'][perm], p['bk'][perm], p['bv'][perm]], 0)),
                       ('bm', p['bm'])]
        else:
            wp += [('a1q', p['a1'][:, :F]), ('a1k', p['a1'][:, F:2 * F]),
                   ('a1d', p['a1'][:, 2 * F:]), ('a2w', p['a2w'])]
            bp += [('a1b', p['a1b']), ('a2b', p['a2b'])]
        if not is_last:  # propagation MLP (first conv split into x / msg blocks)
            wp += [('w1x', p['w1'][:, :F]), ('w1m', p['w1'][:, F:])]
            bp += [('b1', p['b1']), ('b2', p['b2'])]
        wbuf, woffs = _pack_rows(wp)
        bbuf, boffs = _pack_rows(bp)
        add(f'W{li}', wbuf)
        add(f'b{li}', bbuf)
        if not is_last:
            add(f'w2_{li}', p['w2'])
        layer_offs.append((woffs, boffs))

    # ------------------------------- kernel body --------------------------------
    def kernel(*refs):
        out_ref = refs[-1]

        def get(name):
            return refs[index[name]]

        def softmax_rows(s):
            m = jnp.max(s, axis=-1, keepdims=True)
            e = jnp.exp(s - m)
            return e / jnp.sum(e, axis=-1, keepdims=True)

        def prop_mlp(x, msg, W, woffs, bvec, boffs, w2):
            h1 = jnp.maximum(
                jnp.dot(_seg(W, woffs, 'w1x'), x, preferred_element_type=jnp.float32)
                + jnp.dot(_seg(W, woffs, 'w1m'), msg, preferred_element_type=jnp.float32)
                + _seg(bvec, boffs, 'b1'), 0.0)
            return (jnp.dot(w2, h1, preferred_element_type=jnp.float32)
                    + _seg(bvec, boffs, 'b2'))

        def self_update(x, mask, li):
            W = get(f'W{li}')[...]
            bvec = get(f'b{li}')[...]
            w2 = get(f'w2_{li}')[...]
            woffs, boffs = layer_offs[li]
            qkv = (jnp.dot(_seg(W, woffs, 'wqkv'), x,
                           preferred_element_type=jnp.float32)
                   + _seg(bvec, boffs, 'bqkv'))                         # (3F, N)
            wm = _seg(W, woffs, 'wm')
            msg = _seg(bvec, boffs, 'bm')                               # (F, 1) -> bcast
            for h in range(num_heads):                                  # static unroll
                qh = qkv[h * dh:(h + 1) * dh, :]
                kh = qkv[F + h * dh:F + (h + 1) * dh, :]
                vh = qkv[2 * F + h * dh:2 * F + (h + 1) * dh, :]
                s = jnp.einsum('dn,dm->nm', qh, kh,
                               preferred_element_type=jnp.float32) * scale
                pmat = softmax_rows(s + mask)                           # block-diag rows
                ah = jnp.einsum('dm,nm->dn', vh, pmat,
                                preferred_element_type=jnp.float32)     # (dh, N)
                msg = msg + jnp.dot(wm[:, h * dh:(h + 1) * dh], ah,
                                    preferred_element_type=jnp.float32)
            return x + prop_mlp(x, msg, W, woffs, bvec, boffs, w2)

        def cross_scores(xq, xk, dst, eq, ek, W, woffs, bvec, boffs):
            hq = jnp.dot(_seg(W, woffs, 'a1q'), xq, preferred_element_type=jnp.float32)
            hk = jnp.dot(_seg(W, woffs, 'a1k'), xk, preferred_element_type=jnp.float32)
            hd = jnp.dot(_seg(W, woffs, 'a1d'), dst, preferred_element_type=jnp.float32)
            h = jnp.maximum(
                hd
                + jnp.dot(hq, eq, preferred_element_type=jnp.float32)
                + jnp.dot(hk, ek, preferred_element_type=jnp.float32)
                + _seg(bvec, boffs, 'a1b'), 0.0)                        # (F, P)
            return (jnp.dot(_seg(W, woffs, 'a2w'), h,
                            preferred_element_type=jnp.float32)
                    + _seg(bvec, boffs, 'a2b'))                         # (1, P)

        def cross_update(xq, xk, dst, eq, ek, ekt, mask, li):
            W = get(f'W{li}')[...]
            bvec = get(f'b{li}')[...]
            w2 = get(f'w2_{li}')[...]
            woffs, boffs = layer_offs[li]
            s_flat = cross_scores(xq, xk, dst, eq, ek, W, woffs, bvec, boffs)
            scores = jnp.dot(eq * s_flat, ekt,
                             preferred_element_type=jnp.float32)        # (Nq, Nk)
            pmat = softmax_rows(scores + mask)
            msg = jnp.einsum('dk,qk->dq', xk, pmat,
                             preferred_element_type=jnp.float32)        # (F, Nq)
            return xq + prop_mlp(xq, msg, W, woffs, bvec, boffs, w2)

        d0 = get('d0')[...].astype(jnp.float32)
        d1 = get('d1')[...].astype(jnp.float32)

        for li, name in enumerate(layer_names):                         # static unroll
            if li != last:
                if name == 'self':
                    new0 = self_update(d0, get('m00')[...], li)
                    new1 = self_update(d1, get('m11')[...], li)
                else:
                    new0 = cross_update(d0, d1, get('dist0')[...],
                                        get('eq0')[...], get('ek0')[...],
                                        get('ekt0')[...], get('m01')[...], li)
                    new1 = cross_update(d1, d0, get('dist1')[...],
                                        get('eq1')[...], get('ek1')[...],
                                        get('ekt1')[...], get('m10')[...], li)
                d0, d1 = new0, new1
            else:
                # Final layer: forward() only returns score1 -> score-only path,
                # no desc updates, no desc0-query pass, no softmax/merge/prop MLP.
                W = get(f'W{li}')[...]
                bvec = get(f'b{li}')[...]
                woffs, boffs = layer_offs[li]
                if name == 'self':
                    qk = (jnp.dot(_seg(W, woffs, 'wqk'), d1,
                                  preferred_element_type=jnp.float32)
                          + _seg(bvec, boffs, 'bqk'))                   # (2F, N1)
                    ssum = jnp.zeros((d1.shape[1], d1.shape[1]), jnp.float32)
                    for h in range(num_heads):
                        qh = qk[h * dh:(h + 1) * dh, :]
                        kh = qk[F + h * dh:F + (h + 1) * dh, :]
                        ssum = ssum + jnp.einsum('dn,dm->nm', qh, kh,
                                                 preferred_element_type=jnp.float32)
                    out_ref[...] = (ssum * (scale / num_heads)).astype(out_ref.dtype)
                else:
                    s_flat = cross_scores(d1, d0, get('dist1')[...],
                                          get('eq1')[...], get('ek1')[...],
                                          W, woffs, bvec, boffs)
                    out_ref[...] = s_flat.astype(out_ref.dtype)         # (1, B*n1*n0)

    if layer_names[last] == 'cross':
        out_shape = jax.ShapeDtypeStruct((1, P1), jnp.float32)          # lane-dense
    else:
        out_shape = jax.ShapeDtypeStruct((N1, N1), jnp.float32)

    out = pl.pallas_call(
        kernel,
        grid=(1,),
        in_specs=[pl.BlockSpec(a.shape, lambda i: (0, 0)) for a in inputs],
        out_specs=pl.BlockSpec(out_shape.shape, lambda i: (0, 0)),
        out_shape=out_shape,
        compiler_params=pltpu.CompilerParams(
            dimension_semantics=("arbitrary",),
            vmem_limit_bytes=32 * 1024 * 1024),
    )(*inputs)

    if layer_names[last] == 'cross':
        return out.reshape(B, n1, n0)
    return jnp.stack([out[b * n1:(b + 1) * n1, b * n1:(b + 1) * n1]
                      for b in range(B)], axis=0)


# --------------------------------------------------------------------------- #
# Pure-JAX reference (mirrors the PyTorch code) for validation
# --------------------------------------------------------------------------- #
def _conv1x1(w, b, x):
    return jnp.einsum('oc,bcn->bon', w, x, precision=_HI) + b[None]


def _ref_self_layer(x, p, num_heads):
    B, F, N = x.shape
    dh = F // num_heads
    q = _conv1x1(p['wq'], p['bq'], x).reshape(B, dh, num_heads, N)
    k = _conv1x1(p['wk'], p['bk'], x).reshape(B, dh, num_heads, N)
    v = _conv1x1(p['wv'], p['bv'], x).reshape(B, dh, num_heads, N)
    scores = jnp.einsum('bdhn,bdhm->bhnm', q, k, precision=_HI) / dh ** 0.5
    prob = jax.nn.softmax(scores, axis=-1)
    att = jnp.einsum('bhnm,bdhm->bdhn', prob, v, precision=_HI).reshape(B, F, N)
    msg = _conv1x1(p['wm'], p['bm'], att)
    weights = scores.mean(axis=1)
    cat = jnp.concatenate([x, msg], axis=1)
    h1 = jax.nn.relu(_conv1x1(p['w1'], p['b1'], cat))
    delta = _conv1x1(p['w2'], p['b2'], h1)
    return x + delta, weights


def _ref_cross_layer(x, src, dist_flat, p):
    B, F, nq = x.shape
    nk = src.shape[2]
    qb = jnp.repeat(x, nk, axis=2)
    kb = jnp.tile(src, (1, 1, nq))
    cat = jnp.concatenate([qb, kb, dist_flat], axis=1)
    h = jax.nn.relu(_conv1x1(p['a1'], p['a1b'], cat))
    scores = _conv1x1(p['a2w'], p['a2b'], h).reshape(B, nq, nk)
    prob = jax.nn.softmax(scores, axis=-1)
    msg = jnp.einsum('bnm,bdm->bdn', prob, src, precision=_HI)
    cat2 = jnp.concatenate([x, msg], axis=1)
    h1 = jax.nn.relu(_conv1x1(p['w1'], p['b1'], cat2))
    delta = _conv1x1(p['w2'], p['b2'], h1)
    return x + delta, scores


def make_ref_forward(layer_names, num_heads=NUM_HEADS):
    def forward(params, desc0, desc1, dist):
        B, F, n0, n1 = dist.shape
        dist0 = dist.reshape(B, F, n0 * n1)
        dist1 = jnp.transpose(dist, (0, 1, 3, 2)).reshape(B, F, n1 * n0)
        score1 = None
        for p, name in zip(params, layer_names):
            if name == 'cross':
                new0, _ = _ref_cross_layer(desc0, desc1, dist0, p)
                new1, score1 = _ref_cross_layer(desc1, desc0, dist1, p)
            else:
                new0, _ = _ref_self_layer(desc0, p, num_heads)
                new1, score1 = _ref_self_layer(desc1, p, num_heads)
            desc0, desc1 = new0, new1
        return score1
    return forward


# --------------------------------------------------------------------------- #
# Parameter init (torch Conv1d-style uniform init, prop-MLP last bias = 0)
# --------------------------------------------------------------------------- #
def _uniform(key, shape, fan_in):
    bound = 1.0 / float(fan_in) ** 0.5
    return jax.random.uniform(key, shape, jnp.float32, -bound, bound)


def init_params(key, feature_dim, layer_names):
    F = feature_dim
    params = []
    for name in layer_names:
        key, *ks = jax.random.split(key, 13)
        p = {}
        if name == 'cross':
            p['a1'] = _uniform(ks[0], (F, 3 * F), 3 * F)
            p['a1b'] = _uniform(ks[1], (F, 1), 3 * F)
            p['a2w'] = _uniform(ks[2], (1, F), F)
            p['a2b'] = _uniform(ks[3], (1, 1), F)
        else:
            p['wq'] = _uniform(ks[0], (F, F), F)
            p['bq'] = _uniform(ks[1], (F, 1), F)
            p['wk'] = _uniform(ks[2], (F, F), F)
            p['bk'] = _uniform(ks[3], (F, 1), F)
            p['wv'] = _uniform(ks[4], (F, F), F)
            p['bv'] = _uniform(ks[5], (F, 1), F)
            p['wm'] = _uniform(ks[6], (F, F), F)
            p['bm'] = _uniform(ks[7], (F, 1), F)
        p['w1'] = _uniform(ks[8], (2 * F, 2 * F), 2 * F)
        p['b1'] = _uniform(ks[9], (2 * F, 1), 2 * F)
        p['w2'] = _uniform(ks[10], (F, 2 * F), 2 * F)
        p['b2'] = jnp.zeros((F, 1), jnp.float32)   # nn.init.constant_(mlp[-1].bias, 0.0)
        params.append(p)
    return params


if __name__ == "__main__":
    B, F = 2, 32                          # batch, feature_dim (4 heads x 8)
    n_agents, n_frontier = 8, 16
    layer_names = ['self', 'cross', 'self', 'cross']
    assert F % NUM_HEADS == 0

    key = jax.random.PRNGKey(0)
    k0, k1, k2, kp = jax.random.split(key, 4)
    desc0 = jax.random.normal(k0, (B, F, n_agents), jnp.float32)
    desc1 = jax.random.normal(k1, (B, F, n_frontier), jnp.float32)
    dist = jax.random.normal(k2, (B, F, n_agents, n_frontier), jnp.float32)
    params = init_params(kp, F, layer_names)

    fwd = jax.jit(functools.partial(gnn_forward, layer_names=layer_names))
    score1 = jax.block_until_ready(fwd(params, desc0, desc1, dist))
    assert score1.shape == (B, n_frontier, n_agents), score1.shape
    assert bool(jnp.all(jnp.isfinite(score1)))

    ref = jax.jit(make_ref_forward(layer_names))(params, desc0, desc1, dist)
    max_err = float(jnp.max(jnp.abs(score1 - ref)))
    assert jnp.allclose(score1, ref, atol=5e-2, rtol=5e-2), max_err

    print("KERNEL_OK")
</pallas_src>

<mosaic_0001>
module attributes {stable_mosaic.version = 11 : i64} {
  func.func @kernel(%arg0: i32, %arg1: memref<32x16xf32, #tpu.memory_space<vmem>>, %arg2: memref<32x32xf32, #tpu.memory_space<vmem>>, %arg3: memref<32x256xf32, #tpu.memory_space<vmem>>, %arg4: memref<32x256xf32, #tpu.memory_space<vmem>>, %arg5: memref<16x16xf32, #tpu.memory_space<vmem>>, %arg6: memref<32x32xf32, #tpu.memory_space<vmem>>, %arg7: memref<16x256xf32, #tpu.memory_space<vmem>>, %arg8: memref<32x256xf32, #tpu.memory_space<vmem>>, %arg9: memref<256x32xf32, #tpu.memory_space<vmem>>, %arg10: memref<16x32xf32, #tpu.memory_space<vmem>>, %arg11: memref<32x256xf32, #tpu.memory_space<vmem>>, %arg12: memref<16x256xf32, #tpu.memory_space<vmem>>, %arg13: memref<256x16xf32, #tpu.memory_space<vmem>>, %arg14: memref<32x16xf32, #tpu.memory_space<vmem>>, %arg15: memref<256x32xf32, #tpu.memory_space<vmem>>, %arg16: memref<224x1xf32, #tpu.memory_space<vmem>>, %arg17: memref<32x64xf32, #tpu.memory_space<vmem>>, %arg18: memref<232x32xf32, #tpu.memory_space<vmem>>, %arg19: memref<136x1xf32, #tpu.memory_space<vmem>>, %arg20: memref<32x64xf32, #tpu.memory_space<vmem>>, %arg21: memref<256x32xf32, #tpu.memory_space<vmem>>, %arg22: memref<224x1xf32, #tpu.memory_space<vmem>>, %arg23: memref<32x64xf32, #tpu.memory_space<vmem>>, %arg24: memref<104x32xf32, #tpu.memory_space<vmem>>, %arg25: memref<40x1xf32, #tpu.memory_space<vmem>>, %arg26: memref<1x256xf32, #tpu.memory_space<vmem>>) attributes {dimension_semantics = [#tpu.dimension_semantics<arbitrary>], iteration_bounds = array<i64: 1>, scalar_prefetch = 0 : i64, scratch_operands = 0 : i64, tpu.core_type = #tpu.core_type<tc>, window_params = [{pipeline_mode = #tpu.pipeline_mode<synchronous>, transform_indices = @transform_0, window_bounds = array<i64: 32, 16>}, {pipeline_mode = #tpu.pipeline_mode<synchronous>, transform_indices = @transform_1, window_bounds = array<i64: 32, 32>}, {pipeline_mode = #tpu.pipeline_mode<synchronous>, transform_indices = @transform_2, window_bounds = array<i64: 32, 256>}, {pipeline_mode = #tpu.pipeline_mode<synchronous>, transform_indices = @transform_3, window_bounds = array<i64: 32, 256>}, {pipeline_mode = #tpu.pipeline_mode<synchronous>, transform_indices = @transform_4, window_bounds = array<i64: 16, 16>}, {pipeline_mode = #tpu.pipeline_mode<synchronous>, transform_indices = @transform_5, window_bounds = array<i64: 32, 32>}, {pipeline_mode = #tpu.pipeline_mode<synchronous>, transform_indices = @transform_6, window_bounds = array<i64: 16, 256>}, {pipeline_mode = #tpu.pipeline_mode<synchronous>, transform_indices = @transform_7, window_bounds = array<i64: 32, 256>}, {pipeline_mode = #tpu.pipeline_mode<synchronous>, transform_indices = @transform_8, window_bounds = array<i64: 256, 32>}, {pipeline_mode = #tpu.pipeline_mode<synchronous>, transform_indices = @transform_9, window_bounds = array<i64: 16, 32>}, {pipeline_mode = #tpu.pipeline_mode<synchronous>, transform_indices = @transform_10, window_bounds = array<i64: 32, 256>}, {pipeline_mode = #tpu.pipeline_mode<synchronous>, transform_indices = @transform_11, window_bounds = array<i64: 16, 256>}, {pipeline_mode = #tpu.pipeline_mode<synchronous>, transform_indices = @transform_12, window_bounds = array<i64: 256, 16>}, {pipeline_mode = #tpu.pipeline_mode<synchronous>, transform_indices = @transform_13, window_bounds = array<i64: 32, 16>}, {pipeline_mode = #tpu.pipeline_mode<synchronous>, transform_indices = @transform_14, window_bounds = array<i64: 256, 32>}, {pipeline_mode = #tpu.pipeline_mode<synchronous>, transform_indices = @transform_15, window_bounds = array<i64: 224, 1>}, {pipeline_mode = #tpu.pipeline_mode<synchronous>, transform_indices = @transform_16, window_bounds = array<i64: 32, 64>}, {pipeline_mode = #tpu.pipeline_mode<synchronous>, transform_indices = @transform_17, window_bounds = array<i64: 232, 32>}, {pipeline_mode = #tpu.pipeline_mode<synchronous>, transform_indices = @transform_18, window_bounds = array<i64: 136, 1>}, {pipeline_mode = #tpu.pipeline_mode<synchronous>, transform_indices = @transform_19, window_bounds = array<i64: 32, 64>}, {pipeline_mode = #tpu.pipeline_mode<synchronous>, transform_indices = @transform_20, window_bounds = array<i64: 256, 32>}, {pipeline_mode = #tpu.pipeline_mode<synchronous>, transform_indices = @transform_21, window_bounds = array<i64: 224, 1>}, {pipeline_mode = #tpu.pipeline_mode<synchronous>, transform_indices = @transform_22, window_bounds = array<i64: 32, 64>}, {pipeline_mode = #tpu.pipeline_mode<synchronous>, transform_indices = @transform_23, window_bounds = array<i64: 104, 32>}, {pipeline_mode = #tpu.pipeline_mode<synchronous>, transform_indices = @transform_24, window_bounds = array<i64: 40, 1>}, {pipeline_mode = #tpu.pipeline_mode<synchronous>, transform_indices = @transform_25, window_bounds = array<i64: 1, 256>}]} {
    %c0 = arith.constant 0 : index
    %c0_0 = arith.constant 0 : index
    %0 = vector.load %arg1[%c0, %c0_0] : memref<32x16xf32, #tpu.memory_space<vmem>>, vector<32x16xf32>
    %c0_1 = arith.constant 0 : index
    %c0_2 = arith.constant 0 : index
    %1 = vector.load %arg2[%c0_1, %c0_2] : memref<32x32xf32, #tpu.memory_space<vmem>>, vector<32x32xf32>
    %c0_3 = arith.constant 0 : index
    %c0_4 = arith.constant 0 : index
    %2 = vector.load %arg5[%c0_3, %c0_4] : memref<16x16xf32, #tpu.memory_space<vmem>>, vector<16x16xf32>
    %c0_5 = arith.constant 0 : index
    %c0_6 = arith.constant 0 : index
    %3 = vector.load %arg15[%c0_5, %c0_6] : memref<256x32xf32, #tpu.memory_space<vmem>>, vector<256x32xf32>
    %c0_7 = arith.constant 0 : index
    %c0_8 = arith.constant 0 : index
    %4 = vector.load %arg16[%c0_7, %c0_8] : memref<224x1xf32, #tpu.memory_space<vmem>>, vector<224x1xf32>
    %c0_9 = arith.constant 0 : index
    %c0_10 = arith.constant 0 : index
    %5 = vector.load %arg17[%c0_9, %c0_10] : memref<32x64xf32, #tpu.memory_space<vmem>>, vector<32x64xf32>
    %6 = vector.extract_strided_slice %3 {offsets = [0, 0], sizes = [96, 32], strides = [1, 1]} : vector<256x32xf32> to vector<96x32xf32>
    %cst = arith.constant dense<0.000000e+00> : vector<96x16xf32>
    %7 = tpu.matmul %6, %0, %cst {dimension_numbers = #tpu.dot_dimension_numbers<[1], [0], [0], [1], [0, 0, 1, 1], [], []>} : vector<96x32xf32>, vector<32x16xf32>, vector<96x16xf32> -> vector<96x16xf32>
    %8 = vector.extract_strided_slice %4 {offsets = [0, 0], sizes = [96, 1], strides = [1, 1]} : vector<224x1xf32> to vector<96x1xf32>
    %9 = vector.broadcast %8 : vector<96x1xf32> to vector<96x16xf32>
    %10 = arith.addf %7, %9 : vector<96x16xf32>
    %11 = vector.extract_strided_slice %3 {offsets = [96, 0], sizes = [32, 32], strides = [1, 1]} : vector<256x32xf32> to vector<32x32xf32>
    %12 = vector.extract_strided_slice %4 {offsets = [96, 0], sizes = [32, 1], strides = [1, 1]} : vector<224x1xf32> to vector<32x1xf32>
    %13 = vector.extract_strided_slice %10 {offsets = [0, 0], sizes = [8, 16], strides = [1, 1]} : vector<96x16xf32> to vector<8x16xf32>
    %14 = vector.extract_strided_slice %10 {offsets = [32, 0], sizes = [8, 16], strides = [1, 1]} : vector<96x16xf32> to vector<8x16xf32>
    %15 = vector.extract_strided_slice %10 {offsets = [64, 0], sizes = [8, 16], strides = [1, 1]} : vector<96x16xf32> to vector<8x16xf32>
    "tpu.trace_start"() <{level = 10 : i32, message = "dn,dm->nm"}> : () -> ()
    %cst_11 = arith.constant dense<0.000000e+00> : vector<16x16xf32>
    %16 = tpu.matmul %13, %14, %cst_11 {dimension_numbers = #tpu.dot_dimension_numbers<[0], [0], [1], [1], [0, 1, 1, 1], [], []>} : vector<8x16xf32>, vector<8x16xf32>, vector<16x16xf32> -> vector<16x16xf32>
    "tpu.trace_stop"() : () -> ()
    %cst_12 = arith.constant 0.353553385 : f32
    %17 = vector.broadcast %cst_12 : f32 to vector<16x16xf32>
    %18 = arith.mulf %16, %17 : vector<16x16xf32>
    %19 = arith.addf %18, %2 : vector<16x16xf32>
    %cst_13 = arith.constant dense<0xFF800000> : vector<16xf32>
    %20 = vector.multi_reduction <maximumf>, %19, %cst_13 [1] : vector<16x16xf32> to vector<16xf32>
    %21 = vector.shape_cast %20 : vector<16xf32> to vector<16x1xf32>
    %22 = vector.broadcast %21 : vector<16x1xf32> to vector<16x16xf32>
    %23 = arith.subf %19, %22 : vector<16x16xf32>
    %24 = math.exp %23 : vector<16x16xf32>
    %cst_14 = arith.constant dense<0.000000e+00> : vector<16xf32>
    %25 = vector.multi_reduction <add>, %24, %cst_14 [1] : vector<16x16xf32> to vector<16xf32>
    %26 = vector.shape_cast %25 : vector<16xf32> to vector<16x1xf32>
    %27 = vector.broadcast %26 : vector<16x1xf32> to vector<16x16xf32>
    %28 = arith.divf %24, %27 : vector<16x16xf32>
    "tpu.trace_start"() <{level = 10 : i32, message = "dm,nm->dn"}> : () -> ()
    %cst_15 = arith.constant dense<0.000000e+00> : vector<8x16xf32>
    %29 = tpu.matmul %15, %28, %cst_15 {dimension_numbers = #tpu.dot_dimension_numbers<[1], [1], [0], [0], [0, 0, 1, 0], [], []>} : vector<8x16xf32>, vector<16x16xf32>, vector<8x16xf32> -> vector<8x16xf32>
    "tpu.trace_stop"() : () -> ()
    %30 = vector.extract_strided_slice %11 {offsets = [0, 0], sizes = [32, 8], strides = [1, 1]} : vector<32x32xf32> to vector<32x8xf32>
    %cst_16 = arith.constant dense<0.000000e+00> : vector<32x16xf32>
    %31 = tpu.matmul %30, %29, %cst_16 {dimension_numbers = #tpu.dot_dimension_numbers<[1], [0], [0], [1], [0, 0, 1, 1], [], []>} : vector<32x8xf32>, vector<8x16xf32>, vector<32x16xf32> -> vector<32x16xf32>
    %32 = vector.broadcast %12 : vector<32x1xf32> to vector<32x16xf32>
    %33 = arith.addf %32, %31 : vector<32x16xf32>
    %34 = vector.extract_strided_slice %10 {offsets = [8, 0], sizes = [8, 16], strides = [1, 1]} : vector<96x16xf32> to vector<8x16xf32>
    %35 = vector.extract_strided_slice %10 {offsets = [40, 0], sizes = [8, 16], strides = [1, 1]} : vector<96x16xf32> to vector<8x16xf32>
    %36 = vector.extract_strided_slice %10 {offsets = [72, 0], sizes = [8, 16], strides = [1, 1]} : vector<96x16xf32> to vector<8x16xf32>
    "tpu.trace_start"() <{level = 10 : i32, message = "dn,dm->nm"}> : () -> ()
    %cst_17 = arith.constant dense<0.000000e+00> : vector<16x16xf32>
    %37 = tpu.matmul %34, %35, %cst_17 {dimension_numbers = #tpu.dot_dimension_numbers<[0], [0], [1], [1], [0, 1, 1, 1], [], []>} : vector<8x16xf32>, vector<8x16xf32>, vector<16x16xf32> -> vector<16x16xf32>
    "tpu.trace_stop"() : () -> ()
    %cst_18 = arith.constant 0.353553385 : f32
    %38 = vector.broadcast %cst_18 : f32 to vector<16x16xf32>
    %39 = arith.mulf %37, %38 : vector<16x16xf32>
    %40 = arith.addf %39, %2 : vector<16x16xf32>
    %cst_19 = arith.constant dense<0xFF800000> : vector<16xf32>
    %41 = vector.multi_reduction <maximumf>, %40, %cst_19 [1] : vector<16x16xf32> to vector<16xf32>
    %42 = vector.shape_cast %41 : vector<16xf32> to vector<16x1xf32>
    %43 = vector.broadcast %42 : vector<16x1xf32> to vector<16x16xf32>
    %44 = arith.subf %40, %43 : vector<16x16xf32>
    %45 = math.exp %44 : vector<16x16xf32>
    %cst_20 = arith.constant dense<0.000000e+00> : vector<16xf32>
    %46 = vector.multi_reduction <add>, %45, %cst_20 [1] : vector<16x16xf32> to vector<16xf32>
    %47 = vector.shape_cast %46 : vector<16xf32> to vector<16x1xf32>
    %48 = vector.broadcast %47 : vector<16x1xf32> to vector<16x16xf32>
    %49 = arith.divf %45, %48 : vector<16x16xf32>
    "tpu.trace_start"() <{level = 10 : i32, message = "dm,nm->dn"}> : () -> ()
    %cst_21 = arith.constant dense<0.000000e+00> : vector<8x16xf32>
    %50 = tpu.matmul %36, %49, %cst_21 {dimension_numbers = #tpu.dot_dimension_numbers<[1], [1], [0], [0], [0, 0, 1, 0], [], []>} : vector<8x16xf32>, vector<16x16xf32>, vector<8x16xf32> -> vector<8x16xf32>
    "tpu.trace_stop"() : () -> ()
    %51 = vector.extract_strided_slice %11 {offsets = [0, 8], sizes = [32, 8], strides = [1, 1]} : vector<32x32xf32> to vector<32x8xf32>
    %cst_22 = arith.constant dense<0.000000e+00> : vector<32x16xf32>
    %52 = tpu.matmul %51, %50, %cst_22 {dimension_numbers = #tpu.dot_dimension_numbers<[1], [0], [0], [1], [0, 0, 1, 1], [], []>} : vector<32x8xf32>, vector<8x16xf32>, vector<32x16xf32> -> vector<32x16xf32>
    %53 = arith.addf %33, %52 : vector<32x16xf32>
    %54 = vector.extract_strided_slice %10 {offsets = [16, 0], sizes = [8, 16], strides = [1, 1]} : vector<96x16xf32> to vector<8x16xf32>
    %55 = vector.extract_strided_slice %10 {offsets = [48, 0], sizes = [8, 16], strides = [1, 1]} : vector<96x16xf32> to vector<8x16xf32>
    %56 = vector.extract_strided_slice %10 {offsets = [80, 0], sizes = [8, 16], strides = [1, 1]} : vector<96x16xf32> to vector<8x16xf32>
    "tpu.trace_start"() <{level = 10 : i32, message = "dn,dm->nm"}> : () -> ()
    %cst_23 = arith.constant dense<0.000000e+00> : vector<16x16xf32>
    %57 = tpu.matmul %54, %55, %cst_23 {dimension_numbers = #tpu.dot_dimension_numbers<[0], [0], [1], [1], [0, 1, 1, 1], [], []>} : vector<8x16xf32>, vector<8x16xf32>, vector<16x16xf32> -> vector<16x16xf32>
    "tpu.trace_stop"() : () -> ()
    %cst_24 = arith.constant 0.353553385 : f32
    %58 = vector.broadcast %cst_24 : f32 to vector<16x16xf32>
    %59 = arith.mulf %57, %58 : vector<16x16xf32>
    %60 = arith.addf %59, %2 : vector<16x16xf32>
    %cst_25 = arith.constant dense<0xFF800000> : vector<16xf32>
    %61 = vector.multi_reduction <maximumf>, %60, %cst_25 [1] : vector<16x16xf32> to vector<16xf32>
    %62 = vector.shape_cast %61 : vector<16xf32> to vector<16x1xf32>
    %63 = vector.broadcast %62 : vector<16x1xf32> to vector<16x16xf32>
    %64 = arith.subf %60, %63 : vector<16x16xf32>
    %65 = math.exp %64 : vector<16x16xf32>
    %cst_26 = arith.constant dense<0.000000e+00> : vector<16xf32>
    %66 = vector.multi_reduction <add>, %65, %cst_26 [1] : vector<16x16xf32> to vector<16xf32>
    %67 = vector.shape_cast %66 : vector<16xf32> to vector<16x1xf32>
    %68 = vector.broadcast %67 : vector<16x1xf32> to vector<16x16xf32>
    %69 = arith.divf %65, %68 : vector<16x16xf32>
    "tpu.trace_start"() <{level = 10 : i32, message = "dm,nm->dn"}> : () -> ()
    %cst_27 = arith.constant dense<0.000000e+00> : vector<8x16xf32>
    %70 = tpu.matmul %56, %69, %cst_27 {dimension_numbers = #tpu.dot_dimension_numbers<[1], [1], [0], [0], [0, 0, 1, 0], [], []>} : vector<8x16xf32>, vector<16x16xf32>, vector<8x16xf32> -> vector<8x16xf32>
    "tpu.trace_stop"() : () -> ()
    %71 = vector.extract_strided_slice %11 {offsets = [0, 16], sizes = [32, 8], strides = [1, 1]} : vector<32x32xf32> to vector<32x8xf32>
    %cst_28 = arith.constant dense<0.000000e+00> : vector<32x16xf32>
    %72 = tpu.matmul %71, %70, %cst_28 {dimension_numbers = #tpu.dot_dimension_numbers<[1], [0], [0], [1], [0, 0, 1, 1], [], []>} : vector<32x8xf32>, vector<8x16xf32>, vector<32x16xf32> -> vector<32x16xf32>
    %73 = arith.addf %53, %72 : vector<32x16xf32>
    %74 = vector.extract_strided_slice %10 {offsets = [24, 0], sizes = [8, 16], strides = [1, 1]} : vector<96x16xf32> to vector<8x16xf32>
    %75 = vector.extract_strided_slice %10 {offsets = [56, 0], sizes = [8, 16], strides = [1, 1]} : vector<96x16xf32> to vector<8x16xf32>
    %76 = vector.extract_strided_slice %10 {offsets = [88, 0], sizes = [8, 16], strides = [1, 1]} : vector<96x16xf32> to vector<8x16xf32>
    "tpu.trace_start"() <{level = 10 : i32, message = "dn,dm->nm"}> : () -> ()
    %cst_29 = arith.constant dense<0.000000e+00> : vector<16x16xf32>
    %77 = tpu.matmul %74, %75, %cst_29 {dimension_numbers = #tpu.dot_dimension_numbers<[0], [0], [1], [1], [0, 1, 1, 1], [], []>} : vector<8x16xf32>, vector<8x16xf32>, vector<16x16xf32> -> vector<16x16xf32>
    "tpu.trace_stop"() : () -> ()
    %cst_30 = arith.constant 0.353553385 : f32
    %78 = vector.broadcast %cst_30 : f32 to vector<16x16xf32>
    %79 = arith.mulf %77, %78 : vector<16x16xf32>
    %80 = arith.addf %79, %2 : vector<16x16xf32>
    %cst_31 = arith.constant dense<0xFF800000> : vector<16xf32>
    %81 = vector.multi_reduction <maximumf>, %80, %cst_31 [1] : vector<16x16xf32> to vector<16xf32>
    %82 = vector.shape_cast %81 : vector<16xf32> to vector<16x1xf32>
    %83 = vector.broadcast %82 : vector<16x1xf32> to vector<16x16xf32>
    %84 = arith.subf %80, %83 : vector<16x16xf32>
    %85 = math.exp %84 : vector<16x16xf32>
    %cst_32 = arith.constant dense<0.000000e+00> : vector<16xf32>
    %86 = vector.multi_reduction <add>, %85, %cst_32 [1] : vector<16x16xf32> to vector<16xf32>
    %87 = vector.shape_cast %86 : vector<16xf32> to vector<16x1xf32>
    %88 = vector.broadcast %87 : vector<16x1xf32> to vector<16x16xf32>
    %89 = arith.divf %85, %88 : vector<16x16xf32>
    "tpu.trace_start"() <{level = 10 : i32, message = "dm,nm->dn"}> : () -> ()
    %cst_33 = arith.constant dense<0.000000e+00> : vector<8x16xf32>
    %90 = tpu.matmul %76, %89, %cst_33 {dimension_numbers = #tpu.dot_dimension_numbers<[1], [1], [0], [0], [0, 0, 1, 0], [], []>} : vector<8x16xf32>, vector<16x16xf32>, vector<8x16xf32> -> vector<8x16xf32>
    "tpu.trace_stop"() : () -> ()
    %91 = vector.extract_strided_slice %11 {offsets = [0, 24], sizes = [32, 8], strides = [1, 1]} : vector<32x32xf32> to vector<32x8xf32>
    %cst_34 = arith.constant dense<0.000000e+00> : vector<32x16xf32>
    %92 = tpu.matmul %91, %90, %cst_34 {dimension_numbers = #tpu.dot_dimension_numbers<[1], [0], [0], [1], [0, 0, 1, 1], [], []>} : vector<32x8xf32>, vector<8x16xf32>, vector<32x16xf32> -> vector<32x16xf32>
    %93 = arith.addf %73, %92 : vector<32x16xf32>
    %94 = vector.extract_strided_slice %3 {offsets = [128, 0], sizes = [64, 32], strides = [1, 1]} : vector<256x32xf32> to vector<64x32xf32>
    %cst_35 = arith.constant dense<0.000000e+00> : vector<64x16xf32>
    %95 = tpu.matmul %94, %0, %cst_35 {dimension_numbers = #tpu.dot_dimension_numbers<[1], [0], [0], [1], [0, 0, 1, 1], [], []>} : vector<64x32xf32>, vector<32x16xf32>, vector<64x16xf32> -> vector<64x16xf32>
    %96 = vector.extract_strided_slice %3 {offsets = [192, 0], sizes = [64, 32], strides = [1, 1]} : vector<256x32xf32> to vector<64x32xf32>
    %cst_36 = arith.constant dense<0.000000e+00> : vector<64x16xf32>
    %97 = tpu.matmul %96, %93, %cst_36 {dimension_numbers = #tpu.dot_dimension_numbers<[1], [0], [0], [1], [0, 0, 1, 1], [], []>} : vector<64x32xf32>, vector<32x16xf32>, vector<64x16xf32> -> vector<64x16xf32>
    %98 = arith.addf %95, %97 : vector<64x16xf32>
    %99 = vector.extract_strided_slice %4 {offsets = [128, 0], sizes = [64, 1], strides = [1, 1]} : vector<224x1xf32> to vector<64x1xf32>
    %100 = vector.broadcast %99 : vector<64x1xf32> to vector<64x16xf32>
    %101 = arith.addf %98, %100 : vector<64x16xf32>
    %cst_37 = arith.constant 0.000000e+00 : f32
    %102 = vector.broadcast %cst_37 : f32 to vector<64x16xf32>
    %103 = arith.maximumf %101, %102 : vector<64x16xf32>
    %cst_38 = arith.constant dense<0.000000e+00> : vector<32x16xf32>
    %104 = tpu.matmul %5, %103, %cst_38 {dimension_numbers = #tpu.dot_dimension_numbers<[1], [0], [0], [1], [0, 0, 1, 1], [], []>} : vector<32x64xf32>, vector<64x16xf32>, vector<32x16xf32> -> vector<32x16xf32>
    %105 = vector.extract_strided_slice %4 {offsets = [192, 0], sizes = [32, 1], strides = [1, 1]} : vector<224x1xf32> to vector<32x1xf32>
    %106 = vector.broadcast %105 : vector<32x1xf32> to vector<32x16xf32>
    %107 = arith.addf %104, %106 : vector<32x16xf32>
    %108 = arith.addf %0, %107 : vector<32x16xf32>
    %c0_39 = arith.constant 0 : index
    %c0_40 = arith.constant 0 : index
    %109 = vector.load %arg6[%c0_39, %c0_40] : memref<32x32xf32, #tpu.memory_space<vmem>>, vector<32x32xf32>
    %c0_41 = arith.constant 0 : index
    %c0_42 = arith.constant 0 : index
    %110 = vector.load %arg15[%c0_41, %c0_42] : memref<256x32xf32, #tpu.memory_space<vmem>>, vector<256x32xf32>
    %c0_43 = arith.constant 0 : index
    %c0_44 = arith.constant 0 : index
    %111 = vector.load %arg16[%c0_43, %c0_44] : memref<224x1xf32, #tpu.memory_space<vmem>>, vector<224x1xf32>
    %c0_45 = arith.constant 0 : index
    %c0_46 = arith.constant 0 : index
    %112 = vector.load %arg17[%c0_45, %c0_46] : memref<32x64xf32, #tpu.memory_space<vmem>>, vector<32x64xf32>
    %113 = vector.extract_strided_slice %110 {offsets = [0, 0], sizes = [96, 32], strides = [1, 1]} : vector<256x32xf32> to vector<96x32xf32>
    %cst_47 = arith.constant dense<0.000000e+00> : vector<96x32xf32>
    %114 = tpu.matmul %113, %1, %cst_47 {dimension_numbers = #tpu.dot_dimension_numbers<[1], [0], [0], [1], [0, 0, 1, 1], [], []>} : vector<96x32xf32>, vector<32x32xf32>, vector<96x32xf32> -> vector<96x32xf32>
    %115 = vector.extract_strided_slice %111 {offsets = [0, 0], sizes = [96, 1], strides = [1, 1]} : vector<224x1xf32> to vector<96x1xf32>
    %116 = vector.broadcast %115 : vector<96x1xf32> to vector<96x32xf32>
    %117 = arith.addf %114, %116 : vector<96x32xf32>
    %118 = vector.extract_strided_slice %110 {offsets = [96, 0], sizes = [32, 32], strides = [1, 1]} : vector<256x32xf32> to vector<32x32xf32>
    %119 = vector.extract_strided_slice %111 {offsets = [96, 0], sizes = [32, 1], strides = [1, 1]} : vector<224x1xf32> to vector<32x1xf32>
    %120 = vector.extract_strided_slice %117 {offsets = [0, 0], sizes = [8, 32], strides = [1, 1]} : vector<96x32xf32> to vector<8x32xf32>
    %121 = vector.extract_strided_slice %117 {offsets = [32, 0], sizes = [8, 32], strides = [1, 1]} : vector<96x32xf32> to vector<8x32xf32>
    %122 = vector.extract_strided_slice %117 {offsets = [64, 0], sizes = [8, 32], strides = [1, 1]} : vector<96x32xf32> to vector<8x32xf32>
    "tpu.trace_start"() <{level = 10 : i32, message = "dn,dm->nm"}> : () -> ()
    %cst_48 = arith.constant dense<0.000000e+00> : vector<32x32xf32>
    %123 = tpu.matmul %120, %121, %cst_48 {dimension_numbers = #tpu.dot_dimension_numbers<[0], [0], [1], [1], [0, 1, 1, 1], [], []>} : vector<8x32xf32>, vector<8x32xf32>, vector<32x32xf32> -> vector<32x32xf32>
    "tpu.trace_stop"() : () -> ()
    %cst_49 = arith.constant 0.353553385 : f32
    %124 = vector.broadcast %cst_49 : f32 to vector<32x32xf32>
    %125 = arith.mulf %123, %124 : vector<32x32xf32>
    %126 = arith.addf %125, %109 : vector<32x32xf32>
    %cst_50 = arith.constant dense<0xFF800000> : vector<32xf32>
    %127 = vector.multi_reduction <maximumf>, %126, %cst_50 [1] : vector<32x32xf32> to vector<32xf32>
    %128 = vector.shape_cast %127 : vector<32xf32> to vector<32x1xf32>
    %129 = vector.broadcast %128 : vector<32x1xf32> to vector<32x32xf32>
    %130 = arith.subf %126, %129 : vector<32x32xf32>
    %131 = math.exp %130 : vector<32x32xf32>
    %cst_51 = arith.constant dense<0.000000e+00> : vector<32xf32>
    %132 = vector.multi_reduction <add>, %131, %cst_51 [1] : vector<32x32xf32> to vector<32xf32>
    %133 = vector.shape_cast %132 : vector<32xf32> to vector<32x1xf32>
    %134 = vector.broadcast %133 : vector<32x1xf32> to vector<32x32xf32>
    %135 = arith.divf %131, %134 : vector<32x32xf32>
    "tpu.trace_start"() <{level = 10 : i32, message = "dm,nm->dn"}> : () -> ()
    %cst_52 = arith.constant dense<0.000000e+00> : vector<8x32xf32>
    %136 = tpu.matmul %122, %135, %cst_52 {dimension_numbers = #tpu.dot_dimension_numbers<[1], [1], [0], [0], [0, 0, 1, 0], [], []>} : vector<8x32xf32>, vector<32x32xf32>, vector<8x32xf32> -> vector<8x32xf32>
    "tpu.trace_stop"() : () -> ()
    %137 = vector.extract_strided_slice %118 {offsets = [0, 0], sizes = [32, 8], strides = [1, 1]} : vector<32x32xf32> to vector<32x8xf32>
    %cst_53 = arith.constant dense<0.000000e+00> : vector<32x32xf32>
    %138 = tpu.matmul %137, %136, %cst_53 {dimension_numbers = #tpu.dot_dimension_numbers<[1], [0], [0], [1], [0, 0, 1, 1], [], []>} : vector<32x8xf32>, vector<8x32xf32>, vector<32x32xf32> -> vector<32x32xf32>
    %139 = vector.broadcast %119 : vector<32x1xf32> to vector<32x32xf32>
    %140 = arith.addf %139, %138 : vector<32x32xf32>
    %141 = vector.extract_strided_slice %117 {offsets = [8, 0], sizes = [8, 32], strides = [1, 1]} : vector<96x32xf32> to vector<8x32xf32>
    %142 = vector.extract_strided_slice %117 {offsets = [40, 0], sizes = [8, 32], strides = [1, 1]} : vector<96x32xf32> to vector<8x32xf32>
    %143 = vector.extract_strided_slice %117 {offsets = [72, 0], sizes = [8, 32], strides = [1, 1]} : vector<96x32xf32> to vector<8x32xf32>
    "tpu.trace_start"() <{level = 10 : i32, message = "dn,dm->nm"}> : () -> ()
    %cst_54 = arith.constant dense<0.000000e+00> : vector<32x32xf32>
    %144 = tpu.matmul %141, %142, %cst_54 {dimension_numbers = #tpu.dot_dimension_numbers<[0], [0], [1], [1], [0, 1, 1, 1], [], []>} : vector<8x32xf32>, vector<8x32xf32>, vector<32x32xf32> -> vector<32x32xf32>
    "tpu.trace_stop"() : () -> ()
    %cst_55 = arith.constant 0.353553385 : f32
    %145 = vector.broadcast %cst_55 : f32 to vector<32x32xf32>
    %146 = arith.mulf %144, %145 : vector<32x32xf32>
    %147 = arith.addf %146, %109 : vector<32x32xf32>
    %cst_56 = arith.constant dense<0xFF800000> : vector<32xf32>
    %148 = vector.multi_reduction <maximumf>, %147, %cst_56 [1] : vector<32x32xf32> to vector<32xf32>
    %149 = vector.shape_cast %148 : vector<32xf32> to vector<32x1xf32>
    %150 = vector.broadcast %149 : vector<32x1xf32> to vector<32x32xf32>
    %151 = arith.subf %147, %150 : vector<32x32xf32>
    %152 = math.exp %151 : vector<32x32xf32>
    %cst_57 = arith.constant dense<0.000000e+00> : vector<32xf32>
    %153 = vector.multi_reduction <add>, %152, %cst_57 [1] : vector<32x32xf32> to vector<32xf32>
    %154 = vector.shape_cast %153 : vector<32xf32> to vector<32x1xf32>
    %155 = vector.broadcast %154 : vector<32x1xf32> to vector<32x32xf32>
    %156 = arith.divf %152, %155 : vector<32x32xf32>
    "tpu.trace_start"() <{level = 10 : i32, message = "dm,nm->dn"}> : () -> ()
    %cst_58 = arith.constant dense<0.000000e+00> : vector<8x32xf32>
    %157 = tpu.matmul %143, %156, %cst_58 {dimension_numbers = #tpu.dot_dimension_numbers<[1], [1], [0], [0], [0, 0, 1, 0], [], []>} : vector<8x32xf32>, vector<32x32xf32>, vector<8x32xf32> -> vector<8x32xf32>
    "tpu.trace_stop"() : () -> ()
    %158 = vector.extract_strided_slice %118 {offsets = [0, 8], sizes = [32, 8], strides = [1, 1]} : vector<32x32xf32> to vector<32x8xf32>
    %cst_59 = arith.constant dense<0.000000e+00> : vector<32x32xf32>
    %159 = tpu.matmul %158, %157, %cst_59 {dimension_numbers = #tpu.dot_dimension_numbers<[1], [0], [0], [1], [0, 0, 1, 1], [], []>} : vector<32x8xf32>, vector<8x32xf32>, vector<32x32xf32> -> vector<32x32xf32>
    %160 = arith.addf %140, %159 : vector<32x32xf32>
    %161 = vector.extract_strided_slice %117 {offsets = [16, 0], sizes = [8, 32], strides = [1, 1]} : vector<96x32xf32> to vector<8x32xf32>
    %162 = vector.extract_strided_slice %117 {offsets = [48, 0], sizes = [8, 32], strides = [1, 1]} : vector<96x32xf32> to vector<8x32xf32>
    %163 = vector.extract_strided_slice %117 {offsets = [80, 0], sizes = [8, 32], strides = [1, 1]} : vector<96x32xf32> to vector<8x32xf32>
    "tpu.trace_start"() <{level = 10 : i32, message = "dn,dm->nm"}> : () -> ()
    %cst_60 = arith.constant dense<0.000000e+00> : vector<32x32xf32>
    %164 = tpu.matmul %161, %162, %cst_60 {dimension_numbers = #tpu.dot_dimension_numbers<[0], [0], [1], [1], [0, 1, 1, 1], [], []>} : vector<8x32xf32>, vector<8x32xf32>, vector<32x32xf32> -> vector<32x32xf32>
    "tpu.trace_stop"() : () -> ()
    %cst_61 = arith.constant 0.353553385 : f32
    %165 = vector.broadcast %cst_61 : f32 to vector<32x32xf32>
    %166 = arith.mulf %164, %165 : vector<32x32xf32>
    %167 = arith.addf %166, %109 : vector<32x32xf32>
    %cst_62 = arith.constant dense<0xFF800000> : vector<32xf32>
    %168 = vector.multi_reduction <maximumf>, %167, %cst_62 [1] : vector<32x32xf32> to vector<32xf32>
    %169 = vector.shape_cast %168 : vector<32xf32> to vector<32x1xf32>
    %170 = vector.broadcast %169 : vector<32x1xf32> to vector<32x32xf32>
    %171 = arith.subf %167, %170 : vector<32x32xf32>
    %172 = math.exp %171 : vector<32x32xf32>
    %cst_63 = arith.constant dense<0.000000e+00> : vector<32xf32>
    %173 = vector.multi_reduction <add>, %172, %cst_63 [1] : vector<32x32xf32> to vector<32xf32>
    %174 = vector.shape_cast %173 : vector<32xf32> to vector<32x1xf32>
    %175 = vector.broadcast %174 : vector<32x1xf32> to vector<32x32xf32>
    %176 = arith.divf %172, %175 : vector<32x32xf32>
    "tpu.trace_start"() <{level = 10 : i32, message = "dm,nm->dn"}> : () -> ()
    %cst_64 = arith.constant dense<0.000000e+00> : vector<8x32xf32>
    %177 = tpu.matmul %163, %176, %cst_64 {dimension_numbers = #tpu.dot_dimension_numbers<[1], [1], [0], [0], [0, 0, 1, 0], [], []>} : vector<8x32xf32>, vector<32x32xf32>, vector<8x32xf32> -> vector<8x32xf32>
    "tpu.trace_stop"() : () -> ()
    %178 = vector.extract_strided_slice %118 {offsets = [0, 16], sizes = [32, 8], strides = [1, 1]} : vector<32x32xf32> to vector<32x8xf32>
    %cst_65 = arith.constant dense<0.000000e+00> : vector<32x32xf32>
    %179 = tpu.matmul %178, %177, %cst_65 {dimension_numbers = #tpu.dot_dimension_numbers<[1], [0], [0], [1], [0, 0, 1, 1], [], []>} : vector<32x8xf32>, vector<8x32xf32>, vector<32x32xf32> -> vector<32x32xf32>
    %180 = arith.addf %160, %179 : vector<32x32xf32>
    %181 = vector.extract_strided_slice %117 {offsets = [24, 0], sizes = [8, 32], strides = [1, 1]} : vector<96x32xf32> to vector<8x32xf32>
    %182 = vector.extract_strided_slice %117 {offsets = [56, 0], sizes = [8, 32], strides = [1, 1]} : vector<96x32xf32> to vector<8x32xf32>
    %183 = vector.extract_strided_slice %117 {offsets = [88, 0], sizes = [8, 32], strides = [1, 1]} : vector<96x32xf32> to vector<8x32xf32>
    "tpu.trace_start"() <{level = 10 : i32, message = "dn,dm->nm"}> : () -> ()
    %cst_66 = arith.constant dense<0.000000e+00> : vector<32x32xf32>
    %184 = tpu.matmul %181, %182, %cst_66 {dimension_numbers = #tpu.dot_dimension_numbers<[0], [0], [1], [1], [0, 1, 1, 1], [], []>} : vector<8x32xf32>, vector<8x32xf32>, vector<32x32xf32> -> vector<32x32xf32>
    "tpu.trace_stop"() : () -> ()
    %cst_67 = arith.constant 0.353553385 : f32
    %185 = vector.broadcast %cst_67 : f32 to vector<32x32xf32>
    %186 = arith.mulf %184, %185 : vector<32x32xf32>
    %187 = arith.addf %186, %109 : vector<32x32xf32>
    %cst_68 = arith.constant dense<0xFF800000> : vector<32xf32>
    %188 = vector.multi_reduction <maximumf>, %187, %cst_68 [1] : vector<32x32xf32> to vector<32xf32>
    %189 = vector.shape_cast %188 : vector<32xf32> to vector<32x1xf32>
    %190 = vector.broadcast %189 : vector<32x1xf32> to vector<32x32xf32>
    %191 = arith.subf %187, %190 : vector<32x32xf32>
    %192 = math.exp %191 : vector<32x32xf32>
    %cst_69 = arith.constant dense<0.000000e+00> : vector<32xf32>
    %193 = vector.multi_reduction <add>, %192, %cst_69 [1] : vector<32x32xf32> to vector<32xf32>
    %194 = vector.shape_cast %193 : vector<32xf32> to vector<32x1xf32>
    %195 = vector.broadcast %194 : vector<32x1xf32> to vector<32x32xf32>
    %196 = arith.divf %192, %195 : vector<32x32xf32>
    "tpu.trace_start"() <{level = 10 : i32, message = "dm,nm->dn"}> : () -> ()
    %cst_70 = arith.constant dense<0.000000e+00> : vector<8x32xf32>
    %197 = tpu.matmul %183, %196, %cst_70 {dimension_numbers = #tpu.dot_dimension_numbers<[1], [1], [0], [0], [0, 0, 1, 0], [], []>} : vector<8x32xf32>, vector<32x32xf32>, vector<8x32xf32> -> vector<8x32xf32>
    "tpu.trace_stop"() : () -> ()
    %198 = vector.extract_strided_slice %118 {offsets = [0, 24], sizes = [32, 8], strides = [1, 1]} : vector<32x32xf32> to vector<32x8xf32>
    %cst_71 = arith.constant dense<0.000000e+00> : vector<32x32xf32>
    %199 = tpu.matmul %198, %197, %cst_71 {dimension_numbers = #tpu.dot_dimension_numbers<[1], [0], [0], [1], [0, 0, 1, 1], [], []>} : vector<32x8xf32>, vector<8x32xf32>, vector<32x32xf32> -> vector<32x32xf32>
    %200 = arith.addf %180, %199 : vector<32x32xf32>
    %201 = vector.extract_strided_slice %110 {offsets = [128, 0], sizes = [64, 32], strides = [1, 1]} : vector<256x32xf32> to vector<64x32xf32>
    %cst_72 = arith.constant dense<0.000000e+00> : vector<64x32xf32>
    %202 = tpu.matmul %201, %1, %cst_72 {dimension_numbers = #tpu.dot_dimension_numbers<[1], [0], [0], [1], [0, 0, 1, 1], [], []>} : vector<64x32xf32>, vector<32x32xf32>, vector<64x32xf32> -> vector<64x32xf32>
    %203 = vector.extract_strided_slice %110 {offsets = [192, 0], sizes = [64, 32], strides = [1, 1]} : vector<256x32xf32> to vector<64x32xf32>
    %cst_73 = arith.constant dense<0.000000e+00> : vector<64x32xf32>
    %204 = tpu.matmul %203, %200, %cst_73 {dimension_numbers = #tpu.dot_dimension_numbers<[1], [0], [0], [1], [0, 0, 1, 1], [], []>} : vector<64x32xf32>, vector<32x32xf32>, vector<64x32xf32> -> vector<64x32xf32>
    %205 = arith.addf %202, %204 : vector<64x32xf32>
    %206 = vector.extract_strided_slice %111 {offsets = [128, 0], sizes = [64, 1], strides = [1, 1]} : vector<224x1xf32> to vector<64x1xf32>
    %207 = vector.broadcast %206 : vector<64x1xf32> to vector<64x32xf32>
    %208 = arith.addf %205, %207 : vector<64x32xf32>
    %cst_74 = arith.constant 0.000000e+00 : f32
    %209 = vector.broadcast %cst_74 : f32 to vector<64x32xf32>
    %210 = arith.maximumf %208, %209 : vector<64x32xf32>
    %cst_75 = arith.constant dense<0.000000e+00> : vector<32x32xf32>
    %211 = tpu.matmul %112, %210, %cst_75 {dimension_numbers = #tpu.dot_dimension_numbers<[1], [0], [0], [1], [0, 0, 1, 1], [], []>} : vector<32x64xf32>, vector<64x32xf32>, vector<32x32xf32> -> vector<32x32xf32>
    %212 = vector.extract_strided_slice %111 {offsets = [192, 0], sizes = [32, 1], strides = [1, 1]} : vector<224x1xf32> to vector<32x1xf32>
    %213 = vector.broadcast %212 : vector<32x1xf32> to vector<32x32xf32>
    %214 = arith.addf %211, %213 : vector<32x32xf32>
    %215 = arith.addf %1, %214 : vector<32x32xf32>
    %c0_76 = arith.constant 0 : index
    %c0_77 = arith.constant 0 : index
    %216 = vector.load %arg3[%c0_76, %c0_77] : memref<32x256xf32, #tpu.memory_space<vmem>>, vector<32x256xf32>
    %c0_78 = arith.constant 0 : index
    %c0_79 = arith.constant 0 : index
    %217 = vector.load %arg7[%c0_78, %c0_79] : memref<16x256xf32, #tpu.memory_space<vmem>>, vector<16x256xf32>
    %c0_80 = arith.constant 0 : index
    %c0_81 = arith.constant 0 : index
    %218 = vector.load %arg8[%c0_80, %c0_81] : memref<32x256xf32, #tpu.memory_space<vmem>>, vector<32x256xf32>
    %c0_82 = arith.constant 0 : index
    %c0_83 = arith.constant 0 : index
    %219 = vector.load %arg9[%c0_82, %c0_83] : memref<256x32xf32, #tpu.memory_space<vmem>>, vector<256x32xf32>
    %c0_84 = arith.constant 0 : index
    %c0_85 = arith.constant 0 : index
    %220 = vector.load %arg10[%c0_84, %c0_85] : memref<16x32xf32, #tpu.memory_space<vmem>>, vector<16x32xf32>
    %c0_86 = arith.constant 0 : index
    %c0_87 = arith.constant 0 : index
    %221 = vector.load %arg18[%c0_86, %c0_87] : memref<232x32xf32, #tpu.memory_space<vmem>>, vector<232x32xf32>
    %c0_88 = arith.constant 0 : index
    %c0_89 = arith.constant 0 : index
    %222 = vector.load %arg19[%c0_88, %c0_89] : memref<136x1xf32, #tpu.memory_space<vmem>>, vector<136x1xf32>
    %c0_90 = arith.constant 0 : index
    %c0_91 = arith.constant 0 : index
    %223 = vector.load %arg20[%c0_90, %c0_91] : memref<32x64xf32, #tpu.memory_space<vmem>>, vector<32x64xf32>
    %224 = vector.extract_strided_slice %221 {offsets = [0, 0], sizes = [32, 32], strides = [1, 1]} : vector<232x32xf32> to vector<32x32xf32>
    %cst_92 = arith.constant dense<0.000000e+00> : vector<32x16xf32>
    %225 = tpu.matmul %224, %108, %cst_92 {dimension_numbers = #tpu.dot_dimension_numbers<[1], [0], [0], [1], [0, 0, 1, 1], [], []>} : vector<32x32xf32>, vector<32x16xf32>, vector<32x16xf32> -> vector<32x16xf32>
    %226 = vector.extract_strided_slice %221 {offsets = [32, 0], sizes = [32, 32], strides = [1, 1]} : vector<232x32xf32> to vector<32x32xf32>
    %cst_93 = arith.constant dense<0.000000e+00> : vector<32x32xf32>
    %227 = tpu.matmul %226, %215, %cst_93 {dimension_numbers = #tpu.dot_dimension_numbers<[1], [0], [0], [1], [0, 0, 1, 1], [], []>} : vector<32x32xf32>, vector<32x32xf32>, vector<32x32xf32> -> vector<32x32xf32>
    %228 = vector.extract_strided_slice %221 {offsets = [64, 0], sizes = [32, 32], strides = [1, 1]} : vector<232x32xf32> to vector<32x32xf32>
    %cst_94 = arith.constant dense<0.000000e+00> : vector<32x256xf32>
    %229 = tpu.matmul %228, %216, %cst_94 {dimension_numbers = #tpu.dot_dimension_numbers<[1], [0], [0], [1], [0, 0, 1, 1], [], []>} : vector<32x32xf32>, vector<32x256xf32>, vector<32x256xf32> -> vector<32x256xf32>
    %cst_95 = arith.constant dense<0.000000e+00> : vector<32x256xf32>
    %230 = tpu.matmul %225, %217, %cst_95 {dimension_numbers = #tpu.dot_dimension_numbers<[1], [0], [0], [1], [0, 0, 1, 1], [], []>} : vector<32x16xf32>, vector<16x256xf32>, vector<32x256xf32> -> vector<32x256xf32>
    %231 = arith.addf %229, %230 : vector<32x256xf32>
    %cst_96 = arith.constant dense<0.000000e+00> : vector<32x256xf32>
    %232 = tpu.matmul %227, %218, %cst_96 {dimension_numbers = #tpu.dot_dimension_numbers<[1], [0], [0], [1], [0, 0, 1, 1], [], []>} : vector<32x32xf32>, vector<32x256xf32>, vector<32x256xf32> -> vector<32x256xf32>
    %233 = arith.addf %231, %232 : vector<32x256xf32>
    %234 = vector.extract_strided_slice %222 {offsets = [0, 0], sizes = [32, 1], strides = [1, 1]} : vector<136x1xf32> to vector<32x1xf32>
    %235 = vector.broadcast %234 : vector<32x1xf32> to vector<32x256xf32>
    %236 = arith.addf %233, %235 : vector<32x256xf32>
    %cst_97 = arith.constant 0.000000e+00 : f32
    %237 = vector.broadcast %cst_97 : f32 to vector<32x256xf32>
    %238 = arith.maximumf %236, %237 : vector<32x256xf32>
    %239 = vector.extract_strided_slice %221 {offsets = [96, 0], sizes = [1, 32], strides = [1, 1]} : vector<232x32xf32> to vector<1x32xf32>
    %cst_98 = arith.constant dense<0.000000e+00> : vector<1x256xf32>
    %240 = tpu.matmul %239, %238, %cst_98 {dimension_numbers = #tpu.dot_dimension_numbers<[1], [0], [0], [1], [0, 0, 1, 1], [], []>} : vector<1x32xf32>, vector<32x256xf32>, vector<1x256xf32> -> vector<1x256xf32>
    %241 = vector.extract_strided_slice %222 {offsets = [32, 0], sizes = [1, 1], strides = [1, 1]} : vector<136x1xf32> to vector<1x1xf32>
    %242 = vector.broadcast %241 : vector<1x1xf32> to vector<1x256xf32>
    %243 = arith.addf %240, %242 : vector<1x256xf32>
    %244 = vector.broadcast %243 : vector<1x256xf32> to vector<16x256xf32>
    %245 = arith.mulf %217, %244 : vector<16x256xf32>
    %cst_99 = arith.constant dense<0.000000e+00> : vector<16x32xf32>
    %246 = tpu.matmul %245, %219, %cst_99 {dimension_numbers = #tpu.dot_dimension_numbers<[1], [0], [0], [1], [0, 0, 1, 1], [], []>} : vector<16x256xf32>, vector<256x32xf32>, vector<16x32xf32> -> vector<16x32xf32>
    %247 = arith.addf %246, %220 : vector<16x32xf32>
    %cst_100 = arith.constant dense<0xFF800000> : vector<16xf32>
    %248 = vector.multi_reduction <maximumf>, %247, %cst_100 [1] : vector<16x32xf32> to vector<16xf32>
    %249 = vector.shape_cast %248 : vector<16xf32> to vector<16x1xf32>
    %250 = vector.broadcast %249 : vector<16x1xf32> to vector<16x32xf32>
    %251 = arith.subf %247, %250 : vector<16x32xf32>
    %252 = math.exp %251 : vector<16x32xf32>
    %cst_101 = arith.constant dense<0.000000e+00> : vector<16xf32>
    %253 = vector.multi_reduction <add>, %252, %cst_101 [1] : vector<16x32xf32> to vector<16xf32>
    %254 = vector.shape_cast %253 : vector<16xf32> to vector<16x1xf32>
    %255 = vector.broadcast %254 : vector<16x1xf32> to vector<16x32xf32>
    %256 = arith.divf %252, %255 : vector<16x32xf32>
    "tpu.trace_start"() <{level = 10 : i32, message = "dk,qk->dq"}> : () -> ()
    %cst_102 = arith.constant dense<0.000000e+00> : vector<32x16xf32>
    %257 = tpu.matmul %215, %256, %cst_102 {dimension_numbers = #tpu.dot_dimension_numbers<[1], [1], [0], [0], [0, 0, 1, 0], [], []>} : vector<32x32xf32>, vector<16x32xf32>, vector<32x16xf32> -> vector<32x16xf32>
    "tpu.trace_stop"() : () -> ()
    %258 = vector.extract_strided_slice %221 {offsets = [104, 0], sizes = [64, 32], strides = [1, 1]} : vector<232x32xf32> to vector<64x32xf32>
    %cst_103 = arith.constant dense<0.000000e+00> : vector<64x16xf32>
    %259 = tpu.matmul %258, %108, %cst_103 {dimension_numbers = #tpu.dot_dimension_numbers<[1], [0], [0], [1], [0, 0, 1, 1], [], []>} : vector<64x32xf32>, vector<32x16xf32>, vector<64x16xf32> -> vector<64x16xf32>
    %260 = vector.extract_strided_slice %221 {offsets = [168, 0], sizes = [64, 32], strides = [1, 1]} : vector<232x32xf32> to vector<64x32xf32>
    %cst_104 = arith.constant dense<0.000000e+00> : vector<64x16xf32>
    %261 = tpu.matmul %260, %257, %cst_104 {dimension_numbers = #tpu.dot_dimension_numbers<[1], [0], [0], [1], [0, 0, 1, 1], [], []>} : vector<64x32xf32>, vector<32x16xf32>, vector<64x16xf32> -> vector<64x16xf32>
    %262 = arith.addf %259, %261 : vector<64x16xf32>
    %263 = vector.extract_strided_slice %222 {offsets = [40, 0], sizes = [64, 1], strides = [1, 1]} : vector<136x1xf32> to vector<64x1xf32>
    %264 = vector.broadcast %263 : vector<64x1xf32> to vector<64x16xf32>
    %265 = arith.addf %262, %264 : vector<64x16xf32>
    %cst_105 = arith.constant 0.000000e+00 : f32
    %266 = vector.broadcast %cst_105 : f32 to vector<64x16xf32>
    %267 = arith.maximumf %265, %266 : vector<64x16xf32>
    %cst_106 = arith.constant dense<0.000000e+00> : vector<32x16xf32>
    %268 = tpu.matmul %223, %267, %cst_106 {dimension_numbers = #tpu.dot_dimension_numbers<[1], [0], [0], [1], [0, 0, 1, 1], [], []>} : vector<32x64xf32>, vector<64x16xf32>, vector<32x16xf32> -> vector<32x16xf32>
    %269 = vector.extract_strided_slice %222 {offsets = [104, 0], sizes = [32, 1], strides = [1, 1]} : vector<136x1xf32> to vector<32x1xf32>
    %270 = vector.broadcast %269 : vector<32x1xf32> to vector<32x16xf32>
    %271 = arith.addf %268, %270 : vector<32x16xf32>
    %272 = arith.addf %108, %271 : vector<32x16xf32>
    %c0_107 = arith.constant 0 : index
    %c0_108 = arith.constant 0 : index
    %273 = vector.load %arg4[%c0_107, %c0_108] : memref<32x256xf32, #tpu.memory_space<vmem>>, vector<32x256xf32>
    %c0_109 = arith.constant 0 : index
    %c0_110 = arith.constant 0 : index
    %274 = vector.load %arg11[%c0_109, %c0_110] : memref<32x256xf32, #tpu.memory_space<vmem>>, vector<32x256xf32>
    %c0_111 = arith.constant 0 : index
    %c0_112 = arith.constant 0 : index
    %275 = vector.load %arg12[%c0_111, %c0_112] : memref<16x256xf32, #tpu.memory_space<vmem>>, vector<16x256xf32>
    %c0_113 = arith.constant 0 : index
    %c0_114 = arith.constant 0 : index
    %276 = vector.load %arg13[%c0_113, %c0_114] : memref<256x16xf32, #tpu.memory_space<vmem>>, vector<256x16xf32>
    %c0_115 = arith.constant 0 : index
    %c0_116 = arith.constant 0 : index
    %277 = vector.load %arg14[%c0_115, %c0_116] : memref<32x16xf32, #tpu.memory_space<vmem>>, vector<32x16xf32>
    %c0_117 = arith.constant 0 : index
    %c0_118 = arith.constant 0 : index
    %278 = vector.load %arg18[%c0_117, %c0_118] : memref<232x32xf32, #tpu.memory_space<vmem>>, vector<232x32xf32>
    %c0_119 = arith.constant 0 : index
    %c0_120 = arith.constant 0 : index
    %279 = vector.load %arg19[%c0_119, %c0_120] : memref<136x1xf32, #tpu.memory_space<vmem>>, vector<136x1xf32>
    %c0_121 = arith.constant 0 : index
    %c0_122 = arith.constant 0 : index
    %280 = vector.load %arg20[%c0_121, %c0_122] : memref<32x64xf32, #tpu.memory_space<vmem>>, vector<32x64xf32>
    %281 = vector.extract_strided_slice %278 {offsets = [0, 0], sizes = [32, 32], strides = [1, 1]} : vector<232x32xf32> to vector<32x32xf32>
    %cst_123 = arith.constant dense<0.000000e+00> : vector<32x32xf32>
    %282 = tpu.matmul %281, %215, %cst_123 {dimension_numbers = #tpu.dot_dimension_numbers<[1], [0], [0], [1], [0, 0, 1, 1], [], []>} : vector<32x32xf32>, vector<32x32xf32>, vector<32x32xf32> -> vector<32x32xf32>
    %283 = vector.extract_strided_slice %278 {offsets = [32, 0], sizes = [32, 32], strides = [1, 1]} : vector<232x32xf32> to vector<32x32xf32>
    %cst_124 = arith.constant dense<0.000000e+00> : vector<32x16xf32>
    %284 = tpu.matmul %283, %108, %cst_124 {dimension_numbers = #tpu.dot_dimension_numbers<[1], [0], [0], [1], [0, 0, 1, 1], [], []>} : vector<32x32xf32>, vector<32x16xf32>, vector<32x16xf32> -> vector<32x16xf32>
    %285 = vector.extract_strided_slice %278 {offsets = [64, 0], sizes = [32, 32], strides = [1, 1]} : vector<232x32xf32> to vector<32x32xf32>
    %cst_125 = arith.constant dense<0.000000e+00> : vector<32x256xf32>
    %286 = tpu.matmul %285, %273, %cst_125 {dimension_numbers = #tpu.dot_dimension_numbers<[1], [0], [0], [1], [0, 0, 1, 1], [], []>} : vector<32x32xf32>, vector<32x256xf32>, vector<32x256xf32> -> vector<32x256xf32>
    %cst_126 = arith.constant dense<0.000000e+00> : vector<32x256xf32>
    %287 = tpu.matmul %282, %274, %cst_126 {dimension_numbers = #tpu.dot_dimension_numbers<[1], [0], [0], [1], [0, 0, 1, 1], [], []>} : vector<32x32xf32>, vector<32x256xf32>, vector<32x256xf32> -> vector<32x256xf32>
    %288 = arith.addf %286, %287 : vector<32x256xf32>
    %cst_127 = arith.constant dense<0.000000e+00> : vector<32x256xf32>
    %289 = tpu.matmul %284, %275, %cst_127 {dimension_numbers = #tpu.dot_dimension_numbers<[1], [0], [0], [1], [0, 0, 1, 1], [], []>} : vector<32x16xf32>, vector<16x256xf32>, vector<32x256xf32> -> vector<32x256xf32>
    %290 = arith.addf %288, %289 : vector<32x256xf32>
    %291 = vector.extract_strided_slice %279 {offsets = [0, 0], sizes = [32, 1], strides = [1, 1]} : vector<136x1xf32> to vector<32x1xf32>
    %292 = vector.broadcast %291 : vector<32x1xf32> to vector<32x256xf32>
    %293 = arith.addf %290, %292 : vector<32x256xf32>
    %cst_128 = arith.constant 0.000000e+00 : f32
    %294 = vector.broadcast %cst_128 : f32 to vector<32x256xf32>
    %295 = arith.maximumf %293, %294 : vector<32x256xf32>
    %296 = vector.extract_strided_slice %278 {offsets = [96, 0], sizes = [1, 32], strides = [1, 1]} : vector<232x32xf32> to vector<1x32xf32>
    %cst_129 = arith.constant dense<0.000000e+00> : vector<1x256xf32>
    %297 = tpu.matmul %296, %295, %cst_129 {dimension_numbers = #tpu.dot_dimension_numbers<[1], [0], [0], [1], [0, 0, 1, 1], [], []>} : vector<1x32xf32>, vector<32x256xf32>, vector<1x256xf32> -> vector<1x256xf32>
    %298 = vector.extract_strided_slice %279 {offsets = [32, 0], sizes = [1, 1], strides = [1, 1]} : vector<136x1xf32> to vector<1x1xf32>
    %299 = vector.broadcast %298 : vector<1x1xf32> to vector<1x256xf32>
    %300 = arith.addf %297, %299 : vector<1x256xf32>
    %301 = vector.broadcast %300 : vector<1x256xf32> to vector<32x256xf32>
    %302 = arith.mulf %274, %301 : vector<32x256xf32>
    %cst_130 = arith.constant dense<0.000000e+00> : vector<32x16xf32>
    %303 = tpu.matmul %302, %276, %cst_130 {dimension_numbers = #tpu.dot_dimension_numbers<[1], [0], [0], [1], [0, 0, 1, 1], [], []>} : vector<32x256xf32>, vector<256x16xf32>, vector<32x16xf32> -> vector<32x16xf32>
    %304 = arith.addf %303, %277 : vector<32x16xf32>
    %cst_131 = arith.constant dense<0xFF800000> : vector<32xf32>
    %305 = vector.multi_reduction <maximumf>, %304, %cst_131 [1] : vector<32x16xf32> to vector<32xf32>
    %306 = vector.shape_cast %305 : vector<32xf32> to vector<32x1xf32>
    %307 = vector.broadcast %306 : vector<32x1xf32> to vector<32x16xf32>
    %308 = arith.subf %304, %307 : vector<32x16xf32>
    %309 = math.exp %308 : vector<32x16xf32>
    %cst_132 = arith.constant dense<0.000000e+00> : vector<32xf32>
    %310 = vector.multi_reduction <add>, %309, %cst_132 [1] : vector<32x16xf32> to vector<32xf32>
    %311 = vector.shape_cast %310 : vector<32xf32> to vector<32x1xf32>
    %312 = vector.broadcast %311 : vector<32x1xf32> to vector<32x16xf32>
    %313 = arith.divf %309, %312 : vector<32x16xf32>
    "tpu.trace_start"() <{level = 10 : i32, message = "dk,qk->dq"}> : () -> ()
    %cst_133 = arith.constant dense<0.000000e+00> : vector<32x32xf32>
    %314 = tpu.matmul %108, %313, %cst_133 {dimension_numbers = #tpu.dot_dimension_numbers<[1], [1], [0], [0], [0, 0, 1, 0], [], []>} : vector<32x16xf32>, vector<32x16xf32>, vector<32x32xf32> -> vector<32x32xf32>
    "tpu.trace_stop"() : () -> ()
    %315 = vector.extract_strided_slice %278 {offsets = [104, 0], sizes = [64, 32], strides = [1, 1]} : vector<232x32xf32> to vector<64x32xf32>
    %cst_134 = arith.constant dense<0.000000e+00> : vector<64x32xf32>
    %316 = tpu.matmul %315, %215, %cst_134 {dimension_numbers = #tpu.dot_dimension_numbers<[1], [0], [0], [1], [0, 0, 1, 1], [], []>} : vector<64x32xf32>, vector<32x32xf32>, vector<64x32xf32> -> vector<64x32xf32>
    %317 = vector.extract_strided_slice %278 {offsets = [168, 0], sizes = [64, 32], strides = [1, 1]} : vector<232x32xf32> to vector<64x32xf32>
    %cst_135 = arith.constant dense<0.000000e+00> : vector<64x32xf32>
    %318 = tpu.matmul %317, %314, %cst_135 {dimension_numbers = #tpu.dot_dimension_numbers<[1], [0], [0], [1], [0, 0, 1, 1], [], []>} : vector<64x32xf32>, vector<32x32xf32>, vector<64x32xf32> -> vector<64x32xf32>
    %319 = arith.addf %316, %318 : vector<64x32xf32>
    %320 = vector.extract_strided_slice %279 {offsets = [40, 0], sizes = [64, 1], strides = [1, 1]} : vector<136x1xf32> to vector<64x1xf32>
    %321 = vector.broadcast %320 : vector<64x1xf32> to vector<64x32xf32>
    %322 = arith.addf %319, %321 : vector<64x32xf32>
    %cst_136 = arith.constant 0.000000e+00 : f32
    %323 = vector.broadcast %cst_136 : f32 to vector<64x32xf32>
    %324 = arith.maximumf %322, %323 : vector<64x32xf32>
    %cst_137 = arith.constant dense<0.000000e+00> : vector<32x32xf32>
    %325 = tpu.matmul %280, %324, %cst_137 {dimension_numbers = #tpu.dot_dimension_numbers<[1], [0], [0], [1], [0, 0, 1, 1], [], []>} : vector<32x64xf32>, vector<64x32xf32>, vector<32x32xf32> -> vector<32x32xf32>
    %326 = vector.extract_strided_slice %279 {offsets = [104, 0], sizes = [32, 1], strides = [1, 1]} : vector<136x1xf32> to vector<32x1xf32>
    %327 = vector.broadcast %326 : vector<32x1xf32> to vector<32x32xf32>
    %328 = arith.addf %325, %327 : vector<32x32xf32>
    %329 = arith.addf %215, %328 : vector<32x32xf32>
    %c0_138 = arith.constant 0 : index
    %c0_139 = arith.constant 0 : index
    %330 = vector.load %arg5[%c0_138, %c0_139] : memref<16x16xf32, #tpu.memory_space<vmem>>, vector<16x16xf32>
    %c0_140 = arith.constant 0 : index
    %c0_141 = arith.constant 0 : index
    %331 = vector.load %arg21[%c0_140, %c0_141] : memref<256x32xf32, #tpu.memory_space<vmem>>, vector<256x32xf32>
    %c0_142 = arith.constant 0 : index
    %c0_143 = arith.constant 0 : index
    %332 = vector.load %arg22[%c0_142, %c0_143] : memref<224x1xf32, #tpu.memory_space<vmem>>, vector<224x1xf32>
    %c0_144 = arith.constant 0 : index
    %c0_145 = arith.constant 0 : index
    %333 = vector.load %arg23[%c0_144, %c0_145] : memref<32x64xf32, #tpu.memory_space<vmem>>, vector<32x64xf32>
    %334 = vector.extract_strided_slice %331 {offsets = [0, 0], sizes = [96, 32], strides = [1, 1]} : vector<256x32xf32> to vector<96x32xf32>
    %cst_146 = arith.constant dense<0.000000e+00> : vector<96x16xf32>
    %335 = tpu.matmul %334, %272, %cst_146 {dimension_numbers = #tpu.dot_dimension_numbers<[1], [0], [0], [1], [0, 0, 1, 1], [], []>} : vector<96x32xf32>, vector<32x16xf32>, vector<96x16xf32> -> vector<96x16xf32>
    %336 = vector.extract_strided_slice %332 {offsets = [0, 0], sizes = [96, 1], strides = [1, 1]} : vector<224x1xf32> to vector<96x1xf32>
    %337 = vector.broadcast %336 : vector<96x1xf32> to vector<96x16xf32>
    %338 = arith.addf %335, %337 : vector<96x16xf32>
    %339 = vector.extract_strided_slice %331 {offsets = [96, 0], sizes = [32, 32], strides = [1, 1]} : vector<256x32xf32> to vector<32x32xf32>
    %340 = vector.extract_strided_slice %332 {offsets = [96, 0], sizes = [32, 1], strides = [1, 1]} : vector<224x1xf32> to vector<32x1xf32>
    %341 = vector.extract_strided_slice %338 {offsets = [0, 0], sizes = [8, 16], strides = [1, 1]} : vector<96x16xf32> to vector<8x16xf32>
    %342 = vector.extract_strided_slice %338 {offsets = [32, 0], sizes = [8, 16], strides = [1, 1]} : vector<96x16xf32> to vector<8x16xf32>
    %343 = vector.extract_strided_slice %338 {offsets = [64, 0], sizes = [8, 16], strides = [1, 1]} : vector<96x16xf32> to vector<8x16xf32>
    "tpu.trace_start"() <{level = 10 : i32, message = "dn,dm->nm"}> : () -> ()
    %cst_147 = arith.constant dense<0.000000e+00> : vector<16x16xf32>
    %344 = tpu.matmul %341, %342, %cst_147 {dimension_numbers = #tpu.dot_dimension_numbers<[0], [0], [1], [1], [0, 1, 1, 1], [], []>} : vector<8x16xf32>, vector<8x16xf32>, vector<16x16xf32> -> vector<16x16xf32>
    "tpu.trace_stop"() : () -> ()
    %cst_148 = arith.constant 0.353553385 : f32
    %345 = vector.broadcast %cst_148 : f32 to vector<16x16xf32>
    %346 = arith.mulf %344, %345 : vector<16x16xf32>
    %347 = arith.addf %346, %330 : vector<16x16xf32>
    %cst_149 = arith.constant dense<0xFF800000> : vector<16xf32>
    %348 = vector.multi_reduction <maximumf>, %347, %cst_149 [1] : vector<16x16xf32> to vector<16xf32>
    %349 = vector.shape_cast %348 : vector<16xf32> to vector<16x1xf32>
    %350 = vector.broadcast %349 : vector<16x1xf32> to vector<16x16xf32>
    %351 = arith.subf %347, %350 : vector<16x16xf32>
    %352 = math.exp %351 : vector<16x16xf32>
    %cst_150 = arith.constant dense<0.000000e+00> : vector<16xf32>
    %353 = vector.multi_reduction <add>, %352, %cst_150 [1] : vector<16x16xf32> to vector<16xf32>
    %354 = vector.shape_cast %353 : vector<16xf32> to vector<16x1xf32>
    %355 = vector.broadcast %354 : vector<16x1xf32> to vector<16x16xf32>
    %356 = arith.divf %352, %355 : vector<16x16xf32>
    "tpu.trace_start"() <{level = 10 : i32, message = "dm,nm->dn"}> : () -> ()
    %cst_151 = arith.constant dense<0.000000e+00> : vector<8x16xf32>
    %357 = tpu.matmul %343, %356, %cst_151 {dimension_numbers = #tpu.dot_dimension_numbers<[1], [1], [0], [0], [0, 0, 1, 0], [], []>} : vector<8x16xf32>, vector<16x16xf32>, vector<8x16xf32> -> vector<8x16xf32>
    "tpu.trace_stop"() : () -> ()
    %358 = vector.extract_strided_slice %339 {offsets = [0, 0], sizes = [32, 8], strides = [1, 1]} : vector<32x32xf32> to vector<32x8xf32>
    %cst_152 = arith.constant dense<0.000000e+00> : vector<32x16xf32>
    %359 = tpu.matmul %358, %357, %cst_152 {dimension_numbers = #tpu.dot_dimension_numbers<[1], [0], [0], [1], [0, 0, 1, 1], [], []>} : vector<32x8xf32>, vector<8x16xf32>, vector<32x16xf32> -> vector<32x16xf32>
    %360 = vector.broadcast %340 : vector<32x1xf32> to vector<32x16xf32>
    %361 = arith.addf %360, %359 : vector<32x16xf32>
    %362 = vector.extract_strided_slice %338 {offsets = [8, 0], sizes = [8, 16], strides = [1, 1]} : vector<96x16xf32> to vector<8x16xf32>
    %363 = vector.extract_strided_slice %338 {offsets = [40, 0], sizes = [8, 16], strides = [1, 1]} : vector<96x16xf32> to vector<8x16xf32>
    %364 = vector.extract_strided_slice %338 {offsets = [72, 0], sizes = [8, 16], strides = [1, 1]} : vector<96x16xf32> to vector<8x16xf32>
    "tpu.trace_start"() <{level = 10 : i32, message = "dn,dm->nm"}> : () -> ()
    %cst_153 = arith.constant dense<0.000000e+00> : vector<16x16xf32>
    %365 = tpu.matmul %362, %363, %cst_153 {dimension_numbers = #tpu.dot_dimension_numbers<[0], [0], [1], [1], [0, 1, 1, 1], [], []>} : vector<8x16xf32>, vector<8x16xf32>, vector<16x16xf32> -> vector<16x16xf32>
    "tpu.trace_stop"() : () -> ()
    %cst_154 = arith.constant 0.353553385 : f32
    %366 = vector.broadcast %cst_154 : f32 to vector<16x16xf32>
    %367 = arith.mulf %365, %366 : vector<16x16xf32>
    %368 = arith.addf %367, %330 : vector<16x16xf32>
    %cst_155 = arith.constant dense<0xFF800000> : vector<16xf32>
    %369 = vector.multi_reduction <maximumf>, %368, %cst_155 [1] : vector<16x16xf32> to vector<16xf32>
    %370 = vector.shape_cast %369 : vector<16xf32> to vector<16x1xf32>
    %371 = vector.broadcast %370 : vector<16x1xf32> to vector<16x16xf32>
    %372 = arith.subf %368, %371 : vector<16x16xf32>
    %373 = math.exp %372 : vector<16x16xf32>
    %cst_156 = arith.constant dense<0.000000e+00> : vector<16xf32>
    %374 = vector.multi_reduction <add>, %373, %cst_156 [1] : vector<16x16xf32> to vector<16xf32>
    %375 = vector.shape_cast %374 : vector<16xf32> to vector<16x1xf32>
    %376 = vector.broadcast %375 : vector<16x1xf32> to vector<16x16xf32>
    %377 = arith.divf %373, %376 : vector<16x16xf32>
    "tpu.trace_start"() <{level = 10 : i32, message = "dm,nm->dn"}> : () -> ()
    %cst_157 = arith.constant dense<0.000000e+00> : vector<8x16xf32>
    %378 = tpu.matmul %364, %377, %cst_157 {dimension_numbers = #tpu.dot_dimension_numbers<[1], [1], [0], [0], [0, 0, 1, 0], [], []>} : vector<8x16xf32>, vector<16x16xf32>, vector<8x16xf32> -> vector<8x16xf32>
    "tpu.trace_stop"() : () -> ()
    %379 = vector.extract_strided_slice %339 {offsets = [0, 8], sizes = [32, 8], strides = [1, 1]} : vector<32x32xf32> to vector<32x8xf32>
    %cst_158 = arith.constant dense<0.000000e+00> : vector<32x16xf32>
    %380 = tpu.matmul %379, %378, %cst_158 {dimension_numbers = #tpu.dot_dimension_numbers<[1], [0], [0], [1], [0, 0, 1, 1], [], []>} : vector<32x8xf32>, vector<8x16xf32>, vector<32x16xf32> -> vector<32x16xf32>
    %381 = arith.addf %361, %380 : vector<32x16xf32>
    %382 = vector.extract_strided_slice %338 {offsets = [16, 0], sizes = [8, 16], strides = [1, 1]} : vector<96x16xf32> to vector<8x16xf32>
    %383 = vector.extract_strided_slice %338 {offsets = [48, 0], sizes = [8, 16], strides = [1, 1]} : vector<96x16xf32> to vector<8x16xf32>
    %384 = vector.extract_strided_slice %338 {offsets = [80, 0], sizes = [8, 16], strides = [1, 1]} : vector<96x16xf32> to vector<8x16xf32>
    "tpu.trace_start"() <{level = 10 : i32, message = "dn,dm->nm"}> : () -> ()
    %cst_159 = arith.constant dense<0.000000e+00> : vector<16x16xf32>
    %385 = tpu.matmul %382, %383, %cst_159 {dimension_numbers = #tpu.dot_dimension_numbers<[0], [0], [1], [1], [0, 1, 1, 1], [], []>} : vector<8x16xf32>, vector<8x16xf32>, vector<16x16xf32> -> vector<16x16xf32>
    "tpu.trace_stop"() : () -> ()
    %cst_160 = arith.constant 0.353553385 : f32
    %386 = vector.broadcast %cst_160 : f32 to vector<16x16xf32>
    %387 = arith.mulf %385, %386 : vector<16x16xf32>
    %388 = arith.addf %387, %330 : vector<16x16xf32>
    %cst_161 = arith.constant dense<0xFF800000> : vector<16xf32>
    %389 = vector.multi_reduction <maximumf>, %388, %cst_161 [1] : vector<16x16xf32> to vector<16xf32>
    %390 = vector.shape_cast %389 : vector<16xf32> to vector<16x1xf32>
    %391 = vector.broadcast %390 : vector<16x1xf32> to vector<16x16xf32>
    %392 = arith.subf %388, %391 : vector<16x16xf32>
    %393 = math.exp %392 : vector<16x16xf32>
    %cst_162 = arith.constant dense<0.000000e+00> : vector<16xf32>
    %394 = vector.multi_reduction <add>, %393, %cst_162 [1] : vector<16x16xf32> to vector<16xf32>
    %395 = vector.shape_cast %394 : vector<16xf32> to vector<16x1xf32>
    %396 = vector.broadcast %395 : vector<16x1xf32> to vector<16x16xf32>
    %397 = arith.divf %393, %396 : vector<16x16xf32>
    "tpu.trace_start"() <{level = 10 : i32, message = "dm,nm->dn"}> : () -> ()
    %cst_163 = arith.constant dense<0.000000e+00> : vector<8x16xf32>
    %398 = tpu.matmul %384, %397, %cst_163 {dimension_numbers = #tpu.dot_dimension_numbers<[1], [1], [0], [0], [0, 0, 1, 0], [], []>} : vector<8x16xf32>, vector<16x16xf32>, vector<8x16xf32> -> vector<8x16xf32>
    "tpu.trace_stop"() : () -> ()
    %399 = vector.extract_strided_slice %339 {offsets = [0, 16], sizes = [32, 8], strides = [1, 1]} : vector<32x32xf32> to vector<32x8xf32>
    %cst_164 = arith.constant dense<0.000000e+00> : vector<32x16xf32>
    %400 = tpu.matmul %399, %398, %cst_164 {dimension_numbers = #tpu.dot_dimension_numbers<[1], [0], [0], [1], [0, 0, 1, 1], [], []>} : vector<32x8xf32>, vector<8x16xf32>, vector<32x16xf32> -> vector<32x16xf32>
    %401 = arith.addf %381, %400 : vector<32x16xf32>
    %402 = vector.extract_strided_slice %338 {offsets = [24, 0], sizes = [8, 16], strides = [1, 1]} : vector<96x16xf32> to vector<8x16xf32>
    %403 = vector.extract_strided_slice %338 {offsets = [56, 0], sizes = [8, 16], strides = [1, 1]} : vector<96x16xf32> to vector<8x16xf32>
    %404 = vector.extract_strided_slice %338 {offsets = [88, 0], sizes = [8, 16], strides = [1, 1]} : vector<96x16xf32> to vector<8x16xf32>
    "tpu.trace_start"() <{level = 10 : i32, message = "dn,dm->nm"}> : () -> ()
    %cst_165 = arith.constant dense<0.000000e+00> : vector<16x16xf32>
    %405 = tpu.matmul %402, %403, %cst_165 {dimension_numbers = #tpu.dot_dimension_numbers<[0], [0], [1], [1], [0, 1, 1, 1], [], []>} : vector<8x16xf32>, vector<8x16xf32>, vector<16x16xf32> -> vector<16x16xf32>
    "tpu.trace_stop"() : () -> ()
    %cst_166 = arith.constant 0.353553385 : f32
    %406 = vector.broadcast %cst_166 : f32 to vector<16x16xf32>
    %407 = arith.mulf %405, %406 : vector<16x16xf32>
    %408 = arith.addf %407, %330 : vector<16x16xf32>
    %cst_167 = arith.constant dense<0xFF800000> : vector<16xf32>
    %409 = vector.multi_reduction <maximumf>, %408, %cst_167 [1] : vector<16x16xf32> to vector<16xf32>
    %410 = vector.shape_cast %409 : vector<16xf32> to vector<16x1xf32>
    %411 = vector.broadcast %410 : vector<16x1xf32> to vector<16x16xf32>
    %412 = arith.subf %408, %411 : vector<16x16xf32>
    %413 = math.exp %412 : vector<16x16xf32>
    %cst_168 = arith.constant dense<0.000000e+00> : vector<16xf32>
    %414 = vector.multi_reduction <add>, %413, %cst_168 [1] : vector<16x16xf32> to vector<16xf32>
    %415 = vector.shape_cast %414 : vector<16xf32> to vector<16x1xf32>
    %416 = vector.broadcast %415 : vector<16x1xf32> to vector<16x16xf32>
    %417 = arith.divf %413, %416 : vector<16x16xf32>
    "tpu.trace_start"() <{level = 10 : i32, message = "dm,nm->dn"}> : () -> ()
    %cst_169 = arith.constant dense<0.000000e+00> : vector<8x16xf32>
    %418 = tpu.matmul %404, %417, %cst_169 {dimension_numbers = #tpu.dot_dimension_numbers<[1], [1], [0], [0], [0, 0, 1, 0], [], []>} : vector<8x16xf32>, vector<16x16xf32>, vector<8x16xf32> -> vector<8x16xf32>
    "tpu.trace_stop"() : () -> ()
    %419 = vector.extract_strided_slice %339 {offsets = [0, 24], sizes = [32, 8], strides = [1, 1]} : vector<32x32xf32> to vector<32x8xf32>
    %cst_170 = arith.constant dense<0.000000e+00> : vector<32x16xf32>
    %420 = tpu.matmul %419, %418, %cst_170 {dimension_numbers = #tpu.dot_dimension_numbers<[1], [0], [0], [1], [0, 0, 1, 1], [], []>} : vector<32x8xf32>, vector<8x16xf32>, vector<32x16xf32> -> vector<32x16xf32>
    %421 = arith.addf %401, %420 : vector<32x16xf32>
    %422 = vector.extract_strided_slice %331 {offsets = [128, 0], sizes = [64, 32], strides = [1, 1]} : vector<256x32xf32> to vector<64x32xf32>
    %cst_171 = arith.constant dense<0.000000e+00> : vector<64x16xf32>
    %423 = tpu.matmul %422, %272, %cst_171 {dimension_numbers = #tpu.dot_dimension_numbers<[1], [0], [0], [1], [0, 0, 1, 1], [], []>} : vector<64x32xf32>, vector<32x16xf32>, vector<64x16xf32> -> vector<64x16xf32>
    %424 = vector.extract_strided_slice %331 {offsets = [192, 0], sizes = [64, 32], strides = [1, 1]} : vector<256x32xf32> to vector<64x32xf32>
    %cst_172 = arith.constant dense<0.000000e+00> : vector<64x16xf32>
    %425 = tpu.matmul %424, %421, %cst_172 {dimension_numbers = #tpu.dot_dimension_numbers<[1], [0], [0], [1], [0, 0, 1, 1], [], []>} : vector<64x32xf32>, vector<32x16xf32>, vector<64x16xf32> -> vector<64x16xf32>
    %426 = arith.addf %423, %425 : vector<64x16xf32>
    %427 = vector.extract_strided_slice %332 {offsets = [128, 0], sizes = [64, 1], strides = [1, 1]} : vector<224x1xf32> to vector<64x1xf32>
    %428 = vector.broadcast %427 : vector<64x1xf32> to vector<64x16xf32>
    %429 = arith.addf %426, %428 : vector<64x16xf32>
    %cst_173 = arith.constant 0.000000e+00 : f32
    %430 = vector.broadcast %cst_173 : f32 to vector<64x16xf32>
    %431 = arith.maximumf %429, %430 : vector<64x16xf32>
    %cst_174 = arith.constant dense<0.000000e+00> : vector<32x16xf32>
    %432 = tpu.matmul %333, %431, %cst_174 {dimension_numbers = #tpu.dot_dimension_numbers<[1], [0], [0], [1], [0, 0, 1, 1], [], []>} : vector<32x64xf32>, vector<64x16xf32>, vector<32x16xf32> -> vector<32x16xf32>
    %433 = vector.extract_strided_slice %332 {offsets = [192, 0], sizes = [32, 1], strides = [1, 1]} : vector<224x1xf32> to vector<32x1xf32>
    %434 = vector.broadcast %433 : vector<32x1xf32> to vector<32x16xf32>
    %435 = arith.addf %432, %434 : vector<32x16xf32>
    %436 = arith.addf %272, %435 : vector<32x16xf32>
    %c0_175 = arith.constant 0 : index
    %c0_176 = arith.constant 0 : index
    %437 = vector.load %arg6[%c0_175, %c0_176] : memref<32x32xf32, #tpu.memory_space<vmem>>, vector<32x32xf32>
    %c0_177 = arith.constant 0 : index
    %c0_178 = arith.constant 0 : index
    %438 = vector.load %arg21[%c0_177, %c0_178] : memref<256x32xf32, #tpu.memory_space<vmem>>, vector<256x32xf32>
    %c0_179 = arith.constant 0 : index
    %c0_180 = arith.constant 0 : index
    %439 = vector.load %arg22[%c0_179, %c0_180] : memref<224x1xf32, #tpu.memory_space<vmem>>, vector<224x1xf32>
    %c0_181 = arith.constant 0 : index
    %c0_182 = arith.constant 0 : index
    %440 = vector.load %arg23[%c0_181, %c0_182] : memref<32x64xf32, #tpu.memory_space<vmem>>, vector<32x64xf32>
    %441 = vector.extract_strided_slice %438 {offsets = [0, 0], sizes = [96, 32], strides = [1, 1]} : vector<256x32xf32> to vector<96x32xf32>
    %cst_183 = arith.constant dense<0.000000e+00> : vector<96x32xf32>
    %442 = tpu.matmul %441, %329, %cst_183 {dimension_numbers = #tpu.dot_dimension_numbers<[1], [0], [0], [1], [0, 0, 1, 1], [], []>} : vector<96x32xf32>, vector<32x32xf32>, vector<96x32xf32> -> vector<96x32xf32>
    %443 = vector.extract_strided_slice %439 {offsets = [0, 0], sizes = [96, 1], strides = [1, 1]} : vector<224x1xf32> to vector<96x1xf32>
    %444 = vector.broadcast %443 : vector<96x1xf32> to vector<96x32xf32>
    %445 = arith.addf %442, %444 : vector<96x32xf32>
    %446 = vector.extract_strided_slice %438 {offsets = [96, 0], sizes = [32, 32], strides = [1, 1]} : vector<256x32xf32> to vector<32x32xf32>
    %447 = vector.extract_strided_slice %439 {offsets = [96, 0], sizes = [32, 1], strides = [1, 1]} : vector<224x1xf32> to vector<32x1xf32>
    %448 = vector.extract_strided_slice %445 {offsets = [0, 0], sizes = [8, 32], strides = [1, 1]} : vector<96x32xf32> to vector<8x32xf32>
    %449 = vector.extract_strided_slice %445 {offsets = [32, 0], sizes = [8, 32], strides = [1, 1]} : vector<96x32xf32> to vector<8x32xf32>
    %450 = vector.extract_strided_slice %445 {offsets = [64, 0], sizes = [8, 32], strides = [1, 1]} : vector<96x32xf32> to vector<8x32xf32>
    "tpu.trace_start"() <{level = 10 : i32, message = "dn,dm->nm"}> : () -> ()
    %cst_184 = arith.constant dense<0.000000e+00> : vector<32x32xf32>
    %451 = tpu.matmul %448, %449, %cst_184 {dimension_numbers = #tpu.dot_dimension_numbers<[0], [0], [1], [1], [0, 1, 1, 1], [], []>} : vector<8x32xf32>, vector<8x32xf32>, vector<32x32xf32> -> vector<32x32xf32>
    "tpu.trace_stop"() : () -> ()
    %cst_185 = arith.constant 0.353553385 : f32
    %452 = vector.broadcast %cst_185 : f32 to vector<32x32xf32>
    %453 = arith.mulf %451, %452 : vector<32x32xf32>
    %454 = arith.addf %453, %437 : vector<32x32xf32>
    %cst_186 = arith.constant dense<0xFF800000> : vector<32xf32>
    %455 = vector.multi_reduction <maximumf>, %454, %cst_186 [1] : vector<32x32xf32> to vector<32xf32>
    %456 = vector.shape_cast %455 : vector<32xf32> to vector<32x1xf32>
    %457 = vector.broadcast %456 : vector<32x1xf32> to vector<32x32xf32>
    %458 = arith.subf %454, %457 : vector<32x32xf32>
    %459 = math.exp %458 : vector<32x32xf32>
    %cst_187 = arith.constant dense<0.000000e+00> : vector<32xf32>
    %460 = vector.multi_reduction <add>, %459, %cst_187 [1] : vector<32x32xf32> to vector<32xf32>
    %461 = vector.shape_cast %460 : vector<32xf32> to vector<32x1xf32>
    %462 = vector.broadcast %461 : vector<32x1xf32> to vector<32x32xf32>
    %463 = arith.divf %459, %462 : vector<32x32xf32>
    "tpu.trace_start"() <{level = 10 : i32, message = "dm,nm->dn"}> : () -> ()
    %cst_188 = arith.constant dense<0.000000e+00> : vector<8x32xf32>
    %464 = tpu.matmul %450, %463, %cst_188 {dimension_numbers = #tpu.dot_dimension_numbers<[1], [1], [0], [0], [0, 0, 1, 0], [], []>} : vector<8x32xf32>, vector<32x32xf32>, vector<8x32xf32> -> vector<8x32xf32>
    "tpu.trace_stop"() : () -> ()
    %465 = vector.extract_strided_slice %446 {offsets = [0, 0], sizes = [32, 8], strides = [1, 1]} : vector<32x32xf32> to vector<32x8xf32>
    %cst_189 = arith.constant dense<0.000000e+00> : vector<32x32xf32>
    %466 = tpu.matmul %465, %464, %cst_189 {dimension_numbers = #tpu.dot_dimension_numbers<[1], [0], [0], [1], [0, 0, 1, 1], [], []>} : vector<32x8xf32>, vector<8x32xf32>, vector<32x32xf32> -> vector<32x32xf32>
    %467 = vector.broadcast %447 : vector<32x1xf32> to vector<32x32xf32>
    %468 = arith.addf %467, %466 : vector<32x32xf32>
    %469 = vector.extract_strided_slice %445 {offsets = [8, 0], sizes = [8, 32], strides = [1, 1]} : vector<96x32xf32> to vector<8x32xf32>
    %470 = vector.extract_strided_slice %445 {offsets = [40, 0], sizes = [8, 32], strides = [1, 1]} : vector<96x32xf32> to vector<8x32xf32>
    %471 = vector.extract_strided_slice %445 {offsets = [72, 0], sizes = [8, 32], strides = [1, 1]} : vector<96x32xf32> to vector<8x32xf32>
    "tpu.trace_start"() <{level = 10 : i32, message = "dn,dm->nm"}> : () -> ()
    %cst_190 = arith.constant dense<0.000000e+00> : vector<32x32xf32>
    %472 = tpu.matmul %469, %470, %cst_190 {dimension_numbers = #tpu.dot_dimension_numbers<[0], [0], [1], [1], [0, 1, 1, 1], [], []>} : vector<8x32xf32>, vector<8x32xf32>, vector<32x32xf32> -> vector<32x32xf32>
    "tpu.trace_stop"() : () -> ()
    %cst_191 = arith.constant 0.353553385 : f32
    %473 = vector.broadcast %cst_191 : f32 to vector<32x32xf32>
    %474 = arith.mulf %472, %473 : vector<32x32xf32>
    %475 = arith.addf %474, %437 : vector<32x32xf32>
    %cst_192 = arith.constant dense<0xFF800000> : vector<32xf32>
    %476 = vector.multi_reduction <maximumf>, %475, %cst_192 [1] : vector<32x32xf32> to vector<32xf32>
    %477 = vector.shape_cast %476 : vector<32xf32> to vector<32x1xf32>
    %478 = vector.broadcast %477 : vector<32x1xf32> to vector<32x32xf32>
    %479 = arith.subf %475, %478 : vector<32x32xf32>
    %480 = math.exp %479 : vector<32x32xf32>
    %cst_193 = arith.constant dense<0.000000e+00> : vector<32xf32>
    %481 = vector.multi_reduction <add>, %480, %cst_193 [1] : vector<32x32xf32> to vector<32xf32>
    %482 = vector.shape_cast %481 : vector<32xf32> to vector<32x1xf32>
    %483 = vector.broadcast %482 : vector<32x1xf32> to vector<32x32xf32>
    %484 = arith.divf %480, %483 : vector<32x32xf32>
    "tpu.trace_start"() <{level = 10 : i32, message = "dm,nm->dn"}> : () -> ()
    %cst_194 = arith.constant dense<0.000000e+00> : vector<8x32xf32>
    %485 = tpu.matmul %471, %484, %cst_194 {dimension_numbers = #tpu.dot_dimension_numbers<[1], [1], [0], [0], [0, 0, 1, 0], [], []>} : vector<8x32xf32>, vector<32x32xf32>, vector<8x32xf32> -> vector<8x32xf32>
    "tpu.trace_stop"() : () -> ()
    %486 = vector.extract_strided_slice %446 {offsets = [0, 8], sizes = [32, 8], strides = [1, 1]} : vector<32x32xf32> to vector<32x8xf32>
    %cst_195 = arith.constant dense<0.000000e+00> : vector<32x32xf32>
    %487 = tpu.matmul %486, %485, %cst_195 {dimension_numbers = #tpu.dot_dimension_numbers<[1], [0], [0], [1], [0, 0, 1, 1], [], []>} : vector<32x8xf32>, vector<8x32xf32>, vector<32x32xf32> -> vector<32x32xf32>
    %488 = arith.addf %468, %487 : vector<32x32xf32>
    %489 = vector.extract_strided_slice %445 {offsets = [16, 0], sizes = [8, 32], strides = [1, 1]} : vector<96x32xf32> to vector<8x32xf32>
    %490 = vector.extract_strided_slice %445 {offsets = [48, 0], sizes = [8, 32], strides = [1, 1]} : vector<96x32xf32> to vector<8x32xf32>
    %491 = vector.extract_strided_slice %445 {offsets = [80, 0], sizes = [8, 32], strides = [1, 1]} : vector<96x32xf32> to vector<8x32xf32>
    "tpu.trace_start"() <{level = 10 : i32, message = "dn,dm->nm"}> : () -> ()
    %cst_196 = arith.constant dense<0.000000e+00> : vector<32x32xf32>
    %492 = tpu.matmul %489, %490, %cst_196 {dimension_numbers = #tpu.dot_dimension_numbers<[0], [0], [1], [1], [0, 1, 1, 1], [], []>} : vector<8x32xf32>, vector<8x32xf32>, vector<32x32xf32> -> vector<32x32xf32>
    "tpu.trace_stop"() : () -> ()
    %cst_197 = arith.constant 0.353553385 : f32
    %493 = vector.broadcast %cst_197 : f32 to vector<32x32xf32>
    %494 = arith.mulf %492, %493 : vector<32x32xf32>
    %495 = arith.addf %494, %437 : vector<32x32xf32>
    %cst_198 = arith.constant dense<0xFF800000> : vector<32xf32>
    %496 = vector.multi_reduction <maximumf>, %495, %cst_198 [1] : vector<32x32xf32> to vector<32xf32>
    %497 = vector.shape_cast %496 : vector<32xf32> to vector<32x1xf32>
    %498 = vector.broadcast %497 : vector<32x1xf32> to vector<32x32xf32>
    %499 = arith.subf %495, %498 : vector<32x32xf32>
    %500 = math.exp %499 : vector<32x32xf32>
    %cst_199 = arith.constant dense<0.000000e+00> : vector<32xf32>
    %501 = vector.multi_reduction <add>, %500, %cst_199 [1] : vector<32x32xf32> to vector<32xf32>
    %502 = vector.shape_cast %501 : vector<32xf32> to vector<32x1xf32>
    %503 = vector.broadcast %502 : vector<32x1xf32> to vector<32x32xf32>
    %504 = arith.divf %500, %503 : vector<32x32xf32>
    "tpu.trace_start"() <{level = 10 : i32, message = "dm,nm->dn"}> : () -> ()
    %cst_200 = arith.constant dense<0.000000e+00> : vector<8x32xf32>
    %505 = tpu.matmul %491, %504, %cst_200 {dimension_numbers = #tpu.dot_dimension_numbers<[1], [1], [0], [0], [0, 0, 1, 0], [], []>} : vector<8x32xf32>, vector<32x32xf32>, vector<8x32xf32> -> vector<8x32xf32>
    "tpu.trace_stop"() : () -> ()
    %506 = vector.extract_strided_slice %446 {offsets = [0, 16], sizes = [32, 8], strides = [1, 1]} : vector<32x32xf32> to vector<32x8xf32>
    %cst_201 = arith.constant dense<0.000000e+00> : vector<32x32xf32>
    %507 = tpu.matmul %506, %505, %cst_201 {dimension_numbers = #tpu.dot_dimension_numbers<[1], [0], [0], [1], [0, 0, 1, 1], [], []>} : vector<32x8xf32>, vector<8x32xf32>, vector<32x32xf32> -> vector<32x32xf32>
    %508 = arith.addf %488, %507 : vector<32x32xf32>
    %509 = vector.extract_strided_slice %445 {offsets = [24, 0], sizes = [8, 32], strides = [1, 1]} : vector<96x32xf32> to vector<8x32xf32>
    %510 = vector.extract_strided_slice %445 {offsets = [56, 0], sizes = [8, 32], strides = [1, 1]} : vector<96x32xf32> to vector<8x32xf32>
    %511 = vector.extract_strided_slice %445 {offsets = [88, 0], sizes = [8, 32], strides = [1, 1]} : vector<96x32xf32> to vector<8x32xf32>
    "tpu.trace_start"() <{level = 10 : i32, message = "dn,dm->nm"}> : () -> ()
    %cst_202 = arith.constant dense<0.000000e+00> : vector<32x32xf32>
    %512 = tpu.matmul %509, %510, %cst_202 {dimension_numbers = #tpu.dot_dimension_numbers<[0], [0], [1], [1], [0, 1, 1, 1], [], []>} : vector<8x32xf32>, vector<8x32xf32>, vector<32x32xf32> -> vector<32x32xf32>
    "tpu.trace_stop"() : () -> ()
    %cst_203 = arith.constant 0.353553385 : f32
    %513 = vector.broadcast %cst_203 : f32 to vector<32x32xf32>
    %514 = arith.mulf %512, %513 : vector<32x32xf32>
    %515 = arith.addf %514, %437 : vector<32x32xf32>
    %cst_204 = arith.constant dense<0xFF800000> : vector<32xf32>
    %516 = vector.multi_reduction <maximumf>, %515, %cst_204 [1] : vector<32x32xf32> to vector<32xf32>
    %517 = vector.shape_cast %516 : vector<32xf32> to vector<32x1xf32>
    %518 = vector.broadcast %517 : vector<32x1xf32> to vector<32x32xf32>
    %519 = arith.subf %515, %518 : vector<32x32xf32>
    %520 = math.exp %519 : vector<32x32xf32>
    %cst_205 = arith.constant dense<0.000000e+00> : vector<32xf32>
    %521 = vector.multi_reduction <add>, %520, %cst_205 [1] : vector<32x32xf32> to vector<32xf32>
    %522 = vector.shape_cast %521 : vector<32xf32> to vector<32x1xf32>
    %523 = vector.broadcast %522 : vector<32x1xf32> to vector<32x32xf32>
    %524 = arith.divf %520, %523 : vector<32x32xf32>
    "tpu.trace_start"() <{level = 10 : i32, message = "dm,nm->dn"}> : () -> ()
    %cst_206 = arith.constant dense<0.000000e+00> : vector<8x32xf32>
    %525 = tpu.matmul %511, %524, %cst_206 {dimension_numbers = #tpu.dot_dimension_numbers<[1], [1], [0], [0], [0, 0, 1, 0], [], []>} : vector<8x32xf32>, vector<32x32xf32>, vector<8x32xf32> -> vector<8x32xf32>
    "tpu.trace_stop"() : () -> ()
    %526 = vector.extract_strided_slice %446 {offsets = [0, 24], sizes = [32, 8], strides = [1, 1]} : vector<32x32xf32> to vector<32x8xf32>
    %cst_207 = arith.constant dense<0.000000e+00> : vector<32x32xf32>
    %527 = tpu.matmul %526, %525, %cst_207 {dimension_numbers = #tpu.dot_dimension_numbers<[1], [0], [0], [1], [0, 0, 1, 1], [], []>} : vector<32x8xf32>, vector<8x32xf32>, vector<32x32xf32> -> vector<32x32xf32>
    %528 = arith.addf %508, %527 : vector<32x32xf32>
    %529 = vector.extract_strided_slice %438 {offsets = [128, 0], sizes = [64, 32], strides = [1, 1]} : vector<256x32xf32> to vector<64x32xf32>
    %cst_208 = arith.constant dense<0.000000e+00> : vector<64x32xf32>
    %530 = tpu.matmul %529, %329, %cst_208 {dimension_numbers = #tpu.dot_dimension_numbers<[1], [0], [0], [1], [0, 0, 1, 1], [], []>} : vector<64x32xf32>, vector<32x32xf32>, vector<64x32xf32> -> vector<64x32xf32>
    %531 = vector.extract_strided_slice %438 {offsets = [192, 0], sizes = [64, 32], strides = [1, 1]} : vector<256x32xf32> to vector<64x32xf32>
    %cst_209 = arith.constant dense<0.000000e+00> : vector<64x32xf32>
    %532 = tpu.matmul %531, %528, %cst_209 {dimension_numbers = #tpu.dot_dimension_numbers<[1], [0], [0], [1], [0, 0, 1, 1], [], []>} : vector<64x32xf32>, vector<32x32xf32>, vector<64x32xf32> -> vector<64x32xf32>
    %533 = arith.addf %530, %532 : vector<64x32xf32>
    %534 = vector.extract_strided_slice %439 {offsets = [128, 0], sizes = [64, 1], strides = [1, 1]} : vector<224x1xf32> to vector<64x1xf32>
    %535 = vector.broadcast %534 : vector<64x1xf32> to vector<64x32xf32>
    %536 = arith.addf %533, %535 : vector<64x32xf32>
    %cst_210 = arith.constant 0.000000e+00 : f32
    %537 = vector.broadcast %cst_210 : f32 to vector<64x32xf32>
    %538 = arith.maximumf %536, %537 : vector<64x32xf32>
    %cst_211 = arith.constant dense<0.000000e+00> : vector<32x32xf32>
    %539 = tpu.matmul %440, %538, %cst_211 {dimension_numbers = #tpu.dot_dimension_numbers<[1], [0], [0], [1], [0, 0, 1, 1], [], []>} : vector<32x64xf32>, vector<64x32xf32>, vector<32x32xf32> -> vector<32x32xf32>
    %540 = vector.extract_strided_slice %439 {offsets = [192, 0], sizes = [32, 1], strides = [1, 1]} : vector<224x1xf32> to vector<32x1xf32>
    %541 = vector.broadcast %540 : vector<32x1xf32> to vector<32x32xf32>
    %542 = arith.addf %539, %541 : vector<32x32xf32>
    %543 = arith.addf %329, %542 : vector<32x32xf32>
    %c0_212 = arith.constant 0 : index
    %c0_213 = arith.constant 0 : index
    %544 = vector.load %arg24[%c0_212, %c0_213] : memref<104x32xf32, #tpu.memory_space<vmem>>, vector<104x32xf32>
    %c0_214 = arith.constant 0 : index
    %c0_215 = arith.constant 0 : index
    %545 = vector.load %arg25[%c0_214, %c0_215] : memref<40x1xf32, #tpu.memory_space<vmem>>, vector<40x1xf32>
    %c0_216 = arith.constant 0 : index
    %c0_217 = arith.constant 0 : index
    %546 = vector.load %arg4[%c0_216, %c0_217] : memref<32x256xf32, #tpu.memory_space<vmem>>, vector<32x256xf32>
    %c0_218 = arith.constant 0 : index
    %c0_219 = arith.constant 0 : index
    %547 = vector.load %arg11[%c0_218, %c0_219] : memref<32x256xf32, #tpu.memory_space<vmem>>, vector<32x256xf32>
    %c0_220 = arith.constant 0 : index
    %c0_221 = arith.constant 0 : index
    %548 = vector.load %arg12[%c0_220, %c0_221] : memref<16x256xf32, #tpu.memory_space<vmem>>, vector<16x256xf32>
    %549 = vector.extract_strided_slice %544 {offsets = [0, 0], sizes = [32, 32], strides = [1, 1]} : vector<104x32xf32> to vector<32x32xf32>
    %cst_222 = arith.constant dense<0.000000e+00> : vector<32x32xf32>
    %550 = tpu.matmul %549, %543, %cst_222 {dimension_numbers = #tpu.dot_dimension_numbers<[1], [0], [0], [1], [0, 0, 1, 1], [], []>} : vector<32x32xf32>, vector<32x32xf32>, vector<32x32xf32> -> vector<32x32xf32>
    %551 = vector.extract_strided_slice %544 {offsets = [32, 0], sizes = [32, 32], strides = [1, 1]} : vector<104x32xf32> to vector<32x32xf32>
    %cst_223 = arith.constant dense<0.000000e+00> : vector<32x16xf32>
    %552 = tpu.matmul %551, %436, %cst_223 {dimension_numbers = #tpu.dot_dimension_numbers<[1], [0], [0], [1], [0, 0, 1, 1], [], []>} : vector<32x32xf32>, vector<32x16xf32>, vector<32x16xf32> -> vector<32x16xf32>
    %553 = vector.extract_strided_slice %544 {offsets = [64, 0], sizes = [32, 32], strides = [1, 1]} : vector<104x32xf32> to vector<32x32xf32>
    %cst_224 = arith.constant dense<0.000000e+00> : vector<32x256xf32>
    %554 = tpu.matmul %553, %546, %cst_224 {dimension_numbers = #tpu.dot_dimension_numbers<[1], [0], [0], [1], [0, 0, 1, 1], [], []>} : vector<32x32xf32>, vector<32x256xf32>, vector<32x256xf32> -> vector<32x256xf32>
    %cst_225 = arith.constant dense<0.000000e+00> : vector<32x256xf32>
    %555 = tpu.matmul %550, %547, %cst_225 {dimension_numbers = #tpu.dot_dimension_numbers<[1], [0], [0], [1], [0, 0, 1, 1], [], []>} : vector<32x32xf32>, vector<32x256xf32>, vector<32x256xf32> -> vector<32x256xf32>
    %556 = arith.addf %554, %555 : vector<32x256xf32>
    %cst_226 = arith.constant dense<0.000000e+00> : vector<32x256xf32>
    %557 = tpu.matmul %552, %548, %cst_226 {dimension_numbers = #tpu.dot_dimension_numbers<[1], [0], [0], [1], [0, 0, 1, 1], [], []>} : vector<32x16xf32>, vector<16x256xf32>, vector<32x256xf32> -> vector<32x256xf32>
    %558 = arith.addf %556, %557 : vector<32x256xf32>
    %559 = vector.extract_strided_slice %545 {offsets = [0, 0], sizes = [32, 1], strides = [1, 1]} : vector<40x1xf32> to vector<32x1xf32>
    %560 = vector.broadcast %559 : vector<32x1xf32> to vector<32x256xf32>
    %561 = arith.addf %558, %560 : vector<32x256xf32>
    %cst_227 = arith.constant 0.000000e+00 : f32
    %562 = vector.broadcast %cst_227 : f32 to vector<32x256xf32>
    %563 = arith.maximumf %561, %562 : vector<32x256xf32>
    %564 = vector.extract_strided_slice %544 {offsets = [96, 0], sizes = [1, 32], strides = [1, 1]} : vector<104x32xf32> to vector<1x32xf32>
    %cst_228 = arith.constant dense<0.000000e+00> : vector<1x256xf32>
    %565 = tpu.matmul %564, %563, %cst_228 {dimension_numbers = #tpu.dot_dimension_numbers<[1], [0], [0], [1], [0, 0, 1, 1], [], []>} : vector<1x32xf32>, vector<32x256xf32>, vector<1x256xf32> -> vector<1x256xf32>
    %566 = vector.extract_strided_slice %545 {offsets = [32, 0], sizes = [1, 1], strides = [1, 1]} : vector<40x1xf32> to vector<1x1xf32>
    %567 = vector.broadcast %566 : vector<1x1xf32> to vector<1x256xf32>
    %568 = arith.addf %565, %567 : vector<1x256xf32>
    %c0_229 = arith.constant 0 : index
    %c0_230 = arith.constant 0 : index
    %569 = vector.load %arg26[%c0_229, %c0_230] : memref<1x256xf32, #tpu.memory_space<vmem>>, vector<1x256xf32>
    tpu.vector_store %arg26[%c0_229, %c0_230], %568 {strides = array<i32>} : memref<1x256xf32, #tpu.memory_space<vmem>>, vector<1x256xf32>,
    return
  }
  func.func @transform_0(%arg0: i32) -> (i32, i32) {
    %c0_i32 = arith.constant 0 : i32
    %c0_i32_0 = arith.constant 0 : i32
    %c0_i32_1 = arith.constant 0 : i32
    return %c0_i32, %c0_i32_0 : i32, i32
  }
  func.func @transform_1(%arg0: i32) -> (i32, i32) {
    %c0_i32 = arith.constant 0 : i32
    %c0_i32_0 = arith.constant 0 : i32
    %c0_i32_1 = arith.constant 0 : i32
    return %c0_i32, %c0_i32_0 : i32, i32
  }
  func.func @transform_2(%arg0: i32) -> (i32, i32) {
    %c0_i32 = arith.constant 0 : i32
    %c0_i32_0 = arith.constant 0 : i32
    %c0_i32_1 = arith.constant 0 : i32
    return %c0_i32, %c0_i32_0 : i32, i32
  }
  func.func @transform_3(%arg0: i32) -> (i32, i32) {
    %c0_i32 = arith.constant 0 : i32
    %c0_i32_0 = arith.constant 0 : i32
    %c0_i32_1 = arith.constant 0 : i32
    return %c0_i32, %c0_i32_0 : i32, i32
  }
  func.func @transform_4(%arg0: i32) -> (i32, i32) {
    %c0_i32 = arith.constant 0 : i32
    %c0_i32_0 = arith.constant 0 : i32
    %c0_i32_1 = arith.constant 0 : i32
    return %c0_i32, %c0_i32_0 : i32, i32
  }
  func.func @transform_5(%arg0: i32) -> (i32, i32) {
    %c0_i32 = arith.constant 0 : i32
    %c0_i32_0 = arith.constant 0 : i32
    %c0_i32_1 = arith.constant 0 : i32
    return %c0_i32, %c0_i32_0 : i32, i32
  }
  func.func @transform_6(%arg0: i32) -> (i32, i32) {
    %c0_i32 = arith.constant 0 : i32
    %c0_i32_0 = arith.constant 0 : i32
    %c0_i32_1 = arith.constant 0 : i32
    return %c0_i32, %c0_i32_0 : i32, i32
  }
  func.func @transform_7(%arg0: i32) -> (i32, i32) {
    %c0_i32 = arith.constant 0 : i32
    %c0_i32_0 = arith.constant 0 : i32
    %c0_i32_1 = arith.constant 0 : i32
    return %c0_i32, %c0_i32_0 : i32, i32
  }
  func.func @transform_8(%arg0: i32) -> (i32, i32) {
    %c0_i32 = arith.constant 0 : i32
    %c0_i32_0 = arith.constant 0 : i32
    %c0_i32_1 = arith.constant 0 : i32
    return %c0_i32, %c0_i32_0 : i32, i32
  }
  func.func @transform_9(%arg0: i32) -> (i32, i32) {
    %c0_i32 = arith.constant 0 : i32
    %c0_i32_0 = arith.constant 0 : i32
    %c0_i32_1 = arith.constant 0 : i32
    return %c0_i32, %c0_i32_0 : i32, i32
  }
  func.func @transform_10(%arg0: i32) -> (i32, i32) {
    %c0_i32 = arith.constant 0 : i32
    %c0_i32_0 = arith.constant 0 : i32
    %c0_i32_1 = arith.constant 0 : i32
    return %c0_i32, %c0_i32_0 : i32, i32
  }
  func.func @transform_11(%arg0: i32) -> (i32, i32) {
    %c0_i32 = arith.constant 0 : i32
    %c0_i32_0 = arith.constant 0 : i32
    %c0_i32_1 = arith.constant 0 : i32
    return %c0_i32, %c0_i32_0 : i32, i32
  }
  func.func @transform_12(%arg0: i32) -> (i32, i32) {
    %c0_i32 = arith.constant 0 : i32
    %c0_i32_0 = arith.constant 0 : i32
    %c0_i32_1 = arith.constant 0 : i32
    return %c0_i32, %c0_i32_0 : i32, i32
  }
  func.func @transform_13(%arg0: i32) -> (i32, i32) {
    %c0_i32 = arith.constant 0 : i32
    %c0_i32_0 = arith.constant 0 : i32
    %c0_i32_1 = arith.constant 0 : i32
    return %c0_i32, %c0_i32_0 : i32, i32
  }
  func.func @transform_14(%arg0: i32) -> (i32, i32) {
    %c0_i32 = arith.constant 0 : i32
    %c0_i32_0 = arith.constant 0 : i32
    %c0_i32_1 = arith.constant 0 : i32
    return %c0_i32, %c0_i32_0 : i32, i32
  }
  func.func @transform_15(%arg0: i32) -> (i32, i32) {
    %c0_i32 = arith.constant 0 : i32
    %c0_i32_0 = arith.constant 0 : i32
    %c0_i32_1 = arith.constant 0 : i32
    return %c0_i32, %c0_i32_0 : i32, i32
  }
  func.func @transform_16(%arg0: i32) -> (i32, i32) {
    %c0_i32 = arith.constant 0 : i32
    %c0_i32_0 = arith.constant 0 : i32
    %c0_i32_1 = arith.constant 0 : i32
    return %c0_i32, %c0_i32_0 : i32, i32
  }
  func.func @transform_17(%arg0: i32) -> (i32, i32) {
    %c0_i32 = arith.constant 0 : i32
    %c0_i32_0 = arith.constant 0 : i32
    %c0_i32_1 = arith.constant 0 : i32
    return %c0_i32, %c0_i32_0 : i32, i32
  }
  func.func @transform_18(%arg0: i32) -> (i32, i32) {
    %c0_i32 = arith.constant 0 : i32
    %c0_i32_0 = arith.constant 0 : i32
    %c0_i32_1 = arith.constant 0 : i32
    return %c0_i32, %c0_i32_0 : i32, i32
  }
  func.func @transform_19(%arg0: i32) -> (i32, i32) {
    %c0_i32 = arith.constant 0 : i32
    %c0_i32_0 = arith.constant 0 : i32
    %c0_i32_1 = arith.constant 0 : i32
    return %c0_i32, %c0_i32_0 : i32, i32
  }
  func.func @transform_20(%arg0: i32) -> (i32, i32) {
    %c0_i32 = arith.constant 0 : i32
    %c0_i32_0 = arith.constant 0 : i32
    %c0_i32_1 = arith.constant 0 : i32
    return %c0_i32, %c0_i32_0 : i32, i32
  }
  func.func @transform_21(%arg0: i32) -> (i32, i32) {
    %c0_i32 = arith.constant 0 : i32
    %c0_i32_0 = arith.constant 0 : i32
    %c0_i32_1 = arith.constant 0 : i32
    return %c0_i32, %c0_i32_0 : i32, i32
  }
  func.func @transform_22(%arg0: i32) -> (i32, i32) {
    %c0_i32 = arith.constant 0 : i32
    %c0_i32_0 = arith.constant 0 : i32
    %c0_i32_1 = arith.constant 0 : i32
    return %c0_i32, %c0_i32_0 : i32, i32
  }
  func.func @transform_23(%arg0: i32) -> (i32, i32) {
    %c0_i32 = arith.constant 0 : i32
    %c0_i32_0 = arith.constant 0 : i32
    %c0_i32_1 = arith.constant 0 : i32
    return %c0_i32, %c0_i32_0 : i32, i32
  }
  func.func @transform_24(%arg0: i32) -> (i32, i32) {
    %c0_i32 = arith.constant 0 : i32
    %c0_i32_0 = arith.constant 0 : i32
    %c0_i32_1 = arith.constant 0 : i32
    return %c0_i32, %c0_i32_0 : i32, i32
  }
  func.func @transform_25(%arg0: i32) -> (i32, i32) {
    %c0_i32 = arith.constant 0 : i32
    %c0_i32_0 = arith.constant 0 : i32
    %c0_i32_1 = arith.constant 0 : i32
    return %c0_i32, %c0_i32_0 : i32, i32
  }
}

</mosaic_0001>

<llo_original>
// kernel: gnn_forward.1
$region0: #{gnn_forward.1}
  #allocation0 [shape = 'u32[]', space=smem, size = 0x4, offset = 0x4, fixed_abs, tag = 'smem constant byte address 0x4 - core index']
  #allocation1 [shape = 'u32[72,128]{1,0:T(1,128)}', space=vmem, size = 0x9000, scoped, tag = 'internal scratch']
  %s0 = inlined_call_operand.vmem [shape: f32[32,16], index: 0, kind: input, shape index: {}]
  %s1 = inlined_call_operand.vmem [shape: f32[32,32], index: 1, kind: input, shape index: {}]
  %s2 = inlined_call_operand.vmem [shape: f32[32,256], index: 2, kind: input, shape index: {}]
  %s3 = inlined_call_operand.vmem [shape: f32[32,256], index: 3, kind: input, shape index: {}]
  %s4 = inlined_call_operand.vmem [shape: f32[16,16], index: 4, kind: input, shape index: {}]
  %s5 = inlined_call_operand.vmem [shape: f32[32,32], index: 5, kind: input, shape index: {}]
  %s6 = inlined_call_operand.vmem [shape: f32[16,256], index: 6, kind: input, shape index: {}]
  %s7 = inlined_call_operand.vmem [shape: f32[32,256], index: 7, kind: input, shape index: {}]
  %s8 = inlined_call_operand.vmem [shape: f32[256,32], index: 8, kind: input, shape index: {}]
  %s9 = inlined_call_operand.vmem [shape: f32[16,32], index: 9, kind: input, shape index: {}]
  %s10 = inlined_call_operand.vmem [shape: f32[32,256], index: 10, kind: input, shape index: {}]
  %s11 = inlined_call_operand.vmem [shape: f32[16,256], index: 11, kind: input, shape index: {}]
  %s12 = inlined_call_operand.vmem [shape: f32[256,16], index: 12, kind: input, shape index: {}]
  %s13 = inlined_call_operand.vmem [shape: f32[32,16], index: 13, kind: input, shape index: {}]
  %s14 = inlined_call_operand.vmem [shape: f32[256,32], index: 14, kind: input, shape index: {}]
  %s15 = inlined_call_operand.vmem [shape: f32[224,1], index: 15, kind: input, shape index: {}]
  %s16 = inlined_call_operand.vmem [shape: f32[32,64], index: 16, kind: input, shape index: {}]
  %s17 = inlined_call_operand.vmem [shape: f32[232,32], index: 17, kind: input, shape index: {}]
  %s18 = inlined_call_operand.vmem [shape: f32[136,1], index: 18, kind: input, shape index: {}]
  %s19 = inlined_call_operand.vmem [shape: f32[32,64], index: 19, kind: input, shape index: {}]
  %s20 = inlined_call_operand.vmem [shape: f32[256,32], index: 20, kind: input, shape index: {}]
  %s21 = inlined_call_operand.vmem [shape: f32[224,1], index: 21, kind: input, shape index: {}]
  %s22 = inlined_call_operand.vmem [shape: f32[32,64], index: 22, kind: input, shape index: {}]
  %s23 = inlined_call_operand.vmem [shape: f32[104,32], index: 23, kind: input, shape index: {}]
  %s24 = inlined_call_operand.vmem [shape: f32[40,1], index: 24, kind: input, shape index: {}]
  %s25 = inlined_call_operand.vmem [shape: f32[1,256], index: 25, kind: output, shape index: {}]
  %s26 = sld [smem:[#allocation0]]
  $region110: #{gnn_forward.1} parent=0
    _
  %s28 = ssub.s32 1, %s26
  %s29 = scalar_select 0, %s28, %s26
  // Predicated region
  $region2: #{gnn_forward.1} parent=0 // pred_check
    _
  $region3: #{gnn_forward.1} parent=0 // pred_check_branch
    %31 = sbr.rel (0) target = $region5
  $region4: #{gnn_forward.1} parent=0 // pred_region
    _
  $region5: #{gnn_forward.1} parent=0 // pred_fallthru
    _
  // Predicated region
  $region6: #{gnn_forward.1} parent=0 // pred_check
    _
  $region7: #{gnn_forward.1} parent=0 // pred_check_branch
    %33 = sbr.rel (0) target = $region9
  $region8: #{gnn_forward.1} parent=0 // pred_region
    _
  $region9: #{gnn_forward.1} parent=0 // pred_fallthru
    _
  // Predicated region
  $region10: #{gnn_forward.1} parent=0 // pred_check
    _
  $region11: #{gnn_forward.1} parent=0 // pred_check_branch
    %35 = sbr.rel (0) target = $region13
  $region12: #{gnn_forward.1} parent=0 // pred_region
    _
  $region13: #{gnn_forward.1} parent=0 // pred_fallthru
    _
  // Predicated region
  $region14: #{gnn_forward.1} parent=0 // pred_check
    _
  $region15: #{gnn_forward.1} parent=0 // pred_check_branch
    %37 = sbr.rel (0) target = $region17
  $region16: #{gnn_forward.1} parent=0 // pred_region
    _
  $region17: #{gnn_forward.1} parent=0 // pred_fallthru
    _
  // Predicated region
  $region18: #{gnn_forward.1} parent=0 // pred_check
    _
  $region19: #{gnn_forward.1} parent=0 // pred_check_branch
    %39 = sbr.rel (0) target = $region21
  $region20: #{gnn_forward.1} parent=0 // pred_region
    _
  $region21: #{gnn_forward.1} parent=0 // pred_fallthru
    _
  // Predicated region
  $region22: #{gnn_forward.1} parent=0 // pred_check
    _
  $region23: #{gnn_forward.1} parent=0 // pred_check_branch
    %41 = sbr.rel (0) target = $region25
  $region24: #{gnn_forward.1} parent=0 // pred_region
    _
  $region25: #{gnn_forward.1} parent=0 // pred_fallthru
    _
  // Predicated region
  $region26: #{gnn_forward.1} parent=0 // pred_check
    _
  $region27: #{gnn_forward.1} parent=0 // pred_check_branch
    %43 = sbr.rel (0) target = $region29
  $region28: #{gnn_forward.1} parent=0 // pred_region
    _
  $region29: #{gnn_forward.1} parent=0 // pred_fallthru
    _
  // Predicated region
  $region30: #{gnn_forward.1} parent=0 // pred_check
    _
  $region31: #{gnn_forward.1} parent=0 // pred_check_branch
    %45 = sbr.rel (0) target = $region33
  $region32: #{gnn_forward.1} parent=0 // pred_region
    _
  $region33: #{gnn_forward.1} parent=0 // pred_fallthru
    _
  // Predicated region
  $region34: #{gnn_forward.1} parent=0 // pred_check
    _
  $region35: #{gnn_forward.1} parent=0 // pred_check_branch
    %47 = sbr.rel (0) target = $region37
  $region36: #{gnn_forward.1} parent=0 // pred_region
    _
  $region37: #{gnn_forward.1} parent=0 // pred_fallthru
    _
  // Predicated region
  $region38: #{gnn_forward.1} parent=0 // pred_check
    _
  $region39: #{gnn_forward.1} parent=0 // pred_check_branch
    %49 = sbr.rel (0) target = $region41
  $region40: #{gnn_forward.1} parent=0 // pred_region
    _
  $region41: #{gnn_forward.1} parent=0 // pred_fallthru
    _
  // Predicated region
  $region42: #{gnn_forward.1} parent=0 // pred_check
    _
  $region43: #{gnn_forward.1} parent=0 // pred_check_branch
    %51 = sbr.rel (0) target = $region45
  $region44: #{gnn_forward.1} parent=0 // pred_region
    _
  $region45: #{gnn_forward.1} parent=0 // pred_fallthru
    _
  // Predicated region
  $region46: #{gnn_forward.1} parent=0 // pred_check
    _
  $region47: #{gnn_forward.1} parent=0 // pred_check_branch
    %53 = sbr.rel (0) target = $region49
  $region48: #{gnn_forward.1} parent=0 // pred_region
    _
  $region49: #{gnn_forward.1} parent=0 // pred_fallthru
    _
  // Predicated region
  $region50: #{gnn_forward.1} parent=0 // pred_check
    _
  $region51: #{gnn_forward.1} parent=0 // pred_check_branch
    %55 = sbr.rel (0) target = $region53
  $region52: #{gnn_forward.1} parent=0 // pred_region
    _
  $region53: #{gnn_forward.1} parent=0 // pred_fallthru
    _
  // Predicated region
  $region54: #{gnn_forward.1} parent=0 // pred_check
    _
  $region55: #{gnn_forward.1} parent=0 // pred_check_branch
    %57 = sbr.rel (0) target = $region57
  $region56: #{gnn_forward.1} parent=0 // pred_region
    _
  $region57: #{gnn_forward.1} parent=0 // pred_fallthru
    _
  // Predicated region
  $region58: #{gnn_forward.1} parent=0 // pred_check
    _
  $region59: #{gnn_forward.1} parent=0 // pred_check_branch
    %59 = sbr.rel (0) target = $region61
  $region60: #{gnn_forward.1} parent=0 // pred_region
    _
  $region61: #{gnn_forward.1} parent=0 // pred_fallthru
    _
  // Predicated region
  $region62: #{gnn_forward.1} parent=0 // pred_check
    _
  $region63: #{gnn_forward.1} parent=0 // pred_check_branch
    %61 = sbr.rel (0) target = $region65
  $region64: #{gnn_forward.1} parent=0 // pred_region
    _
  $region65: #{gnn_forward.1} parent=0 // pred_fallthru
    _
  // Predicated region
  $region66: #{gnn_forward.1} parent=0 // pred_check
    _
  $region67: #{gnn_forward.1} parent=0 // pred_check_branch
    %63 = sbr.rel (0) target = $region69
  $region68: #{gnn_forward.1} parent=0 // pred_region
    _
  $region69: #{gnn_forward.1} parent=0 // pred_fallthru
    _
  // Predicated region
  $region70: #{gnn_forward.1} parent=0 // pred_check
    _
  $region71: #{gnn_forward.1} parent=0 // pred_check_branch
    %65 = sbr.rel (0) target = $region73
  $region72: #{gnn_forward.1} parent=0 // pred_region
    _
  $region73: #{gnn_forward.1} parent=0 // pred_fallthru
    _
  // Predicated region
  $region74: #{gnn_forward.1} parent=0 // pred_check
    _
  $region75: #{gnn_forward.1} parent=0 // pred_check_branch
    %67 = sbr.rel (0) target = $region77
  $region76: #{gnn_forward.1} parent=0 // pred_region
    _
  $region77: #{gnn_forward.1} parent=0 // pred_fallthru
    _
  // Predicated region
  $region78: #{gnn_forward.1} parent=0 // pred_check
    _
  $region79: #{gnn_forward.1} parent=0 // pred_check_branch
    %69 = sbr.rel (0) target = $region81
  $region80: #{gnn_forward.1} parent=0 // pred_region
    _
  $region81: #{gnn_forward.1} parent=0 // pred_fallthru
    _
  // Predicated region
  $region82: #{gnn_forward.1} parent=0 // pred_check
    _
  $region83: #{gnn_forward.1} parent=0 // pred_check_branch
    %71 = sbr.rel (0) target = $region85
  $region84: #{gnn_forward.1} parent=0 // pred_region
    _
  $region85: #{gnn_forward.1} parent=0 // pred_fallthru
    _
  // Predicated region
  $region86: #{gnn_forward.1} parent=0 // pred_check
    _
  $region87: #{gnn_forward.1} parent=0 // pred_check_branch
    %73 = sbr.rel (0) target = $region89
  $region88: #{gnn_forward.1} parent=0 // pred_region
    _
  $region89: #{gnn_forward.1} parent=0 // pred_fallthru
    _
  // Predicated region
  $region90: #{gnn_forward.1} parent=0 // pred_check
    _
  $region91: #{gnn_forward.1} parent=0 // pred_check_branch
    %75 = sbr.rel (0) target = $region93
  $region92: #{gnn_forward.1} parent=0 // pred_region
    _
  $region93: #{gnn_forward.1} parent=0 // pred_fallthru
    _
  // Predicated region
  $region94: #{gnn_forward.1} parent=0 // pred_check
    _
  $region95: #{gnn_forward.1} parent=0 // pred_check_branch
    %77 = sbr.rel (0) target = $region97
  $region96: #{gnn_forward.1} parent=0 // pred_region
    _
  $region97: #{gnn_forward.1} parent=0 // pred_fallthru
    _
  // Predicated region
  $region98: #{gnn_forward.1} parent=0 // pred_check
    _
  $region99: #{gnn_forward.1} parent=0 // pred_check_branch
    %79 = sbr.rel (0) target = $region101
  $region100: #{gnn_forward.1} parent=0 // pred_region
    _
  $region101: #{gnn_forward.1} parent=0 // pred_fallthru
    _
  %v80 = vld [vmem:[%s0] sm:$0xff]
  %v81 = vld [vmem:[%s0 + $0x8] sm:$0xff]
  %v82 = vld [vmem:[%s0 + $0x10] sm:$0xff]
  %v83 = vld [vmem:[%s0 + $0x18] sm:$0xff]
  %v84 = vld [vmem:[%s1] sm:$0xff]
  %v85 = vld [vmem:[%s1 + $0x8] sm:$0xff]
  %v86 = vld [vmem:[%s1 + $0x10] sm:$0xff]
  %v87 = vld [vmem:[%s1 + $0x18] sm:$0xff]
  %v88 = vld [vmem:[%s4] sm:$0xff]
  %v89 = vld [vmem:[%s4 + $0x8] sm:$0xff]
  %v90 = vld [vmem:[%s14] sm:$0xff]
  %v91 = vld [vmem:[%s14 + $0x8] sm:$0xff]
  %v92 = vld [vmem:[%s14 + $0x10] sm:$0xff]
  %v93 = vld [vmem:[%s14 + $0x18] sm:$0xff]
  %v94 = vld [vmem:[%s14 + $0x20] sm:$0xff]
  %v95 = vld [vmem:[%s14 + $0x28] sm:$0xff]
  %v96 = vld [vmem:[%s14 + $0x30] sm:$0xff]
  %v97 = vld [vmem:[%s14 + $0x38] sm:$0xff]
  %v98 = vld [vmem:[%s14 + $0x40] sm:$0xff]
  %v99 = vld [vmem:[%s14 + $0x48] sm:$0xff]
  %v100 = vld [vmem:[%s14 + $0x50] sm:$0xff]
  %v101 = vld [vmem:[%s14 + $0x58] sm:$0xff]
  %v102 = vld [vmem:[%s14 + $0x60] sm:$0xff]
  %v103 = vld [vmem:[%s14 + $0x68] sm:$0xff]
  %v104 = vld [vmem:[%s14 + $0x70] sm:$0xff]
  %v105 = vld [vmem:[%s14 + $0x78] sm:$0xff]
  %v106 = vld [vmem:[%s14 + $0x80] sm:$0xff]
  %v107 = vld [vmem:[%s14 + $0x88] sm:$0xff]
  %v108 = vld [vmem:[%s14 + $0x90] sm:$0xff]
  %v109 = vld [vmem:[%s14 + $0x98] sm:$0xff]
  %v110 = vld [vmem:[%s14 + $0xa0] sm:$0xff]
  %v111 = vld [vmem:[%s14 + $0xa8] sm:$0xff]
  %v112 = vld [vmem:[%s14 + $0xb0] sm:$0xff]
  %v113 = vld [vmem:[%s14 + $0xb8] sm:$0xff]
  %v114 = vld [vmem:[%s14 + $0xc0] sm:$0xff]
  %v115 = vld [vmem:[%s14 + $0xc8] sm:$0xff]
  %v116 = vld [vmem:[%s14 + $0xd0] sm:$0xff]
  %v117 = vld [vmem:[%s14 + $0xd8] sm:$0xff]
  %v118 = vld [vmem:[%s14 + $0xe0] sm:$0xff]
  %v119 = vld [vmem:[%s14 + $0xe8] sm:$0xff]
  %v120 = vld [vmem:[%s14 + $0xf0] sm:$0xff]
  %v121 = vld [vmem:[%s14 + $0xf8] sm:$0xff]
  %v122 = vld [vmem:[%s15] sm:$0xff]
  %v123 = vld [vmem:[%s15 + $0x8] sm:$0xff]
  %v124 = vld [vmem:[%s15 + $0x10] sm:$0xff]
  %v125 = vld [vmem:[%s15 + $0x18] sm:$0xff]
  %v126 = vld [vmem:[%s15 + $0x20] sm:$0xff]
  %v127 = vld [vmem:[%s15 + $0x28] sm:$0xff]
  %v128 = vld [vmem:[%s15 + $0x30] sm:$0xff]
  %v129 = vld [vmem:[%s15 + $0x38] sm:$0xff]
  %v130 = vld [vmem:[%s15 + $0x40] sm:$0xff]
  %v131 = vld [vmem:[%s15 + $0x48] sm:$0xff]
  %v132 = vld [vmem:[%s15 + $0x50] sm:$0xff]
  %v133 = vld [vmem:[%s15 + $0x58] sm:$0xff]
  %v134 = vld [vmem:[%s15 + $0x60] sm:$0xff]
  %v135 = vld [vmem:[%s15 + $0x68] sm:$0xff]
  %v136 = vld [vmem:[%s15 + $0x70] sm:$0xff]
  %v137 = vld [vmem:[%s15 + $0x78] sm:$0xff]
  %v138 = vld [vmem:[%s15 + $0x80] sm:$0xff]
  %v139 = vld [vmem:[%s15 + $0x88] sm:$0xff]
  %v140 = vld [vmem:[%s15 + $0x90] sm:$0xff]
  %v141 = vld [vmem:[%s15 + $0x98] sm:$0xff]
  %v142 = vld [vmem:[%s15 + $0xa0] sm:$0xff]
  %v143 = vld [vmem:[%s15 + $0xa8] sm:$0xff]
  %v144 = vld [vmem:[%s15 + $0xb0] sm:$0xff]
  %v145 = vld [vmem:[%s15 + $0xb8] sm:$0xff]
  %v146 = vld [vmem:[%s15 + $0xc0] sm:$0xff]
  %v147 = vld [vmem:[%s15 + $0xc8] sm:$0xff]
  %v148 = vld [vmem:[%s15 + $0xd0] sm:$0xff]
  %v149 = vld [vmem:[%s15 + $0xd8] sm:$0xff]
  %v150 = vld [vmem:[%s16] sm:$0xff]
  %v151 = vld [vmem:[%s16 + $0x8] sm:$0xff]
  %v152 = vld [vmem:[%s16 + $0x10] sm:$0xff]
  %v153 = vld [vmem:[%s16 + $0x18] sm:$0xff]
  %155 = vset.pattern.permute.xlu0 0
  %156 = vperm.xlu0 %155, %v122
  %v157 = vpop.permute.xlu0 %156
  %160 = vset.pattern.permute.xlu0 0
  %161 = vperm.xlu0 %160, %v123
  %v162 = vpop.permute.xlu0 %161
  %165 = vset.pattern.permute.xlu0 0
  %166 = vperm.xlu0 %165, %v124
  %v167 = vpop.permute.xlu0 %166
  %170 = vset.pattern.permute.xlu0 0
  %171 = vperm.xlu0 %170, %v125
  %v172 = vpop.permute.xlu0 %171
  %175 = vset.pattern.permute.xlu0 0
  %176 = vperm.xlu0 %175, %v126
  %v177 = vpop.permute.xlu0 %176
  %180 = vset.pattern.permute.xlu0 0
  %181 = vperm.xlu0 %180, %v127
  %v182 = vpop.permute.xlu0 %181
  %185 = vset.pattern.permute.xlu0 0
  %186 = vperm.xlu0 %185, %v128
  %v187 = vpop.permute.xlu0 %186
  %190 = vset.pattern.permute.xlu0 0
  %191 = vperm.xlu0 %190, %v129
  %v192 = vpop.permute.xlu0 %191
  %195 = vset.pattern.permute.xlu0 0
  %196 = vperm.xlu0 %195, %v130
  %v197 = vpop.permute.xlu0 %196
  %200 = vset.pattern.permute.xlu0 0
  %201 = vperm.xlu0 %200, %v131
  %v202 = vpop.permute.xlu0 %201
  %205 = vset.pattern.permute.xlu0 0
  %206 = vperm.xlu0 %205, %v132
  %v207 = vpop.permute.xlu0 %206
  %210 = vset.pattern.permute.xlu0 0
  %211 = vperm.xlu0 %210, %v133
  %v212 = vpop.permute.xlu0 %211
  %vm214 = vcmask 261120
  %v216 = vsel %vm214, %v90, 0
  %v219 = vsel %vm214, %v91, 0
  %v222 = vsel %vm214, %v92, 0
  %v225 = vsel %vm214, %v93, 0
  %v228 = vsel %vm214, %v94, 0
  %v231 = vsel %vm214, %v95, 0
  %v234 = vsel %vm214, %v96, 0
  %v237 = vsel %vm214, %v97, 0
  %v240 = vsel %vm214, %v98, 0
  %v243 = vsel %vm214, %v99, 0
  %v246 = vsel %vm214, %v100, 0
  %v249 = vsel %vm214, %v101, 0
  %251 = vmatpush.msra.mxu0 0.0
  %252 = vmatpush.msra.mxu0 0.0
  %253 = vmatpush.msra.mxu0 0.0
  %254 = vmatpush.msra.mxu0 0.0
  %255 = vmatpush.msra.mxu0 0.0
  %256 = vmatpush.msra.mxu0 0.0
  %257 = vmatpush.msra.mxu0 0.0
  %258 = vmatpush.msra.mxu0 0.0
  %259 = vmatpush.msra.mxu0 0.0
  %260 = vmatpush.msra.mxu0 0.0
  %261 = vmatpush.msra.mxu0 0.0
  %262 = vmatpush.msra.mxu0 0.0
  %263 = vmatpush.msra.mxu0 %v83
  %264 = vmatpush.msra.mxu0 %v82
  %265 = vmatpush.msra.mxu0 %v81
  %266 = vmatpush.msra.mxu0 %v80
  %267 = vmatmul.f32.gmra.mxu0 %v216
  %v268 = vpop.f32.mrf.mxu0
  %v269 = vadd.f32 %v157, %v268
  %270 = vmatmul.f32.gmra.mxu0 %v219
  %v271 = vpop.f32.mrf.mxu0
  %v272 = vadd.f32 %v162, %v271
  %273 = vmatmul.f32.gmra.mxu0 %v222
  %v274 = vpop.f32.mrf.mxu0
  %v275 = vadd.f32 %v167, %v274
  %276 = vmatmul.f32.gmra.mxu0 %v225
  %v277 = vpop.f32.mrf.mxu0
  %v278 = vadd.f32 %v172, %v277
  %279 = vmatmul.f32.gmra.mxu0 %v228
  %v280 = vpop.f32.mrf.mxu0
  %v281 = vadd.f32 %v177, %v280
  %282 = vmatmul.f32.gmra.mxu0 %v231
  %v283 = vpop.f32.mrf.mxu0
  %v284 = vadd.f32 %v182, %v283
  %285 = vmatmul.f32.gmra.mxu0 %v234
  %v286 = vpop.f32.mrf.mxu0
  %v287 = vadd.f32 %v187, %v286
  %288 = vmatmul.f32.gmra.mxu0 %v237
  %v289 = vpop.f32.mrf.mxu0
  %v290 = vadd.f32 %v192, %v289
  %291 = vmatmul.f32.gmra.mxu0 %v240
  %v292 = vpop.f32.mrf.mxu0
  %v293 = vadd.f32 %v197, %v292
  %294 = vmatmul.f32.gmra.mxu0 %v243
  %v295 = vpop.f32.mrf.mxu0
  %v296 = vadd.f32 %v202, %v295
  %297 = vmatmul.f32.gmra.mxu0 %v246
  %v298 = vpop.f32.mrf.mxu0
  %v299 = vadd.f32 %v207, %v298
  %300 = vmatmul.f32.gmra.mxu0 %v249
  %v301 = vpop.f32.mrf.mxu0
  %v302 = vadd.f32 %v212, %v301
  %303 = vdwg.mxu0
  %304 = vxpose.xlu0.b32.start [1/16] %v269, 128
  %305 = vxpose.xlu0.b32.cont [2/16] 0.0, 128
  %306 = vxpose.xlu0.b32.cont [3/16] 0.0, 128
  %307 = vxpose.xlu0.b32.cont [4/16] 0.0, 128
  %308 = vxpose.xlu0.b32.cont [5/16] 0.0, 128
  %309 = vxpose.xlu0.b32.cont [6/16] 0.0, 128
  %310 = vxpose.xlu0.b32.cont [7/16] 0.0, 128
  %311 = vxpose.xlu0.b32.cont [8/16] 0.0, 128
  %312 = vxpose.xlu0.b32.cont [9/16] 0.0, 128
  %313 = vxpose.xlu0.b32.cont [10/16] 0.0, 128
  %314 = vxpose.xlu0.b32.cont [11/16] 0.0, 128
  %315 = vxpose.xlu0.b32.cont [12/16] 0.0, 128
  %316 = vxpose.xlu0.b32.cont [13/16] 0.0, 128
  %317 = vxpose.xlu0.b32.cont [14/16] 0.0, 128
  %318 = vxpose.xlu0.b32.cont [15/16] 0.0, 128
  %319 = vxpose.xlu0.b32.end [16/16] 0.0, 128
  %v320 = vpop.trf.xlu0
  %v321 = vpop.trf.xlu0
  %v322 = vpop.trf.xlu0
  %v323 = vpop.trf.xlu0
  %v324 = vpop.trf.xlu0
  %v325 = vpop.trf.xlu0
  %v326 = vpop.trf.xlu0
  %v327 = vpop.trf.xlu0
  %v328 = vpop.trf.xlu0
  %v329 = vpop.trf.xlu0
  %v330 = vpop.trf.xlu0
  %v331 = vpop.trf.xlu0
  %v332 = vpop.trf.xlu0
  %v333 = vpop.trf.xlu0
  %v334 = vpop.trf.xlu0
  %v335 = vpop.trf.xlu0
  %vm336 = vcmask 64512
  %v338 = vsel %vm336, %v320, 0
  %v341 = vsel %vm336, %v321, 0
  %343 = vmatpush.msra.mxu0 0.0
  %344 = vmatpush.msra.mxu0 0.0
  %345 = vmatpush.msra.mxu0 0.0
  %346 = vmatpush.msra.mxu0 0.0
  %347 = vmatpush.msra.mxu0 0.0
  %348 = vmatpush.msra.mxu0 0.0
  %349 = vmatpush.msra.mxu0 0.0
  %350 = vmatpush.msra.mxu0 0.0
  %351 = vmatpush.msra.mxu0 0.0
  %352 = vmatpush.msra.mxu0 0.0
  %353 = vmatpush.msra.mxu0 0.0
  %354 = vmatpush.msra.mxu0 0.0
  %355 = vmatpush.msra.mxu0 0.0
  %356 = vmatpush.msra.mxu0 0.0
  %357 = vmatpush.msra.mxu0 0.0
  %358 = vmatpush.msra.mxu0 %v281
  %359 = vmatmul.f32.gmra.mxu0 %v338
  %v360 = vpop.f32.mrf.mxu0
  %v361 = vadd.f32 0.0, %v360
  %362 = vmatmul.f32.gmra.mxu0 %v341
  %v363 = vpop.f32.mrf.mxu0
  %v364 = vadd.f32 0.0, %v363
  %365 = vdwg.mxu0
  %v366 = vmul.f32 %v361, 0.35355338
  %v367 = vmul.f32 %v364, 0.35355338
  %v368 = vadd.f32 %v366, %v88
  %v369 = vadd.f32 %v367, %v89
  %vm370 = vcmask 130048
  %v371 = vsel %vm370, %v368, -inf
  %372 = vmax.xlane.f32.xlu0 %v371
  %v373 = vpop.xlane.xlu0 %372
  %v374 = vsel %vm370, %v369, -inf
  %375 = vmax.xlane.f32.xlu0 %v374
  %v376 = vpop.xlane.xlu0 %375
  %v377 = vsub.f32 %v368, %v373
  %v378 = vsub.f32 %v369, %v376
  %v379 = vmul.f32 %v377, 1.442695
  %v380 = vpow.pop %v379
  %v381 = vmul.f32 %v378, 1.442695
  %v382 = vpow.pop %v381
  %v383 = vsel %vm370, %v380, 0.0
  %384 = vadd.xlane.f32.xlu0 %v383
  %v385 = vpop.xlane.xlu0 %384
  %v386 = vsel %vm370, %v382, 0.0
  %387 = vadd.xlane.f32.xlu0 %v386
  %v388 = vpop.xlane.xlu0 %387
  %v389 = vrcp.pop %v385
  %v390 = vmul.f32 %v385, %v389
  %v391 = vsub.f32 1.0, %v390
  %v392 = vmul.f32 %v389, %v391
  %v393 = vadd.f32 %v389, %v392
  %vm394 = vweird.f32 %v385
  %vm395 = vweird.f32 %v389
  %vm396 = vmor %vm394, %vm395
  %v397 = vsel %vm396, %v389, %v393
  %v398 = vand.u32 2147483647, %v385
  %vm399 = vcmp.eq.f32.partialorder %v398, 8.507059e+37
  %v400 = vand.u32 %v385, 2147483648
  %v401 = vor.u32 1.1754944e-38, %v400
  %v402 = vsel %vm399, %v401, %v397
  %v403 = vmul.f32 %v380, %v402
  %v404 = vrcp.pop %v388
  %v405 = vmul.f32 %v388, %v404
  %v406 = vsub.f32 1.0, %v405
  %v407 = vmul.f32 %v404, %v406
  %v408 = vadd.f32 %v404, %v407
  %vm409 = vweird.f32 %v388
  %vm410 = vweird.f32 %v404
  %vm411 = vmor %vm409, %vm410
  %v412 = vsel %vm411, %v404, %v408
  %v413 = vand.u32 2147483647, %v388
  %vm414 = vcmp.eq.f32.partialorder %v413, 8.507059e+37
  %v415 = vand.u32 %v388, 2147483648
  %v416 = vor.u32 1.1754944e-38, %v415
  %v417 = vsel %vm414, %v416, %v412
  %v418 = vmul.f32 %v382, %v417
  %v420 = vsel %vm370, %v293, 0
  %v423 = vsel %vm370, %v403, 0
  %v426 = vsel %vm370, %v418, 0
  %428 = vmatpush.xpose.msra.mxu0 0.0
  %429 = vmatpush.xpose.msra.mxu0 0.0
  %430 = vmatpush.xpose.msra.mxu0 0.0
  %431 = vmatpush.xpose.msra.mxu0 0.0
  %432 = vmatpush.xpose.msra.mxu0 0.0
  %433 = vmatpush.xpose.msra.mxu0 0.0
  %434 = vmatpush.xpose.msra.mxu0 0.0
  %435 = vmatpush.xpose.msra.mxu0 0.0
  %436 = vmatpush.xpose.msra.mxu0 0.0
  %437 = vmatpush.xpose.msra.mxu0 0.0
  %438 = vmatpush.xpose.msra.mxu0 0.0
  %439 = vmatpush.xpose.msra.mxu0 0.0
  %440 = vmatpush.xpose.msra.mxu0 0.0
  %441 = vmatpush.xpose.msra.mxu0 0.0
  %442 = vmatpush.xpose.msra.mxu0 %v426
  %443 = vmatpush.xpose.msra.mxu0 %v423
  %444 = vmatmul.f32.gmra.mxu0 %v420
  %v445 = vpop.f32.mrf.mxu0
  %v446 = vadd.f32 0.0, %v445
  %447 = vdwg.mxu0
  %v449 = vsel %vm336, %v102, 0
  %v452 = vsel %vm336, %v103, 0
  %v455 = vsel %vm336, %v104, 0
  %v458 = vsel %vm336, %v105, 0
  %460 = vmatpush.msra.mxu0 0.0
  %461 = vmatpush.msra.mxu0 0.0
  %462 = vmatpush.msra.mxu0 0.0
  %463 = vmatpush.msra.mxu0 0.0
  %464 = vmatpush.msra.mxu0 0.0
  %465 = vmatpush.msra.mxu0 0.0
  %466 = vmatpush.msra.mxu0 0.0
  %467 = vmatpush.msra.mxu0 0.0
  %468 = vmatpush.msra.mxu0 0.0
  %469 = vmatpush.msra.mxu0 0.0
  %470 = vmatpush.msra.mxu0 0.0
  %471 = vmatpush.msra.mxu0 0.0
  %472 = vmatpush.msra.mxu0 0.0
  %473 = vmatpush.msra.mxu0 0.0
  %474 = vmatpush.msra.mxu0 0.0
  %475 = vmatpush.msra.mxu0 %v446
  %476 = vmatmul.f32.gmra.mxu0 %v449
  %v477 = vpop.f32.mrf.mxu0
  %v478 = vadd.f32 0.0, %v477
  %479 = vmatmul.f32.gmra.mxu0 %v452
  %v480 = vpop.f32.mrf.mxu0
  %v481 = vadd.f32 0.0, %v480
  %482 = vmatmul.f32.gmra.mxu0 %v455
  %v483 = vpop.f32.mrf.mxu0
  %v484 = vadd.f32 0.0, %v483
  %485 = vmatmul.f32.gmra.mxu0 %v458
  %v486 = vpop.f32.mrf.mxu0
  %v487 = vadd.f32 0.0, %v486
  %488 = vdwg.mxu0
  %490 = vset.pattern.permute.xlu0 0
  %491 = vperm.xlu0 %490, %v134
  %v492 = vpop.permute.xlu0 %491
  %495 = vset.pattern.permute.xlu0 0
  %496 = vperm.xlu0 %495, %v135
  %v497 = vpop.permute.xlu0 %496
  %500 = vset.pattern.permute.xlu0 0
  %501 = vperm.xlu0 %500, %v136
  %v502 = vpop.permute.xlu0 %501
  %505 = vset.pattern.permute.xlu0 0
  %506 = vperm.xlu0 %505, %v137
  %v507 = vpop.permute.xlu0 %506
  %v509 = vadd.f32 %v492, %v478
  %v510 = vadd.f32 %v497, %v481
  %v511 = vadd.f32 %v502, %v484
  %v512 = vadd.f32 %v507, %v487
  %513 = vxpose.xlu0.b32.start [1/16] %v272, 128
  %514 = vxpose.xlu0.b32.cont [2/16] 0.0, 128
  %515 = vxpose.xlu0.b32.cont [3/16] 0.0, 128
  %516 = vxpose.xlu0.b32.cont [4/16] 0.0, 128
  %517 = vxpose.xlu0.b32.cont [5/16] 0.0, 128
  %518 = vxpose.xlu0.b32.cont [6/16] 0.0, 128
  %519 = vxpose.xlu0.b32.cont [7/16] 0.0, 128
  %520 = vxpose.xlu0.b32.cont [8/16] 0.0, 128
  %521 = vxpose.xlu0.b32.cont [9/16] 0.0, 128
  %522 = vxpose.xlu0.b32.cont [10/16] 0.0, 128
  %523 = vxpose.xlu0.b32.cont [11/16] 0.0, 128
  %524 = vxpose.xlu0.b32.cont [12/16] 0.0, 128
  %525 = vxpose.xlu0.b32.cont [13/16] 0.0, 128
  %526 = vxpose.xlu0.b32.cont [14/16] 0.0, 128
  %527 = vxpose.xlu0.b32.cont [15/16] 0.0, 128
  %528 = vxpose.xlu0.b32.end [16/16] 0.0, 128
  %v529 = vpop.trf.xlu0
  %v530 = vpop.trf.xlu0
  %v531 = vpop.trf.xlu0
  %v532 = vpop.trf.xlu0
  %v533 = vpop.trf.xlu0
  %v534 = vpop.trf.xlu0
  %v535 = vpop.trf.xlu0
  %v536 = vpop.trf.xlu0
  %v537 = vpop.trf.xlu0
  %v538 = vpop.trf.xlu0
  %v539 = vpop.trf.xlu0
  %v540 = vpop.trf.xlu0
  %v541 = vpop.trf.xlu0
  %v542 = vpop.trf.xlu0
  %v543 = vpop.trf.xlu0
  %v544 = vpop.trf.xlu0
  %v546 = vsel %vm336, %v529, 0
  %v549 = vsel %vm336, %v530, 0
  %551 = vmatpush.msra.mxu0 0.0
  %552 = vmatpush.msra.mxu0 0.0
  %553 = vmatpush.msra.mxu0 0.0
  %554 = vmatpush.msra.mxu0 0.0
  %555 = vmatpush.msra.mxu0 0.0
  %556 = vmatpush.msra.mxu0 0.0
  %557 = vmatpush.msra.mxu0 0.0
  %558 = vmatpush.msra.mxu0 0.0
  %559 = vmatpush.msra.mxu0 0.0
  %560 = vmatpush.msra.mxu0 0.0
  %561 = vmatpush.msra.mxu0 0.0
  %562 = vmatpush.msra.mxu0 0.0
  %563 = vmatpush.msra.mxu0 0.0
  %564 = vmatpush.msra.mxu0 0.0
  %565 = vmatpush.msra.mxu0 0.0
  %566 = vmatpush.msra.mxu0 %v284
  %567 = vmatmul.f32.gmra.mxu0 %v546
  %v568 = vpop.f32.mrf.mxu0
  %v569 = vadd.f32 0.0, %v568
  %570 = vmatmul.f32.gmra.mxu0 %v549
  %v571 = vpop.f32.mrf.mxu0
  %v572 = vadd.f32 0.0, %v571
  %573 = vdwg.mxu0
  %v574 = vmul.f32 %v569, 0.35355338
  %v575 = vmul.f32 %v572, 0.35355338
  %v576 = vadd.f32 %v574, %v88
  %v577 = vadd.f32 %v575, %v89
  %v578 = vsel %vm370, %v576, -inf
  %579 = vmax.xlane.f32.xlu0 %v578
  %v580 = vpop.xlane.xlu0 %579
  %v581 = vsel %vm370, %v577, -inf
  %582 = vmax.xlane.f32.xlu0 %v581
  %v583 = vpop.xlane.xlu0 %582
  %v584 = vsub.f32 %v576, %v580
  %v585 = vsub.f32 %v577, %v583
  %v586 = vmul.f32 %v584, 1.442695
  %v587 = vpow.pop %v586
  %v588 = vmul.f32 %v585, 1.442695
  %v589 = vpow.pop %v588
  %v590 = vsel %vm370, %v587, 0.0
  %591 = vadd.xlane.f32.xlu0 %v590
  %v592 = vpop.xlane.xlu0 %591
  %v593 = vsel %vm370, %v589, 0.0
  %594 = vadd.xlane.f32.xlu0 %v593
  %v595 = vpop.xlane.xlu0 %594
  %v596 = vrcp.pop %v592
  %v597 = vmul.f32 %v592, %v596
  %v598 = vsub.f32 1.0, %v597
  %v599 = vmul.f32 %v596, %v598
  %v600 = vadd.f32 %v596, %v599
  %vm601 = vweird.f32 %v592
  %vm602 = vweird.f32 %v596
  %vm603 = vmor %vm601, %vm602
  %v604 = vsel %vm603, %v596, %v600
  %v605 = vand.u32 2147483647, %v592
  %vm606 = vcmp.eq.f32.partialorder %v605, 8.507059e+37
  %v607 = vand.u32 %v592, 2147483648
  %v608 = vor.u32 1.1754944e-38, %v607
  %v609 = vsel %vm606, %v608, %v604
  %v610 = vmul.f32 %v587, %v609
  %v611 = vrcp.pop %v595
  %v612 = vmul.f32 %v595, %v611
  %v613 = vsub.f32 1.0, %v612
  %v614 = vmul.f32 %v611, %v613
  %v615 = vadd.f32 %v611, %v614
  %vm616 = vweird.f32 %v595
  %vm617 = vweird.f32 %v611
  %vm618 = vmor %vm616, %vm617
  %v619 = vsel %vm618, %v611, %v615
  %v620 = vand.u32 2147483647, %v595
  %vm621 = vcmp.eq.f32.partialorder %v620, 8.507059e+37
  %v622 = vand.u32 %v595, 2147483648
  %v623 = vor.u32 1.1754944e-38, %v622
  %v624 = vsel %vm621, %v623, %v619
  %v625 = vmul.f32 %v589, %v624
  %v627 = vsel %vm370, %v296, 0
  %v630 = vsel %vm370, %v610, 0
  %v633 = vsel %vm370, %v625, 0
  %635 = vmatpush.xpose.msra.mxu0 0.0
  %636 = vmatpush.xpose.msra.mxu0 0.0
  %637 = vmatpush.xpose.msra.mxu0 0.0
  %638 = vmatpush.xpose.msra.mxu0 0.0
  %639 = vmatpush.xpose.msra.mxu0 0.0
  %640 = vmatpush.xpose.msra.mxu0 0.0
  %641 = vmatpush.xpose.msra.mxu0 0.0
  %642 = vmatpush.xpose.msra.mxu0 0.0
  %643 = vmatpush.xpose.msra.mxu0 0.0
  %644 = vmatpush.xpose.msra.mxu0 0.0
  %645 = vmatpush.xpose.msra.mxu0 0.0
  %646 = vmatpush.xpose.msra.mxu0 0.0
  %647 = vmatpush.xpose.msra.mxu0 0.0
  %648 = vmatpush.xpose.msra.mxu0 0.0
  %649 = vmatpush.xpose.msra.mxu0 %v633
  %650 = vmatpush.xpose.msra.mxu0 %v630
  %651 = vmatmul.f32.gmra.mxu0 %v627
  %v652 = vpop.f32.mrf.mxu0
  %v653 = vadd.f32 0.0, %v652
  %654 = vdwg.mxu0
  %655 = vrot.lane.b32.xlu0 %v102, 120
  %v656 = vpop.permute.xlu0 %655
  %657 = vrot.lane.b32.xlu0 %v103, 120
  %v658 = vpop.permute.xlu0 %657
  %659 = vrot.lane.b32.xlu0 %v104, 120
  %v660 = vpop.permute.xlu0 %659
  %661 = vrot.lane.b32.xlu0 %v105, 120
  %v662 = vpop.permute.xlu0 %661
  %v663 = vsel %vm336, %v656, 0
  %v665 = vsel %vm336, %v658, 0
  %v667 = vsel %vm336, %v660, 0
  %v669 = vsel %vm336, %v662, 0
  %671 = vmatpush.msra.mxu0 0.0
  %672 = vmatpush.msra.mxu0 0.0
  %673 = vmatpush.msra.mxu0 0.0
  %674 = vmatpush.msra.mxu0 0.0
  %675 = vmatpush.msra.mxu0 0.0
  %676 = vmatpush.msra.mxu0 0.0
  %677 = vmatpush.msra.mxu0 0.0
  %678 = vmatpush.msra.mxu0 0.0
  %679 = vmatpush.msra.mxu0 0.0
  %680 = vmatpush.msra.mxu0 0.0
  %681 = vmatpush.msra.mxu0 0.0
  %682 = vmatpush.msra.mxu0 0.0
  %683 = vmatpush.msra.mxu0 0.0
  %684 = vmatpush.msra.mxu0 0.0
  %685 = vmatpush.msra.mxu0 0.0
  %686 = vmatpush.msra.mxu0 %v653
  %687 = vmatmul.f32.gmra.mxu0 %v663
  %v688 = vpop.f32.mrf.mxu0
  %v689 = vadd.f32 0.0, %v688
  %690 = vmatmul.f32.gmra.mxu0 %v665
  %v691 = vpop.f32.mrf.mxu0
  %v692 = vadd.f32 0.0, %v691
  %693 = vmatmul.f32.gmra.mxu0 %v667
  %v694 = vpop.f32.mrf.mxu0
  %v695 = vadd.f32 0.0, %v694
  %696 = vmatmul.f32.gmra.mxu0 %v669
  %v697 = vpop.f32.mrf.mxu0
  %v698 = vadd.f32 0.0, %v697
  %699 = vdwg.mxu0
  %v700 = vadd.f32 %v509, %v689
  %v701 = vadd.f32 %v510, %v692
  %v702 = vadd.f32 %v511, %v695
  %v703 = vadd.f32 %v512, %v698
  %704 = vxpose.xlu0.b32.start [1/16] %v275, 128
  %705 = vxpose.xlu0.b32.cont [2/16] 0.0, 128
  %706 = vxpose.xlu0.b32.cont [3/16] 0.0, 128
  %707 = vxpose.xlu0.b32.cont [4/16] 0.0, 128
  %708 = vxpose.xlu0.b32.cont [5/16] 0.0, 128
  %709 = vxpose.xlu0.b32.cont [6/16] 0.0, 128
  %710 = vxpose.xlu0.b32.cont [7/16] 0.0, 128
  %711 = vxpose.xlu0.b32.cont [8/16] 0.0, 128
  %712 = vxpose.xlu0.b32.cont [9/16] 0.0, 128
  %713 = vxpose.xlu0.b32.cont [10/16] 0.0, 128
  %714 = vxpose.xlu0.b32.cont [11/16] 0.0, 128
  %715 = vxpose.xlu0.b32.cont [12/16] 0.0, 128
  %716 = vxpose.xlu0.b32.cont [13/16] 0.0, 128
  %717 = vxpose.xlu0.b32.cont [14/16] 0.0, 128
  %718 = vxpose.xlu0.b32.cont [15/16] 0.0, 128
  %719 = vxpose.xlu0.b32.end [16/16] 0.0, 128
  %v720 = vpop.trf.xlu0
  %v721 = vpop.trf.xlu0
  %v722 = vpop.trf.xlu0
  %v723 = vpop.trf.xlu0
  %v724 = vpop.trf.xlu0
  %v725 = vpop.trf.xlu0
  %v726 = vpop.trf.xlu0
  %v727 = vpop.trf.xlu0
  %v728 = vpop.trf.xlu0
  %v729 = vpop.trf.xlu0
  %v730 = vpop.trf.xlu0
  %v731 = vpop.trf.xlu0
  %v732 = vpop.trf.xlu0
  %v733 = vpop.trf.xlu0
  %v734 = vpop.trf.xlu0
  %v735 = vpop.trf.xlu0
  %v737 = vsel %vm336, %v720, 0
  %v740 = vsel %vm336, %v721, 0
  %742 = vmatpush.msra.mxu0 0.0
  %743 = vmatpush.msra.mxu0 0.0
  %744 = vmatpush.msra.mxu0 0.0
  %745 = vmatpush.msra.mxu0 0.0
  %746 = vmatpush.msra.mxu0 0.0
  %747 = vmatpush.msra.mxu0 0.0
  %748 = vmatpush.msra.mxu0 0.0
  %749 = vmatpush.msra.mxu0 0.0
  %750 = vmatpush.msra.mxu0 0.0
  %751 = vmatpush.msra.mxu0 0.0
  %752 = vmatpush.msra.mxu0 0.0
  %753 = vmatpush.msra.mxu0 0.0
  %754 = vmatpush.msra.mxu0 0.0
  %755 = vmatpush.msra.mxu0 0.0
  %756 = vmatpush.msra.mxu0 0.0
  %757 = vmatpush.msra.mxu0 %v287
  %758 = vmatmul.f32.gmra.mxu0 %v737
  %v759 = vpop.f32.mrf.mxu0
  %v760 = vadd.f32 0.0, %v759
  %761 = vmatmul.f32.gmra.mxu0 %v740
  %v762 = vpop.f32.mrf.mxu0
  %v763 = vadd.f32 0.0, %v762
  %764 = vdwg.mxu0
  %v765 = vmul.f32 %v760, 0.35355338
  %v766 = vmul.f32 %v763, 0.35355338
  %v767 = vadd.f32 %v765, %v88
  %v768 = vadd.f32 %v766, %v89
  %v769 = vsel %vm370, %v767, -inf
  %770 = vmax.xlane.f32.xlu0 %v769
  %v771 = vpop.xlane.xlu0 %770
  %v772 = vsel %vm370, %v768, -inf
  %773 = vmax.xlane.f32.xlu0 %v772
  %v774 = vpop.xlane.xlu0 %773
  %v775 = vsub.f32 %v767, %v771
  %v776 = vsub.f32 %v768, %v774
  %v777 = vmul.f32 %v775, 1.442695
  %v778 = vpow.pop %v777
  %v779 = vmul.f32 %v776, 1.442695
  %v780 = vpow.pop %v779
  %v781 = vsel %vm370, %v778, 0.0
  %782 = vadd.xlane.f32.xlu0 %v781
  %v783 = vpop.xlane.xlu0 %782
  %v784 = vsel %vm370, %v780, 0.0
  %785 = vadd.xlane.f32.xlu0 %v784
  %v786 = vpop.xlane.xlu0 %785
  %v787 = vrcp.pop %v783
  %v788 = vmul.f32 %v783, %v787
  %v789 = vsub.f32 1.0, %v788
  %v790 = vmul.f32 %v787, %v789
  %v791 = vadd.f32 %v787, %v790
  %vm792 = vweird.f32 %v783
  %vm793 = vweird.f32 %v787
  %vm794 = vmor %vm792, %vm793
  %v795 = vsel %vm794, %v787, %v791
  %v796 = vand.u32 2147483647, %v783
  %vm797 = vcmp.eq.f32.partialorder %v796, 8.507059e+37
  %v798 = vand.u32 %v783, 2147483648
  %v799 = vor.u32 1.1754944e-38, %v798
  %v800 = vsel %vm797, %v799, %v795
  %v801 = vmul.f32 %v778, %v800
  %v802 = vrcp.pop %v786
  %v803 = vmul.f32 %v786, %v802
  %v804 = vsub.f32 1.0, %v803
  %v805 = vmul.f32 %v802, %v804
  %v806 = vadd.f32 %v802, %v805
  %vm807 = vweird.f32 %v786
  %vm808 = vweird.f32 %v802
  %vm809 = vmor %vm807, %vm808
  %v810 = vsel %vm809, %v802, %v806
  %v811 = vand.u32 2147483647, %v786
  %vm812 = vcmp.eq.f32.partialorder %v811, 8.507059e+37
  %v813 = vand.u32 %v786, 2147483648
  %v814 = vor.u32 1.1754944e-38, %v813
  %v815 = vsel %vm812, %v814, %v810
  %v816 = vmul.f32 %v780, %v815
  %v818 = vsel %vm370, %v299, 0
  %v821 = vsel %vm370, %v801, 0
  %v824 = vsel %vm370, %v816, 0
  %826 = vmatpush.xpose.msra.mxu0 0.0
  %827 = vmatpush.xpose.msra.mxu0 0.0
  %828 = vmatpush.xpose.msra.mxu0 0.0
  %829 = vmatpush.xpose.msra.mxu0 0.0
  %830 = vmatpush.xpose.msra.mxu0 0.0
  %831 = vmatpush.xpose.msra.mxu0 0.0
  %832 = vmatpush.xpose.msra.mxu0 0.0
  %833 = vmatpush.xpose.msra.mxu0 0.0
  %834 = vmatpush.xpose.msra.mxu0 0.0
  %835 = vmatpush.xpose.msra.mxu0 0.0
  %836 = vmatpush.xpose.msra.mxu0 0.0
  %837 = vmatpush.xpose.msra.mxu0 0.0
  %838 = vmatpush.xpose.msra.mxu0 0.0
  %839 = vmatpush.xpose.msra.mxu0 0.0
  %840 = vmatpush.xpose.msra.mxu0 %v824
  %841 = vmatpush.xpose.msra.mxu0 %v821
  %842 = vmatmul.f32.gmra.mxu0 %v818
  %v843 = vpop.f32.mrf.mxu0
  %v844 = vadd.f32 0.0, %v843
  %845 = vdwg.mxu0
  %846 = vrot.lane.b32.xlu0 %v102, 112
  %v847 = vpop.permute.xlu0 %846
  %848 = vrot.lane.b32.xlu0 %v103, 112
  %v849 = vpop.permute.xlu0 %848
  %850 = vrot.lane.b32.xlu0 %v104, 112
  %v851 = vpop.permute.xlu0 %850
  %852 = vrot.lane.b32.xlu0 %v105, 112
  %v853 = vpop.permute.xlu0 %852
  %v854 = vsel %vm336, %v847, 0
  %v856 = vsel %vm336, %v849, 0
  %v858 = vsel %vm336, %v851, 0
  %v860 = vsel %vm336, %v853, 0
  %862 = vmatpush.msra.mxu0 0.0
  %863 = vmatpush.msra.mxu0 0.0
  %864 = vmatpush.msra.mxu0 0.0
  %865 = vmatpush.msra.mxu0 0.0
  %866 = vmatpush.msra.mxu0 0.0
  %867 = vmatpush.msra.mxu0 0.0
  %868 = vmatpush.msra.mxu0 0.0
  %869 = vmatpush.msra.mxu0 0.0
  %870 = vmatpush.msra.mxu0 0.0
  %871 = vmatpush.msra.mxu0 0.0
  %872 = vmatpush.msra.mxu0 0.0
  %873 = vmatpush.msra.mxu0 0.0
  %874 = vmatpush.msra.mxu0 0.0
  %875 = vmatpush.msra.mxu0 0.0
  %876 = vmatpush.msra.mxu0 0.0
  %877 = vmatpush.msra.mxu0 %v844
  %878 = vmatmul.f32.gmra.mxu0 %v854
  %v879 = vpop.f32.mrf.mxu0
  %v880 = vadd.f32 0.0, %v879
  %881 = vmatmul.f32.gmra.mxu0 %v856
  %v882 = vpop.f32.mrf.mxu0
  %v883 = vadd.f32 0.0, %v882
  %884 = vmatmul.f32.gmra.mxu0 %v858
  %v885 = vpop.f32.mrf.mxu0
  %v886 = vadd.f32 0.0, %v885
  %887 = vmatmul.f32.gmra.mxu0 %v860
  %v888 = vpop.f32.mrf.mxu0
  %v889 = vadd.f32 0.0, %v888
  %890 = vdwg.mxu0
  %v891 = vadd.f32 %v700, %v880
  %v892 = vadd.f32 %v701, %v883
  %v893 = vadd.f32 %v702, %v886
  %v894 = vadd.f32 %v703, %v889
  %895 = vxpose.xlu0.b32.start [1/16] %v278, 128
  %896 = vxpose.xlu0.b32.cont [2/16] 0.0, 128
  %897 = vxpose.xlu0.b32.cont [3/16] 0.0, 128
  %898 = vxpose.xlu0.b32.cont [4/16] 0.0, 128
  %899 = vxpose.xlu0.b32.cont [5/16] 0.0, 128
  %900 = vxpose.xlu0.b32.cont [6/16] 0.0, 128
  %901 = vxpose.xlu0.b32.cont [7/16] 0.0, 128
  %902 = vxpose.xlu0.b32.cont [8/16] 0.0, 128
  %903 = vxpose.xlu0.b32.cont [9/16] 0.0, 128
  %904 = vxpose.xlu0.b32.cont [10/16] 0.0, 128
  %905 = vxpose.xlu0.b32.cont [11/16] 0.0, 128
  %906 = vxpose.xlu0.b32.cont [12/16] 0.0, 128
  %907 = vxpose.xlu0.b32.cont [13/16] 0.0, 128
  %908 = vxpose.xlu0.b32.cont [14/16] 0.0, 128
  %909 = vxpose.xlu0.b32.cont [15/16] 0.0, 128
  %910 = vxpose.xlu0.b32.end [16/16] 0.0, 128
  %v911 = vpop.trf.xlu0
  %v912 = vpop.trf.xlu0
  %v913 = vpop.trf.xlu0
  %v914 = vpop.trf.xlu0
  %v915 = vpop.trf.xlu0
  %v916 = vpop.trf.xlu0
  %v917 = vpop.trf.xlu0
  %v918 = vpop.trf.xlu0
  %v919 = vpop.trf.xlu0
  %v920 = vpop.trf.xlu0
  %v921 = vpop.trf.xlu0
  %v922 = vpop.trf.xlu0
  %v923 = vpop.trf.xlu0
  %v924 = vpop.trf.xlu0
  %v925 = vpop.trf.xlu0
  %v926 = vpop.trf.xlu0
  %v928 = vsel %vm336, %v911, 0
  %v931 = vsel %vm336, %v912, 0
  %933 = vmatpush.msra.mxu0 0.0
  %934 = vmatpush.msra.mxu0 0.0
  %935 = vmatpush.msra.mxu0 0.0
  %936 = vmatpush.msra.mxu0 0.0
  %937 = vmatpush.msra.mxu0 0.0
  %938 = vmatpush.msra.mxu0 0.0
  %939 = vmatpush.msra.mxu0 0.0
  %940 = vmatpush.msra.mxu0 0.0
  %941 = vmatpush.msra.mxu0 0.0
  %942 = vmatpush.msra.mxu0 0.0
  %943 = vmatpush.msra.mxu0 0.0
  %944 = vmatpush.msra.mxu0 0.0
  %945 = vmatpush.msra.mxu0 0.0
  %946 = vmatpush.msra.mxu0 0.0
  %947 = vmatpush.msra.mxu0 0.0
  %948 = vmatpush.msra.mxu0 %v290
  %949 = vmatmul.f32.gmra.mxu0 %v928
  %v950 = vpop.f32.mrf.mxu0
  %v951 = vadd.f32 0.0, %v950
  %952 = vmatmul.f32.gmra.mxu0 %v931
  %v953 = vpop.f32.mrf.mxu0
  %v954 = vadd.f32 0.0, %v953
  %955 = vdwg.mxu0
  %v956 = vmul.f32 %v951, 0.35355338
  %v957 = vmul.f32 %v954, 0.35355338
  %v958 = vadd.f32 %v956, %v88
  %v959 = vadd.f32 %v957, %v89
  %v960 = vsel %vm370, %v958, -inf
  %961 = vmax.xlane.f32.xlu0 %v960
  %v962 = vpop.xlane.xlu0 %961
  %v963 = vsel %vm370, %v959, -inf
  %964 = vmax.xlane.f32.xlu0 %v963
  %v965 = vpop.xlane.xlu0 %964
  %v966 = vsub.f32 %v958, %v962
  %v967 = vsub.f32 %v959, %v965
  %v968 = vmul.f32 %v966, 1.442695
  %v969 = vpow.pop %v968
  %v970 = vmul.f32 %v967, 1.442695
  %v971 = vpow.pop %v970
  %v972 = vsel %vm370, %v969, 0.0
  %973 = vadd.xlane.f32.xlu0 %v972
  %v974 = vpop.xlane.xlu0 %973
  %v975 = vsel %vm370, %v971, 0.0
  %976 = vadd.xlane.f32.xlu0 %v975
  %v977 = vpop.xlane.xlu0 %976
  %v978 = vrcp.pop %v974
  %v979 = vmul.f32 %v974, %v978
  %v980 = vsub.f32 1.0, %v979
  %v981 = vmul.f32 %v978, %v980
  %v982 = vadd.f32 %v978, %v981
  %vm983 = vweird.f32 %v974
  %vm984 = vweird.f32 %v978
  %vm985 = vmor %vm983, %vm984
  %v986 = vsel %vm985, %v978, %v982
  %v987 = vand.u32 2147483647, %v974
  %vm988 = vcmp.eq.f32.partialorder %v987, 8.507059e+37
  %v989 = vand.u32 %v974, 2147483648
  %v990 = vor.u32 1.1754944e-38, %v989
  %v991 = vsel %vm988, %v990, %v986
  %v992 = vmul.f32 %v969, %v991
  %v993 = vrcp.pop %v977
  %v994 = vmul.f32 %v977, %v993
  %v995 = vsub.f32 1.0, %v994
  %v996 = vmul.f32 %v993, %v995
  %v997 = vadd.f32 %v993, %v996
  %vm998 = vweird.f32 %v977
  %vm999 = vweird.f32 %v993
  %vm1000 = vmor %vm998, %vm999
  %v1001 = vsel %vm1000, %v993, %v997
  %v1002 = vand.u32 2147483647, %v977
  %vm1003 = vcmp.eq.f32.partialorder %v1002, 8.507059e+37
  %v1004 = vand.u32 %v977, 2147483648
  %v1005 = vor.u32 1.1754944e-38, %v1004
  %v1006 = vsel %vm1003, %v1005, %v1001
  %v1007 = vmul.f32 %v971, %v1006
  %v1009 = vsel %vm370, %v302, 0
  %v1012 = vsel %vm370, %v992, 0
  %v1015 = vsel %vm370, %v1007, 0
  %1017 = vmatpush.xpose.msra.mxu0 0.0
  %1018 = vmatpush.xpose.msra.mxu0 0.0
  %1019 = vmatpush.xpose.msra.mxu0 0.0
  %1020 = vmatpush.xpose.msra.mxu0 0.0
  %1021 = vmatpush.xpose.msra.mxu0 0.0
  %1022 = vmatpush.xpose.msra.mxu0 0.0
  %1023 = vmatpush.xpose.msra.mxu0 0.0
  %1024 = vmatpush.xpose.msra.mxu0 0.0
  %1025 = vmatpush.xpose.msra.mxu0 0.0
  %1026 = vmatpush.xpose.msra.mxu0 0.0
  %1027 = vmatpush.xpose.msra.mxu0 0.0
  %1028 = vmatpush.xpose.msra.mxu0 0.0
  %1029 = vmatpush.xpose.msra.mxu0 0.0
  %1030 = vmatpush.xpose.msra.mxu0 0.0
  %1031 = vmatpush.xpose.msra.mxu0 %v1015
  %1032 = vmatpush.xpose.msra.mxu0 %v1012
  %1033 = vmatmul.f32.gmra.mxu0 %v1009
  %v1034 = vpop.f32.mrf.mxu0
  %v1035 = vadd.f32 0.0, %v1034
  %1036 = vdwg.mxu0
  %1037 = vrot.lane.b32.xlu0 %v102, 104
  %v1038 = vpop.permute.xlu0 %1037
  %1039 = vrot.lane.b32.xlu0 %v103, 104
  %v1040 = vpop.permute.xlu0 %1039
  %1041 = vrot.lane.b32.xlu0 %v104, 104
  %v1042 = vpop.permute.xlu0 %1041
  %1043 = vrot.lane.b32.xlu0 %v105, 104
  %v1044 = vpop.permute.xlu0 %1043
  %v1045 = vsel %vm336, %v1038, 0
  %v1047 = vsel %vm336, %v1040, 0
  %v1049 = vsel %vm336, %v1042, 0
  %v1051 = vsel %vm336, %v1044, 0
  %1053 = vmatpush.msra.mxu0 0.0
  %1054 = vmatpush.msra.mxu0 0.0
  %1055 = vmatpush.msra.mxu0 0.0
  %1056 = vmatpush.msra.mxu0 0.0
  %1057 = vmatpush.msra.mxu0 0.0
  %1058 = vmatpush.msra.mxu0 0.0
  %1059 = vmatpush.msra.mxu0 0.0
  %1060 = vmatpush.msra.mxu0 0.0
  %1061 = vmatpush.msra.mxu0 0.0
  %1062 = vmatpush.msra.mxu0 0.0
  %1063 = vmatpush.msra.mxu0 0.0
  %1064 = vmatpush.msra.mxu0 0.0
  %1065 = vmatpush.msra.mxu0 0.0
  %1066 = vmatpush.msra.mxu0 0.0
  %1067 = vmatpush.msra.mxu0 0.0
  %1068 = vmatpush.msra.mxu0 %v1035
  %1069 = vmatmul.f32.gmra.mxu0 %v1045
  %v1070 = vpop.f32.mrf.mxu0
  %v1071 = vadd.f32 0.0, %v1070
  %1072 = vmatmul.f32.gmra.mxu0 %v1047
  %v1073 = vpop.f32.mrf.mxu0
  %v1074 = vadd.f32 0.0, %v1073
  %1075 = vmatmul.f32.gmra.mxu0 %v1049
  %v1076 = vpop.f32.mrf.mxu0
  %v1077 = vadd.f32 0.0, %v1076
  %1078 = vmatmul.f32.gmra.mxu0 %v1051
  %v1079 = vpop.f32.mrf.mxu0
  %v1080 = vadd.f32 0.0, %v1079
  %1081 = vdwg.mxu0
  %v1082 = vadd.f32 %v891, %v1071
  %v1083 = vadd.f32 %v892, %v1074
  %v1084 = vadd.f32 %v893, %v1077
  %v1085 = vadd.f32 %v894, %v1080
  %v1087 = vsel %vm214, %v114, 0
  %v1090 = vsel %vm214, %v115, 0
  %v1093 = vsel %vm214, %v116, 0
  %v1096 = vsel %vm214, %v117, 0
  %v1099 = vsel %vm214, %v118, 0
  %v1102 = vsel %vm214, %v119, 0
  %v1105 = vsel %vm214, %v120, 0
  %v1108 = vsel %vm214, %v121, 0
  %1110 = vmatpush.msra.mxu0 0.0
  %1111 = vmatpush.msra.mxu0 0.0
  %1112 = vmatpush.msra.mxu0 0.0
  %1113 = vmatpush.msra.mxu0 0.0
  %1114 = vmatpush.msra.mxu0 0.0
  %1115 = vmatpush.msra.mxu0 0.0
  %1116 = vmatpush.msra.mxu0 0.0
  %1117 = vmatpush.msra.mxu0 0.0
  %1118 = vmatpush.msra.mxu0 0.0
  %1119 = vmatpush.msra.mxu0 0.0
  %1120 = vmatpush.msra.mxu0 0.0
  %1121 = vmatpush.msra.mxu0 0.0
  %1122 = vmatpush.msra.mxu0 %v1085
  %1123 = vmatpush.msra.mxu0 %v1084
  %1124 = vmatpush.msra.mxu0 %v1083
  %1125 = vmatpush.msra.mxu0 %v1082
  %1126 = vmatmul.f32.gmra.mxu0 %v1087
  %v1127 = vpop.f32.mrf.mxu0
  %v1128 = vadd.f32 0.0, %v1127
  %1129 = vmatmul.f32.gmra.mxu0 %v1090
  %v1130 = vpop.f32.mrf.mxu0
  %v1131 = vadd.f32 0.0, %v1130
  %1132 = vmatmul.f32.gmra.mxu0 %v1093
  %v1133 = vpop.f32.mrf.mxu0
  %v1134 = vadd.f32 0.0, %v1133
  %1135 = vmatmul.f32.gmra.mxu0 %v1096
  %v1136 = vpop.f32.mrf.mxu0
  %v1137 = vadd.f32 0.0, %v1136
  %1138 = vmatmul.f32.gmra.mxu0 %v1099
  %v1139 = vpop.f32.mrf.mxu0
  %v1140 = vadd.f32 0.0, %v1139
  %1141 = vmatmul.f32.gmra.mxu0 %v1102
  %v1142 = vpop.f32.mrf.mxu0
  %v1143 = vadd.f32 0.0, %v1142
  %1144 = vmatmul.f32.gmra.mxu0 %v1105
  %v1145 = vpop.f32.mrf.mxu0
  %v1146 = vadd.f32 0.0, %v1145
  %1147 = vmatmul.f32.gmra.mxu0 %v1108
  %v1148 = vpop.f32.mrf.mxu0
  %v1149 = vadd.f32 0.0, %v1148
  %1150 = vdwg.mxu0
  %v1152 = vsel %vm214, %v106, 0
  %v1155 = vsel %vm214, %v107, 0
  %v1158 = vsel %vm214, %v108, 0
  %v1161 = vsel %vm214, %v109, 0
  %v1164 = vsel %vm214, %v110, 0
  %v1167 = vsel %vm214, %v111, 0
  %v1170 = vsel %vm214, %v112, 0
  %v1173 = vsel %vm214, %v113, 0
  %1175 = vmatpush.msra.mxu0 0.0
  %1176 = vmatpush.msra.mxu0 0.0
  %1177 = vmatpush.msra.mxu0 0.0
  %1178 = vmatpush.msra.mxu0 0.0
  %1179 = vmatpush.msra.mxu0 0.0
  %1180 = vmatpush.msra.mxu0 0.0
  %1181 = vmatpush.msra.mxu0 0.0
  %1182 = vmatpush.msra.mxu0 0.0
  %1183 = vmatpush.msra.mxu0 0.0
  %1184 = vmatpush.msra.mxu0 0.0
  %1185 = vmatpush.msra.mxu0 0.0
  %1186 = vmatpush.msra.mxu0 0.0
  %1187 = vmatpush.msra.mxu0 %v83
  %1188 = vmatpush.msra.mxu0 %v82
  %1189 = vmatpush.msra.mxu0 %v81
  %1190 = vmatpush.msra.mxu0 %v80
  %1191 = vmatmul.f32.gmra.mxu0 %v1152
  %v1192 = vpop.f32.mrf.mxu0
  %v1193 = vadd.f32 %v1128, %v1192
  %1194 = vmatmul.f32.gmra.mxu0 %v1155
  %v1195 = vpop.f32.mrf.mxu0
  %v1196 = vadd.f32 %v1131, %v1195
  %1197 = vmatmul.f32.gmra.mxu0 %v1158
  %v1198 = vpop.f32.mrf.mxu0
  %v1199 = vadd.f32 %v1134, %v1198
  %1200 = vmatmul.f32.gmra.mxu0 %v1161
  %v1201 = vpop.f32.mrf.mxu0
  %v1202 = vadd.f32 %v1137, %v1201
  %1203 = vmatmul.f32.gmra.mxu0 %v1164
  %v1204 = vpop.f32.mrf.mxu0
  %v1205 = vadd.f32 %v1140, %v1204
  %1206 = vmatmul.f32.gmra.mxu0 %v1167
  %v1207 = vpop.f32.mrf.mxu0
  %v1208 = vadd.f32 %v1143, %v1207
  %1209 = vmatmul.f32.gmra.mxu0 %v1170
  %v1210 = vpop.f32.mrf.mxu0
  %v1211 = vadd.f32 %v1146, %v1210
  %1212 = vmatmul.f32.gmra.mxu0 %v1173
  %v1213 = vpop.f32.mrf.mxu0
  %v1214 = vadd.f32 %v1149, %v1213
  %1215 = vdwg.mxu0
  %1217 = vset.pattern.permute.xlu0 0
  %1218 = vperm.xlu0 %1217, %v138
  %v1219 = vpop.permute.xlu0 %1218
  %1222 = vset.pattern.permute.xlu0 0
  %1223 = vperm.xlu0 %1222, %v139
  %v1224 = vpop.permute.xlu0 %1223
  %1227 = vset.pattern.permute.xlu0 0
  %1228 = vperm.xlu0 %1227, %v140
  %v1229 = vpop.permute.xlu0 %1228
  %1232 = vset.pattern.permute.xlu0 0
  %1233 = vperm.xlu0 %1232, %v141
  %v1234 = vpop.permute.xlu0 %1233
  %1237 = vset.pattern.permute.xlu0 0
  %1238 = vperm.xlu0 %1237, %v142
  %v1239 = vpop.permute.xlu0 %1238
  %1242 = vset.pattern.permute.xlu0 0
  %1243 = vperm.xlu0 %1242, %v143
  %v1244 = vpop.permute.xlu0 %1243
  %1247 = vset.pattern.permute.xlu0 0
  %1248 = vperm.xlu0 %1247, %v144
  %v1249 = vpop.permute.xlu0 %1248
  %1252 = vset.pattern.permute.xlu0 0
  %1253 = vperm.xlu0 %1252, %v145
  %v1254 = vpop.permute.xlu0 %1253
  %v1256 = vadd.f32 %v1193, %v1219
  %v1257 = vadd.f32 %v1196, %v1224
  %v1258 = vadd.f32 %v1199, %v1229
  %v1259 = vadd.f32 %v1202, %v1234
  %v1260 = vadd.f32 %v1205, %v1239
  %v1261 = vadd.f32 %v1208, %v1244
  %v1262 = vadd.f32 %v1211, %v1249
  %v1263 = vadd.f32 %v1214, %v1254
  %v1264 = vmax.f32 %v1256, 0.0
  %v1265 = vmax.f32 %v1257, 0.0
  %v1266 = vmax.f32 %v1258, 0.0
  %v1267 = vmax.f32 %v1259, 0.0
  %v1268 = vmax.f32 %v1260, 0.0
  %v1269 = vmax.f32 %v1261, 0.0
  %v1270 = vmax.f32 %v1262, 0.0
  %v1271 = vmax.f32 %v1263, 0.0
  %1273 = vset.pattern.permute.xlu0 0
  %1274 = vperm.xlu0 %1273, %v146
  %v1275 = vpop.permute.xlu0 %1274
  %1278 = vset.pattern.permute.xlu0 0
  %1279 = vperm.xlu0 %1278, %v147
  %v1280 = vpop.permute.xlu0 %1279
  %1283 = vset.pattern.permute.xlu0 0
  %1284 = vperm.xlu0 %1283, %v148
  %v1285 = vpop.permute.xlu0 %1284
  %1288 = vset.pattern.permute.xlu0 0
  %1289 = vperm.xlu0 %1288, %v149
  %v1290 = vpop.permute.xlu0 %1289
  %vm1292 = vcmask 523264
  %v1294 = vsel %vm1292, %v150, 0
  %v1297 = vsel %vm1292, %v151, 0
  %v1300 = vsel %vm1292, %v152, 0
  %v1303 = vsel %vm1292, %v153, 0
  %1305 = vmatpush.msra.mxu0 0.0
  %1306 = vmatpush.msra.mxu0 0.0
  %1307 = vmatpush.msra.mxu0 0.0
  %1308 = vmatpush.msra.mxu0 0.0
  %1309 = vmatpush.msra.mxu0 0.0
  %1310 = vmatpush.msra.mxu0 0.0
  %1311 = vmatpush.msra.mxu0 0.0
  %1312 = vmatpush.msra.mxu0 0.0
  %1313 = vmatpush.msra.mxu0 %v1271
  %1314 = vmatpush.msra.mxu0 %v1270
  %1315 = vmatpush.msra.mxu0 %v1269
  %1316 = vmatpush.msra.mxu0 %v1268
  %1317 = vmatpush.msra.mxu0 %v1267
  %1318 = vmatpush.msra.mxu0 %v1266
  %1319 = vmatpush.msra.mxu0 %v1265
  %1320 = vmatpush.msra.mxu0 %v1264
  %1321 = vmatmul.f32.gmra.mxu0 %v1294
  %v1322 = vpop.f32.mrf.mxu0
  %v1323 = vadd.f32 %v1275, %v1322
  %1324 = vmatmul.f32.gmra.mxu0 %v1297
  %v1325 = vpop.f32.mrf.mxu0
  %v1326 = vadd.f32 %v1280, %v1325
  %1327 = vmatmul.f32.gmra.mxu0 %v1300
  %v1328 = vpop.f32.mrf.mxu0
  %v1329 = vadd.f32 %v1285, %v1328
  %1330 = vmatmul.f32.gmra.mxu0 %v1303
  %v1331 = vpop.f32.mrf.mxu0
  %v1332 = vadd.f32 %v1290, %v1331
  %1333 = vdwg.mxu0
  %v1334 = vadd.f32 %v80, %v1323
  %v1335 = vadd.f32 %v81, %v1326
  %v1336 = vadd.f32 %v82, %v1329
  %v1337 = vadd.f32 %v83, %v1332
  %v1338 = vld [vmem:[%s5] sm:$0xff]
  %v1339 = vld [vmem:[%s5 + $0x8] sm:$0xff]
  %v1340 = vld [vmem:[%s5 + $0x10] sm:$0xff]
  %v1341 = vld [vmem:[%s5 + $0x18] sm:$0xff]
  %v1342 = vld [vmem:[%s14] sm:$0xff]
  %v1343 = vld [vmem:[%s14 + $0x8] sm:$0xff]
  %v1344 = vld [vmem:[%s14 + $0x10] sm:$0xff]
  %v1345 = vld [vmem:[%s14 + $0x18] sm:$0xff]
  %v1346 = vld [vmem:[%s14 + $0x20] sm:$0xff]
  %v1347 = vld [vmem:[%s14 + $0x28] sm:$0xff]
  %v1348 = vld [vmem:[%s14 + $0x30] sm:$0xff]
  %v1349 = vld [vmem:[%s14 + $0x38] sm:$0xff]
  %v1350 = vld [vmem:[%s14 + $0x40] sm:$0xff]
  %v1351 = vld [vmem:[%s14 + $0x48] sm:$0xff]
  %v1352 = vld [vmem:[%s14 + $0x50] sm:$0xff]
  %v1353 = vld [vmem:[%s14 + $0x58] sm:$0xff]
  %v1354 = vld [vmem:[%s14 + $0x60] sm:$0xff]
  %v1355 = vld [vmem:[%s14 + $0x68] sm:$0xff]
  %v1356 = vld [vmem:[%s14 + $0x70] sm:$0xff]
  %v1357 = vld [vmem:[%s14 + $0x78] sm:$0xff]
  %v1358 = vld [vmem:[%s14 + $0x80] sm:$0xff]
  %v1359 = vld [vmem:[%s14 + $0x88] sm:$0xff]
  %v1360 = vld [vmem:[%s14 + $0x90] sm:$0xff]
  %v1361 = vld [vmem:[%s14 + $0x98] sm:$0xff]
  %v1362 = vld [vmem:[%s14 + $0xa0] sm:$0xff]
  %v1363 = vld [vmem:[%s14 + $0xa8] sm:$0xff]
  %v1364 = vld [vmem:[%s14 + $0xb0] sm:$0xff]
  %v1365 = vld [vmem:[%s14 + $0xb8] sm:$0xff]
  %v1366 = vld [vmem:[%s14 + $0xc0] sm:$0xff]
  %v1367 = vld [vmem:[%s14 + $0xc8] sm:$0xff]
  %v1368 = vld [vmem:[%s14 + $0xd0] sm:$0xff]
  %v1369 = vld [vmem:[%s14 + $0xd8] sm:$0xff]
  %v1370 = vld [vmem:[%s14 + $0xe0] sm:$0xff]
  %v1371 = vld [vmem:[%s14 + $0xe8] sm:$0xff]
  %v1372 = vld [vmem:[%s14 + $0xf0] sm:$0xff]
  %v1373 = vld [vmem:[%s14 + $0xf8] sm:$0xff]
  %v1374 = vld [vmem:[%s15] sm:$0xff]
  %v1375 = vld [vmem:[%s15 + $0x8] sm:$0xff]
  %v1376 = vld [vmem:[%s15 + $0x10] sm:$0xff]
  %v1377 = vld [vmem:[%s15 + $0x18] sm:$0xff]
  %v1378 = vld [vmem:[%s15 + $0x20] sm:$0xff]
  %v1379 = vld [vmem:[%s15 + $0x28] sm:$0xff]
  %v1380 = vld [vmem:[%s15 + $0x30] sm:$0xff]
  %v1381 = vld [vmem:[%s15 + $0x38] sm:$0xff]
  %v1382 = vld [vmem:[%s15 + $0x40] sm:$0xff]
  %v1383 = vld [vmem:[%s15 + $0x48] sm:$0xff]
  %v1384 = vld [vmem:[%s15 + $0x50] sm:$0xff]
  %v1385 = vld [vmem:[%s15 + $0x58] sm:$0xff]
  %v1386 = vld [vmem:[%s15 + $0x60] sm:$0xff]
  %v1387 = vld [vmem:[%s15 + $0x68] sm:$0xff]
  %v1388 = vld [vmem:[%s15 + $0x70] sm:$0xff]
  %v1389 = vld [vmem:[%s15 + $0x78] sm:$0xff]
  %v1390 = vld [vmem:[%s15 + $0x80] sm:$0xff]
  %v1391 = vld [vmem:[%s15 + $0x88] sm:$0xff]
  %v1392 = vld [vmem:[%s15 + $0x90] sm:$0xff]
  %v1393 = vld [vmem:[%s15 + $0x98] sm:$0xff]
  %v1394 = vld [vmem:[%s15 + $0xa0] sm:$0xff]
  %v1395 = vld [vmem:[%s15 + $0xa8] sm:$0xff]
  %v1396 = vld [vmem:[%s15 + $0xb0] sm:$0xff]
  %v1397 = vld [vmem:[%s15 + $0xb8] sm:$0xff]
  %v1398 = vld [vmem:[%s15 + $0xc0] sm:$0xff]
  %v1399 = vld [vmem:[%s15 + $0xc8] sm:$0xff]
  %v1400 = vld [vmem:[%s15 + $0xd0] sm:$0xff]
  %v1401 = vld [vmem:[%s15 + $0xd8] sm:$0xff]
  %v1402 = vld [vmem:[%s16] sm:$0xff]
  %v1403 = vld [vmem:[%s16 + $0x8] sm:$0xff]
  %v1404 = vld [vmem:[%s16 + $0x10] sm:$0xff]
  %v1405 = vld [vmem:[%s16 + $0x18] sm:$0xff]
  %1407 = vset.pattern.permute.xlu0 0
  %1408 = vperm.xlu0 %1407, %v1374
  %v1409 = vpop.permute.xlu0 %1408
  %1412 = vset.pattern.permute.xlu0 0
  %1413 = vperm.xlu0 %1412, %v1375
  %v1414 = vpop.permute.xlu0 %1413
  %1417 = vset.pattern.permute.xlu0 0
  %1418 = vperm.xlu0 %1417, %v1376
  %v1419 = vpop.permute.xlu0 %1418
  %1422 = vset.pattern.permute.xlu0 0
  %1423 = vperm.xlu0 %1422, %v1377
  %v1424 = vpop.permute.xlu0 %1423
  %1427 = vset.pattern.permute.xlu0 0
  %1428 = vperm.xlu0 %1427, %v1378
  %v1429 = vpop.permute.xlu0 %1428
  %1432 = vset.pattern.permute.xlu0 0
  %1433 = vperm.xlu0 %1432, %v1379
  %v1434 = vpop.permute.xlu0 %1433
  %1437 = vset.pattern.permute.xlu0 0
  %1438 = vperm.xlu0 %1437, %v1380
  %v1439 = vpop.permute.xlu0 %1438
  %1442 = vset.pattern.permute.xlu0 0
  %1443 = vperm.xlu0 %1442, %v1381
  %v1444 = vpop.permute.xlu0 %1443
  %1447 = vset.pattern.permute.xlu0 0
  %1448 = vperm.xlu0 %1447, %v1382
  %v1449 = vpop.permute.xlu0 %1448
  %1452 = vset.pattern.permute.xlu0 0
  %1453 = vperm.xlu0 %1452, %v1383
  %v1454 = vpop.permute.xlu0 %1453
  %1457 = vset.pattern.permute.xlu0 0
  %1458 = vperm.xlu0 %1457, %v1384
  %v1459 = vpop.permute.xlu0 %1458
  %1462 = vset.pattern.permute.xlu0 0
  %1463 = vperm.xlu0 %1462, %v1385
  %v1464 = vpop.permute.xlu0 %1463
  %v1467 = vsel %vm214, %v1342, 0
  %v1470 = vsel %vm214, %v1343, 0
  %v1473 = vsel %vm214, %v1344, 0
  %v1476 = vsel %vm214, %v1345, 0
  %v1479 = vsel %vm214, %v1346, 0
  %v1482 = vsel %vm214, %v1347, 0
  %v1485 = vsel %vm214, %v1348, 0
  %v1488 = vsel %vm214, %v1349, 0
  %v1491 = vsel %vm214, %v1350, 0
  %v1494 = vsel %vm214, %v1351, 0
  %v1497 = vsel %vm214, %v1352, 0
  %v1500 = vsel %vm214, %v1353, 0
  %1502 = vmatpush.msra.mxu0 0.0
  %1503 = vmatpush.msra.mxu0 0.0
  %1504 = vmatpush.msra.mxu0 0.0
  %1505 = vmatpush.msra.mxu0 0.0
  %1506 = vmatpush.msra.mxu0 0.0
  %1507 = vmatpush.msra.mxu0 0.0
  %1508 = vmatpush.msra.mxu0 0.0
  %1509 = vmatpush.msra.mxu0 0.0
  %1510 = vmatpush.msra.mxu0 0.0
  %1511 = vmatpush.msra.mxu0 0.0
  %1512 = vmatpush.msra.mxu0 0.0
  %1513 = vmatpush.msra.mxu0 0.0
  %1514 = vmatpush.msra.mxu0 %v87
  %1515 = vmatpush.msra.mxu0 %v86
  %1516 = vmatpush.msra.mxu0 %v85
  %1517 = vmatpush.msra.mxu0 %v84
  %1518 = vmatmul.f32.gmra.mxu0 %v1467
  %v1519 = vpop.f32.mrf.mxu0
  %v1520 = vadd.f32 %v1409, %v1519
  %1521 = vmatmul.f32.gmra.mxu0 %v1470
  %v1522 = vpop.f32.mrf.mxu0
  %v1523 = vadd.f32 %v1414, %v1522
  %1524 = vmatmul.f32.gmra.mxu0 %v1473
  %v1525 = vpop.f32.mrf.mxu0
  %v1526 = vadd.f32 %v1419, %v1525
  %1527 = vmatmul.f32.gmra.mxu0 %v1476
  %v1528 = vpop.f32.mrf.mxu0
  %v1529 = vadd.f32 %v1424, %v1528
  %1530 = vmatmul.f32.gmra.mxu0 %v1479
  %v1531 = vpop.f32.mrf.mxu0
  %v1532 = vadd.f32 %v1429, %v1531
  %1533 = vmatmul.f32.gmra.mxu0 %v1482
  %v1534 = vpop.f32.mrf.mxu0
  %v1535 = vadd.f32 %v1434, %v1534
  %1536 = vmatmul.f32.gmra.mxu0 %v1485
  %v1537 = vpop.f32.mrf.mxu0
  %v1538 = vadd.f32 %v1439, %v1537
  %1539 = vmatmul.f32.gmra.mxu0 %v1488
  %v1540 = vpop.f32.mrf.mxu0
  %v1541 = vadd.f32 %v1444, %v1540
  %1542 = vmatmul.f32.gmra.mxu0 %v1491
  %v1543 = vpop.f32.mrf.mxu0
  %v1544 = vadd.f32 %v1449, %v1543
  %1545 = vmatmul.f32.gmra.mxu0 %v1494
  %v1546 = vpop.f32.mrf.mxu0
  %v1547 = vadd.f32 %v1454, %v1546
  %1548 = vmatmul.f32.gmra.mxu0 %v1497
  %v1549 = vpop.f32.mrf.mxu0
  %v1550 = vadd.f32 %v1459, %v1549
  %1551 = vmatmul.f32.gmra.mxu0 %v1500
  %v1552 = vpop.f32.mrf.mxu0
  %v1553 = vadd.f32 %v1464, %v1552
  %1554 = vdwg.mxu0
  %1555 = vxpose.xlu0.b32.start [1/16] %v1520, 128
  %1556 = vxpose.xlu0.b32.cont [2/16] 0.0, 128
  %1557 = vxpose.xlu0.b32.cont [3/16] 0.0, 128
  %1558 = vxpose.xlu0.b32.cont [4/16] 0.0, 128
  %1559 = vxpose.xlu0.b32.cont [5/16] 0.0, 128
  %1560 = vxpose.xlu0.b32.cont [6/16] 0.0, 128
  %1561 = vxpose.xlu0.b32.cont [7/16] 0.0, 128
  %1562 = vxpose.xlu0.b32.cont [8/16] 0.0, 128
  %1563 = vxpose.xlu0.b32.cont [9/16] 0.0, 128
  %1564 = vxpose.xlu0.b32.cont [10/16] 0.0, 128
  %1565 = vxpose.xlu0.b32.cont [11/16] 0.0, 128
  %1566 = vxpose.xlu0.b32.cont [12/16] 0.0, 128
  %1567 = vxpose.xlu0.b32.cont [13/16] 0.0, 128
  %1568 = vxpose.xlu0.b32.cont [14/16] 0.0, 128
  %1569 = vxpose.xlu0.b32.cont [15/16] 0.0, 128
  %1570 = vxpose.xlu0.b32.end [16/16] 0.0, 128
  %v1571 = vpop.trf.xlu0
  %v1572 = vpop.trf.xlu0
  %v1573 = vpop.trf.xlu0
  %v1574 = vpop.trf.xlu0
  %v1575 = vpop.trf.xlu0
  %v1576 = vpop.trf.xlu0
  %v1577 = vpop.trf.xlu0
  %v1578 = vpop.trf.xlu0
  %v1579 = vpop.trf.xlu0
  %v1580 = vpop.trf.xlu0
  %v1581 = vpop.trf.xlu0
  %v1582 = vpop.trf.xlu0
  %v1583 = vpop.trf.xlu0
  %v1584 = vpop.trf.xlu0
  %v1585 = vpop.trf.xlu0
  %v1586 = vpop.trf.xlu0
  %v1588 = vsel %vm336, %v1571, 0
  %v1591 = vsel %vm336, %v1572, 0
  %v1594 = vsel %vm336, %v1573, 0
  %v1597 = vsel %vm336, %v1574, 0
  %1599 = vmatpush.msra.mxu0 0.0
  %1600 = vmatpush.msra.mxu0 0.0
  %1601 = vmatpush.msra.mxu0 0.0
  %1602 = vmatpush.msra.mxu0 0.0
  %1603 = vmatpush.msra.mxu0 0.0
  %1604 = vmatpush.msra.mxu0 0.0
  %1605 = vmatpush.msra.mxu0 0.0
  %1606 = vmatpush.msra.mxu0 0.0
  %1607 = vmatpush.msra.mxu0 0.0
  %1608 = vmatpush.msra.mxu0 0.0
  %1609 = vmatpush.msra.mxu0 0.0
  %1610 = vmatpush.msra.mxu0 0.0
  %1611 = vmatpush.msra.mxu0 0.0
  %1612 = vmatpush.msra.mxu0 0.0
  %1613 = vmatpush.msra.mxu0 0.0
  %1614 = vmatpush.msra.mxu0 %v1532
  %1615 = vmatmul.f32.gmra.mxu0 %v1588
  %v1616 = vpop.f32.mrf.mxu0
  %v1617 = vadd.f32 0.0, %v1616
  %1618 = vmatmul.f32.gmra.mxu0 %v1591
  %v1619 = vpop.f32.mrf.mxu0
  %v1620 = vadd.f32 0.0, %v1619
  %1621 = vmatmul.f32.gmra.mxu0 %v1594
  %v1622 = vpop.f32.mrf.mxu0
  %v1623 = vadd.f32 0.0, %v1622
  %1624 = vmatmul.f32.gmra.mxu0 %v1597
  %v1625 = vpop.f32.mrf.mxu0
  %v1626 = vadd.f32 0.0, %v1625
  %1627 = vdwg.mxu0
  %v1628 = vmul.f32 %v1617, 0.35355338
  %v1629 = vmul.f32 %v1620, 0.35355338
  %v1630 = vmul.f32 %v1623, 0.35355338
  %v1631 = vmul.f32 %v1626, 0.35355338
  %v1632 = vadd.f32 %v1628, %v1338
  %v1633 = vadd.f32 %v1629, %v1339
  %v1634 = vadd.f32 %v1630, %v1340
  %v1635 = vadd.f32 %v1631, %v1341
  %v1636 = vsel %vm214, %v1632, -inf
  %1637 = vmax.xlane.f32.xlu0 %v1636
  %v1638 = vpop.xlane.xlu0 %1637
  %v1639 = vsel %vm214, %v1633, -inf
  %1640 = vmax.xlane.f32.xlu0 %v1639
  %v1641 = vpop.xlane.xlu0 %1640
  %v1642 = vsel %vm214, %v1634, -inf
  %1643 = vmax.xlane.f32.xlu0 %v1642
  %v1644 = vpop.xlane.xlu0 %1643
  %v1645 = vsel %vm214, %v1635, -inf
  %1646 = vmax.xlane.f32.xlu0 %v1645
  %v1647 = vpop.xlane.xlu0 %1646
  %v1648 = vsub.f32 %v1632, %v1638
  %v1649 = vsub.f32 %v1633, %v1641
  %v1650 = vsub.f32 %v1634, %v1644
  %v1651 = vsub.f32 %v1635, %v1647
  %v1652 = vmul.f32 %v1648, 1.442695
  %v1653 = vpow.pop %v1652
  %v1654 = vmul.f32 %v1649, 1.442695
  %v1655 = vpow.pop %v1654
  %v1656 = vmul.f32 %v1650, 1.442695
  %v1657 = vpow.pop %v1656
  %v1658 = vmul.f32 %v1651, 1.442695
  %v1659 = vpow.pop %v1658
  %v1660 = vsel %vm214, %v1653, 0.0
  %1661 = vadd.xlane.f32.xlu0 %v1660
  %v1662 = vpop.xlane.xlu0 %1661
  %v1663 = vsel %vm214, %v1655, 0.0
  %1664 = vadd.xlane.f32.xlu0 %v1663
  %v1665 = vpop.xlane.xlu0 %1664
  %v1666 = vsel %vm214, %v1657, 0.0
  %1667 = vadd.xlane.f32.xlu0 %v1666
  %v1668 = vpop.xlane.xlu0 %1667
  %v1669 = vsel %vm214, %v1659, 0.0
  %1670 = vadd.xlane.f32.xlu0 %v1669
  %v1671 = vpop.xlane.xlu0 %1670
  %v1672 = vrcp.pop %v1662
  %v1673 = vmul.f32 %v1662, %v1672
  %v1674 = vsub.f32 1.0, %v1673
  %v1675 = vmul.f32 %v1672, %v1674
  %v1676 = vadd.f32 %v1672, %v1675
  %vm1677 = vweird.f32 %v1662
  %vm1678 = vweird.f32 %v1672
  %vm1679 = vmor %vm1677, %vm1678
  %v1680 = vsel %vm1679, %v1672, %v1676
  %v1681 = vand.u32 2147483647, %v1662
  %vm1682 = vcmp.eq.f32.partialorder %v1681, 8.507059e+37
  %v1683 = vand.u32 %v1662, 2147483648
  %v1684 = vor.u32 1.1754944e-38, %v1683
  %v1685 = vsel %vm1682, %v1684, %v1680
  %v1686 = vmul.f32 %v1653, %v1685
  %v1687 = vrcp.pop %v1665
  %v1688 = vmul.f32 %v1665, %v1687
  %v1689 = vsub.f32 1.0, %v1688
  %v1690 = vmul.f32 %v1687, %v1689
  %v1691 = vadd.f32 %v1687, %v1690
  %vm1692 = vweird.f32 %v1665
  %vm1693 = vweird.f32 %v1687
  %vm1694 = vmor %vm1692, %vm1693
  %v1695 = vsel %vm1694, %v1687, %v1691
  %v1696 = vand.u32 2147483647, %v1665
  %vm1697 = vcmp.eq.f32.partialorder %v1696, 8.507059e+37
  %v1698 = vand.u32 %v1665, 2147483648
  %v1699 = vor.u32 1.1754944e-38, %v1698
  %v1700 = vsel %vm1697, %v1699, %v1695
  %v1701 = vmul.f32 %v1655, %v1700
  %v1702 = vrcp.pop %v1668
  %v1703 = vmul.f32 %v1668, %v1702
  %v1704 = vsub.f32 1.0, %v1703
  %v1705 = vmul.f32 %v1702, %v1704
  %v1706 = vadd.f32 %v1702, %v1705
  %vm1707 = vweird.f32 %v1668
  %vm1708 = vweird.f32 %v1702
  %vm1709 = vmor %vm1707, %vm1708
  %v1710 = vsel %vm1709, %v1702, %v1706
  %v1711 = vand.u32 2147483647, %v1668
  %vm1712 = vcmp.eq.f32.partialorder %v1711, 8.507059e+37
  %v1713 = vand.u32 %v1668, 2147483648
  %v1714 = vor.u32 1.1754944e-38, %v1713
  %v1715 = vsel %vm1712, %v1714, %v1710
  %v1716 = vmul.f32 %v1657, %v1715
  %v1717 = vrcp.pop %v1671
  %v1718 = vmul.f32 %v1671, %v1717
  %v1719 = vsub.f32 1.0, %v1718
  %v1720 = vmul.f32 %v1717, %v1719
  %v1721 = vadd.f32 %v1717, %v1720
  %vm1722 = vweird.f32 %v1671
  %vm1723 = vweird.f32 %v1717
  %vm1724 = vmor %vm1722, %vm1723
  %v1725 = vsel %vm1724, %v1717, %v1721
  %v1726 = vand.u32 2147483647, %v1671
  %vm1727 = vcmp.eq.f32.partialorder %v1726, 8.507059e+37
  %v1728 = vand.u32 %v1671, 2147483648
  %v1729 = vor.u32 1.1754944e-38, %v1728
  %v1730 = vsel %vm1727, %v1729, %v1725
  %v1731 = vmul.f32 %v1659, %v1730
  %v1733 = vsel %vm214, %v1544, 0
  %v1736 = vsel %vm214, %v1686, 0
  %v1739 = vsel %vm214, %v1701, 0
  %v1742 = vsel %vm214, %v1716, 0
  %v1745 = vsel %vm214, %v1731, 0
  %1747 = vmatpush.xpose.msra.mxu0 0.0
  %1748 = vmatpush.xpose.msra.mxu0 0.0
  %1749 = vmatpush.xpose.msra.mxu0 0.0
  %1750 = vmatpush.xpose.msra.mxu0 0.0
  %1751 = vmatpush.xpose.msra.mxu0 0.0
  %1752 = vmatpush.xpose.msra.mxu0 0.0
  %1753 = vmatpush.xpose.msra.mxu0 0.0
  %1754 = vmatpush.xpose.msra.mxu0 0.0
  %1755 = vmatpush.xpose.msra.mxu0 0.0
  %1756 = vmatpush.xpose.msra.mxu0 0.0
  %1757 = vmatpush.xpose.msra.mxu0 0.0
  %1758 = vmatpush.xpose.msra.mxu0 0.0
  %1759 = vmatpush.xpose.msra.mxu0 %v1745
  %1760 = vmatpush.xpose.msra.mxu0 %v1742
  %1761 = vmatpush.xpose.msra.mxu0 %v1739
  %1762 = vmatpush.xpose.msra.mxu0 %v1736
  %1763 = vmatmul.f32.gmra.mxu0 %v1733
  %v1764 = vpop.f32.mrf.mxu0
  %v1765 = vadd.f32 0.0, %v1764
  %1766 = vdwg.mxu0
  %v1768 = vsel %vm336, %v1354, 0
  %v1771 = vsel %vm336, %v1355, 0
  %v1774 = vsel %vm336, %v1356, 0
  %v1777 = vsel %vm336, %v1357, 0
  %1779 = vmatpush.msra.mxu0 0.0
  %1780 = vmatpush.msra.mxu0 0.0
  %1781 = vmatpush.msra.mxu0 0.0
  %1782 = vmatpush.msra.mxu0 0.0
  %1783 = vmatpush.msra.mxu0 0.0
  %1784 = vmatpush.msra.mxu0 0.0
  %1785 = vmatpush.msra.mxu0 0.0
  %1786 = vmatpush.msra.mxu0 0.0
  %1787 = vmatpush.msra.mxu0 0.0
  %1788 = vmatpush.msra.mxu0 0.0
  %1789 = vmatpush.msra.mxu0 0.0
  %1790 = vmatpush.msra.mxu0 0.0
  %1791 = vmatpush.msra.mxu0 0.0
  %1792 = vmatpush.msra.mxu0 0.0
  %1793 = vmatpush.msra.mxu0 0.0
  %1794 = vmatpush.msra.mxu0 %v1765
  %1795 = vmatmul.f32.gmra.mxu0 %v1768
  %v1796 = vpop.f32.mrf.mxu0
  %v1797 = vadd.f32 0.0, %v1796
  %1798 = vmatmul.f32.gmra.mxu0 %v1771
  %v1799 = vpop.f32.mrf.mxu0
  %v1800 = vadd.f32 0.0, %v1799
  %1801 = vmatmul.f32.gmra.mxu0 %v1774
  %v1802 = vpop.f32.mrf.mxu0
  %v1803 = vadd.f32 0.0, %v1802
  %1804 = vmatmul.f32.gmra.mxu0 %v1777
  %v1805 = vpop.f32.mrf.mxu0
  %v1806 = vadd.f32 0.0, %v1805
  %1807 = vdwg.mxu0
  %1809 = vset.pattern.permute.xlu0 0
  %1810 = vperm.xlu0 %1809, %v1386
  %v1811 = vpop.permute.xlu0 %1810
  %1814 = vset.pattern.permute.xlu0 0
  %1815 = vperm.xlu0 %1814, %v1387
  %v1816 = vpop.permute.xlu0 %1815
  %1819 = vset.pattern.permute.xlu0 0
  %1820 = vperm.xlu0 %1819, %v1388
  %v1821 = vpop.permute.xlu0 %1820
  %1824 = vset.pattern.permute.xlu0 0
  %1825 = vperm.xlu0 %1824, %v1389
  %v1826 = vpop.permute.xlu0 %1825
  %v1828 = vadd.f32 %v1811, %v1797
  %v1829 = vadd.f32 %v1816, %v1800
  %v1830 = vadd.f32 %v1821, %v1803
  %v1831 = vadd.f32 %v1826, %v1806
  %1832 = vxpose.xlu0.b32.start [1/16] %v1523, 128
  %1833 = vxpose.xlu0.b32.cont [2/16] 0.0, 128
  %1834 = vxpose.xlu0.b32.cont [3/16] 0.0, 128
  %1835 = vxpose.xlu0.b32.cont [4/16] 0.0, 128
  %1836 = vxpose.xlu0.b32.cont [5/16] 0.0, 128
  %1837 = vxpose.xlu0.b32.cont [6/16] 0.0, 128
  %1838 = vxpose.xlu0.b32.cont [7/16] 0.0, 128
  %1839 = vxpose.xlu0.b32.cont [8/16] 0.0, 128
  %1840 = vxpose.xlu0.b32.cont [9/16] 0.0, 128
  %1841 = vxpose.xlu0.b32.cont [10/16] 0.0, 128
  %1842 = vxpose.xlu0.b32.cont [11/16] 0.0, 128
  %1843 = vxpose.xlu0.b32.cont [12/16] 0.0, 128
  %1844 = vxpose.xlu0.b32.cont [13/16] 0.0, 128
  %1845 = vxpose.xlu0.b32.cont [14/16] 0.0, 128
  %1846 = vxpose.xlu0.b32.cont [15/16] 0.0, 128
  %1847 = vxpose.xlu0.b32.end [16/16] 0.0, 128
  %v1848 = vpop.trf.xlu0
  %v1849 = vpop.trf.xlu0
  %v1850 = vpop.trf.xlu0
  %v1851 = vpop.trf.xlu0
  %v1852 = vpop.trf.xlu0
  %v1853 = vpop.trf.xlu0
  %v1854 = vpop.trf.xlu0
  %v1855 = vpop.trf.xlu0
  %v1856 = vpop.trf.xlu0
  %v1857 = vpop.trf.xlu0
  %v1858 = vpop.trf.xlu0
  %v1859 = vpop.trf.xlu0
  %v1860 = vpop.trf.xlu0
  %v1861 = vpop.trf.xlu0
  %v1862 = vpop.trf.xlu0
  %v1863 = vpop.trf.xlu0
  %v1865 = vsel %vm336, %v1848, 0
  %v1868 = vsel %vm336, %v1849, 0
  %v1871 = vsel %vm336, %v1850, 0
  %v1874 = vsel %vm336, %v1851, 0
  %1876 = vmatpush.msra.mxu0 0.0
  %1877 = vmatpush.msra.mxu0 0.0
  %1878 = vmatpush.msra.mxu0 0.0
  %1879 = vmatpush.msra.mxu0 0.0
  %1880 = vmatpush.msra.mxu0 0.0
  %1881 = vmatpush.msra.mxu0 0.0
  %1882 = vmatpush.msra.mxu0 0.0
  %1883 = vmatpush.msra.mxu0 0.0
  %1884 = vmatpush.msra.mxu0 0.0
  %1885 = vmatpush.msra.mxu0 0.0
  %1886 = vmatpush.msra.mxu0 0.0
  %1887 = vmatpush.msra.mxu0 0.0
  %1888 = vmatpush.msra.mxu0 0.0
  %1889 = vmatpush.msra.mxu0 0.0
  %1890 = vmatpush.msra.mxu0 0.0
  %1891 = vmatpush.msra.mxu0 %v1535
  %1892 = vmatmul.f32.gmra.mxu0 %v1865
  %v1893 = vpop.f32.mrf.mxu0
  %v1894 = vadd.f32 0.0, %v1893
  %1895 = vmatmul.f32.gmra.mxu0 %v1868
  %v1896 = vpop.f32.mrf.mxu0
  %v1897 = vadd.f32 0.0, %v1896
  %1898 = vmatmul.f32.gmra.mxu0 %v1871
  %v1899 = vpop.f32.mrf.mxu0
  %v1900 = vadd.f32 0.0, %v1899
  %1901 = vmatmul.f32.gmra.mxu0 %v1874
  %v1902 = vpop.f32.mrf.mxu0
  %v1903 = vadd.f32 0.0, %v1902
  %1904 = vdwg.mxu0
  %v1905 = vmul.f32 %v1894, 0.35355338
  %v1906 = vmul.f32 %v1897, 0.35355338
  %v1907 = vmul.f32 %v1900, 0.35355338
  %v1908 = vmul.f32 %v1903, 0.35355338
  %v1909 = vadd.f32 %v1905, %v1338
  %v1910 = vadd.f32 %v1906, %v1339
  %v1911 = vadd.f32 %v1907, %v1340
  %v1912 = vadd.f32 %v1908, %v1341
  %v1913 = vsel %vm214, %v1909, -inf
  %1914 = vmax.xlane.f32.xlu0 %v1913
  %v1915 = vpop.xlane.xlu0 %1914
  %v1916 = vsel %vm214, %v1910, -inf
  %1917 = vmax.xlane.f32.xlu0 %v1916
  %v1918 = vpop.xlane.xlu0 %1917
  %v1919 = vsel %vm214, %v1911, -inf
  %1920 = vmax.xlane.f32.xlu0 %v1919
  %v1921 = vpop.xlane.xlu0 %1920
  %v1922 = vsel %vm214, %v1912, -inf
  %1923 = vmax.xlane.f32.xlu0 %v1922
  %v1924 = vpop.xlane.xlu0 %1923
  %v1925 = vsub.f32 %v1909, %v1915
  %v1926 = vsub.f32 %v1910, %v1918
  %v1927 = vsub.f32 %v1911, %v1921
  %v1928 = vsub.f32 %v1912, %v1924
  %v1929 = vmul.f32 %v1925, 1.442695
  %v1930 = vpow.pop %v1929
  %v1931 = vmul.f32 %v1926, 1.442695
  %v1932 = vpow.pop %v1931
  %v1933 = vmul.f32 %v1927, 1.442695
  %v1934 = vpow.pop %v1933
  %v1935 = vmul.f32 %v1928, 1.442695
  %v1936 = vpow.pop %v1935
  %v1937 = vsel %vm214, %v1930, 0.0
  %1938 = vadd.xlane.f32.xlu0 %v1937
  %v1939 = vpop.xlane.xlu0 %1938
  %v1940 = vsel %vm214, %v1932, 0.0
  %1941 = vadd.xlane.f32.xlu0 %v1940
  %v1942 = vpop.xlane.xlu0 %1941
  %v1943 = vsel %vm214, %v1934, 0.0
  %1944 = vadd.xlane.f32.xlu0 %v1943
  %v1945 = vpop.xlane.xlu0 %1944
  %v1946 = vsel %vm214, %v1936, 0.0
  %1947 = vadd.xlane.f32.xlu0 %v1946
  %v1948 = vpop.xlane.xlu0 %1947
  %v1949 = vrcp.pop %v1939
  %v1950 = vmul.f32 %v1939, %v1949
  %v1951 = vsub.f32 1.0, %v1950
  %v1952 = vmul.f32 %v1949, %v1951
  %v1953 = vadd.f32 %v1949, %v1952
  %vm1954 = vweird.f32 %v1939
  %vm1955 = vweird.f32 %v1949
  %vm1956 = vmor %vm1954, %vm1955
  %v1957 = vsel %vm1956, %v1949, %v1953
  %v1958 = vand.u32 2147483647, %v1939
  %vm1959 = vcmp.eq.f32.partialorder %v1958, 8.507059e+37
  %v1960 = vand.u32 %v1939, 2147483648
  %v1961 = vor.u32 1.1754944e-38, %v1960
  %v1962 = vsel %vm1959, %v1961, %v1957
  %v1963 = vmul.f32 %v1930, %v1962
  %v1964 = vrcp.pop %v1942
  %v1965 = vmul.f32 %v1942, %v1964
  %v1966 = vsub.f32 1.0, %v1965
  %v1967 = vmul.f32 %v1964, %v1966
  %v1968 = vadd.f32 %v1964, %v1967
  %vm1969 = vweird.f32 %v1942
  %vm1970 = vweird.f32 %v1964
  %vm1971 = vmor %vm1969, %vm1970
  %v1972 = vsel %vm1971, %v1964, %v1968
  %v1973 = vand.u32 2147483647, %v1942
  %vm1974 = vcmp.eq.f32.partialorder %v1973, 8.507059e+37
  %v1975 = vand.u32 %v1942, 2147483648
  %v1976 = vor.u32 1.1754944e-38, %v1975
  %v1977 = vsel %vm1974, %v1976, %v1972
  %v1978 = vmul.f32 %v1932, %v1977
  %v1979 = vrcp.pop %v1945
  %v1980 = vmul.f32 %v1945, %v1979
  %v1981 = vsub.f32 1.0, %v1980
  %v1982 = vmul.f32 %v1979, %v1981
  %v1983 = vadd.f32 %v1979, %v1982
  %vm1984 = vweird.f32 %v1945
  %vm1985 = vweird.f32 %v1979
  %vm1986 = vmor %vm1984, %vm1985
  %v1987 = vsel %vm1986, %v1979, %v1983
  %v1988 = vand.u32 2147483647, %v1945
  %vm1989 = vcmp.eq.f32.partialorder %v1988, 8.507059e+37
  %v1990 = vand.u32 %v1945, 2147483648
  %v1991 = vor.u32 1.1754944e-38, %v1990
  %v1992 = vsel %vm1989, %v1991, %v1987
  %v1993 = vmul.f32 %v1934, %v1992
  %v1994 = vrcp.pop %v1948
  %v1995 = vmul.f32 %v1948, %v1994
  %v1996 = vsub.f32 1.0, %v1995
  %v1997 = vmul.f32 %v1994, %v1996
  %v1998 = vadd.f32 %v1994, %v1997
  %vm1999 = vweird.f32 %v1948
  %vm2000 = vweird.f32 %v1994
  %vm2001 = vmor %vm1999, %vm2000
  %v2002 = vsel %vm2001, %v1994, %v1998
  %v2003 = vand.u32 2147483647, %v1948
  %vm2004 = vcmp.eq.f32.partialorder %v2003, 8.507059e+37
  %v2005 = vand.u32 %v1948, 2147483648
  %v2006 = vor.u32 1.1754944e-38, %v2005
  %v2007 = vsel %vm2004, %v2006, %v2002
  %v2008 = vmul.f32 %v1936, %v2007
  %v2010 = vsel %vm214, %v1547, 0
  %v2013 = vsel %vm214, %v1963, 0
  %v2016 = vsel %vm214, %v1978, 0
  %v2019 = vsel %vm214, %v1993, 0
  %v2022 = vsel %vm214, %v2008, 0
  %2024 = vmatpush.xpose.msra.mxu0 0.0
  %2025 = vmatpush.xpose.msra.mxu0 0.0
  %2026 = vmatpush.xpose.msra.mxu0 0.0
  %2027 = vmatpush.xpose.msra.mxu0 0.0
  %2028 = vmatpush.xpose.msra.mxu0 0.0
  %2029 = vmatpush.xpose.msra.mxu0 0.0
  %2030 = vmatpush.xpose.msra.mxu0 0.0
  %2031 = vmatpush.xpose.msra.mxu0 0.0
  %2032 = vmatpush.xpose.msra.mxu0 0.0
  %2033 = vmatpush.xpose.msra.mxu0 0.0
  %2034 = vmatpush.xpose.msra.mxu0 0.0
  %2035 = vmatpush.xpose.msra.mxu0 0.0
  %2036 = vmatpush.xpose.msra.mxu0 %v2022
  %2037 = vmatpush.xpose.msra.mxu0 %v2019
  %2038 = vmatpush.xpose.msra.mxu0 %v2016
  %2039 = vmatpush.xpose.msra.mxu0 %v2013
  %2040 = vmatmul.f32.gmra.mxu0 %v2010
  %v2041 = vpop.f32.mrf.mxu0
  %v2042 = vadd.f32 0.0, %v2041
  %2043 = vdwg.mxu0
  %2044 = vrot.lane.b32.xlu0 %v1354, 120
  %v2045 = vpop.permute.xlu0 %2044
  %2046 = vrot.lane.b32.xlu0 %v1355, 120
  %v2047 = vpop.permute.xlu0 %2046
  %2048 = vrot.lane.b32.xlu0 %v1356, 120
  %v2049 = vpop.permute.xlu0 %2048
  %2050 = vrot.lane.b32.xlu0 %v1357, 120
  %v2051 = vpop.permute.xlu0 %2050
  %v2052 = vsel %vm336, %v2045, 0
  %v2054 = vsel %vm336, %v2047, 0
  %v2056 = vsel %vm336, %v2049, 0
  %v2058 = vsel %vm336, %v2051, 0
  %2060 = vmatpush.msra.mxu0 0.0
  %2061 = vmatpush.msra.mxu0 0.0
  %2062 = vmatpush.msra.mxu0 0.0
  %2063 = vmatpush.msra.mxu0 0.0
  %2064 = vmatpush.msra.mxu0 0.0
  %2065 = vmatpush.msra.mxu0 0.0
  %2066 = vmatpush.msra.mxu0 0.0
  %2067 = vmatpush.msra.mxu0 0.0
  %2068 = vmatpush.msra.mxu0 0.0
  %2069 = vmatpush.msra.mxu0 0.0
  %2070 = vmatpush.msra.mxu0 0.0
  %2071 = vmatpush.msra.mxu0 0.0
  %2072 = vmatpush.msra.mxu0 0.0
  %2073 = vmatpush.msra.mxu0 0.0
  %2074 = vmatpush.msra.mxu0 0.0
  %2075 = vmatpush.msra.mxu0 %v2042
  %2076 = vmatmul.f32.gmra.mxu0 %v2052
  %v2077 = vpop.f32.mrf.mxu0
  %v2078 = vadd.f32 0.0, %v2077
  %2079 = vmatmul.f32.gmra.mxu0 %v2054
  %v2080 = vpop.f32.mrf.mxu0
  %v2081 = vadd.f32 0.0, %v2080
  %2082 = vmatmul.f32.gmra.mxu0 %v2056
  %v2083 = vpop.f32.mrf.mxu0
  %v2084 = vadd.f32 0.0, %v2083
  %2085 = vmatmul.f32.gmra.mxu0 %v2058
  %v2086 = vpop.f32.mrf.mxu0
  %v2087 = vadd.f32 0.0, %v2086
  %2088 = vdwg.mxu0
  %v2089 = vadd.f32 %v1828, %v2078
  %v2090 = vadd.f32 %v1829, %v2081
  %v2091 = vadd.f32 %v1830, %v2084
  %v2092 = vadd.f32 %v1831, %v2087
  %2093 = vxpose.xlu0.b32.start [1/16] %v1526, 128
  %2094 = vxpose.xlu0.b32.cont [2/16] 0.0, 128
  %2095 = vxpose.xlu0.b32.cont [3/16] 0.0, 128
  %2096 = vxpose.xlu0.b32.cont [4/16] 0.0, 128
  %2097 = vxpose.xlu0.b32.cont [5/16] 0.0, 128
  %2098 = vxpose.xlu0.b32.cont [6/16] 0.0, 128
  %2099 = vxpose.xlu0.b32.cont [7/16] 0.0, 128
  %2100 = vxpose.xlu0.b32.cont [8/16] 0.0, 128
  %2101 = vxpose.xlu0.b32.cont [9/16] 0.0, 128
  %2102 = vxpose.xlu0.b32.cont [10/16] 0.0, 128
  %2103 = vxpose.xlu0.b32.cont [11/16] 0.0, 128
  %2104 = vxpose.xlu0.b32.cont [12/16] 0.0, 128
  %2105 = vxpose.xlu0.b32.cont [13/16] 0.0, 128
  %2106 = vxpose.xlu0.b32.cont [14/16] 0.0, 128
  %2107 = vxpose.xlu0.b32.cont [15/16] 0.0, 128
  %2108 = vxpose.xlu0.b32.end [16/16] 0.0, 128
  %v2109 = vpop.trf.xlu0
  %v2110 = vpop.trf.xlu0
  %v2111 = vpop.trf.xlu0
  %v2112 = vpop.trf.xlu0
  %v2113 = vpop.trf.xlu0
  %v2114 = vpop.trf.xlu0
  %v2115 = vpop.trf.xlu0
  %v2116 = vpop.trf.xlu0
  %v2117 = vpop.trf.xlu0
  %v2118 = vpop.trf.xlu0
  %v2119 = vpop.trf.xlu0
  %v2120 = vpop.trf.xlu0
  %v2121 = vpop.trf.xlu0
  %v2122 = vpop.trf.xlu0
  %v2123 = vpop.trf.xlu0
  %v2124 = vpop.trf.xlu0
  %v2126 = vsel %vm336, %v2109, 0
  %v2129 = vsel %vm336, %v2110, 0
  %v2132 = vsel %vm336, %v2111, 0
  %v2135 = vsel %vm336, %v2112, 0
  %2137 = vmatpush.msra.mxu0 0.0
  %2138 = vmatpush.msra.mxu0 0.0
  %2139 = vmatpush.msra.mxu0 0.0
  %2140 = vmatpush.msra.mxu0 0.0
  %2141 = vmatpush.msra.mxu0 0.0
  %2142 = vmatpush.msra.mxu0 0.0
  %2143 = vmatpush.msra.mxu0 0.0
  %2144 = vmatpush.msra.mxu0 0.0
  %2145 = vmatpush.msra.mxu0 0.0
  %2146 = vmatpush.msra.mxu0 0.0
  %2147 = vmatpush.msra.mxu0 0.0
  %2148 = vmatpush.msra.mxu0 0.0
  %2149 = vmatpush.msra.mxu0 0.0
  %2150 = vmatpush.msra.mxu0 0.0
  %2151 = vmatpush.msra.mxu0 0.0
  %2152 = vmatpush.msra.mxu0 %v1538
  %2153 = vmatmul.f32.gmra.mxu0 %v2126
  %v2154 = vpop.f32.mrf.mxu0
  %v2155 = vadd.f32 0.0, %v2154
  %2156 = vmatmul.f32.gmra.mxu0 %v2129
  %v2157 = vpop.f32.mrf.mxu0
  %v2158 = vadd.f32 0.0, %v2157
  %2159 = vmatmul.f32.gmra.mxu0 %v2132
  %v2160 = vpop.f32.mrf.mxu0
  %v2161 = vadd.f32 0.0, %v2160
  %2162 = vmatmul.f32.gmra.mxu0 %v2135
  %v2163 = vpop.f32.mrf.mxu0
  %v2164 = vadd.f32 0.0, %v2163
  %2165 = vdwg.mxu0
  %v2166 = vmul.f32 %v2155, 0.35355338
  %v2167 = vmul.f32 %v2158, 0.35355338
  %v2168 = vmul.f32 %v2161, 0.35355338
  %v2169 = vmul.f32 %v2164, 0.35355338
  %v2170 = vadd.f32 %v2166, %v1338
  %v2171 = vadd.f32 %v2167, %v1339
  %v2172 = vadd.f32 %v2168, %v1340
  %v2173 = vadd.f32 %v2169, %v1341
  %v2174 = vsel %vm214, %v2170, -inf
  %2175 = vmax.xlane.f32.xlu0 %v2174
  %v2176 = vpop.xlane.xlu0 %2175
  %v2177 = vsel %vm214, %v2171, -inf
  %2178 = vmax.xlane.f32.xlu0 %v2177
  %v2179 = vpop.xlane.xlu0 %2178
  %v2180 = vsel %vm214, %v2172, -inf
  %2181 = vmax.xlane.f32.xlu0 %v2180
  %v2182 = vpop.xlane.xlu0 %2181
  %v2183 = vsel %vm214, %v2173, -inf
  %2184 = vmax.xlane.f32.xlu0 %v2183
  %v2185 = vpop.xlane.xlu0 %2184
  %v2186 = vsub.f32 %v2170, %v2176
  %v2187 = vsub.f32 %v2171, %v2179
  %v2188 = vsub.f32 %v2172, %v2182
  %v2189 = vsub.f32 %v2173, %v2185
  %v2190 = vmul.f32 %v2186, 1.442695
  %v2191 = vpow.pop %v2190
  %v2192 = vmul.f32 %v2187, 1.442695
  %v2193 = vpow.pop %v2192
  %v2194 = vmul.f32 %v2188, 1.442695
  %v2195 = vpow.pop %v2194
  %v2196 = vmul.f32 %v2189, 1.442695
  %v2197 = vpow.pop %v2196
  %v2198 = vsel %vm214, %v2191, 0.0
  %2199 = vadd.xlane.f32.xlu0 %v2198
  %v2200 = vpop.xlane.xlu0 %2199
  %v2201 = vsel %vm214, %v2193, 0.0
  %2202 = vadd.xlane.f32.xlu0 %v2201
  %v2203 = vpop.xlane.xlu0 %2202
  %v2204 = vsel %vm214, %v2195, 0.0
  %2205 = vadd.xlane.f32.xlu0 %v2204
  %v2206 = vpop.xlane.xlu0 %2205
  %v2207 = vsel %vm214, %v2197, 0.0
  %2208 = vadd.xlane.f32.xlu0 %v2207
  %v2209 = vpop.xlane.xlu0 %2208
  %v2210 = vrcp.pop %v2200
  %v2211 = vmul.f32 %v2200, %v2210
  %v2212 = vsub.f32 1.0, %v2211
  %v2213 = vmul.f32 %v2210, %v2212
  %v2214 = vadd.f32 %v2210, %v2213
  %vm2215 = vweird.f32 %v2200
  %vm2216 = vweird.f32 %v2210
  %vm2217 = vmor %vm2215, %vm2216
  %v2218 = vsel %vm2217, %v2210, %v2214
  %v2219 = vand.u32 2147483647, %v2200
  %vm2220 = vcmp.eq.f32.partialorder %v2219, 8.507059e+37
  %v2221 = vand.u32 %v2200, 2147483648
  %v2222 = vor.u32 1.1754944e-38, %v2221
  %v2223 = vsel %vm2220, %v2222, %v2218
  %v2224 = vmul.f32 %v2191, %v2223
  %v2225 = vrcp.pop %v2203
  %v2226 = vmul.f32 %v2203, %v2225
  %v2227 = vsub.f32 1.0, %v2226
  %v2228 = vmul.f32 %v2225, %v2227
  %v2229 = vadd.f32 %v2225, %v2228
  %vm2230 = vweird.f32 %v2203
  %vm2231 = vweird.f32 %v2225
  %vm2232 = vmor %vm2230, %vm2231
  %v2233 = vsel %vm2232, %v2225, %v2229
  %v2234 = vand.u32 2147483647, %v2203
  %vm2235 = vcmp.eq.f32.partialorder %v2234, 8.507059e+37
  %v2236 = vand.u32 %v2203, 2147483648
  %v2237 = vor.u32 1.1754944e-38, %v2236
  %v2238 = vsel %vm2235, %v2237, %v2233
  %v2239 = vmul.f32 %v2193, %v2238
  %v2240 = vrcp.pop %v2206
  %v2241 = vmul.f32 %v2206, %v2240
  %v2242 = vsub.f32 1.0, %v2241
  %v2243 = vmul.f32 %v2240, %v2242
  %v2244 = vadd.f32 %v2240, %v2243
  %vm2245 = vweird.f32 %v2206
  %vm2246 = vweird.f32 %v2240
  %vm2247 = vmor %vm2245, %vm2246
  %v2248 = vsel %vm2247, %v2240, %v2244
  %v2249 = vand.u32 2147483647, %v2206
  %vm2250 = vcmp.eq.f32.partialorder %v2249, 8.507059e+37
  %v2251 = vand.u32 %v2206, 2147483648
  %v2252 = vor.u32 1.1754944e-38, %v2251
  %v2253 = vsel %vm2250, %v2252, %v2248
  %v2254 = vmul.f32 %v2195, %v2253
  %v2255 = vrcp.pop %v2209
  %v2256 = vmul.f32 %v2209, %v2255
  %v2257 = vsub.f32 1.0, %v2256
  %v2258 = vmul.f32 %v2255, %v2257
  %v2259 = vadd.f32 %v2255, %v2258
  %vm2260 = vweird.f32 %v2209
  %vm2261 = vweird.f32 %v2255
  %vm2262 = vmor %vm2260, %vm2261
  %v2263 = vsel %vm2262, %v2255, %v2259
  %v2264 = vand.u32 2147483647, %v2209
  %vm2265 = vcmp.eq.f32.partialorder %v2264, 8.507059e+37
  %v2266 = vand.u32 %v2209, 2147483648
  %v2267 = vor.u32 1.1754944e-38, %v2266
  %v2268 = vsel %vm2265, %v2267, %v2263
  %v2269 = vmul.f32 %v2197, %v2268
  %v2271 = vsel %vm214, %v1550, 0
  %v2274 = vsel %vm214, %v2224, 0
  %v2277 = vsel %vm214, %v2239, 0
  %v2280 = vsel %vm214, %v2254, 0
  %v2283 = vsel %vm214, %v2269, 0
  %2285 = vmatpush.xpose.msra.mxu0 0.0
  %2286 = vmatpush.xpose.msra.mxu0 0.0
  %2287 = vmatpush.xpose.msra.mxu0 0.0
  %2288 = vmatpush.xpose.msra.mxu0 0.0
  %2289 = vmatpush.xpose.msra.mxu0 0.0
  %2290 = vmatpush.xpose.msra.mxu0 0.0
  %2291 = vmatpush.xpose.msra.mxu0 0.0
  %2292 = vmatpush.xpose.msra.mxu0 0.0
  %2293 = vmatpush.xpose.msra.mxu0 0.0
  %2294 = vmatpush.xpose.msra.mxu0 0.0
  %2295 = vmatpush.xpose.msra.mxu0 0.0
  %2296 = vmatpush.xpose.msra.mxu0 0.0
  %2297 = vmatpush.xpose.msra.mxu0 %v2283
  %2298 = vmatpush.xpose.msra.mxu0 %v2280
  %2299 = vmatpush.xpose.msra.mxu0 %v2277
  %2300 = vmatpush.xpose.msra.mxu0 %v2274
  %2301 = vmatmul.f32.gmra.mxu0 %v2271
  %v2302 = vpop.f32.mrf.mxu0
  %v2303 = vadd.f32 0.0, %v2302
  %2304 = vdwg.mxu0
  %2305 = vrot.lane.b32.xlu0 %v1354, 112
  %v2306 = vpop.permute.xlu0 %2305
  %2307 = vrot.lane.b32.xlu0 %v1355, 112
  %v2308 = vpop.permute.xlu0 %2307
  %2309 = vrot.lane.b32.xlu0 %v1356, 112
  %v2310 = vpop.permute.xlu0 %2309
  %2311 = vrot.lane.b32.xlu0 %v1357, 112
  %v2312 = vpop.permute.xlu0 %2311
  %v2313 = vsel %vm336, %v2306, 0
  %v2315 = vsel %vm336, %v2308, 0
  %v2317 = vsel %vm336, %v2310, 0
  %v2319 = vsel %vm336, %v2312, 0
  %2321 = vmatpush.msra.mxu0 0.0
  %2322 = vmatpush.msra.mxu0 0.0
  %2323 = vmatpush.msra.mxu0 0.0
  %2324 = vmatpush.msra.mxu0 0.0
  %2325 = vmatpush.msra.mxu0 0.0
  %2326 = vmatpush.msra.mxu0 0.0
  %2327 = vmatpush.msra.mxu0 0.0
  %2328 = vmatpush.msra.mxu0 0.0
  %2329 = vmatpush.msra.mxu0 0.0
  %2330 = vmatpush.msra.mxu0 0.0
  %2331 = vmatpush.msra.mxu0 0.0
  %2332 = vmatpush.msra.mxu0 0.0
  %2333 = vmatpush.msra.mxu0 0.0
  %2334 = vmatpush.msra.mxu0 0.0
  %2335 = vmatpush.msra.mxu0 0.0
  %2336 = vmatpush.msra.mxu0 %v2303
  %2337 = vmatmul.f32.gmra.mxu0 %v2313
  %v2338 = vpop.f32.mrf.mxu0
  %v2339 = vadd.f32 0.0, %v2338
  %2340 = vmatmul.f32.gmra.mxu0 %v2315
  %v2341 = vpop.f32.mrf.mxu0
  %v2342 = vadd.f32 0.0, %v2341
  %2343 = vmatmul.f32.gmra.mxu0 %v2317
  %v2344 = vpop.f32.mrf.mxu0
  %v2345 = vadd.f32 0.0, %v2344
  %2346 = vmatmul.f32.gmra.mxu0 %v2319
  %v2347 = vpop.f32.mrf.mxu0
  %v2348 = vadd.f32 0.0, %v2347
  %2349 = vdwg.mxu0
  %v2350 = vadd.f32 %v2089, %v2339
  %v2351 = vadd.f32 %v2090, %v2342
  %v2352 = vadd.f32 %v2091, %v2345
  %v2353 = vadd.f32 %v2092, %v2348
  %2354 = vxpose.xlu0.b32.start [1/16] %v1529, 128
  %2355 = vxpose.xlu0.b32.cont [2/16] 0.0, 128
  %2356 = vxpose.xlu0.b32.cont [3/16] 0.0, 128
  %2357 = vxpose.xlu0.b32.cont [4/16] 0.0, 128
  %2358 = vxpose.xlu0.b32.cont [5/16] 0.0, 128
  %2359 = vxpose.xlu0.b32.cont [6/16] 0.0, 128
  %2360 = vxpose.xlu0.b32.cont [7/16] 0.0, 128
  %2361 = vxpose.xlu0.b32.cont [8/16] 0.0, 128
  %2362 = vxpose.xlu0.b32.cont [9/16] 0.0, 128
  %2363 = vxpose.xlu0.b32.cont [10/16] 0.0, 128
  %2364 = vxpose.xlu0.b32.cont [11/16] 0.0, 128
  %2365 = vxpose.xlu0.b32.cont [12/16] 0.0, 128
  %2366 = vxpose.xlu0.b32.cont [13/16] 0.0, 128
  %2367 = vxpose.xlu0.b32.cont [14/16] 0.0, 128
  %2368 = vxpose.xlu0.b32.cont [15/16] 0.0, 128
  %2369 = vxpose.xlu0.b32.end [16/16] 0.0, 128
  %v2370 = vpop.trf.xlu0
  %v2371 = vpop.trf.xlu0
  %v2372 = vpop.trf.xlu0
  %v2373 = vpop.trf.xlu0
  %v2374 = vpop.trf.xlu0
  %v2375 = vpop.trf.xlu0
  %v2376 = vpop.trf.xlu0
  %v2377 = vpop.trf.xlu0
  %v2378 = vpop.trf.xlu0
  %v2379 = vpop.trf.xlu0
  %v2380 = vpop.trf.xlu0
  %v2381 = vpop.trf.xlu0
  %v2382 = vpop.trf.xlu0
  %v2383 = vpop.trf.xlu0
  %v2384 = vpop.trf.xlu0
  %v2385 = vpop.trf.xlu0
  %v2387 = vsel %vm336, %v2370, 0
  %v2390 = vsel %vm336, %v2371, 0
  %v2393 = vsel %vm336, %v2372, 0
  %v2396 = vsel %vm336, %v2373, 0
  %2398 = vmatpush.msra.mxu0 0.0
  %2399 = vmatpush.msra.mxu0 0.0
  %2400 = vmatpush.msra.mxu0 0.0
  %2401 = vmatpush.msra.mxu0 0.0
  %2402 = vmatpush.msra.mxu0 0.0
  %2403 = vmatpush.msra.mxu0 0.0
  %2404 = vmatpush.msra.mxu0 0.0
  %2405 = vmatpush.msra.mxu0 0.0
  %2406 = vmatpush.msra.mxu0 0.0
  %2407 = vmatpush.msra.mxu0 0.0
  %2408 = vmatpush.msra.mxu0 0.0
  %2409 = vmatpush.msra.mxu0 0.0
  %2410 = vmatpush.msra.mxu0 0.0
  %2411 = vmatpush.msra.mxu0 0.0
  %2412 = vmatpush.msra.mxu0 0.0
  %2413 = vmatpush.msra.mxu0 %v1541
  %2414 = vmatmul.f32.gmra.mxu0 %v2387
  %v2415 = vpop.f32.mrf.mxu0
  %v2416 = vadd.f32 0.0, %v2415
  %2417 = vmatmul.f32.gmra.mxu0 %v2390
  %v2418 = vpop.f32.mrf.mxu0
  %v2419 = vadd.f32 0.0, %v2418
  %2420 = vmatmul.f32.gmra.mxu0 %v2393
  %v2421 = vpop.f32.mrf.mxu0
  %v2422 = vadd.f32 0.0, %v2421
  %2423 = vmatmul.f32.gmra.mxu0 %v2396
  %v2424 = vpop.f32.mrf.mxu0
  %v2425 = vadd.f32 0.0, %v2424
  %2426 = vdwg.mxu0
  %v2427 = vmul.f32 %v2416, 0.35355338
  %v2428 = vmul.f32 %v2419, 0.35355338
  %v2429 = vmul.f32 %v2422, 0.35355338
  %v2430 = vmul.f32 %v2425, 0.35355338
  %v2431 = vadd.f32 %v2427, %v1338
  %v2432 = vadd.f32 %v2428, %v1339
  %v2433 = vadd.f32 %v2429, %v1340
  %v2434 = vadd.f32 %v2430, %v1341
  %v2435 = vsel %vm214, %v2431, -inf
  %2436 = vmax.xlane.f32.xlu0 %v2435
  %v2437 = vpop.xlane.xlu0 %2436
  %v2438 = vsel %vm214, %v2432, -inf
  %2439 = vmax.xlane.f32.xlu0 %v2438
  %v2440 = vpop.xlane.xlu0 %2439
  %v2441 = vsel %vm214, %v2433, -inf
  %2442 = vmax.xlane.f32.xlu0 %v2441
  %v2443 = vpop.xlane.xlu0 %2442
  %v2444 = vsel %vm214, %v2434, -inf
  %2445 = vmax.xlane.f32.xlu0 %v2444
  %v2446 = vpop.xlane.xlu0 %2445
  %v2447 = vsub.f32 %v2431, %v2437
  %v2448 = vsub.f32 %v2432, %v2440
  %v2449 = vsub.f32 %v2433, %v2443
  %v2450 = vsub.f32 %v2434, %v2446
  %v2451 = vmul.f32 %v2447, 1.442695
  %v2452 = vpow.pop %v2451
  %v2453 = vmul.f32 %v2448, 1.442695
  %v2454 = vpow.pop %v2453
  %v2455 = vmul.f32 %v2449, 1.442695
  %v2456 = vpow.pop %v2455
  %v2457 = vmul.f32 %v2450, 1.442695
  %v2458 = vpow.pop %v2457
  %v2459 = vsel %vm214, %v2452, 0.0
  %2460 = vadd.xlane.f32.xlu0 %v2459
  %v2461 = vpop.xlane.xlu0 %2460
  %v2462 = vsel %vm214, %v2454, 0.0
  %2463 = vadd.xlane.f32.xlu0 %v2462
  %v2464 = vpop.xlane.xlu0 %2463
  %v2465 = vsel %vm214, %v2456, 0.0
  %2466 = vadd.xlane.f32.xlu0 %v2465
  %v2467 = vpop.xlane.xlu0 %2466
  %v2468 = vsel %vm214, %v2458, 0.0
  %2469 = vadd.xlane.f32.xlu0 %v2468
  %v2470 = vpop.xlane.xlu0 %2469
  %v2471 = vrcp.pop %v2461
  %v2472 = vmul.f32 %v2461, %v2471
  %v2473 = vsub.f32 1.0, %v2472
  %v2474 = vmul.f32 %v2471, %v2473
  %v2475 = vadd.f32 %v2471, %v2474
  %vm2476 = vweird.f32 %v2461
  %vm2477 = vweird.f32 %v2471
  %vm2478 = vmor %vm2476, %vm2477
  %v2479 = vsel %vm2478, %v2471, %v2475
  %v2480 = vand.u32 2147483647, %v2461
  %vm2481 = vcmp.eq.f32.partialorder %v2480, 8.507059e+37
  %v2482 = vand.u32 %v2461, 2147483648
  %v2483 = vor.u32 1.1754944e-38, %v2482
  %v2484 = vsel %vm2481, %v2483, %v2479
  %v2485 = vmul.f32 %v2452, %v2484
  %v2486 = vrcp.pop %v2464
  %v2487 = vmul.f32 %v2464, %v2486
  %v2488 = vsub.f32 1.0, %v2487
  %v2489 = vmul.f32 %v2486, %v2488
  %v2490 = vadd.f32 %v2486, %v2489
  %vm2491 = vweird.f32 %v2464
  %vm2492 = vweird.f32 %v2486
  %vm2493 = vmor %vm2491, %vm2492
  %v2494 = vsel %vm2493, %v2486, %v2490
  %v2495 = vand.u32 2147483647, %v2464
  %vm2496 = vcmp.eq.f32.partialorder %v2495, 8.507059e+37
  %v2497 = vand.u32 %v2464, 2147483648
  %v2498 = vor.u32 1.1754944e-38, %v2497
  %v2499 = vsel %vm2496, %v2498, %v2494
  %v2500 = vmul.f32 %v2454, %v2499
  %v2501 = vrcp.pop %v2467
  %v2502 = vmul.f32 %v2467, %v2501
  %v2503 = vsub.f32 1.0, %v2502
  %v2504 = vmul.f32 %v2501, %v2503
  %v2505 = vadd.f32 %v2501, %v2504
  %vm2506 = vweird.f32 %v2467
  %vm2507 = vweird.f32 %v2501
  %vm2508 = vmor %vm2506, %vm2507
  %v2509 = vsel %vm2508, %v2501, %v2505
  %v2510 = vand.u32 2147483647, %v2467
  %vm2511 = vcmp.eq.f32.partialorder %v2510, 8.507059e+37
  %v2512 = vand.u32 %v2467, 2147483648
  %v2513 = vor.u32 1.1754944e-38, %v2512
  %v2514 = vsel %vm2511, %v2513, %v2509
  %v2515 = vmul.f32 %v2456, %v2514
  %v2516 = vrcp.pop %v2470
  %v2517 = vmul.f32 %v2470, %v2516
  %v2518 = vsub.f32 1.0, %v2517
  %v2519 = vmul.f32 %v2516, %v2518
  %v2520 = vadd.f32 %v2516, %v2519
  %vm2521 = vweird.f32 %v2470
  %vm2522 = vweird.f32 %v2516
  %vm2523 = vmor %vm2521, %vm2522
  %v2524 = vsel %vm2523, %v2516, %v2520
  %v2525 = vand.u32 2147483647, %v2470
  %vm2526 = vcmp.eq.f32.partialorder %v2525, 8.507059e+37
  %v2527 = vand.u32 %v2470, 2147483648
  %v2528 = vor.u32 1.1754944e-38, %v2527
  %v2529 = vsel %vm2526, %v2528, %v2524
  %v2530 = vmul.f32 %v2458, %v2529
  %v2532 = vsel %vm214, %v1553, 0
  %v2535 = vsel %vm214, %v2485, 0
  %v2538 = vsel %vm214, %v2500, 0
  %v2541 = vsel %vm214, %v2515, 0
  %v2544 = vsel %vm214, %v2530, 0
  %2546 = vmatpush.xpose.msra.mxu0 0.0
  %2547 = vmatpush.xpose.msra.mxu0 0.0
  %2548 = vmatpush.xpose.msra.mxu0 0.0
  %2549 = vmatpush.xpose.msra.mxu0 0.0
  %2550 = vmatpush.xpose.msra.mxu0 0.0
  %2551 = vmatpush.xpose.msra.mxu0 0.0
  %2552 = vmatpush.xpose.msra.mxu0 0.0
  %2553 = vmatpush.xpose.msra.mxu0 0.0
  %2554 = vmatpush.xpose.msra.mxu0 0.0
  %2555 = vmatpush.xpose.msra.mxu0 0.0
  %2556 = vmatpush.xpose.msra.mxu0 0.0
  %2557 = vmatpush.xpose.msra.mxu0 0.0
  %2558 = vmatpush.xpose.msra.mxu0 %v2544
  %2559 = vmatpush.xpose.msra.mxu0 %v2541
  %2560 = vmatpush.xpose.msra.mxu0 %v2538
  %2561 = vmatpush.xpose.msra.mxu0 %v2535
  %2562 = vmatmul.f32.gmra.mxu0 %v2532
  %v2563 = vpop.f32.mrf.mxu0
  %v2564 = vadd.f32 0.0, %v2563
  %2565 = vdwg.mxu0
  %2566 = vrot.lane.b32.xlu0 %v1354, 104
  %v2567 = vpop.permute.xlu0 %2566
  %2568 = vrot.lane.b32.xlu0 %v1355, 104
  %v2569 = vpop.permute.xlu0 %2568
  %2570 = vrot.lane.b32.xlu0 %v1356, 104
  %v2571 = vpop.permute.xlu0 %2570
  %2572 = vrot.lane.b32.xlu0 %v1357, 104
  %v2573 = vpop.permute.xlu0 %2572
  %v2574 = vsel %vm336, %v2567, 0
  %v2576 = vsel %vm336, %v2569, 0
  %v2578 = vsel %vm336, %v2571, 0
  %v2580 = vsel %vm336, %v2573, 0
  %2582 = vmatpush.msra.mxu0 0.0
  %2583 = vmatpush.msra.mxu0 0.0
  %2584 = vmatpush.msra.mxu0 0.0
  %2585 = vmatpush.msra.mxu0 0.0
  %2586 = vmatpush.msra.mxu0 0.0
  %2587 = vmatpush.msra.mxu0 0.0
  %2588 = vmatpush.msra.mxu0 0.0
  %2589 = vmatpush.msra.mxu0 0.0
  %2590 = vmatpush.msra.mxu0 0.0
  %2591 = vmatpush.msra.mxu0 0.0
  %2592 = vmatpush.msra.mxu0 0.0
  %2593 = vmatpush.msra.mxu0 0.0
  %2594 = vmatpush.msra.mxu0 0.0
  %2595 = vmatpush.msra.mxu0 0.0
  %2596 = vmatpush.msra.mxu0 0.0
  %2597 = vmatpush.msra.mxu0 %v2564
  %2598 = vmatmul.f32.gmra.mxu0 %v2574
  %v2599 = vpop.f32.mrf.mxu0
  %v2600 = vadd.f32 0.0, %v2599
  %2601 = vmatmul.f32.gmra.mxu0 %v2576
  %v2602 = vpop.f32.mrf.mxu0
  %v2603 = vadd.f32 0.0, %v2602
  %2604 = vmatmul.f32.gmra.mxu0 %v2578
  %v2605 = vpop.f32.mrf.mxu0
  %v2606 = vadd.f32 0.0, %v2605
  %2607 = vmatmul.f32.gmra.mxu0 %v2580
  %v2608 = vpop.f32.mrf.mxu0
  %v2609 = vadd.f32 0.0, %v2608
  %2610 = vdwg.mxu0
  %v2611 = vadd.f32 %v2350, %v2600
  %v2612 = vadd.f32 %v2351, %v2603
  %v2613 = vadd.f32 %v2352, %v2606
  %v2614 = vadd.f32 %v2353, %v2609
  %v2616 = vsel %vm214, %v1366, 0
  %v2619 = vsel %vm214, %v1367, 0
  %v2622 = vsel %vm214, %v1368, 0
  %v2625 = vsel %vm214, %v1369, 0
  %v2628 = vsel %vm214, %v1370, 0
  %v2631 = vsel %vm214, %v1371, 0
  %v2634 = vsel %vm214, %v1372, 0
  %v2637 = vsel %vm214, %v1373, 0
  %2639 = vmatpush.msra.mxu0 0.0
  %2640 = vmatpush.msra.mxu0 0.0
  %2641 = vmatpush.msra.mxu0 0.0
  %2642 = vmatpush.msra.mxu0 0.0
  %2643 = vmatpush.msra.mxu0 0.0
  %2644 = vmatpush.msra.mxu0 0.0
  %2645 = vmatpush.msra.mxu0 0.0
  %2646 = vmatpush.msra.mxu0 0.0
  %2647 = vmatpush.msra.mxu0 0.0
  %2648 = vmatpush.msra.mxu0 0.0
  %2649 = vmatpush.msra.mxu0 0.0
  %2650 = vmatpush.msra.mxu0 0.0
  %2651 = vmatpush.msra.mxu0 %v2614
  %2652 = vmatpush.msra.mxu0 %v2613
  %2653 = vmatpush.msra.mxu0 %v2612
  %2654 = vmatpush.msra.mxu0 %v2611
  %2655 = vmatmul.f32.gmra.mxu0 %v2616
  %v2656 = vpop.f32.mrf.mxu0
  %v2657 = vadd.f32 0.0, %v2656
  %2658 = vmatmul.f32.gmra.mxu0 %v2619
  %v2659 = vpop.f32.mrf.mxu0
  %v2660 = vadd.f32 0.0, %v2659
  %2661 = vmatmul.f32.gmra.mxu0 %v2622
  %v2662 = vpop.f32.mrf.mxu0
  %v2663 = vadd.f32 0.0, %v2662
  %2664 = vmatmul.f32.gmra.mxu0 %v2625
  %v2665 = vpop.f32.mrf.mxu0
  %v2666 = vadd.f32 0.0, %v2665
  %2667 = vmatmul.f32.gmra.mxu0 %v2628
  %v2668 = vpop.f32.mrf.mxu0
  %v2669 = vadd.f32 0.0, %v2668
  %2670 = vmatmul.f32.gmra.mxu0 %v2631
  %v2671 = vpop.f32.mrf.mxu0
  %v2672 = vadd.f32 0.0, %v2671
  %2673 = vmatmul.f32.gmra.mxu0 %v2634
  %v2674 = vpop.f32.mrf.mxu0
  %v2675 = vadd.f32 0.0, %v2674
  %2676 = vmatmul.f32.gmra.mxu0 %v2637
  %v2677 = vpop.f32.mrf.mxu0
  %v2678 = vadd.f32 0.0, %v2677
  %2679 = vdwg.mxu0
  %v2681 = vsel %vm214, %v1358, 0
  %v2684 = vsel %vm214, %v1359, 0
  %v2687 = vsel %vm214, %v1360, 0
  %v2690 = vsel %vm214, %v1361, 0
  %v2693 = vsel %vm214, %v1362, 0
  %v2696 = vsel %vm214, %v1363, 0
  %v2699 = vsel %vm214, %v1364, 0
  %v2702 = vsel %vm214, %v1365, 0
  %2704 = vmatpush.msra.mxu0 0.0
  %2705 = vmatpush.msra.mxu0 0.0
  %2706 = vmatpush.msra.mxu0 0.0
  %2707 = vmatpush.msra.mxu0 0.0
  %2708 = vmatpush.msra.mxu0 0.0
  %2709 = vmatpush.msra.mxu0 0.0
  %2710 = vmatpush.msra.mxu0 0.0
  %2711 = vmatpush.msra.mxu0 0.0
  %2712 = vmatpush.msra.mxu0 0.0
  %2713 = vmatpush.msra.mxu0 0.0
  %2714 = vmatpush.msra.mxu0 0.0
  %2715 = vmatpush.msra.mxu0 0.0
  %2716 = vmatpush.msra.mxu0 %v87
  %2717 = vmatpush.msra.mxu0 %v86
  %2718 = vmatpush.msra.mxu0 %v85
  %2719 = vmatpush.msra.mxu0 %v84
  %2720 = vmatmul.f32.gmra.mxu0 %v2681
  %v2721 = vpop.f32.mrf.mxu0
  %v2722 = vadd.f32 %v2657, %v2721
  %2723 = vmatmul.f32.gmra.mxu0 %v2684
  %v2724 = vpop.f32.mrf.mxu0
  %v2725 = vadd.f32 %v2660, %v2724
  %2726 = vmatmul.f32.gmra.mxu0 %v2687
  %v2727 = vpop.f32.mrf.mxu0
  %v2728 = vadd.f32 %v2663, %v2727
  %2729 = vmatmul.f32.gmra.mxu0 %v2690
  %v2730 = vpop.f32.mrf.mxu0
  %v2731 = vadd.f32 %v2666, %v2730
  %2732 = vmatmul.f32.gmra.mxu0 %v2693
  %v2733 = vpop.f32.mrf.mxu0
  %v2734 = vadd.f32 %v2669, %v2733
  %2735 = vmatmul.f32.gmra.mxu0 %v2696
  %v2736 = vpop.f32.mrf.mxu0
  %v2737 = vadd.f32 %v2672, %v2736
  %2738 = vmatmul.f32.gmra.mxu0 %v2699
  %v2739 = vpop.f32.mrf.mxu0
  %v2740 = vadd.f32 %v2675, %v2739
  %2741 = vmatmul.f32.gmra.mxu0 %v2702
  %v2742 = vpop.f32.mrf.mxu0
  %v2743 = vadd.f32 %v2678, %v2742
  %2744 = vdwg.mxu0
  %2746 = vset.pattern.permute.xlu0 0
  %2747 = vperm.xlu0 %2746, %v1390
  %v2748 = vpop.permute.xlu0 %2747
  %2751 = vset.pattern.permute.xlu0 0
  %2752 = vperm.xlu0 %2751, %v1391
  %v2753 = vpop.permute.xlu0 %2752
  %2756 = vset.pattern.permute.xlu0 0
  %2757 = vperm.xlu0 %2756, %v1392
  %v2758 = vpop.permute.xlu0 %2757
  %2761 = vset.pattern.permute.xlu0 0
  %2762 = vperm.xlu0 %2761, %v1393
  %v2763 = vpop.permute.xlu0 %2762
  %2766 = vset.pattern.permute.xlu0 0
  %2767 = vperm.xlu0 %2766, %v1394
  %v2768 = vpop.permute.xlu0 %2767
  %2771 = vset.pattern.permute.xlu0 0
  %2772 = vperm.xlu0 %2771, %v1395
  %v2773 = vpop.permute.xlu0 %2772
  %2776 = vset.pattern.permute.xlu0 0
  %2777 = vperm.xlu0 %2776, %v1396
  %v2778 = vpop.permute.xlu0 %2777
  %2781 = vset.pattern.permute.xlu0 0
  %2782 = vperm.xlu0 %2781, %v1397
  %v2783 = vpop.permute.xlu0 %2782
  %v2785 = vadd.f32 %v2722, %v2748
  %v2786 = vadd.f32 %v2725, %v2753
  %v2787 = vadd.f32 %v2728, %v2758
  %v2788 = vadd.f32 %v2731, %v2763
  %v2789 = vadd.f32 %v2734, %v2768
  %v2790 = vadd.f32 %v2737, %v2773
  %v2791 = vadd.f32 %v2740, %v2778
  %v2792 = vadd.f32 %v2743, %v2783
  %v2793 = vmax.f32 %v2785, 0.0
  %v2794 = vmax.f32 %v2786, 0.0
  %v2795 = vmax.f32 %v2787, 0.0
  %v2796 = vmax.f32 %v2788, 0.0
  %v2797 = vmax.f32 %v2789, 0.0
  %v2798 = vmax.f32 %v2790, 0.0
  %v2799 = vmax.f32 %v2791, 0.0
  %v2800 = vmax.f32 %v2792, 0.0
  %2802 = vset.pattern.permute.xlu0 0
  %2803 = vperm.xlu0 %2802, %v1398
  %v2804 = vpop.permute.xlu0 %2803
  %2807 = vset.pattern.permute.xlu0 0
  %2808 = vperm.xlu0 %2807, %v1399
  %v2809 = vpop.permute.xlu0 %2808
  %2812 = vset.pattern.permute.xlu0 0
  %2813 = vperm.xlu0 %2812, %v1400
  %v2814 = vpop.permute.xlu0 %2813
  %2817 = vset.pattern.permute.xlu0 0
  %2818 = vperm.xlu0 %2817, %v1401
  %v2819 = vpop.permute.xlu0 %2818
  %v2822 = vsel %vm1292, %v1402, 0
  %v2825 = vsel %vm1292, %v1403, 0
  %v2828 = vsel %vm1292, %v1404, 0
  %v2831 = vsel %vm1292, %v1405, 0
  %2833 = vmatpush.msra.mxu0 0.0
  %2834 = vmatpush.msra.mxu0 0.0
  %2835 = vmatpush.msra.mxu0 0.0
  %2836 = vmatpush.msra.mxu0 0.0
  %2837 = vmatpush.msra.mxu0 0.0
  %2838 = vmatpush.msra.mxu0 0.0
  %2839 = vmatpush.msra.mxu0 0.0
  %2840 = vmatpush.msra.mxu0 0.0
  %2841 = vmatpush.msra.mxu0 %v2800
  %2842 = vmatpush.msra.mxu0 %v2799
  %2843 = vmatpush.msra.mxu0 %v2798
  %2844 = vmatpush.msra.mxu0 %v2797
  %2845 = vmatpush.msra.mxu0 %v2796
  %2846 = vmatpush.msra.mxu0 %v2795
  %2847 = vmatpush.msra.mxu0 %v2794
  %2848 = vmatpush.msra.mxu0 %v2793
  %2849 = vmatmul.f32.gmra.mxu0 %v2822
  %v2850 = vpop.f32.mrf.mxu0
  %v2851 = vadd.f32 %v2804, %v2850
  %2852 = vmatmul.f32.gmra.mxu0 %v2825
  %v2853 = vpop.f32.mrf.mxu0
  %v2854 = vadd.f32 %v2809, %v2853
  %2855 = vmatmul.f32.gmra.mxu0 %v2828
  %v2856 = vpop.f32.mrf.mxu0
  %v2857 = vadd.f32 %v2814, %v2856
  %2858 = vmatmul.f32.gmra.mxu0 %v2831
  %v2859 = vpop.f32.mrf.mxu0
  %v2860 = vadd.f32 %v2819, %v2859
  %2861 = vdwg.mxu0
  %v2862 = vadd.f32 %v84, %v2851
  %v2863 = vadd.f32 %v85, %v2854
  %v2864 = vadd.f32 %v86, %v2857
  %v2865 = vadd.f32 %v87, %v2860
  %v2866 = vld [vmem:[%s2] sm:$0xff]
  %v2867 = vld [vmem:[%s2 + $0x8] sm:$0xff]
  %v2868 = vld [vmem:[%s2 + $0x10] sm:$0xff]
  %v2869 = vld [vmem:[%s2 + $0x18] sm:$0xff]
  %v2870 = vld [vmem:[%s2 + $0x20] sm:$0xff]
  %v2871 = vld [vmem:[%s2 + $0x28] sm:$0xff]
  %v2872 = vld [vmem:[%s2 + $0x30] sm:$0xff]
  %v2873 = vld [vmem:[%s2 + $0x38] sm:$0xff]
  %v2874 = vld [vmem:[%s6] sm:$0xff]
  %v2875 = vld [vmem:[%s6 + $0x8] sm:$0xff]
  %v2876 = vld [vmem:[%s6 + $0x10] sm:$0xff]
  %v2877 = vld [vmem:[%s6 + $0x18] sm:$0xff]
  %v2878 = vld [vmem:[%s7] sm:$0xff]
  %v2879 = vld [vmem:[%s7 + $0x8] sm:$0xff]
  %v2880 = vld [vmem:[%s7 + $0x10] sm:$0xff]
  %v2881 = vld [vmem:[%s7 + $0x18] sm:$0xff]
  %v2882 = vld [vmem:[%s7 + $0x20] sm:$0xff]
  %v2883 = vld [vmem:[%s7 + $0x28] sm:$0xff]
  %v2884 = vld [vmem:[%s7 + $0x30] sm:$0xff]
  %v2885 = vld [vmem:[%s7 + $0x38] sm:$0xff]
  %v2886 = vld [vmem:[%s8] sm:$0xff]
  %v2887 = vld [vmem:[%s8 + $0x8] sm:$0xff]
  %v2888 = vld [vmem:[%s8 + $0x10] sm:$0xff]
  %v2889 = vld [vmem:[%s8 + $0x18] sm:$0xff]
  %v2890 = vld [vmem:[%s8 + $0x20] sm:$0xff]
  %v2891 = vld [vmem:[%s8 + $0x28] sm:$0xff]
  %v2892 = vld [vmem:[%s8 + $0x30] sm:$0xff]
  %v2893 = vld [vmem:[%s8 + $0x38] sm:$0xff]
  %v2894 = vld [vmem:[%s8 + $0x40] sm:$0xff]
  %v2895 = vld [vmem:[%s8 + $0x48] sm:$0xff]
  %v2896 = vld [vmem:[%s8 + $0x50] sm:$0xff]
  %v2897 = vld [vmem:[%s8 + $0x58] sm:$0xff]
  %v2898 = vld [vmem:[%s8 + $0x60] sm:$0xff]
  %v2899 = vld [vmem:[%s8 + $0x68] sm:$0xff]
  %v2900 = vld [vmem:[%s8 + $0x70] sm:$0xff]
  %v2901 = vld [vmem:[%s8 + $0x78] sm:$0xff]
  %v2902 = vld [vmem:[%s8 + $0x80] sm:$0xff]
  %v2903 = vld [vmem:[%s8 + $0x88] sm:$0xff]
  %v2904 = vld [vmem:[%s8 + $0x90] sm:$0xff]
  %v2905 = vld [vmem:[%s8 + $0x98] sm:$0xff]
  %v2906 = vld [vmem:[%s8 + $0xa0] sm:$0xff]
  %v2907 = vld [vmem:[%s8 + $0xa8] sm:$0xff]
  %v2908 = vld [vmem:[%s8 + $0xb0] sm:$0xff]
  %v2909 = vld [vmem:[%s8 + $0xb8] sm:$0xff]
  %v2910 = vld [vmem:[%s8 + $0xc0] sm:$0xff]
  %v2911 = vld [vmem:[%s8 + $0xc8] sm:$0xff]
  %v2912 = vld [vmem:[%s8 + $0xd0] sm:$0xff]
  %v2913 = vld [vmem:[%s8 + $0xd8] sm:$0xff]
  %v2914 = vld [vmem:[%s8 + $0xe0] sm:$0xff]
  %v2915 = vld [vmem:[%s8 + $0xe8] sm:$0xff]
  %v2916 = vld [vmem:[%s8 + $0xf0] sm:$0xff]
  %v2917 = vld [vmem:[%s8 + $0xf8] sm:$0xff]
  %v2918 = vld [vmem:[%s9] sm:$0xff]
  %v2919 = vld [vmem:[%s9 + $0x8] sm:$0xff]
  %v2920 = vld [vmem:[%s17] sm:$0xff]
  %v2921 = vld [vmem:[%s17 + $0x8] sm:$0xff]
  %v2922 = vld [vmem:[%s17 + $0x10] sm:$0xff]
  %v2923 = vld [vmem:[%s17 + $0x18] sm:$0xff]
  %v2924 = vld [vmem:[%s17 + $0x20] sm:$0xff]
  %v2925 = vld [vmem:[%s17 + $0x28] sm:$0xff]
  %v2926 = vld [vmem:[%s17 + $0x30] sm:$0xff]
  %v2927 = vld [vmem:[%s17 + $0x38] sm:$0xff]
  %v2928 = vld [vmem:[%s17 + $0x40] sm:$0xff]
  %v2929 = vld [vmem:[%s17 + $0x48] sm:$0xff]
  %v2930 = vld [vmem:[%s17 + $0x50] sm:$0xff]
  %v2931 = vld [vmem:[%s17 + $0x58] sm:$0xff]
  %v2932 = vld [vmem:[%s17 + $0x60] sm:$0xff]
  %v2933 = vld [vmem:[%s17 + $0x68] sm:$0xff]
  %v2934 = vld [vmem:[%s17 + $0x70] sm:$0xff]
  %v2935 = vld [vmem:[%s17 + $0x78] sm:$0xff]
  %v2936 = vld [vmem:[%s17 + $0x80] sm:$0xff]
  %v2937 = vld [vmem:[%s17 + $0x88] sm:$0xff]
  %v2938 = vld [vmem:[%s17 + $0x90] sm:$0xff]
  %v2939 = vld [vmem:[%s17 + $0x98] sm:$0xff]
  %v2940 = vld [vmem:[%s17 + $0xa0] sm:$0xff]
  %v2941 = vld [vmem:[%s17 + $0xa8] sm:$0xff]
  %v2942 = vld [vmem:[%s17 + $0xb0] sm:$0xff]
  %v2943 = vld [vmem:[%s17 + $0xb8] sm:$0xff]
  %v2944 = vld [vmem:[%s17 + $0xc0] sm:$0xff]
  %v2945 = vld [vmem:[%s17 + $0xc8] sm:$0xff]
  %v2946 = vld [vmem:[%s17 + $0xd0] sm:$0xff]
  %v2947 = vld [vmem:[%s17 + $0xd8] sm:$0xff]
  %v2948 = vld [vmem:[%s17 + $0xe0] sm:$0xff]
  %v2949 = vld [vmem:[%s18] sm:$0xff]
  %v2950 = vld [vmem:[%s18 + $0x8] sm:$0xff]
  %v2951 = vld [vmem:[%s18 + $0x10] sm:$0xff]
  %v2952 = vld [vmem:[%s18 + $0x18] sm:$0xff]
  %v2953 = vld [vmem:[%s18 + $0x20] sm:$0xff]
  %v2954 = vld [vmem:[%s18 + $0x28] sm:$0xff]
  %v2955 = vld [vmem:[%s18 + $0x30] sm:$0xff]
  %v2956 = vld [vmem:[%s18 + $0x38] sm:$0xff]
  %v2957 = vld [vmem:[%s18 + $0x40] sm:$0xff]
  %v2958 = vld [vmem:[%s18 + $0x48] sm:$0xff]
  %v2959 = vld [vmem:[%s18 + $0x50] sm:$0xff]
  %v2960 = vld [vmem:[%s18 + $0x58] sm:$0xff]
  %v2961 = vld [vmem:[%s18 + $0x60] sm:$0xff]
  %v2962 = vld [vmem:[%s18 + $0x68] sm:$0xff]
  %v2963 = vld [vmem:[%s18 + $0x70] sm:$0xff]
  %v2964 = vld [vmem:[%s18 + $0x78] sm:$0xff]
  %v2965 = vld [vmem:[%s18 + $0x80] sm:$0xff]
  %v2966 = vld [vmem:[%s19] sm:$0xff]
  %v2967 = vld [vmem:[%s19 + $0x8] sm:$0xff]
  %v2968 = vld [vmem:[%s19 + $0x10] sm:$0xff]
  %v2969 = vld [vmem:[%s19 + $0x18] sm:$0xff]
  %v2971 = vsel %vm214, %v2920, 0
  %v2974 = vsel %vm214, %v2921, 0
  %v2977 = vsel %vm214, %v2922, 0
  %v2980 = vsel %vm214, %v2923, 0
  %2982 = vmatpush.msra.mxu0 0.0
  %2983 = vmatpush.msra.mxu0 0.0
  %2984 = vmatpush.msra.mxu0 0.0
  %2985 = vmatpush.msra.mxu0 0.0
  %2986 = vmatpush.msra.mxu0 0.0
  %2987 = vmatpush.msra.mxu0 0.0
  %2988 = vmatpush.msra.mxu0 0.0
  %2989 = vmatpush.msra.mxu0 0.0
  %2990 = vmatpush.msra.mxu0 0.0
  %2991 = vmatpush.msra.mxu0 0.0
  %2992 = vmatpush.msra.mxu0 0.0
  %2993 = vmatpush.msra.mxu0 0.0
  %2994 = vmatpush.msra.mxu0 %v1337
  %2995 = vmatpush.msra.mxu0 %v1336
  %2996 = vmatpush.msra.mxu0 %v1335
  %2997 = vmatpush.msra.mxu0 %v1334
  %2998 = vmatmul.f32.gmra.mxu0 %v2971
  %v2999 = vpop.f32.mrf.mxu0
  %v3000 = vadd.f32 0.0, %v2999
  %3001 = vmatmul.f32.gmra.mxu0 %v2974
  %v3002 = vpop.f32.mrf.mxu0
  %v3003 = vadd.f32 0.0, %v3002
  %3004 = vmatmul.f32.gmra.mxu0 %v2977
  %v3005 = vpop.f32.mrf.mxu0
  %v3006 = vadd.f32 0.0, %v3005
  %3007 = vmatmul.f32.gmra.mxu0 %v2980
  %v3008 = vpop.f32.mrf.mxu0
  %v3009 = vadd.f32 0.0, %v3008
  %3010 = vdwg.mxu0
  %v3012 = vsel %vm214, %v2924, 0
  %v3015 = vsel %vm214, %v2925, 0
  %v3018 = vsel %vm214, %v2926, 0
  %v3021 = vsel %vm214, %v2927, 0
  %3023 = vmatpush.msra.mxu0 0.0
  %3024 = vmatpush.msra.mxu0 0.0
  %3025 = vmatpush.msra.mxu0 0.0
  %3026 = vmatpush.msra.mxu0 0.0
  %3027 = vmatpush.msra.mxu0 0.0
  %3028 = vmatpush.msra.mxu0 0.0
  %3029 = vmatpush.msra.mxu0 0.0
  %3030 = vmatpush.msra.mxu0 0.0
  %3031 = vmatpush.msra.mxu0 0.0
  %3032 = vmatpush.msra.mxu0 0.0
  %3033 = vmatpush.msra.mxu0 0.0
  %3034 = vmatpush.msra.mxu0 0.0
  %3035 = vmatpush.msra.mxu0 %v2865
  %3036 = vmatpush.msra.mxu0 %v2864
  %3037 = vmatpush.msra.mxu0 %v2863
  %3038 = vmatpush.msra.mxu0 %v2862
  %3039 = vmatmul.f32.gmra.mxu0 %v3012
  %v3040 = vpop.f32.mrf.mxu0
  %v3041 = vadd.f32 0.0, %v3040
  %3042 = vmatmul.f32.gmra.mxu0 %v3015
  %v3043 = vpop.f32.mrf.mxu0
  %v3044 = vadd.f32 0.0, %v3043
  %3045 = vmatmul.f32.gmra.mxu0 %v3018
  %v3046 = vpop.f32.mrf.mxu0
  %v3047 = vadd.f32 0.0, %v3046
  %3048 = vmatmul.f32.gmra.mxu0 %v3021
  %v3049 = vpop.f32.mrf.mxu0
  %v3050 = vadd.f32 0.0, %v3049
  %3051 = vdwg.mxu0
  %v3053 = vsel %vm370, %v3000, 0
  %v3056 = vsel %vm370, %v3003, 0
  %v3059 = vsel %vm370, %v3006, 0
  %v3062 = vsel %vm370, %v3009, 0
  %3064 = vmatpush.msra.mxu0 0.0
  %3065 = vmatpush.msra.mxu0 0.0
  %3066 = vmatpush.msra.mxu0 0.0
  %3067 = vmatpush.msra.mxu0 0.0
  %3068 = vmatpush.msra.mxu0 0.0
  %3069 = vmatpush.msra.mxu0 0.0
  %3070 = vmatpush.msra.mxu0 0.0
  %3071 = vmatpush.msra.mxu0 0.0
  %3072 = vmatpush.msra.mxu0 0.0
  %3073 = vmatpush.msra.mxu0 0.0
  %3074 = vmatpush.msra.mxu0 0.0
  %3075 = vmatpush.msra.mxu0 0.0
  %3076 = vmatpush.msra.mxu0 0.0
  %3077 = vmatpush.msra.mxu0 0.0
  %3078 = vmatpush.msra.mxu0 %v2876
  %3079 = vmatpush.msra.mxu0 %v2874
  %3080 = vmatmul.f32.gmra.mxu0 %v3053
  %v3081 = vpop.f32.mrf.mxu0
  %v3082 = vadd.f32 0.0, %v3081
  %3083 = vmatmul.f32.gmra.mxu0 %v3056
  %v3084 = vpop.f32.mrf.mxu0
  %v3085 = vadd.f32 0.0, %v3084
  %3086 = vmatmul.f32.gmra.mxu0 %v3059
  %v3087 = vpop.f32.mrf.mxu0
  %v3088 = vadd.f32 0.0, %v3087
  %3089 = vmatmul.f32.gmra.mxu0 %v3062
  %v3090 = vpop.f32.mrf.mxu0
  %v3091 = vadd.f32 0.0, %v3090
  %3092 = vdwg.mxu0
  %3093 = vmatpush.msra.mxu0 0.0
  %3094 = vmatpush.msra.mxu0 0.0
  %3095 = vmatpush.msra.mxu0 0.0
  %3096 = vmatpush.msra.mxu0 0.0
  %3097 = vmatpush.msra.mxu0 0.0
  %3098 = vmatpush.msra.mxu0 0.0
  %3099 = vmatpush.msra.mxu0 0.0
  %3100 = vmatpush.msra.mxu0 0.0
  %3101 = vmatpush.msra.mxu0 0.0
  %3102 = vmatpush.msra.mxu0 0.0
  %3103 = vmatpush.msra.mxu0 0.0
  %3104 = vmatpush.msra.mxu0 0.0
  %3105 = vmatpush.msra.mxu0 0.0
  %3106 = vmatpush.msra.mxu0 0.0
  %3107 = vmatpush.msra.mxu0 %v2877
  %3108 = vmatpush.msra.mxu0 %v2875
  %3109 = vmatmul.f32.gmra.mxu0 %v3053
  %v3110 = vpop.f32.mrf.mxu0
  %v3111 = vadd.f32 0.0, %v3110
  %3112 = vmatmul.f32.gmra.mxu0 %v3056
  %v3113 = vpop.f32.mrf.mxu0
  %v3114 = vadd.f32 0.0, %v3113
  %3115 = vmatmul.f32.gmra.mxu0 %v3059
  %v3116 = vpop.f32.mrf.mxu0
  %v3117 = vadd.f32 0.0, %v3116
  %3118 = vmatmul.f32.gmra.mxu0 %v3062
  %v3119 = vpop.f32.mrf.mxu0
  %v3120 = vadd.f32 0.0, %v3119
  %3121 = vdwg.mxu0
  %v3123 = vsel %vm214, %v2928, 0
  %v3126 = vsel %vm214, %v2929, 0
  %v3129 = vsel %vm214, %v2930, 0
  %v3132 = vsel %vm214, %v2931, 0
  %3134 = vmatpush.msra.mxu0 0.0
  %3135 = vmatpush.msra.mxu0 0.0
  %3136 = vmatpush.msra.mxu0 0.0
  %3137 = vmatpush.msra.mxu0 0.0
  %3138 = vmatpush.msra.mxu0 0.0
  %3139 = vmatpush.msra.mxu0 0.0
  %3140 = vmatpush.msra.mxu0 0.0
  %3141 = vmatpush.msra.mxu0 0.0
  %3142 = vmatpush.msra.mxu0 0.0
  %3143 = vmatpush.msra.mxu0 0.0
  %3144 = vmatpush.msra.mxu0 0.0
  %3145 = vmatpush.msra.mxu0 0.0
  %3146 = vmatpush.msra.mxu0 %v2872
  %3147 = vmatpush.msra.mxu0 %v2870
  %3148 = vmatpush.msra.mxu0 %v2868
  %3149 = vmatpush.msra.mxu0 %v2866
  %3150 = vmatmul.f32.gmra.mxu0 %v3123
  %v3151 = vpop.f32.mrf.mxu0
  %v3152 = vadd.f32 %v3082, %v3151
  %3153 = vmatmul.f32.gmra.mxu0 %v3126
  %v3154 = vpop.f32.mrf.mxu0
  %v3155 = vadd.f32 %v3085, %v3154
  %3156 = vmatmul.f32.gmra.mxu0 %v3129
  %v3157 = vpop.f32.mrf.mxu0
  %v3158 = vadd.f32 %v3088, %v3157
  %3159 = vmatmul.f32.gmra.mxu0 %v3132
  %v3160 = vpop.f32.mrf.mxu0
  %v3161 = vadd.f32 %v3091, %v3160
  %3162 = vdwg.mxu0
  %3163 = vmatpush.msra.mxu0 0.0
  %3164 = vmatpush.msra.mxu0 0.0
  %3165 = vmatpush.msra.mxu0 0.0
  %3166 = vmatpush.msra.mxu0 0.0
  %3167 = vmatpush.msra.mxu0 0.0
  %3168 = vmatpush.msra.mxu0 0.0
  %3169 = vmatpush.msra.mxu0 0.0
  %3170 = vmatpush.msra.mxu0 0.0
  %3171 = vmatpush.msra.mxu0 0.0
  %3172 = vmatpush.msra.mxu0 0.0
  %3173 = vmatpush.msra.mxu0 0.0
  %3174 = vmatpush.msra.mxu0 0.0
  %3175 = vmatpush.msra.mxu0 %v2873
  %3176 = vmatpush.msra.mxu0 %v2871
  %3177 = vmatpush.msra.mxu0 %v2869
  %3178 = vmatpush.msra.mxu0 %v2867
  %3179 = vmatmul.f32.gmra.mxu0 %v3123
  %v3180 = vpop.f32.mrf.mxu0
  %v3181 = vadd.f32 %v3111, %v3180
  %3182 = vmatmul.f32.gmra.mxu0 %v3126
  %v3183 = vpop.f32.mrf.mxu0
  %v3184 = vadd.f32 %v3114, %v3183
  %3185 = vmatmul.f32.gmra.mxu0 %v3129
  %v3186 = vpop.f32.mrf.mxu0
  %v3187 = vadd.f32 %v3117, %v3186
  %3188 = vmatmul.f32.gmra.mxu0 %v3132
  %v3189 = vpop.f32.mrf.mxu0
  %v3190 = vadd.f32 %v3120, %v3189
  %3191 = vdwg.mxu0
  %v3193 = vsel %vm214, %v3041, 0
  %v3196 = vsel %vm214, %v3044, 0
  %v3199 = vsel %vm214, %v3047, 0
  %v3202 = vsel %vm214, %v3050, 0
  %3204 = vmatpush.msra.mxu0 0.0
  %3205 = vmatpush.msra.mxu0 0.0
  %3206 = vmatpush.msra.mxu0 0.0
  %3207 = vmatpush.msra.mxu0 0.0
  %3208 = vmatpush.msra.mxu0 0.0
  %3209 = vmatpush.msra.mxu0 0.0
  %3210 = vmatpush.msra.mxu0 0.0
  %3211 = vmatpush.msra.mxu0 0.0
  %3212 = vmatpush.msra.mxu0 0.0
  %3213 = vmatpush.msra.mxu0 0.0
  %3214 = vmatpush.msra.mxu0 0.0
  %3215 = vmatpush.msra.mxu0 0.0
  %3216 = vmatpush.msra.mxu0 %v2884
  %3217 = vmatpush.msra.mxu0 %v2882
  %3218 = vmatpush.msra.mxu0 %v2880
  %3219 = vmatpush.msra.mxu0 %v2878
  %3220 = vmatmul.f32.gmra.mxu0 %v3193
  %v3221 = vpop.f32.mrf.mxu0
  %v3222 = vadd.f32 0.0, %v3221
  %3223 = vmatmul.f32.gmra.mxu0 %v3196
  %v3224 = vpop.f32.mrf.mxu0
  %v3225 = vadd.f32 0.0, %v3224
  %3226 = vmatmul.f32.gmra.mxu0 %v3199
  %v3227 = vpop.f32.mrf.mxu0
  %v3228 = vadd.f32 0.0, %v3227
  %3229 = vmatmul.f32.gmra.mxu0 %v3202
  %v3230 = vpop.f32.mrf.mxu0
  %v3231 = vadd.f32 0.0, %v3230
  %3232 = vdwg.mxu0
  %3233 = vmatpush.msra.mxu0 0.0
  %3234 = vmatpush.msra.mxu0 0.0
  %3235 = vmatpush.msra.mxu0 0.0
  %3236 = vmatpush.msra.mxu0 0.0
  %3237 = vmatpush.msra.mxu0 0.0
  %3238 = vmatpush.msra.mxu0 0.0
  %3239 = vmatpush.msra.mxu0 0.0
  %3240 = vmatpush.msra.mxu0 0.0
  %3241 = vmatpush.msra.mxu0 0.0
  %3242 = vmatpush.msra.mxu0 0.0
  %3243 = vmatpush.msra.mxu0 0.0
  %3244 = vmatpush.msra.mxu0 0.0
  %3245 = vmatpush.msra.mxu0 %v2885
  %3246 = vmatpush.msra.mxu0 %v2883
  %3247 = vmatpush.msra.mxu0 %v2881
  %3248 = vmatpush.msra.mxu0 %v2879
  %3249 = vmatmul.f32.gmra.mxu0 %v3193
  %v3250 = vpop.f32.mrf.mxu0
  %v3251 = vadd.f32 0.0, %v3250
  %3252 = vmatmul.f32.gmra.mxu0 %v3196
  %v3253 = vpop.f32.mrf.mxu0
  %v3254 = vadd.f32 0.0, %v3253
  %3255 = vmatmul.f32.gmra.mxu0 %v3199
  %v3256 = vpop.f32.mrf.mxu0
  %v3257 = vadd.f32 0.0, %v3256
  %3258 = vmatmul.f32.gmra.mxu0 %v3202
  %v3259 = vpop.f32.mrf.mxu0
  %v3260 = vadd.f32 0.0, %v3259
  %3261 = vdwg.mxu0
  %v3262 = vadd.f32 %v3152, %v3222
  %v3263 = vadd.f32 %v3181, %v3251
  %v3264 = vadd.f32 %v3155, %v3225
  %v3265 = vadd.f32 %v3184, %v3254
  %v3266 = vadd.f32 %v3158, %v3228
  %v3267 = vadd.f32 %v3187, %v3257
  %v3268 = vadd.f32 %v3161, %v3231
  %v3269 = vadd.f32 %v3190, %v3260
  %3271 = vset.pattern.permute.xlu0 0
  %3272 = vperm.xlu0 %3271, %v2949
  %v3273 = vpop.permute.xlu0 %3272
  %3276 = vset.pattern.permute.xlu0 0
  %3277 = vperm.xlu0 %3276, %v2950
  %v3278 = vpop.permute.xlu0 %3277
  %3281 = vset.pattern.permute.xlu0 0
  %3282 = vperm.xlu0 %3281, %v2951
  %v3283 = vpop.permute.xlu0 %3282
  %3286 = vset.pattern.permute.xlu0 0
  %3287 = vperm.xlu0 %3286, %v2952
  %v3288 = vpop.permute.xlu0 %3287
  %v3290 = vadd.f32 %v3262, %v3273
  %v3291 = vadd.f32 %v3263, %v3273
  %v3292 = vadd.f32 %v3264, %v3278
  %v3293 = vadd.f32 %v3265, %v3278
  %v3294 = vadd.f32 %v3266, %v3283
  %v3295 = vadd.f32 %v3267, %v3283
  %v3296 = vadd.f32 %v3268, %v3288
  %v3297 = vadd.f32 %v3269, %v3288
  %v3298 = vmax.f32 %v3290, 0.0
  %v3299 = vmax.f32 %v3291, 0.0
  %v3300 = vmax.f32 %v3292, 0.0
  %v3301 = vmax.f32 %v3293, 0.0
  %v3302 = vmax.f32 %v3294, 0.0
  %v3303 = vmax.f32 %v3295, 0.0
  %v3304 = vmax.f32 %v3296, 0.0
  %v3305 = vmax.f32 %v3297, 0.0
  %3307 = vset.pattern.permute.xlu0 0
  %3308 = vperm.xlu0 %3307, %v2953
  %v3309 = vpop.permute.xlu0 %3308
  %v3312 = vsel %vm214, %v2932, 0
  %3314 = vmatpush.msra.mxu0 0.0
  %3315 = vmatpush.msra.mxu0 0.0
  %3316 = vmatpush.msra.mxu0 0.0
  %3317 = vmatpush.msra.mxu0 0.0
  %3318 = vmatpush.msra.mxu0 0.0
  %3319 = vmatpush.msra.mxu0 0.0
  %3320 = vmatpush.msra.mxu0 0.0
  %3321 = vmatpush.msra.mxu0 0.0
  %3322 = vmatpush.msra.mxu0 0.0
  %3323 = vmatpush.msra.mxu0 0.0
  %3324 = vmatpush.msra.mxu0 0.0
  %3325 = vmatpush.msra.mxu0 0.0
  %3326 = vmatpush.msra.mxu0 %v3304
  %3327 = vmatpush.msra.mxu0 %v3302
  %3328 = vmatpush.msra.mxu0 %v3300
  %3329 = vmatpush.msra.mxu0 %v3298
  %3330 = vmatmul.f32.gmra.mxu0 %v3312
  %v3331 = vpop.f32.mrf.mxu0
  %v3332 = vadd.f32 %v3309, %v3331
  %3333 = vdwg.mxu0
  %3334 = vmatpush.msra.mxu0 0.0
  %3335 = vmatpush.msra.mxu0 0.0
  %3336 = vmatpush.msra.mxu0 0.0
  %3337 = vmatpush.msra.mxu0 0.0
  %3338 = vmatpush.msra.mxu0 0.0
  %3339 = vmatpush.msra.mxu0 0.0
  %3340 = vmatpush.msra.mxu0 0.0
  %3341 = vmatpush.msra.mxu0 0.0
  %3342 = vmatpush.msra.mxu0 0.0
  %3343 = vmatpush.msra.mxu0 0.0
  %3344 = vmatpush.msra.mxu0 0.0
  %3345 = vmatpush.msra.mxu0 0.0
  %3346 = vmatpush.msra.mxu0 %v3305
  %3347 = vmatpush.msra.mxu0 %v3303
  %3348 = vmatpush.msra.mxu0 %v3301
  %3349 = vmatpush.msra.mxu0 %v3299
  %3350 = vmatmul.f32.gmra.mxu0 %v3312
  %v3351 = vpop.f32.mrf.mxu0
  %v3352 = vadd.f32 %v3309, %v3351
  %3353 = vdwg.mxu0
  %v3354 = vperm.slane %v3332, 0
  %v3355 = vperm.slane %v3352, 0
  %v3356 = vmul.f32 %v2874, %v3354
  %v3357 = vmul.f32 %v2875, %v3355
  %v3358 = vmul.f32 %v2876, %v3354
  %v3359 = vmul.f32 %v2877, %v3355
  %3360 = vmatpush.msra.mxu0 %v2901
  %3361 = vmatpush.msra.mxu0 %v2900
  %3362 = vmatpush.msra.mxu0 %v2899
  %3363 = vmatpush.msra.mxu0 %v2898
  %3364 = vmatpush.msra.mxu0 %v2897
  %3365 = vmatpush.msra.mxu0 %v2896
  %3366 = vmatpush.msra.mxu0 %v2895
  %3367 = vmatpush.msra.mxu0 %v2894
  %3368 = vmatpush.msra.mxu0 %v2893
  %3369 = vmatpush.msra.mxu0 %v2892
  %3370 = vmatpush.msra.mxu0 %v2891
  %3371 = vmatpush.msra.mxu0 %v2890
  %3372 = vmatpush.msra.mxu0 %v2889
  %3373 = vmatpush.msra.mxu0 %v2888
  %3374 = vmatpush.msra.mxu0 %v2887
  %3375 = vmatpush.msra.mxu0 %v2886
  %3376 = vmatmul.f32.gmra.mxu0 %v3356
  %v3377 = vpop.f32.mrf.mxu0
  %v3378 = vadd.f32 %v2918, %v3377
  %3379 = vmatmul.f32.gmra.mxu0 %v3358
  %v3380 = vpop.f32.mrf.mxu0
  %v3381 = vadd.f32 %v2919, %v3380
  %3382 = vdwg.mxu0
  %3383 = vmatpush.msra.mxu0 %v2917
  %3384 = vmatpush.msra.mxu0 %v2916
  %3385 = vmatpush.msra.mxu0 %v2915
  %3386 = vmatpush.msra.mxu0 %v2914
  %3387 = vmatpush.msra.mxu0 %v2913
  %3388 = vmatpush.msra.mxu0 %v2912
  %3389 = vmatpush.msra.mxu0 %v2911
  %3390 = vmatpush.msra.mxu0 %v2910
  %3391 = vmatpush.msra.mxu0 %v2909
  %3392 = vmatpush.msra.mxu0 %v2908
  %3393 = vmatpush.msra.mxu0 %v2907
  %3394 = vmatpush.msra.mxu0 %v2906
  %3395 = vmatpush.msra.mxu0 %v2905
  %3396 = vmatpush.msra.mxu0 %v2904
  %3397 = vmatpush.msra.mxu0 %v2903
  %3398 = vmatpush.msra.mxu0 %v2902
  %3399 = vmatmul.f32.gmra.mxu0 %v3357
  %v3400 = vpop.f32.mrf.mxu0
  %v3401 = vadd.f32 %v3378, %v3400
  %3402 = vmatmul.f32.gmra.mxu0 %v3359
  %v3403 = vpop.f32.mrf.mxu0
  %v3404 = vadd.f32 %v3381, %v3403
  %3405 = vdwg.mxu0
  %v3406 = vsel %vm214, %v3401, -inf
  %3407 = vmax.xlane.f32.xlu0 %v3406
  %v3408 = vpop.xlane.xlu0 %3407
  %v3409 = vsel %vm214, %v3404, -inf
  %3410 = vmax.xlane.f32.xlu0 %v3409
  %v3411 = vpop.xlane.xlu0 %3410
  %v3412 = vsub.f32 %v3401, %v3408
  %v3413 = vsub.f32 %v3404, %v3411
  %v3414 = vmul.f32 %v3412, 1.442695
  %v3415 = vpow.pop %v3414
  %v3416 = vmul.f32 %v3413, 1.442695
  %v3417 = vpow.pop %v3416
  %v3418 = vsel %vm214, %v3415, 0.0
  %3419 = vadd.xlane.f32.xlu0 %v3418
  %v3420 = vpop.xlane.xlu0 %3419
  %v3421 = vsel %vm214, %v3417, 0.0
  %3422 = vadd.xlane.f32.xlu0 %v3421
  %v3423 = vpop.xlane.xlu0 %3422
  %v3424 = vrcp.pop %v3420
  %v3425 = vmul.f32 %v3420, %v3424
  %v3426 = vsub.f32 1.0, %v3425
  %v3427 = vmul.f32 %v3424, %v3426
  %v3428 = vadd.f32 %v3424, %v3427
  %vm3429 = vweird.f32 %v3420
  %vm3430 = vweird.f32 %v3424
  %vm3431 = vmor %vm3429, %vm3430
  %v3432 = vsel %vm3431, %v3424, %v3428
  %v3433 = vand.u32 2147483647, %v3420
  %vm3434 = vcmp.eq.f32.partialorder %v3433, 8.507059e+37
  %v3435 = vand.u32 %v3420, 2147483648
  %v3436 = vor.u32 1.1754944e-38, %v3435
  %v3437 = vsel %vm3434, %v3436, %v3432
  %v3438 = vmul.f32 %v3415, %v3437
  %v3439 = vrcp.pop %v3423
  %v3440 = vmul.f32 %v3423, %v3439
  %v3441 = vsub.f32 1.0, %v3440
  %v3442 = vmul.f32 %v3439, %v3441
  %v3443 = vadd.f32 %v3439, %v3442
  %vm3444 = vweird.f32 %v3423
  %vm3445 = vweird.f32 %v3439
  %vm3446 = vmor %vm3444, %vm3445
  %v3447 = vsel %vm3446, %v3439, %v3443
  %v3448 = vand.u32 2147483647, %v3423
  %vm3449 = vcmp.eq.f32.partialorder %v3448, 8.507059e+37
  %v3450 = vand.u32 %v3423, 2147483648
  %v3451 = vor.u32 1.1754944e-38, %v3450
  %v3452 = vsel %vm3449, %v3451, %v3447
  %v3453 = vmul.f32 %v3417, %v3452
  %v3455 = vsel %vm214, %v2862, 0
  %v3458 = vsel %vm214, %v2863, 0
  %v3461 = vsel %vm214, %v2864, 0
  %v3464 = vsel %vm214, %v2865, 0
  %v3467 = vsel %vm214, %v3438, 0
  %v3470 = vsel %vm214, %v3453, 0
  %3472 = vmatpush.xpose.msra.mxu0 0.0
  %3473 = vmatpush.xpose.msra.mxu0 0.0
  %3474 = vmatpush.xpose.msra.mxu0 0.0
  %3475 = vmatpush.xpose.msra.mxu0 0.0
  %3476 = vmatpush.xpose.msra.mxu0 0.0
  %3477 = vmatpush.xpose.msra.mxu0 0.0
  %3478 = vmatpush.xpose.msra.mxu0 0.0
  %3479 = vmatpush.xpose.msra.mxu0 0.0
  %3480 = vmatpush.xpose.msra.mxu0 0.0
  %3481 = vmatpush.xpose.msra.mxu0 0.0
  %3482 = vmatpush.xpose.msra.mxu0 0.0
  %3483 = vmatpush.xpose.msra.mxu0 0.0
  %3484 = vmatpush.xpose.msra.mxu0 0.0
  %3485 = vmatpush.xpose.msra.mxu0 0.0
  %3486 = vmatpush.xpose.msra.mxu0 %v3470
  %3487 = vmatpush.xpose.msra.mxu0 %v3467
  %3488 = vmatmul.f32.gmra.mxu0 %v3455
  %v3489 = vpop.f32.mrf.mxu0
  %v3490 = vadd.f32 0.0, %v3489
  %3491 = vmatmul.f32.gmra.mxu0 %v3458
  %v3492 = vpop.f32.mrf.mxu0
  %v3493 = vadd.f32 0.0, %v3492
  %3494 = vmatmul.f32.gmra.mxu0 %v3461
  %v3495 = vpop.f32.mrf.mxu0
  %v3496 = vadd.f32 0.0, %v3495
  %3497 = vmatmul.f32.gmra.mxu0 %v3464
  %v3498 = vpop.f32.mrf.mxu0
  %v3499 = vadd.f32 0.0, %v3498
  %3500 = vdwg.mxu0
  %v3502 = vsel %vm214, %v2941, 0
  %v3505 = vsel %vm214, %v2942, 0
  %v3508 = vsel %vm214, %v2943, 0
  %v3511 = vsel %vm214, %v2944, 0
  %v3514 = vsel %vm214, %v2945, 0
  %v3517 = vsel %vm214, %v2946, 0
  %v3520 = vsel %vm214, %v2947, 0
  %v3523 = vsel %vm214, %v2948, 0
  %3525 = vmatpush.msra.mxu0 0.0
  %3526 = vmatpush.msra.mxu0 0.0
  %3527 = vmatpush.msra.mxu0 0.0
  %3528 = vmatpush.msra.mxu0 0.0
  %3529 = vmatpush.msra.mxu0 0.0
  %3530 = vmatpush.msra.mxu0 0.0
  %3531 = vmatpush.msra.mxu0 0.0
  %3532 = vmatpush.msra.mxu0 0.0
  %3533 = vmatpush.msra.mxu0 0.0
  %3534 = vmatpush.msra.mxu0 0.0
  %3535 = vmatpush.msra.mxu0 0.0
  %3536 = vmatpush.msra.mxu0 0.0
  %3537 = vmatpush.msra.mxu0 %v3499
  %3538 = vmatpush.msra.mxu0 %v3496
  %3539 = vmatpush.msra.mxu0 %v3493
  %3540 = vmatpush.msra.mxu0 %v3490
  %3541 = vmatmul.f32.gmra.mxu0 %v3502
  %v3542 = vpop.f32.mrf.mxu0
  %v3543 = vadd.f32 0.0, %v3542
  %3544 = vmatmul.f32.gmra.mxu0 %v3505
  %v3545 = vpop.f32.mrf.mxu0
  %v3546 = vadd.f32 0.0, %v3545
  %3547 = vmatmul.f32.gmra.mxu0 %v3508
  %v3548 = vpop.f32.mrf.mxu0
  %v3549 = vadd.f32 0.0, %v3548
  %3550 = vmatmul.f32.gmra.mxu0 %v3511
  %v3551 = vpop.f32.mrf.mxu0
  %v3552 = vadd.f32 0.0, %v3551
  %3553 = vmatmul.f32.gmra.mxu0 %v3514
  %v3554 = vpop.f32.mrf.mxu0
  %v3555 = vadd.f32 0.0, %v3554
  %3556 = vmatmul.f32.gmra.mxu0 %v3517
  %v3557 = vpop.f32.mrf.mxu0
  %v3558 = vadd.f32 0.0, %v3557
  %3559 = vmatmul.f32.gmra.mxu0 %v3520
  %v3560 = vpop.f32.mrf.mxu0
  %v3561 = vadd.f32 0.0, %v3560
  %3562 = vmatmul.f32.gmra.mxu0 %v3523
  %v3563 = vpop.f32.mrf.mxu0
  %v3564 = vadd.f32 0.0, %v3563
  %3565 = vdwg.mxu0
  %v3567 = vsel %vm214, %v2933, 0
  %v3570 = vsel %vm214, %v2934, 0
  %v3573 = vsel %vm214, %v2935, 0
  %v3576 = vsel %vm214, %v2936, 0
  %v3579 = vsel %vm214, %v2937, 0
  %v3582 = vsel %vm214, %v2938, 0
  %v3585 = vsel %vm214, %v2939, 0
  %v3588 = vsel %vm214, %v2940, 0
  %3590 = vmatpush.msra.mxu0 0.0
  %3591 = vmatpush.msra.mxu0 0.0
  %3592 = vmatpush.msra.mxu0 0.0
  %3593 = vmatpush.msra.mxu0 0.0
  %3594 = vmatpush.msra.mxu0 0.0
  %3595 = vmatpush.msra.mxu0 0.0
  %3596 = vmatpush.msra.mxu0 0.0
  %3597 = vmatpush.msra.mxu0 0.0
  %3598 = vmatpush.msra.mxu0 0.0
  %3599 = vmatpush.msra.mxu0 0.0
  %3600 = vmatpush.msra.mxu0 0.0
  %3601 = vmatpush.msra.mxu0 0.0
  %3602 = vmatpush.msra.mxu0 %v1337
  %3603 = vmatpush.msra.mxu0 %v1336
  %3604 = vmatpush.msra.mxu0 %v1335
  %3605 = vmatpush.msra.mxu0 %v1334
  %3606 = vmatmul.f32.gmra.mxu0 %v3567
  %v3607 = vpop.f32.mrf.mxu0
  %v3608 = vadd.f32 %v3543, %v3607
  %3609 = vmatmul.f32.gmra.mxu0 %v3570
  %v3610 = vpop.f32.mrf.mxu0
  %v3611 = vadd.f32 %v3546, %v3610
  %3612 = vmatmul.f32.gmra.mxu0 %v3573
  %v3613 = vpop.f32.mrf.mxu0
  %v3614 = vadd.f32 %v3549, %v3613
  %3615 = vmatmul.f32.gmra.mxu0 %v3576
  %v3616 = vpop.f32.mrf.mxu0
  %v3617 = vadd.f32 %v3552, %v3616
  %3618 = vmatmul.f32.gmra.mxu0 %v3579
  %v3619 = vpop.f32.mrf.mxu0
  %v3620 = vadd.f32 %v3555, %v3619
  %3621 = vmatmul.f32.gmra.mxu0 %v3582
  %v3622 = vpop.f32.mrf.mxu0
  %v3623 = vadd.f32 %v3558, %v3622
  %3624 = vmatmul.f32.gmra.mxu0 %v3585
  %v3625 = vpop.f32.mrf.mxu0
  %v3626 = vadd.f32 %v3561, %v3625
  %3627 = vmatmul.f32.gmra.mxu0 %v3588
  %v3628 = vpop.f32.mrf.mxu0
  %v3629 = vadd.f32 %v3564, %v3628
  %3630 = vdwg.mxu0
  %3632 = vset.pattern.permute.xlu0 0
  %3633 = vperm.xlu0 %3632, %v2954
  %v3634 = vpop.permute.xlu0 %3633
  %3637 = vset.pattern.permute.xlu0 0
  %3638 = vperm.xlu0 %3637, %v2955
  %v3639 = vpop.permute.xlu0 %3638
  %3642 = vset.pattern.permute.xlu0 0
  %3643 = vperm.xlu0 %3642, %v2956
  %v3644 = vpop.permute.xlu0 %3643
  %3647 = vset.pattern.permute.xlu0 0
  %3648 = vperm.xlu0 %3647, %v2957
  %v3649 = vpop.permute.xlu0 %3648
  %3652 = vset.pattern.permute.xlu0 0
  %3653 = vperm.xlu0 %3652, %v2958
  %v3654 = vpop.permute.xlu0 %3653
  %3657 = vset.pattern.permute.xlu0 0
  %3658 = vperm.xlu0 %3657, %v2959
  %v3659 = vpop.permute.xlu0 %3658
  %3662 = vset.pattern.permute.xlu0 0
  %3663 = vperm.xlu0 %3662, %v2960
  %v3664 = vpop.permute.xlu0 %3663
  %3667 = vset.pattern.permute.xlu0 0
  %3668 = vperm.xlu0 %3667, %v2961
  %v3669 = vpop.permute.xlu0 %3668
  %v3671 = vadd.f32 %v3608, %v3634
  %v3672 = vadd.f32 %v3611, %v3639
  %v3673 = vadd.f32 %v3614, %v3644
  %v3674 = vadd.f32 %v3617, %v3649
  %v3675 = vadd.f32 %v3620, %v3654
  %v3676 = vadd.f32 %v3623, %v3659
  %v3677 = vadd.f32 %v3626, %v3664
  %v3678 = vadd.f32 %v3629, %v3669
  %v3679 = vmax.f32 %v3671, 0.0
  %v3680 = vmax.f32 %v3672, 0.0
  %v3681 = vmax.f32 %v3673, 0.0
  %v3682 = vmax.f32 %v3674, 0.0
  %v3683 = vmax.f32 %v3675, 0.0
  %v3684 = vmax.f32 %v3676, 0.0
  %v3685 = vmax.f32 %v3677, 0.0
  %v3686 = vmax.f32 %v3678, 0.0
  %3688 = vset.pattern.permute.xlu0 0
  %3689 = vperm.xlu0 %3688, %v2962
  %v3690 = vpop.permute.xlu0 %3689
  %3693 = vset.pattern.permute.xlu0 0
  %3694 = vperm.xlu0 %3693, %v2963
  %v3695 = vpop.permute.xlu0 %3694
  %3698 = vset.pattern.permute.xlu0 0
  %3699 = vperm.xlu0 %3698, %v2964
  %v3700 = vpop.permute.xlu0 %3699
  %3703 = vset.pattern.permute.xlu0 0
  %3704 = vperm.xlu0 %3703, %v2965
  %v3705 = vpop.permute.xlu0 %3704
  %v3708 = vsel %vm1292, %v2966, 0
  %v3711 = vsel %vm1292, %v2967, 0
  %v3714 = vsel %vm1292, %v2968, 0
  %v3717 = vsel %vm1292, %v2969, 0
  %3719 = vmatpush.msra.mxu0 0.0
  %3720 = vmatpush.msra.mxu0 0.0
  %3721 = vmatpush.msra.mxu0 0.0
  %3722 = vmatpush.msra.mxu0 0.0
  %3723 = vmatpush.msra.mxu0 0.0
  %3724 = vmatpush.msra.mxu0 0.0
  %3725 = vmatpush.msra.mxu0 0.0
  %3726 = vmatpush.msra.mxu0 0.0
  %3727 = vmatpush.msra.mxu0 %v3686
  %3728 = vmatpush.msra.mxu0 %v3685
  %3729 = vmatpush.msra.mxu0 %v3684
  %3730 = vmatpush.msra.mxu0 %v3683
  %3731 = vmatpush.msra.mxu0 %v3682
  %3732 = vmatpush.msra.mxu0 %v3681
  %3733 = vmatpush.msra.mxu0 %v3680
  %3734 = vmatpush.msra.mxu0 %v3679
  %3735 = vmatmul.f32.gmra.mxu0 %v3708
  %v3736 = vpop.f32.mrf.mxu0
  %v3737 = vadd.f32 %v3690, %v3736
  %3738 = vmatmul.f32.gmra.mxu0 %v3711
  %v3739 = vpop.f32.mrf.mxu0
  %v3740 = vadd.f32 %v3695, %v3739
  %3741 = vmatmul.f32.gmra.mxu0 %v3714
  %v3742 = vpop.f32.mrf.mxu0
  %v3743 = vadd.f32 %v3700, %v3742
  %3744 = vmatmul.f32.gmra.mxu0 %v3717
  %v3745 = vpop.f32.mrf.mxu0
  %v3746 = vadd.f32 %v3705, %v3745
  %3747 = vdwg.mxu0
  %v3748 = vadd.f32 %v1334, %v3737
  %v3749 = vadd.f32 %v1335, %v3740
  %v3750 = vadd.f32 %v1336, %v3743
  %v3751 = vadd.f32 %v1337, %v3746
  %v3752 = vld [vmem:[%s3] sm:$0xff]
  %v3753 = vld [vmem:[%s3 + $0x8] sm:$0xff]
  %v3754 = vld [vmem:[%s3 + $0x10] sm:$0xff]
  %v3755 = vld [vmem:[%s3 + $0x18] sm:$0xff]
  %v3756 = vld [vmem:[%s3 + $0x20] sm:$0xff]
  %v3757 = vld [vmem:[%s3 + $0x28] sm:$0xff]
  %v3758 = vld [vmem:[%s3 + $0x30] sm:$0xff]
  %v3759 = vld [vmem:[%s3 + $0x38] sm:$0xff]
  %v3760 = vld [vmem:[%s10] sm:$0xff]
  %v3761 = vld [vmem:[%s10 + $0x8] sm:$0xff]
  %v3762 = vld [vmem:[%s10 + $0x10] sm:$0xff]
  %v3763 = vld [vmem:[%s10 + $0x18] sm:$0xff]
  %v3764 = vld [vmem:[%s10 + $0x20] sm:$0xff]
  %v3765 = vld [vmem:[%s10 + $0x28] sm:$0xff]
  %v3766 = vld [vmem:[%s10 + $0x30] sm:$0xff]
  %v3767 = vld [vmem:[%s10 + $0x38] sm:$0xff]
  %v3768 = vld [vmem:[%s11] sm:$0xff]
  %v3769 = vld [vmem:[%s11 + $0x8] sm:$0xff]
  %v3770 = vld [vmem:[%s11 + $0x10] sm:$0xff]
  %v3771 = vld [vmem:[%s11 + $0x18] sm:$0xff]
  %v3772 = vld [vmem:[%s12] sm:$0xff]
  %v3773 = vld [vmem:[%s12 + $0x8] sm:$0xff]
  %v3774 = vld [vmem:[%s12 + $0x10] sm:$0xff]
  %v3775 = vld [vmem:[%s12 + $0x18] sm:$0xff]
  %v3776 = vld [vmem:[%s12 + $0x20] sm:$0xff]
  %v3777 = vld [vmem:[%s12 + $0x28] sm:$0xff]
  %v3778 = vld [vmem:[%s12 + $0x30] sm:$0xff]
  %v3779 = vld [vmem:[%s12 + $0x38] sm:$0xff]
  %v3780 = vld [vmem:[%s12 + $0x40] sm:$0xff]
  %v3781 = vld [vmem:[%s12 + $0x48] sm:$0xff]
  %v3782 = vld [vmem:[%s12 + $0x50] sm:$0xff]
  %v3783 = vld [vmem:[%s12 + $0x58] sm:$0xff]
  %v3784 = vld [vmem:[%s12 + $0x60] sm:$0xff]
  %v3785 = vld [vmem:[%s12 + $0x68] sm:$0xff]
  %v3786 = vld [vmem:[%s12 + $0x70] sm:$0xff]
  %v3787 = vld [vmem:[%s12 + $0x78] sm:$0xff]
  %v3788 = vld [vmem:[%s12 + $0x80] sm:$0xff]
  %v3789 = vld [vmem:[%s12 + $0x88] sm:$0xff]
  %v3790 = vld [vmem:[%s12 + $0x90] sm:$0xff]
  %v3791 = vld [vmem:[%s12 + $0x98] sm:$0xff]
  %v3792 = vld [vmem:[%s12 + $0xa0] sm:$0xff]
  %v3793 = vld [vmem:[%s12 + $0xa8] sm:$0xff]
  %v3794 = vld [vmem:[%s12 + $0xb0] sm:$0xff]
  %v3795 = vld [vmem:[%s12 + $0xb8] sm:$0xff]
  %v3796 = vld [vmem:[%s12 + $0xc0] sm:$0xff]
  %v3797 = vld [vmem:[%s12 + $0xc8] sm:$0xff]
  %v3798 = vld [vmem:[%s12 + $0xd0] sm:$0xff]
  %v3799 = vld [vmem:[%s12 + $0xd8] sm:$0xff]
  %v3800 = vld [vmem:[%s12 + $0xe0] sm:$0xff]
  %v3801 = vld [vmem:[%s12 + $0xe8] sm:$0xff]
  %v3802 = vld [vmem:[%s12 + $0xf0] sm:$0xff]
  %v3803 = vld [vmem:[%s12 + $0xf8] sm:$0xff]
  %v3804 = vld [vmem:[%s13] sm:$0xff]
  %v3805 = vld [vmem:[%s13 + $0x8] sm:$0xff]
  %v3806 = vld [vmem:[%s13 + $0x10] sm:$0xff]
  %v3807 = vld [vmem:[%s13 + $0x18] sm:$0xff]
  %v3808 = vld [vmem:[%s17] sm:$0xff]
  %v3809 = vld [vmem:[%s17 + $0x8] sm:$0xff]
  %v3810 = vld [vmem:[%s17 + $0x10] sm:$0xff]
  %v3811 = vld [vmem:[%s17 + $0x18] sm:$0xff]
  %v3812 = vld [vmem:[%s17 + $0x20] sm:$0xff]
  %v3813 = vld [vmem:[%s17 + $0x28] sm:$0xff]
  %v3814 = vld [vmem:[%s17 + $0x30] sm:$0xff]
  %v3815 = vld [vmem:[%s17 + $0x38] sm:$0xff]
  %v3816 = vld [vmem:[%s17 + $0x40] sm:$0xff]
  %v3817 = vld [vmem:[%s17 + $0x48] sm:$0xff]
  %v3818 = vld [vmem:[%s17 + $0x50] sm:$0xff]
  %v3819 = vld [vmem:[%s17 + $0x58] sm:$0xff]
  %v3820 = vld [vmem:[%s17 + $0x60] sm:$0xff]
  %v3821 = vld [vmem:[%s17 + $0x68] sm:$0xff]
  %v3822 = vld [vmem:[%s17 + $0x70] sm:$0xff]
  %v3823 = vld [vmem:[%s17 + $0x78] sm:$0xff]
  %v3824 = vld [vmem:[%s17 + $0x80] sm:$0xff]
  %v3825 = vld [vmem:[%s17 + $0x88] sm:$0xff]
  %v3826 = vld [vmem:[%s17 + $0x90] sm:$0xff]
  %v3827 = vld [vmem:[%s17 + $0x98] sm:$0xff]
  %v3828 = vld [vmem:[%s17 + $0xa0] sm:$0xff]
  %v3829 = vld [vmem:[%s17 + $0xa8] sm:$0xff]
  %v3830 = vld [vmem:[%s17 + $0xb0] sm:$0xff]
  %v3831 = vld [vmem:[%s17 + $0xb8] sm:$0xff]
  %v3832 = vld [vmem:[%s17 + $0xc0] sm:$0xff]
  %v3833 = vld [vmem:[%s17 + $0xc8] sm:$0xff]
  %v3834 = vld [vmem:[%s17 + $0xd0] sm:$0xff]
  %v3835 = vld [vmem:[%s17 + $0xd8] sm:$0xff]
  %v3836 = vld [vmem:[%s17 + $0xe0] sm:$0xff]
  %v3837 = vld [vmem:[%s18] sm:$0xff]
  %v3838 = vld [vmem:[%s18 + $0x8] sm:$0xff]
  %v3839 = vld [vmem:[%s18 + $0x10] sm:$0xff]
  %v3840 = vld [vmem:[%s18 + $0x18] sm:$0xff]
  %v3841 = vld [vmem:[%s18 + $0x20] sm:$0xff]
  %v3842 = vld [vmem:[%s18 + $0x28] sm:$0xff]
  %v3843 = vld [vmem:[%s18 + $0x30] sm:$0xff]
  %v3844 = vld [vmem:[%s18 + $0x38] sm:$0xff]
  %v3845 = vld [vmem:[%s18 + $0x40] sm:$0xff]
  %v3846 = vld [vmem:[%s18 + $0x48] sm:$0xff]
  %v3847 = vld [vmem:[%s18 + $0x50] sm:$0xff]
  %v3848 = vld [vmem:[%s18 + $0x58] sm:$0xff]
  %v3849 = vld [vmem:[%s18 + $0x60] sm:$0xff]
  %v3850 = vld [vmem:[%s18 + $0x68] sm:$0xff]
  %v3851 = vld [vmem:[%s18 + $0x70] sm:$0xff]
  %v3852 = vld [vmem:[%s18 + $0x78] sm:$0xff]
  %v3853 = vld [vmem:[%s18 + $0x80] sm:$0xff]
  %v3854 = vld [vmem:[%s19] sm:$0xff]
  %v3855 = vld [vmem:[%s19 + $0x8] sm:$0xff]
  %v3856 = vld [vmem:[%s19 + $0x10] sm:$0xff]
  %v3857 = vld [vmem:[%s19 + $0x18] sm:$0xff]
  %v3859 = vsel %vm214, %v3808, 0
  %v3862 = vsel %vm214, %v3809, 0
  %v3865 = vsel %vm214, %v3810, 0
  %v3868 = vsel %vm214, %v3811, 0
  %3870 = vmatpush.msra.mxu0 0.0
  %3871 = vmatpush.msra.mxu0 0.0
  %3872 = vmatpush.msra.mxu0 0.0
  %3873 = vmatpush.msra.mxu0 0.0
  %3874 = vmatpush.msra.mxu0 0.0
  %3875 = vmatpush.msra.mxu0 0.0
  %3876 = vmatpush.msra.mxu0 0.0
  %3877 = vmatpush.msra.mxu0 0.0
  %3878 = vmatpush.msra.mxu0 0.0
  %3879 = vmatpush.msra.mxu0 0.0
  %3880 = vmatpush.msra.mxu0 0.0
  %3881 = vmatpush.msra.mxu0 0.0
  %3882 = vmatpush.msra.mxu0 %v2865
  %3883 = vmatpush.msra.mxu0 %v2864
  %3884 = vmatpush.msra.mxu0 %v2863
  %3885 = vmatpush.msra.mxu0 %v2862
  %3886 = vmatmul.f32.gmra.mxu0 %v3859
  %v3887 = vpop.f32.mrf.mxu0
  %v3888 = vadd.f32 0.0, %v3887
  %3889 = vmatmul.f32.gmra.mxu0 %v3862
  %v3890 = vpop.f32.mrf.mxu0
  %v3891 = vadd.f32 0.0, %v3890
  %3892 = vmatmul.f32.gmra.mxu0 %v3865
  %v3893 = vpop.f32.mrf.mxu0
  %v3894 = vadd.f32 0.0, %v3893
  %3895 = vmatmul.f32.gmra.mxu0 %v3868
  %v3896 = vpop.f32.mrf.mxu0
  %v3897 = vadd.f32 0.0, %v3896
  %3898 = vdwg.mxu0
  %v3900 = vsel %vm214, %v3812, 0
  %v3903 = vsel %vm214, %v3813, 0
  %v3906 = vsel %vm214, %v3814, 0
  %v3909 = vsel %vm214, %v3815, 0
  %3911 = vmatpush.msra.mxu0 0.0
  %3912 = vmatpush.msra.mxu0 0.0
  %3913 = vmatpush.msra.mxu0 0.0
  %3914 = vmatpush.msra.mxu0 0.0
  %3915 = vmatpush.msra.mxu0 0.0
  %3916 = vmatpush.msra.mxu0 0.0
  %3917 = vmatpush.msra.mxu0 0.0
  %3918 = vmatpush.msra.mxu0 0.0
  %3919 = vmatpush.msra.mxu0 0.0
  %3920 = vmatpush.msra.mxu0 0.0
  %3921 = vmatpush.msra.mxu0 0.0
  %3922 = vmatpush.msra.mxu0 0.0
  %3923 = vmatpush.msra.mxu0 %v1337
  %3924 = vmatpush.msra.mxu0 %v1336
  %3925 = vmatpush.msra.mxu0 %v1335
  %3926 = vmatpush.msra.mxu0 %v1334
  %3927 = vmatmul.f32.gmra.mxu0 %v3900
  %v3928 = vpop.f32.mrf.mxu0
  %v3929 = vadd.f32 0.0, %v3928
  %3930 = vmatmul.f32.gmra.mxu0 %v3903
  %v3931 = vpop.f32.mrf.mxu0
  %v3932 = vadd.f32 0.0, %v3931
  %3933 = vmatmul.f32.gmra.mxu0 %v3906
  %v3934 = vpop.f32.mrf.mxu0
  %v3935 = vadd.f32 0.0, %v3934
  %3936 = vmatmul.f32.gmra.mxu0 %v3909
  %v3937 = vpop.f32.mrf.mxu0
  %v3938 = vadd.f32 0.0, %v3937
  %3939 = vdwg.mxu0
  %v3941 = vsel %vm214, %v3888, 0
  %v3944 = vsel %vm214, %v3891, 0
  %v3947 = vsel %vm214, %v3894, 0
  %v3950 = vsel %vm214, %v3897, 0
  %3952 = vmatpush.msra.mxu0 0.0
  %3953 = vmatpush.msra.mxu0 0.0
  %3954 = vmatpush.msra.mxu0 0.0
  %3955 = vmatpush.msra.mxu0 0.0
  %3956 = vmatpush.msra.mxu0 0.0
  %3957 = vmatpush.msra.mxu0 0.0
  %3958 = vmatpush.msra.mxu0 0.0
  %3959 = vmatpush.msra.mxu0 0.0
  %3960 = vmatpush.msra.mxu0 0.0
  %3961 = vmatpush.msra.mxu0 0.0
  %3962 = vmatpush.msra.mxu0 0.0
  %3963 = vmatpush.msra.mxu0 0.0
  %3964 = vmatpush.msra.mxu0 %v3766
  %3965 = vmatpush.msra.mxu0 %v3764
  %3966 = vmatpush.msra.mxu0 %v3762
  %3967 = vmatpush.msra.mxu0 %v3760
  %3968 = vmatmul.f32.gmra.mxu0 %v3941
  %v3969 = vpop.f32.mrf.mxu0
  %v3970 = vadd.f32 0.0, %v3969
  %3971 = vmatmul.f32.gmra.mxu0 %v3944
  %v3972 = vpop.f32.mrf.mxu0
  %v3973 = vadd.f32 0.0, %v3972
  %3974 = vmatmul.f32.gmra.mxu0 %v3947
  %v3975 = vpop.f32.mrf.mxu0
  %v3976 = vadd.f32 0.0, %v3975
  %3977 = vmatmul.f32.gmra.mxu0 %v3950
  %v3978 = vpop.f32.mrf.mxu0
  %v3979 = vadd.f32 0.0, %v3978
  %3980 = vdwg.mxu0
  %3981 = vmatpush.msra.mxu0 0.0
  %3982 = vmatpush.msra.mxu0 0.0
  %3983 = vmatpush.msra.mxu0 0.0
  %3984 = vmatpush.msra.mxu0 0.0
  %3985 = vmatpush.msra.mxu0 0.0
  %3986 = vmatpush.msra.mxu0 0.0
  %3987 = vmatpush.msra.mxu0 0.0
  %3988 = vmatpush.msra.mxu0 0.0
  %3989 = vmatpush.msra.mxu0 0.0
  %3990 = vmatpush.msra.mxu0 0.0
  %3991 = vmatpush.msra.mxu0 0.0
  %3992 = vmatpush.msra.mxu0 0.0
  %3993 = vmatpush.msra.mxu0 %v3767
  %3994 = vmatpush.msra.mxu0 %v3765
  %3995 = vmatpush.msra.mxu0 %v3763
  %3996 = vmatpush.msra.mxu0 %v3761
  %3997 = vmatmul.f32.gmra.mxu0 %v3941
  %v3998 = vpop.f32.mrf.mxu0
  %v3999 = vadd.f32 0.0, %v3998
  %4000 = vmatmul.f32.gmra.mxu0 %v3944
  %v4001 = vpop.f32.mrf.mxu0
  %v4002 = vadd.f32 0.0, %v4001
  %4003 = vmatmul.f32.gmra.mxu0 %v3947
  %v4004 = vpop.f32.mrf.mxu0
  %v4005 = vadd.f32 0.0, %v4004
  %4006 = vmatmul.f32.gmra.mxu0 %v3950
  %v4007 = vpop.f32.mrf.mxu0
  %v4008 = vadd.f32 0.0, %v4007
  %4009 = vdwg.mxu0
  %v4011 = vsel %vm214, %v3816, 0
  %v4014 = vsel %vm214, %v3817, 0
  %v4017 = vsel %vm214, %v3818, 0
  %v4020 = vsel %vm214, %v3819, 0
  %4022 = vmatpush.msra.mxu0 0.0
  %4023 = vmatpush.msra.mxu0 0.0
  %4024 = vmatpush.msra.mxu0 0.0
  %4025 = vmatpush.msra.mxu0 0.0
  %4026 = vmatpush.msra.mxu0 0.0
  %4027 = vmatpush.msra.mxu0 0.0
  %4028 = vmatpush.msra.mxu0 0.0
  %4029 = vmatpush.msra.mxu0 0.0
  %4030 = vmatpush.msra.mxu0 0.0
  %4031 = vmatpush.msra.mxu0 0.0
  %4032 = vmatpush.msra.mxu0 0.0
  %4033 = vmatpush.msra.mxu0 0.0
  %4034 = vmatpush.msra.mxu0 %v3758
  %4035 = vmatpush.msra.mxu0 %v3756
  %4036 = vmatpush.msra.mxu0 %v3754
  %4037 = vmatpush.msra.mxu0 %v3752
  %4038 = vmatmul.f32.gmra.mxu0 %v4011
  %v4039 = vpop.f32.mrf.mxu0
  %v4040 = vadd.f32 %v3970, %v4039
  %4041 = vmatmul.f32.gmra.mxu0 %v4014
  %v4042 = vpop.f32.mrf.mxu0
  %v4043 = vadd.f32 %v3973, %v4042
  %4044 = vmatmul.f32.gmra.mxu0 %v4017
  %v4045 = vpop.f32.mrf.mxu0
  %v4046 = vadd.f32 %v3976, %v4045
  %4047 = vmatmul.f32.gmra.mxu0 %v4020
  %v4048 = vpop.f32.mrf.mxu0
  %v4049 = vadd.f32 %v3979, %v4048
  %4050 = vdwg.mxu0
  %4051 = vmatpush.msra.mxu0 0.0
  %4052 = vmatpush.msra.mxu0 0.0
  %4053 = vmatpush.msra.mxu0 0.0
  %4054 = vmatpush.msra.mxu0 0.0
  %4055 = vmatpush.msra.mxu0 0.0
  %4056 = vmatpush.msra.mxu0 0.0
  %4057 = vmatpush.msra.mxu0 0.0
  %4058 = vmatpush.msra.mxu0 0.0
  %4059 = vmatpush.msra.mxu0 0.0
  %4060 = vmatpush.msra.mxu0 0.0
  %4061 = vmatpush.msra.mxu0 0.0
  %4062 = vmatpush.msra.mxu0 0.0
  %4063 = vmatpush.msra.mxu0 %v3759
  %4064 = vmatpush.msra.mxu0 %v3757
  %4065 = vmatpush.msra.mxu0 %v3755
  %4066 = vmatpush.msra.mxu0 %v3753
  %4067 = vmatmul.f32.gmra.mxu0 %v4011
  %v4068 = vpop.f32.mrf.mxu0
  %v4069 = vadd.f32 %v3999, %v4068
  %4070 = vmatmul.f32.gmra.mxu0 %v4014
  %v4071 = vpop.f32.mrf.mxu0
  %v4072 = vadd.f32 %v4002, %v4071
  %4073 = vmatmul.f32.gmra.mxu0 %v4017
  %v4074 = vpop.f32.mrf.mxu0
  %v4075 = vadd.f32 %v4005, %v4074
  %4076 = vmatmul.f32.gmra.mxu0 %v4020
  %v4077 = vpop.f32.mrf.mxu0
  %v4078 = vadd.f32 %v4008, %v4077
  %4079 = vdwg.mxu0
  %v4081 = vsel %vm370, %v3929, 0
  %v4084 = vsel %vm370, %v3932, 0
  %v4087 = vsel %vm370, %v3935, 0
  %v4090 = vsel %vm370, %v3938, 0
  %4092 = vmatpush.msra.mxu0 0.0
  %4093 = vmatpush.msra.mxu0 0.0
  %4094 = vmatpush.msra.mxu0 0.0
  %4095 = vmatpush.msra.mxu0 0.0
  %4096 = vmatpush.msra.mxu0 0.0
  %4097 = vmatpush.msra.mxu0 0.0
  %4098 = vmatpush.msra.mxu0 0.0
  %4099 = vmatpush.msra.mxu0 0.0
  %4100 = vmatpush.msra.mxu0 0.0
  %4101 = vmatpush.msra.mxu0 0.0
  %4102 = vmatpush.msra.mxu0 0.0
  %4103 = vmatpush.msra.mxu0 0.0
  %4104 = vmatpush.msra.mxu0 0.0
  %4105 = vmatpush.msra.mxu0 0.0
  %4106 = vmatpush.msra.mxu0 %v3770
  %4107 = vmatpush.msra.mxu0 %v3768
  %4108 = vmatmul.f32.gmra.mxu0 %v4081
  %v4109 = vpop.f32.mrf.mxu0
  %v4110 = vadd.f32 0.0, %v4109
  %4111 = vmatmul.f32.gmra.mxu0 %v4084
  %v4112 = vpop.f32.mrf.mxu0
  %v4113 = vadd.f32 0.0, %v4112
  %4114 = vmatmul.f32.gmra.mxu0 %v4087
  %v4115 = vpop.f32.mrf.mxu0
  %v4116 = vadd.f32 0.0, %v4115
  %4117 = vmatmul.f32.gmra.mxu0 %v4090
  %v4118 = vpop.f32.mrf.mxu0
  %v4119 = vadd.f32 0.0, %v4118
  %4120 = vdwg.mxu0
  %4121 = vmatpush.msra.mxu0 0.0
  %4122 = vmatpush.msra.mxu0 0.0
  %4123 = vmatpush.msra.mxu0 0.0
  %4124 = vmatpush.msra.mxu0 0.0
  %4125 = vmatpush.msra.mxu0 0.0
  %4126 = vmatpush.msra.mxu0 0.0
  %4127 = vmatpush.msra.mxu0 0.0
  %4128 = vmatpush.msra.mxu0 0.0
  %4129 = vmatpush.msra.mxu0 0.0
  %4130 = vmatpush.msra.mxu0 0.0
  %4131 = vmatpush.msra.mxu0 0.0
  %4132 = vmatpush.msra.mxu0 0.0
  %4133 = vmatpush.msra.mxu0 0.0
  %4134 = vmatpush.msra.mxu0 0.0
  %4135 = vmatpush.msra.mxu0 %v3771
  %4136 = vmatpush.msra.mxu0 %v3769
  %4137 = vmatmul.f32.gmra.mxu0 %v4081
  %v4138 = vpop.f32.mrf.mxu0
  %v4139 = vadd.f32 0.0, %v4138
  %4140 = vmatmul.f32.gmra.mxu0 %v4084
  %v4141 = vpop.f32.mrf.mxu0
  %v4142 = vadd.f32 0.0, %v4141
  %4143 = vmatmul.f32.gmra.mxu0 %v4087
  %v4144 = vpop.f32.mrf.mxu0
  %v4145 = vadd.f32 0.0, %v4144
  %4146 = vmatmul.f32.gmra.mxu0 %v4090
  %v4147 = vpop.f32.mrf.mxu0
  %v4148 = vadd.f32 0.0, %v4147
  %4149 = vdwg.mxu0
  %v4150 = vadd.f32 %v4040, %v4110
  %v4151 = vadd.f32 %v4069, %v4139
  %v4152 = vadd.f32 %v4043, %v4113
  %v4153 = vadd.f32 %v4072, %v4142
  %v4154 = vadd.f32 %v4046, %v4116
  %v4155 = vadd.f32 %v4075, %v4145
  %v4156 = vadd.f32 %v4049, %v4119
  %v4157 = vadd.f32 %v4078, %v4148
  %4159 = vset.pattern.permute.xlu0 0
  %4160 = vperm.xlu0 %4159, %v3837
  %v4161 = vpop.permute.xlu0 %4160
  %4164 = vset.pattern.permute.xlu0 0
  %4165 = vperm.xlu0 %4164, %v3838
  %v4166 = vpop.permute.xlu0 %4165
  %4169 = vset.pattern.permute.xlu0 0
  %4170 = vperm.xlu0 %4169, %v3839
  %v4171 = vpop.permute.xlu0 %4170
  %4174 = vset.pattern.permute.xlu0 0
  %4175 = vperm.xlu0 %4174, %v3840
  %v4176 = vpop.permute.xlu0 %4175
  %v4178 = vadd.f32 %v4150, %v4161
  %v4179 = vadd.f32 %v4151, %v4161
  %v4180 = vadd.f32 %v4152, %v4166
  %v4181 = vadd.f32 %v4153, %v4166
  %v4182 = vadd.f32 %v4154, %v4171
  %v4183 = vadd.f32 %v4155, %v4171
  %v4184 = vadd.f32 %v4156, %v4176
  %v4185 = vadd.f32 %v4157, %v4176
  %v4186 = vmax.f32 %v4178, 0.0
  %v4187 = vmax.f32 %v4179, 0.0
  %v4188 = vmax.f32 %v4180, 0.0
  %v4189 = vmax.f32 %v4181, 0.0
  %v4190 = vmax.f32 %v4182, 0.0
  %v4191 = vmax.f32 %v4183, 0.0
  %v4192 = vmax.f32 %v4184, 0.0
  %v4193 = vmax.f32 %v4185, 0.0
  %4195 = vset.pattern.permute.xlu0 0
  %4196 = vperm.xlu0 %4195, %v3841
  %v4197 = vpop.permute.xlu0 %4196
  %v4200 = vsel %vm214, %v3820, 0
  %4202 = vmatpush.msra.mxu0 0.0
  %4203 = vmatpush.msra.mxu0 0.0
  %4204 = vmatpush.msra.mxu0 0.0
  %4205 = vmatpush.msra.mxu0 0.0
  %4206 = vmatpush.msra.mxu0 0.0
  %4207 = vmatpush.msra.mxu0 0.0
  %4208 = vmatpush.msra.mxu0 0.0
  %4209 = vmatpush.msra.mxu0 0.0
  %4210 = vmatpush.msra.mxu0 0.0
  %4211 = vmatpush.msra.mxu0 0.0
  %4212 = vmatpush.msra.mxu0 0.0
  %4213 = vmatpush.msra.mxu0 0.0
  %4214 = vmatpush.msra.mxu0 %v4192
  %4215 = vmatpush.msra.mxu0 %v4190
  %4216 = vmatpush.msra.mxu0 %v4188
  %4217 = vmatpush.msra.mxu0 %v4186
  %4218 = vmatmul.f32.gmra.mxu0 %v4200
  %v4219 = vpop.f32.mrf.mxu0
  %v4220 = vadd.f32 %v4197, %v4219
  %4221 = vdwg.mxu0
  %4222 = vmatpush.msra.mxu0 0.0
  %4223 = vmatpush.msra.mxu0 0.0
  %4224 = vmatpush.msra.mxu0 0.0
  %4225 = vmatpush.msra.mxu0 0.0
  %4226 = vmatpush.msra.mxu0 0.0
  %4227 = vmatpush.msra.mxu0 0.0
  %4228 = vmatpush.msra.mxu0 0.0
  %4229 = vmatpush.msra.mxu0 0.0
  %4230 = vmatpush.msra.mxu0 0.0
  %4231 = vmatpush.msra.mxu0 0.0
  %4232 = vmatpush.msra.mxu0 0.0
  %4233 = vmatpush.msra.mxu0 0.0
  %4234 = vmatpush.msra.mxu0 %v4193
  %4235 = vmatpush.msra.mxu0 %v4191
  %4236 = vmatpush.msra.mxu0 %v4189
  %4237 = vmatpush.msra.mxu0 %v4187
  %4238 = vmatmul.f32.gmra.mxu0 %v4200
  %v4239 = vpop.f32.mrf.mxu0
  %v4240 = vadd.f32 %v4197, %v4239
  %4241 = vdwg.mxu0
  %v4242 = vperm.slane %v4220, 0
  %v4243 = vperm.slane %v4240, 0
  %v4244 = vmul.f32 %v3760, %v4242
  %v4245 = vmul.f32 %v3761, %v4243
  %v4246 = vmul.f32 %v3762, %v4242
  %v4247 = vmul.f32 %v3763, %v4243
  %v4248 = vmul.f32 %v3764, %v4242
  %v4249 = vmul.f32 %v3765, %v4243
  %v4250 = vmul.f32 %v3766, %v4242
  %v4251 = vmul.f32 %v3767, %v4243
  %4252 = vmatpush.msra.mxu0 %v3787
  %4253 = vmatpush.msra.mxu0 %v3786
  %4254 = vmatpush.msra.mxu0 %v3785
  %4255 = vmatpush.msra.mxu0 %v3784
  %4256 = vmatpush.msra.mxu0 %v3783
  %4257 = vmatpush.msra.mxu0 %v3782
  %4258 = vmatpush.msra.mxu0 %v3781
  %4259 = vmatpush.msra.mxu0 %v3780
  %4260 = vmatpush.msra.mxu0 %v3779
  %4261 = vmatpush.msra.mxu0 %v3778
  %4262 = vmatpush.msra.mxu0 %v3777
  %4263 = vmatpush.msra.mxu0 %v3776
  %4264 = vmatpush.msra.mxu0 %v3775
  %4265 = vmatpush.msra.mxu0 %v3774
  %4266 = vmatpush.msra.mxu0 %v3773
  %4267 = vmatpush.msra.mxu0 %v3772
  %4268 = vmatmul.f32.gmra.mxu0 %v4244
  %v4269 = vpop.f32.mrf.mxu0
  %v4270 = vadd.f32 %v3804, %v4269
  %4271 = vmatmul.f32.gmra.mxu0 %v4246
  %v4272 = vpop.f32.mrf.mxu0
  %v4273 = vadd.f32 %v3805, %v4272
  %4274 = vmatmul.f32.gmra.mxu0 %v4248
  %v4275 = vpop.f32.mrf.mxu0
  %v4276 = vadd.f32 %v3806, %v4275
  %4277 = vmatmul.f32.gmra.mxu0 %v4250
  %v4278 = vpop.f32.mrf.mxu0
  %v4279 = vadd.f32 %v3807, %v4278
  %4280 = vdwg.mxu0
  %4281 = vmatpush.msra.mxu0 %v3803
  %4282 = vmatpush.msra.mxu0 %v3802
  %4283 = vmatpush.msra.mxu0 %v3801
  %4284 = vmatpush.msra.mxu0 %v3800
  %4285 = vmatpush.msra.mxu0 %v3799
  %4286 = vmatpush.msra.mxu0 %v3798
  %4287 = vmatpush.msra.mxu0 %v3797
  %4288 = vmatpush.msra.mxu0 %v3796
  %4289 = vmatpush.msra.mxu0 %v3795
  %4290 = vmatpush.msra.mxu0 %v3794
  %4291 = vmatpush.msra.mxu0 %v3793
  %4292 = vmatpush.msra.mxu0 %v3792
  %4293 = vmatpush.msra.mxu0 %v3791
  %4294 = vmatpush.msra.mxu0 %v3790
  %4295 = vmatpush.msra.mxu0 %v3789
  %4296 = vmatpush.msra.mxu0 %v3788
  %4297 = vmatmul.f32.gmra.mxu0 %v4245
  %v4298 = vpop.f32.mrf.mxu0
  %v4299 = vadd.f32 %v4270, %v4298
  %4300 = vmatmul.f32.gmra.mxu0 %v4247
  %v4301 = vpop.f32.mrf.mxu0
  %v4302 = vadd.f32 %v4273, %v4301
  %4303 = vmatmul.f32.gmra.mxu0 %v4249
  %v4304 = vpop.f32.mrf.mxu0
  %v4305 = vadd.f32 %v4276, %v4304
  %4306 = vmatmul.f32.gmra.mxu0 %v4251
  %v4307 = vpop.f32.mrf.mxu0
  %v4308 = vadd.f32 %v4279, %v4307
  %4309 = vdwg.mxu0
  %v4310 = vsel %vm370, %v4299, -inf
  %4311 = vmax.xlane.f32.xlu0 %v4310
  %v4312 = vpop.xlane.xlu0 %4311
  %v4313 = vsel %vm370, %v4302, -inf
  %4314 = vmax.xlane.f32.xlu0 %v4313
  %v4315 = vpop.xlane.xlu0 %4314
  %v4316 = vsel %vm370, %v4305, -inf
  %4317 = vmax.xlane.f32.xlu0 %v4316
  %v4318 = vpop.xlane.xlu0 %4317
  %v4319 = vsel %vm370, %v4308, -inf
  %4320 = vmax.xlane.f32.xlu0 %v4319
  %v4321 = vpop.xlane.xlu0 %4320
  %v4322 = vsub.f32 %v4299, %v4312
  %v4323 = vsub.f32 %v4302, %v4315
  %v4324 = vsub.f32 %v4305, %v4318
  %v4325 = vsub.f32 %v4308, %v4321
  %v4326 = vmul.f32 %v4322, 1.442695
  %v4327 = vpow.pop %v4326
  %v4328 = vmul.f32 %v4323, 1.442695
  %v4329 = vpow.pop %v4328
  %v4330 = vmul.f32 %v4324, 1.442695
  %v4331 = vpow.pop %v4330
  %v4332 = vmul.f32 %v4325, 1.442695
  %v4333 = vpow.pop %v4332
  %v4334 = vsel %vm370, %v4327, 0.0
  %4335 = vadd.xlane.f32.xlu0 %v4334
  %v4336 = vpop.xlane.xlu0 %4335
  %v4337 = vsel %vm370, %v4329, 0.0
  %4338 = vadd.xlane.f32.xlu0 %v4337
  %v4339 = vpop.xlane.xlu0 %4338
  %v4340 = vsel %vm370, %v4331, 0.0
  %4341 = vadd.xlane.f32.xlu0 %v4340
  %v4342 = vpop.xlane.xlu0 %4341
  %v4343 = vsel %vm370, %v4333, 0.0
  %4344 = vadd.xlane.f32.xlu0 %v4343
  %v4345 = vpop.xlane.xlu0 %4344
  %v4346 = vrcp.pop %v4336
  %v4347 = vmul.f32 %v4336, %v4346
  %v4348 = vsub.f32 1.0, %v4347
  %v4349 = vmul.f32 %v4346, %v4348
  %v4350 = vadd.f32 %v4346, %v4349
  %vm4351 = vweird.f32 %v4336
  %vm4352 = vweird.f32 %v4346
  %vm4353 = vmor %vm4351, %vm4352
  %v4354 = vsel %vm4353, %v4346, %v4350
  %v4355 = vand.u32 2147483647, %v4336
  %vm4356 = vcmp.eq.f32.partialorder %v4355, 8.507059e+37
  %v4357 = vand.u32 %v4336, 2147483648
  %v4358 = vor.u32 1.1754944e-38, %v4357
  %v4359 = vsel %vm4356, %v4358, %v4354
  %v4360 = vmul.f32 %v4327, %v4359
  %v4361 = vrcp.pop %v4339
  %v4362 = vmul.f32 %v4339, %v4361
  %v4363 = vsub.f32 1.0, %v4362
  %v4364 = vmul.f32 %v4361, %v4363
  %v4365 = vadd.f32 %v4361, %v4364
  %vm4366 = vweird.f32 %v4339
  %vm4367 = vweird.f32 %v4361
  %vm4368 = vmor %vm4366, %vm4367
  %v4369 = vsel %vm4368, %v4361, %v4365
  %v4370 = vand.u32 2147483647, %v4339
  %vm4371 = vcmp.eq.f32.partialorder %v4370, 8.507059e+37
  %v4372 = vand.u32 %v4339, 2147483648
  %v4373 = vor.u32 1.1754944e-38, %v4372
  %v4374 = vsel %vm4371, %v4373, %v4369
  %v4375 = vmul.f32 %v4329, %v4374
  %v4376 = vrcp.pop %v4342
  %v4377 = vmul.f32 %v4342, %v4376
  %v4378 = vsub.f32 1.0, %v4377
  %v4379 = vmul.f32 %v4376, %v4378
  %v4380 = vadd.f32 %v4376, %v4379
  %vm4381 = vweird.f32 %v4342
  %vm4382 = vweird.f32 %v4376
  %vm4383 = vmor %vm4381, %vm4382
  %v4384 = vsel %vm4383, %v4376, %v4380
  %v4385 = vand.u32 2147483647, %v4342
  %vm4386 = vcmp.eq.f32.partialorder %v4385, 8.507059e+37
  %v4387 = vand.u32 %v4342, 2147483648
  %v4388 = vor.u32 1.1754944e-38, %v4387
  %v4389 = vsel %vm4386, %v4388, %v4384
  %v4390 = vmul.f32 %v4331, %v4389
  %v4391 = vrcp.pop %v4345
  %v4392 = vmul.f32 %v4345, %v4391
  %v4393 = vsub.f32 1.0, %v4392
  %v4394 = vmul.f32 %v4391, %v4393
  %v4395 = vadd.f32 %v4391, %v4394
  %vm4396 = vweird.f32 %v4345
  %vm4397 = vweird.f32 %v4391
  %vm4398 = vmor %vm4396, %vm4397
  %v4399 = vsel %vm4398, %v4391, %v4395
  %v4400 = vand.u32 2147483647, %v4345
  %vm4401 = vcmp.eq.f32.partialorder %v4400, 8.507059e+37
  %v4402 = vand.u32 %v4345, 2147483648
  %v4403 = vor.u32 1.1754944e-38, %v4402
  %v4404 = vsel %vm4401, %v4403, %v4399
  %v4405 = vmul.f32 %v4333, %v4404
  %v4407 = vsel %vm370, %v1334, 0
  %v4410 = vsel %vm370, %v1335, 0
  %v4413 = vsel %vm370, %v1336, 0
  %v4416 = vsel %vm370, %v1337, 0
  %v4419 = vsel %vm370, %v4360, 0
  %v4422 = vsel %vm370, %v4375, 0
  %v4425 = vsel %vm370, %v4390, 0
  %v4428 = vsel %vm370, %v4405, 0
  %4430 = vmatpush.xpose.msra.mxu0 0.0
  %4431 = vmatpush.xpose.msra.mxu0 0.0
  %4432 = vmatpush.xpose.msra.mxu0 0.0
  %4433 = vmatpush.xpose.msra.mxu0 0.0
  %4434 = vmatpush.xpose.msra.mxu0 0.0
  %4435 = vmatpush.xpose.msra.mxu0 0.0
  %4436 = vmatpush.xpose.msra.mxu0 0.0
  %4437 = vmatpush.xpose.msra.mxu0 0.0
  %4438 = vmatpush.xpose.msra.mxu0 0.0
  %4439 = vmatpush.xpose.msra.mxu0 0.0
  %4440 = vmatpush.xpose.msra.mxu0 0.0
  %4441 = vmatpush.xpose.msra.mxu0 0.0
  %4442 = vmatpush.xpose.msra.mxu0 %v4428
  %4443 = vmatpush.xpose.msra.mxu0 %v4425
  %4444 = vmatpush.xpose.msra.mxu0 %v4422
  %4445 = vmatpush.xpose.msra.mxu0 %v4419
  %4446 = vmatmul.f32.gmra.mxu0 %v4407
  %v4447 = vpop.f32.mrf.mxu0
  %v4448 = vadd.f32 0.0, %v4447
  %4449 = vmatmul.f32.gmra.mxu0 %v4410
  %v4450 = vpop.f32.mrf.mxu0
  %v4451 = vadd.f32 0.0, %v4450
  %4452 = vmatmul.f32.gmra.mxu0 %v4413
  %v4453 = vpop.f32.mrf.mxu0
  %v4454 = vadd.f32 0.0, %v4453
  %4455 = vmatmul.f32.gmra.mxu0 %v4416
  %v4456 = vpop.f32.mrf.mxu0
  %v4457 = vadd.f32 0.0, %v4456
  %4458 = vdwg.mxu0
  %v4460 = vsel %vm214, %v3829, 0
  %v4463 = vsel %vm214, %v3830, 0
  %v4466 = vsel %vm214, %v3831, 0
  %v4469 = vsel %vm214, %v3832, 0
  %v4472 = vsel %vm214, %v3833, 0
  %v4475 = vsel %vm214, %v3834, 0
  %v4478 = vsel %vm214, %v3835, 0
  %v4481 = vsel %vm214, %v3836, 0
  %4483 = vmatpush.msra.mxu0 0.0
  %4484 = vmatpush.msra.mxu0 0.0
  %4485 = vmatpush.msra.mxu0 0.0
  %4486 = vmatpush.msra.mxu0 0.0
  %4487 = vmatpush.msra.mxu0 0.0
  %4488 = vmatpush.msra.mxu0 0.0
  %4489 = vmatpush.msra.mxu0 0.0
  %4490 = vmatpush.msra.mxu0 0.0
  %4491 = vmatpush.msra.mxu0 0.0
  %4492 = vmatpush.msra.mxu0 0.0
  %4493 = vmatpush.msra.mxu0 0.0
  %4494 = vmatpush.msra.mxu0 0.0
  %4495 = vmatpush.msra.mxu0 %v4457
  %4496 = vmatpush.msra.mxu0 %v4454
  %4497 = vmatpush.msra.mxu0 %v4451
  %4498 = vmatpush.msra.mxu0 %v4448
  %4499 = vmatmul.f32.gmra.mxu0 %v4460
  %v4500 = vpop.f32.mrf.mxu0
  %v4501 = vadd.f32 0.0, %v4500
  %4502 = vmatmul.f32.gmra.mxu0 %v4463
  %v4503 = vpop.f32.mrf.mxu0
  %v4504 = vadd.f32 0.0, %v4503
  %4505 = vmatmul.f32.gmra.mxu0 %v4466
  %v4506 = vpop.f32.mrf.mxu0
  %v4507 = vadd.f32 0.0, %v4506
  %4508 = vmatmul.f32.gmra.mxu0 %v4469
  %v4509 = vpop.f32.mrf.mxu0
  %v4510 = vadd.f32 0.0, %v4509
  %4511 = vmatmul.f32.gmra.mxu0 %v4472
  %v4512 = vpop.f32.mrf.mxu0
  %v4513 = vadd.f32 0.0, %v4512
  %4514 = vmatmul.f32.gmra.mxu0 %v4475
  %v4515 = vpop.f32.mrf.mxu0
  %v4516 = vadd.f32 0.0, %v4515
  %4517 = vmatmul.f32.gmra.mxu0 %v4478
  %v4518 = vpop.f32.mrf.mxu0
  %v4519 = vadd.f32 0.0, %v4518
  %4520 = vmatmul.f32.gmra.mxu0 %v4481
  %v4521 = vpop.f32.mrf.mxu0
  %v4522 = vadd.f32 0.0, %v4521
  %4523 = vdwg.mxu0
  %v4525 = vsel %vm214, %v3821, 0
  %v4528 = vsel %vm214, %v3822, 0
  %v4531 = vsel %vm214, %v3823, 0
  %v4534 = vsel %vm214, %v3824, 0
  %v4537 = vsel %vm214, %v3825, 0
  %v4540 = vsel %vm214, %v3826, 0
  %v4543 = vsel %vm214, %v3827, 0
  %v4546 = vsel %vm214, %v3828, 0
  %4548 = vmatpush.msra.mxu0 0.0
  %4549 = vmatpush.msra.mxu0 0.0
  %4550 = vmatpush.msra.mxu0 0.0
  %4551 = vmatpush.msra.mxu0 0.0
  %4552 = vmatpush.msra.mxu0 0.0
  %4553 = vmatpush.msra.mxu0 0.0
  %4554 = vmatpush.msra.mxu0 0.0
  %4555 = vmatpush.msra.mxu0 0.0
  %4556 = vmatpush.msra.mxu0 0.0
  %4557 = vmatpush.msra.mxu0 0.0
  %4558 = vmatpush.msra.mxu0 0.0
  %4559 = vmatpush.msra.mxu0 0.0
  %4560 = vmatpush.msra.mxu0 %v2865
  %4561 = vmatpush.msra.mxu0 %v2864
  %4562 = vmatpush.msra.mxu0 %v2863
  %4563 = vmatpush.msra.mxu0 %v2862
  %4564 = vmatmul.f32.gmra.mxu0 %v4525
  %v4565 = vpop.f32.mrf.mxu0
  %v4566 = vadd.f32 %v4501, %v4565
  %4567 = vmatmul.f32.gmra.mxu0 %v4528
  %v4568 = vpop.f32.mrf.mxu0
  %v4569 = vadd.f32 %v4504, %v4568
  %4570 = vmatmul.f32.gmra.mxu0 %v4531
  %v4571 = vpop.f32.mrf.mxu0
  %v4572 = vadd.f32 %v4507, %v4571
  %4573 = vmatmul.f32.gmra.mxu0 %v4534
  %v4574 = vpop.f32.mrf.mxu0
  %v4575 = vadd.f32 %v4510, %v4574
  %4576 = vmatmul.f32.gmra.mxu0 %v4537
  %v4577 = vpop.f32.mrf.mxu0
  %v4578 = vadd.f32 %v4513, %v4577
  %4579 = vmatmul.f32.gmra.mxu0 %v4540
  %v4580 = vpop.f32.mrf.mxu0
  %v4581 = vadd.f32 %v4516, %v4580
  %4582 = vmatmul.f32.gmra.mxu0 %v4543
  %v4583 = vpop.f32.mrf.mxu0
  %v4584 = vadd.f32 %v4519, %v4583
  %4585 = vmatmul.f32.gmra.mxu0 %v4546
  %v4586 = vpop.f32.mrf.mxu0
  %v4587 = vadd.f32 %v4522, %v4586
  %4588 = vdwg.mxu0
  %4590 = vset.pattern.permute.xlu0 0
  %4591 = vperm.xlu0 %4590, %v3842
  %v4592 = vpop.permute.xlu0 %4591
  %4595 = vset.pattern.permute.xlu0 0
  %4596 = vperm.xlu0 %4595, %v3843
  %v4597 = vpop.permute.xlu0 %4596
  %4600 = vset.pattern.permute.xlu0 0
  %4601 = vperm.xlu0 %4600, %v3844
  %v4602 = vpop.permute.xlu0 %4601
  %4605 = vset.pattern.permute.xlu0 0
  %4606 = vperm.xlu0 %4605, %v3845
  %v4607 = vpop.permute.xlu0 %4606
  %4610 = vset.pattern.permute.xlu0 0
  %4611 = vperm.xlu0 %4610, %v3846
  %v4612 = vpop.permute.xlu0 %4611
  %4615 = vset.pattern.permute.xlu0 0
  %4616 = vperm.xlu0 %4615, %v3847
  %v4617 = vpop.permute.xlu0 %4616
  %4620 = vset.pattern.permute.xlu0 0
  %4621 = vperm.xlu0 %4620, %v3848
  %v4622 = vpop.permute.xlu0 %4621
  %4625 = vset.pattern.permute.xlu0 0
  %4626 = vperm.xlu0 %4625, %v3849
  %v4627 = vpop.permute.xlu0 %4626
  %v4629 = vadd.f32 %v4566, %v4592
  %v4630 = vadd.f32 %v4569, %v4597
  %v4631 = vadd.f32 %v4572, %v4602
  %v4632 = vadd.f32 %v4575, %v4607
  %v4633 = vadd.f32 %v4578, %v4612
  %v4634 = vadd.f32 %v4581, %v4617
  %v4635 = vadd.f32 %v4584, %v4622
  %v4636 = vadd.f32 %v4587, %v4627
  %v4637 = vmax.f32 %v4629, 0.0
  %v4638 = vmax.f32 %v4630, 0.0
  %v4639 = vmax.f32 %v4631, 0.0
  %v4640 = vmax.f32 %v4632, 0.0
  %v4641 = vmax.f32 %v4633, 0.0
  %v4642 = vmax.f32 %v4634, 0.0
  %v4643 = vmax.f32 %v4635, 0.0
  %v4644 = vmax.f32 %v4636, 0.0
  %4646 = vset.pattern.permute.xlu0 0
  %4647 = vperm.xlu0 %4646, %v3850
  %v4648 = vpop.permute.xlu0 %4647
  %4651 = vset.pattern.permute.xlu0 0
  %4652 = vperm.xlu0 %4651, %v3851
  %v4653 = vpop.permute.xlu0 %4652
  %4656 = vset.pattern.permute.xlu0 0
  %4657 = vperm.xlu0 %4656, %v3852
  %v4658 = vpop.permute.xlu0 %4657
  %4661 = vset.pattern.permute.xlu0 0
  %4662 = vperm.xlu0 %4661, %v3853
  %v4663 = vpop.permute.xlu0 %4662
  %v4666 = vsel %vm1292, %v3854, 0
  %v4669 = vsel %vm1292, %v3855, 0
  %v4672 = vsel %vm1292, %v3856, 0
  %v4675 = vsel %vm1292, %v3857, 0
  %4677 = vmatpush.msra.mxu0 0.0
  %4678 = vmatpush.msra.mxu0 0.0
  %4679 = vmatpush.msra.mxu0 0.0
  %4680 = vmatpush.msra.mxu0 0.0
  %4681 = vmatpush.msra.mxu0 0.0
  %4682 = vmatpush.msra.mxu0 0.0
  %4683 = vmatpush.msra.mxu0 0.0
  %4684 = vmatpush.msra.mxu0 0.0
  %4685 = vmatpush.msra.mxu0 %v4644
  %4686 = vmatpush.msra.mxu0 %v4643
  %4687 = vmatpush.msra.mxu0 %v4642
  %4688 = vmatpush.msra.mxu0 %v4641
  %4689 = vmatpush.msra.mxu0 %v4640
  %4690 = vmatpush.msra.mxu0 %v4639
  %4691 = vmatpush.msra.mxu0 %v4638
  %4692 = vmatpush.msra.mxu0 %v4637
  %4693 = vmatmul.f32.gmra.mxu0 %v4666
  %v4694 = vpop.f32.mrf.mxu0
  %v4695 = vadd.f32 %v4648, %v4694
  %4696 = vmatmul.f32.gmra.mxu0 %v4669
  %v4697 = vpop.f32.mrf.mxu0
  %v4698 = vadd.f32 %v4653, %v4697
  %4699 = vmatmul.f32.gmra.mxu0 %v4672
  %v4700 = vpop.f32.mrf.mxu0
  %v4701 = vadd.f32 %v4658, %v4700
  %4702 = vmatmul.f32.gmra.mxu0 %v4675
  %v4703 = vpop.f32.mrf.mxu0
  %v4704 = vadd.f32 %v4663, %v4703
  %4705 = vdwg.mxu0
  %v4706 = vadd.f32 %v2862, %v4695
  %v4707 = vadd.f32 %v2863, %v4698
  %v4708 = vadd.f32 %v2864, %v4701
  %v4709 = vadd.f32 %v2865, %v4704
  %v4710 = vld [vmem:[%s4] sm:$0xff]
  %v4711 = vld [vmem:[%s4 + $0x8] sm:$0xff]
  %v4712 = vld [vmem:[%s20] sm:$0xff]
  %v4713 = vld [vmem:[%s20 + $0x8] sm:$0xff]
  %v4714 = vld [vmem:[%s20 + $0x10] sm:$0xff]
  %v4715 = vld [vmem:[%s20 + $0x18] sm:$0xff]
  %v4716 = vld [vmem:[%s20 + $0x20] sm:$0xff]
  %v4717 = vld [vmem:[%s20 + $0x28] sm:$0xff]
  %v4718 = vld [vmem:[%s20 + $0x30] sm:$0xff]
  %v4719 = vld [vmem:[%s20 + $0x38] sm:$0xff]
  %v4720 = vld [vmem:[%s20 + $0x40] sm:$0xff]
  %v4721 = vld [vmem:[%s20 + $0x48] sm:$0xff]
  %v4722 = vld [vmem:[%s20 + $0x50] sm:$0xff]
  %v4723 = vld [vmem:[%s20 + $0x58] sm:$0xff]
  %v4724 = vld [vmem:[%s20 + $0x60] sm:$0xff]
  %v4725 = vld [vmem:[%s20 + $0x68] sm:$0xff]
  %v4726 = vld [vmem:[%s20 + $0x70] sm:$0xff]
  %v4727 = vld [vmem:[%s20 + $0x78] sm:$0xff]
  %v4728 = vld [vmem:[%s20 + $0x80] sm:$0xff]
  %v4729 = vld [vmem:[%s20 + $0x88] sm:$0xff]
  %v4730 = vld [vmem:[%s20 + $0x90] sm:$0xff]
  %v4731 = vld [vmem:[%s20 + $0x98] sm:$0xff]
  %v4732 = vld [vmem:[%s20 + $0xa0] sm:$0xff]
  %v4733 = vld [vmem:[%s20 + $0xa8] sm:$0xff]
  %v4734 = vld [vmem:[%s20 + $0xb0] sm:$0xff]
  %v4735 = vld [vmem:[%s20 + $0xb8] sm:$0xff]
  %v4736 = vld [vmem:[%s20 + $0xc0] sm:$0xff]
  %v4737 = vld [vmem:[%s20 + $0xc8] sm:$0xff]
  %v4738 = vld [vmem:[%s20 + $0xd0] sm:$0xff]
  %v4739 = vld [vmem:[%s20 + $0xd8] sm:$0xff]
  %v4740 = vld [vmem:[%s20 + $0xe0] sm:$0xff]
  %v4741 = vld [vmem:[%s20 + $0xe8] sm:$0xff]
  %v4742 = vld [vmem:[%s20 + $0xf0] sm:$0xff]
  %v4743 = vld [vmem:[%s20 + $0xf8] sm:$0xff]
  %v4744 = vld [vmem:[%s21] sm:$0xff]
  %v4745 = vld [vmem:[%s21 + $0x8] sm:$0xff]
  %v4746 = vld [vmem:[%s21 + $0x10] sm:$0xff]
  %v4747 = vld [vmem:[%s21 + $0x18] sm:$0xff]
  %v4748 = vld [vmem:[%s21 + $0x20] sm:$0xff]
  %v4749 = vld [vmem:[%s21 + $0x28] sm:$0xff]
  %v4750 = vld [vmem:[%s21 + $0x30] sm:$0xff]
  %v4751 = vld [vmem:[%s21 + $0x38] sm:$0xff]
  %v4752 = vld [vmem:[%s21 + $0x40] sm:$0xff]
  %v4753 = vld [vmem:[%s21 + $0x48] sm:$0xff]
  %v4754 = vld [vmem:[%s21 + $0x50] sm:$0xff]
  %v4755 = vld [vmem:[%s21 + $0x58] sm:$0xff]
  %v4756 = vld [vmem:[%s21 + $0x60] sm:$0xff]
  %v4757 = vld [vmem:[%s21 + $0x68] sm:$0xff]
  %v4758 = vld [vmem:[%s21 + $0x70] sm:$0xff]
  %v4759 = vld [vmem:[%s21 + $0x78] sm:$0xff]
  %v4760 = vld [vmem:[%s21 + $0x80] sm:$0xff]
  %v4761 = vld [vmem:[%s21 + $0x88] sm:$0xff]
  %v4762 = vld [vmem:[%s21 + $0x90] sm:$0xff]
  %v4763 = vld [vmem:[%s21 + $0x98] sm:$0xff]
  %v4764 = vld [vmem:[%s21 + $0xa0] sm:$0xff]
  %v4765 = vld [vmem:[%s21 + $0xa8] sm:$0xff]
  %v4766 = vld [vmem:[%s21 + $0xb0] sm:$0xff]
  %v4767 = vld [vmem:[%s21 + $0xb8] sm:$0xff]
  %v4768 = vld [vmem:[%s21 + $0xc0] sm:$0xff]
  %v4769 = vld [vmem:[%s21 + $0xc8] sm:$0xff]
  %v4770 = vld [vmem:[%s21 + $0xd0] sm:$0xff]
  %v4771 = vld [vmem:[%s21 + $0xd8] sm:$0xff]
  %v4772 = vld [vmem:[%s22] sm:$0xff]
  %v4773 = vld [vmem:[%s22 + $0x8] sm:$0xff]
  %v4774 = vld [vmem:[%s22 + $0x10] sm:$0xff]
  %v4775 = vld [vmem:[%s22 + $0x18] sm:$0xff]
  %4777 = vset.pattern.permute.xlu0 0
  %4778 = vperm.xlu0 %4777, %v4744
  %v4779 = vpop.permute.xlu0 %4778
  %4782 = vset.pattern.permute.xlu0 0
  %4783 = vperm.xlu0 %4782, %v4745
  %v4784 = vpop.permute.xlu0 %4783
  %4787 = vset.pattern.permute.xlu0 0
  %4788 = vperm.xlu0 %4787, %v4746
  %v4789 = vpop.permute.xlu0 %4788
  %4792 = vset.pattern.permute.xlu0 0
  %4793 = vperm.xlu0 %4792, %v4747
  %v4794 = vpop.permute.xlu0 %4793
  %4797 = vset.pattern.permute.xlu0 0
  %4798 = vperm.xlu0 %4797, %v4748
  %v4799 = vpop.permute.xlu0 %4798
  %4802 = vset.pattern.permute.xlu0 0
  %4803 = vperm.xlu0 %4802, %v4749
  %v4804 = vpop.permute.xlu0 %4803
  %4807 = vset.pattern.permute.xlu0 0
  %4808 = vperm.xlu0 %4807, %v4750
  %v4809 = vpop.permute.xlu0 %4808
  %4812 = vset.pattern.permute.xlu0 0
  %4813 = vperm.xlu0 %4812, %v4751
  %v4814 = vpop.permute.xlu0 %4813
  %4817 = vset.pattern.permute.xlu0 0
  %4818 = vperm.xlu0 %4817, %v4752
  %v4819 = vpop.permute.xlu0 %4818
  %4822 = vset.pattern.permute.xlu0 0
  %4823 = vperm.xlu0 %4822, %v4753
  %v4824 = vpop.permute.xlu0 %4823
  %4827 = vset.pattern.permute.xlu0 0
  %4828 = vperm.xlu0 %4827, %v4754
  %v4829 = vpop.permute.xlu0 %4828
  %4832 = vset.pattern.permute.xlu0 0
  %4833 = vperm.xlu0 %4832, %v4755
  %v4834 = vpop.permute.xlu0 %4833
  %v4837 = vsel %vm214, %v4712, 0
  %v4840 = vsel %vm214, %v4713, 0
  %v4843 = vsel %vm214, %v4714, 0
  %v4846 = vsel %vm214, %v4715, 0
  %v4849 = vsel %vm214, %v4716, 0
  %v4852 = vsel %vm214, %v4717, 0
  %v4855 = vsel %vm214, %v4718, 0
  %v4858 = vsel %vm214, %v4719, 0
  %v4861 = vsel %vm214, %v4720, 0
  %v4864 = vsel %vm214, %v4721, 0
  %v4867 = vsel %vm214, %v4722, 0
  %v4870 = vsel %vm214, %v4723, 0
  %4872 = vmatpush.msra.mxu0 0.0
  %4873 = vmatpush.msra.mxu0 0.0
  %4874 = vmatpush.msra.mxu0 0.0
  %4875 = vmatpush.msra.mxu0 0.0
  %4876 = vmatpush.msra.mxu0 0.0
  %4877 = vmatpush.msra.mxu0 0.0
  %4878 = vmatpush.msra.mxu0 0.0
  %4879 = vmatpush.msra.mxu0 0.0
  %4880 = vmatpush.msra.mxu0 0.0
  %4881 = vmatpush.msra.mxu0 0.0
  %4882 = vmatpush.msra.mxu0 0.0
  %4883 = vmatpush.msra.mxu0 0.0
  %4884 = vmatpush.msra.mxu0 %v3751
  %4885 = vmatpush.msra.mxu0 %v3750
  %4886 = vmatpush.msra.mxu0 %v3749
  %4887 = vmatpush.msra.mxu0 %v3748
  %4888 = vmatmul.f32.gmra.mxu0 %v4837
  %v4889 = vpop.f32.mrf.mxu0
  %v4890 = vadd.f32 %v4779, %v4889
  %4891 = vmatmul.f32.gmra.mxu0 %v4840
  %v4892 = vpop.f32.mrf.mxu0
  %v4893 = vadd.f32 %v4784, %v4892
  %4894 = vmatmul.f32.gmra.mxu0 %v4843
  %v4895 = vpop.f32.mrf.mxu0
  %v4896 = vadd.f32 %v4789, %v4895
  %4897 = vmatmul.f32.gmra.mxu0 %v4846
  %v4898 = vpop.f32.mrf.mxu0
  %v4899 = vadd.f32 %v4794, %v4898
  %4900 = vmatmul.f32.gmra.mxu0 %v4849
  %v4901 = vpop.f32.mrf.mxu0
  %v4902 = vadd.f32 %v4799, %v4901
  %4903 = vmatmul.f32.gmra.mxu0 %v4852
  %v4904 = vpop.f32.mrf.mxu0
  %v4905 = vadd.f32 %v4804, %v4904
  %4906 = vmatmul.f32.gmra.mxu0 %v4855
  %v4907 = vpop.f32.mrf.mxu0
  %v4908 = vadd.f32 %v4809, %v4907
  %4909 = vmatmul.f32.gmra.mxu0 %v4858
  %v4910 = vpop.f32.mrf.mxu0
  %v4911 = vadd.f32 %v4814, %v4910
  %4912 = vmatmul.f32.gmra.mxu0 %v4861
  %v4913 = vpop.f32.mrf.mxu0
  %v4914 = vadd.f32 %v4819, %v4913
  %4915 = vmatmul.f32.gmra.mxu0 %v4864
  %v4916 = vpop.f32.mrf.mxu0
  %v4917 = vadd.f32 %v4824, %v4916
  %4918 = vmatmul.f32.gmra.mxu0 %v4867
  %v4919 = vpop.f32.mrf.mxu0
  %v4920 = vadd.f32 %v4829, %v4919
  %4921 = vmatmul.f32.gmra.mxu0 %v4870
  %v4922 = vpop.f32.mrf.mxu0
  %v4923 = vadd.f32 %v4834, %v4922
  %4924 = vdwg.mxu0
  %4925 = vxpose.xlu0.b32.start [1/16] %v4890, 128
  %4926 = vxpose.xlu0.b32.cont [2/16] 0.0, 128
  %4927 = vxpose.xlu0.b32.cont [3/16] 0.0, 128
  %4928 = vxpose.xlu0.b32.cont [4/16] 0.0, 128
  %4929 = vxpose.xlu0.b32.cont [5/16] 0.0, 128
  %4930 = vxpose.xlu0.b32.cont [6/16] 0.0, 128
  %4931 = vxpose.xlu0.b32.cont [7/16] 0.0, 128
  %4932 = vxpose.xlu0.b32.cont [8/16] 0.0, 128
  %4933 = vxpose.xlu0.b32.cont [9/16] 0.0, 128
  %4934 = vxpose.xlu0.b32.cont [10/16] 0.0, 128
  %4935 = vxpose.xlu0.b32.cont [11/16] 0.0, 128
  %4936 = vxpose.xlu0.b32.cont [12/16] 0.0, 128
  %4937 = vxpose.xlu0.b32.cont [13/16] 0.0, 128
  %4938 = vxpose.xlu0.b32.cont [14/16] 0.0, 128
  %4939 = vxpose.xlu0.b32.cont [15/16] 0.0, 128
  %4940 = vxpose.xlu0.b32.end [16/16] 0.0, 128
  %v4941 = vpop.trf.xlu0
  %v4942 = vpop.trf.xlu0
  %v4943 = vpop.trf.xlu0
  %v4944 = vpop.trf.xlu0
  %v4945 = vpop.trf.xlu0
  %v4946 = vpop.trf.xlu0
  %v4947 = vpop.trf.xlu0
  %v4948 = vpop.trf.xlu0
  %v4949 = vpop.trf.xlu0
  %v4950 = vpop.trf.xlu0
  %v4951 = vpop.trf.xlu0
  %v4952 = vpop.trf.xlu0
  %v4953 = vpop.trf.xlu0
  %v4954 = vpop.trf.xlu0
  %v4955 = vpop.trf.xlu0
  %v4956 = vpop.trf.xlu0
  %v4958 = vsel %vm336, %v4941, 0
  %v4961 = vsel %vm336, %v4942, 0
  %4963 = vmatpush.msra.mxu0 0.0
  %4964 = vmatpush.msra.mxu0 0.0
  %4965 = vmatpush.msra.mxu0 0.0
  %4966 = vmatpush.msra.mxu0 0.0
  %4967 = vmatpush.msra.mxu0 0.0
  %4968 = vmatpush.msra.mxu0 0.0
  %4969 = vmatpush.msra.mxu0 0.0
  %4970 = vmatpush.msra.mxu0 0.0
  %4971 = vmatpush.msra.mxu0 0.0
  %4972 = vmatpush.msra.mxu0 0.0
  %4973 = vmatpush.msra.mxu0 0.0
  %4974 = vmatpush.msra.mxu0 0.0
  %4975 = vmatpush.msra.mxu0 0.0
  %4976 = vmatpush.msra.mxu0 0.0
  %4977 = vmatpush.msra.mxu0 0.0
  %4978 = vmatpush.msra.mxu0 %v4902
  %4979 = vmatmul.f32.gmra.mxu0 %v4958
  %v4980 = vpop.f32.mrf.mxu0
  %v4981 = vadd.f32 0.0, %v4980
  %4982 = vmatmul.f32.gmra.mxu0 %v4961
  %v4983 = vpop.f32.mrf.mxu0
  %v4984 = vadd.f32 0.0, %v4983
  %4985 = vdwg.mxu0
  %v4986 = vmul.f32 %v4981, 0.35355338
  %v4987 = vmul.f32 %v4984, 0.35355338
  %v4988 = vadd.f32 %v4986, %v4710
  %v4989 = vadd.f32 %v4987, %v4711
  %v4990 = vsel %vm370, %v4988, -inf
  %4991 = vmax.xlane.f32.xlu0 %v4990
  %v4992 = vpop.xlane.xlu0 %4991
  %v4993 = vsel %vm370, %v4989, -inf
  %4994 = vmax.xlane.f32.xlu0 %v4993
  %v4995 = vpop.xlane.xlu0 %4994
  %v4996 = vsub.f32 %v4988, %v4992
  %v4997 = vsub.f32 %v4989, %v4995
  %v4998 = vmul.f32 %v4996, 1.442695
  %v4999 = vpow.pop %v4998
  %v5000 = vmul.f32 %v4997, 1.442695
  %v5001 = vpow.pop %v5000
  %v5002 = vsel %vm370, %v4999, 0.0
  %5003 = vadd.xlane.f32.xlu0 %v5002
  %v5004 = vpop.xlane.xlu0 %5003
  %v5005 = vsel %vm370, %v5001, 0.0
  %5006 = vadd.xlane.f32.xlu0 %v5005
  %v5007 = vpop.xlane.xlu0 %5006
  %v5008 = vrcp.pop %v5004
  %v5009 = vmul.f32 %v5004, %v5008
  %v5010 = vsub.f32 1.0, %v5009
  %v5011 = vmul.f32 %v5008, %v5010
  %v5012 = vadd.f32 %v5008, %v5011
  %vm5013 = vweird.f32 %v5004
  %vm5014 = vweird.f32 %v5008
  %vm5015 = vmor %vm5013, %vm5014
  %v5016 = vsel %vm5015, %v5008, %v5012
  %v5017 = vand.u32 2147483647, %v5004
  %vm5018 = vcmp.eq.f32.partialorder %v5017, 8.507059e+37
  %v5019 = vand.u32 %v5004, 2147483648
  %v5020 = vor.u32 1.1754944e-38, %v5019
  %v5021 = vsel %vm5018, %v5020, %v5016
  %v5022 = vmul.f32 %v4999, %v5021
  %v5023 = vrcp.pop %v5007
  %v5024 = vmul.f32 %v5007, %v5023
  %v5025 = vsub.f32 1.0, %v5024
  %v5026 = vmul.f32 %v5023, %v5025
  %v5027 = vadd.f32 %v5023, %v5026
  %vm5028 = vweird.f32 %v5007
  %vm5029 = vweird.f32 %v5023
  %vm5030 = vmor %vm5028, %vm5029
  %v5031 = vsel %vm5030, %v5023, %v5027
  %v5032 = vand.u32 2147483647, %v5007
  %vm5033 = vcmp.eq.f32.partialorder %v5032, 8.507059e+37
  %v5034 = vand.u32 %v5007, 2147483648
  %v5035 = vor.u32 1.1754944e-38, %v5034
  %v5036 = vsel %vm5033, %v5035, %v5031
  %v5037 = vmul.f32 %v5001, %v5036
  %v5039 = vsel %vm370, %v4914, 0
  %v5042 = vsel %vm370, %v5022, 0
  %v5045 = vsel %vm370, %v5037, 0
  %5047 = vmatpush.xpose.msra.mxu0 0.0
  %5048 = vmatpush.xpose.msra.mxu0 0.0
  %5049 = vmatpush.xpose.msra.mxu0 0.0
  %5050 = vmatpush.xpose.msra.mxu0 0.0
  %5051 = vmatpush.xpose.msra.mxu0 0.0
  %5052 = vmatpush.xpose.msra.mxu0 0.0
  %5053 = vmatpush.xpose.msra.mxu0 0.0
  %5054 = vmatpush.xpose.msra.mxu0 0.0
  %5055 = vmatpush.xpose.msra.mxu0 0.0
  %5056 = vmatpush.xpose.msra.mxu0 0.0
  %5057 = vmatpush.xpose.msra.mxu0 0.0
  %5058 = vmatpush.xpose.msra.mxu0 0.0
  %5059 = vmatpush.xpose.msra.mxu0 0.0
  %5060 = vmatpush.xpose.msra.mxu0 0.0
  %5061 = vmatpush.xpose.msra.mxu0 %v5045
  %5062 = vmatpush.xpose.msra.mxu0 %v5042
  %5063 = vmatmul.f32.gmra.mxu0 %v5039
  %v5064 = vpop.f32.mrf.mxu0
  %v5065 = vadd.f32 0.0, %v5064
  %5066 = vdwg.mxu0
  %v5068 = vsel %vm336, %v4724, 0
  %v5071 = vsel %vm336, %v4725, 0
  %v5074 = vsel %vm336, %v4726, 0
  %v5077 = vsel %vm336, %v4727, 0
  %5079 = vmatpush.msra.mxu0 0.0
  %5080 = vmatpush.msra.mxu0 0.0
  %5081 = vmatpush.msra.mxu0 0.0
  %5082 = vmatpush.msra.mxu0 0.0
  %5083 = vmatpush.msra.mxu0 0.0
  %5084 = vmatpush.msra.mxu0 0.0
  %5085 = vmatpush.msra.mxu0 0.0
  %5086 = vmatpush.msra.mxu0 0.0
  %5087 = vmatpush.msra.mxu0 0.0
  %5088 = vmatpush.msra.mxu0 0.0
  %5089 = vmatpush.msra.mxu0 0.0
  %5090 = vmatpush.msra.mxu0 0.0
  %5091 = vmatpush.msra.mxu0 0.0
  %5092 = vmatpush.msra.mxu0 0.0
  %5093 = vmatpush.msra.mxu0 0.0
  %5094 = vmatpush.msra.mxu0 %v5065
  %5095 = vmatmul.f32.gmra.mxu0 %v5068
  %v5096 = vpop.f32.mrf.mxu0
  %v5097 = vadd.f32 0.0, %v5096
  %5098 = vmatmul.f32.gmra.mxu0 %v5071
  %v5099 = vpop.f32.mrf.mxu0
  %v5100 = vadd.f32 0.0, %v5099
  %5101 = vmatmul.f32.gmra.mxu0 %v5074
  %v5102 = vpop.f32.mrf.mxu0
  %v5103 = vadd.f32 0.0, %v5102
  %5104 = vmatmul.f32.gmra.mxu0 %v5077
  %v5105 = vpop.f32.mrf.mxu0
  %v5106 = vadd.f32 0.0, %v5105
  %5107 = vdwg.mxu0
  %5109 = vset.pattern.permute.xlu0 0
  %5110 = vperm.xlu0 %5109, %v4756
  %v5111 = vpop.permute.xlu0 %5110
  %5114 = vset.pattern.permute.xlu0 0
  %5115 = vperm.xlu0 %5114, %v4757
  %v5116 = vpop.permute.xlu0 %5115
  %5119 = vset.pattern.permute.xlu0 0
  %5120 = vperm.xlu0 %5119, %v4758
  %v5121 = vpop.permute.xlu0 %5120
  %5124 = vset.pattern.permute.xlu0 0
  %5125 = vperm.xlu0 %5124, %v4759
  %v5126 = vpop.permute.xlu0 %5125
  %v5128 = vadd.f32 %v5111, %v5097
  %v5129 = vadd.f32 %v5116, %v5100
  %v5130 = vadd.f32 %v5121, %v5103
  %v5131 = vadd.f32 %v5126, %v5106
  %5132 = vxpose.xlu0.b32.start [1/16] %v4893, 128
  %5133 = vxpose.xlu0.b32.cont [2/16] 0.0, 128
  %5134 = vxpose.xlu0.b32.cont [3/16] 0.0, 128
  %5135 = vxpose.xlu0.b32.cont [4/16] 0.0, 128
  %5136 = vxpose.xlu0.b32.cont [5/16] 0.0, 128
  %5137 = vxpose.xlu0.b32.cont [6/16] 0.0, 128
  %5138 = vxpose.xlu0.b32.cont [7/16] 0.0, 128
  %5139 = vxpose.xlu0.b32.cont [8/16] 0.0, 128
  %5140 = vxpose.xlu0.b32.cont [9/16] 0.0, 128
  %5141 = vxpose.xlu0.b32.cont [10/16] 0.0, 128
  %5142 = vxpose.xlu0.b32.cont [11/16] 0.0, 128
  %5143 = vxpose.xlu0.b32.cont [12/16] 0.0, 128
  %5144 = vxpose.xlu0.b32.cont [13/16] 0.0, 128
  %5145 = vxpose.xlu0.b32.cont [14/16] 0.0, 128
  %5146 = vxpose.xlu0.b32.cont [15/16] 0.0, 128
  %5147 = vxpose.xlu0.b32.end [16/16] 0.0, 128
  %v5148 = vpop.trf.xlu0
  %v5149 = vpop.trf.xlu0
  %v5150 = vpop.trf.xlu0
  %v5151 = vpop.trf.xlu0
  %v5152 = vpop.trf.xlu0
  %v5153 = vpop.trf.xlu0
  %v5154 = vpop.trf.xlu0
  %v5155 = vpop.trf.xlu0
  %v5156 = vpop.trf.xlu0
  %v5157 = vpop.trf.xlu0
  %v5158 = vpop.trf.xlu0
  %v5159 = vpop.trf.xlu0
  %v5160 = vpop.trf.xlu0
  %v5161 = vpop.trf.xlu0
  %v5162 = vpop.trf.xlu0
  %v5163 = vpop.trf.xlu0
  %v5165 = vsel %vm336, %v5148, 0
  %v5168 = vsel %vm336, %v5149, 0
  %5170 = vmatpush.msra.mxu0 0.0
  %5171 = vmatpush.msra.mxu0 0.0
  %5172 = vmatpush.msra.mxu0 0.0
  %5173 = vmatpush.msra.mxu0 0.0
  %5174 = vmatpush.msra.mxu0 0.0
  %5175 = vmatpush.msra.mxu0 0.0
  %5176 = vmatpush.msra.mxu0 0.0
  %5177 = vmatpush.msra.mxu0 0.0
  %5178 = vmatpush.msra.mxu0 0.0
  %5179 = vmatpush.msra.mxu0 0.0
  %5180 = vmatpush.msra.mxu0 0.0
  %5181 = vmatpush.msra.mxu0 0.0
  %5182 = vmatpush.msra.mxu0 0.0
  %5183 = vmatpush.msra.mxu0 0.0
  %5184 = vmatpush.msra.mxu0 0.0
  %5185 = vmatpush.msra.mxu0 %v4905
  %5186 = vmatmul.f32.gmra.mxu0 %v5165
  %v5187 = vpop.f32.mrf.mxu0
  %v5188 = vadd.f32 0.0, %v5187
  %5189 = vmatmul.f32.gmra.mxu0 %v5168
  %v5190 = vpop.f32.mrf.mxu0
  %v5191 = vadd.f32 0.0, %v5190
  %5192 = vdwg.mxu0
  %v5193 = vmul.f32 %v5188, 0.35355338
  %v5194 = vmul.f32 %v5191, 0.35355338
  %v5195 = vadd.f32 %v5193, %v4710
  %v5196 = vadd.f32 %v5194, %v4711
  %v5197 = vsel %vm370, %v5195, -inf
  %5198 = vmax.xlane.f32.xlu0 %v5197
  %v5199 = vpop.xlane.xlu0 %5198
  %v5200 = vsel %vm370, %v5196, -inf
  %5201 = vmax.xlane.f32.xlu0 %v5200
  %v5202 = vpop.xlane.xlu0 %5201
  %v5203 = vsub.f32 %v5195, %v5199
  %v5204 = vsub.f32 %v5196, %v5202
  %v5205 = vmul.f32 %v5203, 1.442695
  %v5206 = vpow.pop %v5205
  %v5207 = vmul.f32 %v5204, 1.442695
  %v5208 = vpow.pop %v5207
  %v5209 = vsel %vm370, %v5206, 0.0
  %5210 = vadd.xlane.f32.xlu0 %v5209
  %v5211 = vpop.xlane.xlu0 %5210
  %v5212 = vsel %vm370, %v5208, 0.0
  %5213 = vadd.xlane.f32.xlu0 %v5212
  %v5214 = vpop.xlane.xlu0 %5213
  %v5215 = vrcp.pop %v5211
  %v5216 = vmul.f32 %v5211, %v5215
  %v5217 = vsub.f32 1.0, %v5216
  %v5218 = vmul.f32 %v5215, %v5217
  %v5219 = vadd.f32 %v5215, %v5218
  %vm5220 = vweird.f32 %v5211
  %vm5221 = vweird.f32 %v5215
  %vm5222 = vmor %vm5220, %vm5221
  %v5223 = vsel %vm5222, %v5215, %v5219
  %v5224 = vand.u32 2147483647, %v5211
  %vm5225 = vcmp.eq.f32.partialorder %v5224, 8.507059e+37
  %v5226 = vand.u32 %v5211, 2147483648
  %v5227 = vor.u32 1.1754944e-38, %v5226
  %v5228 = vsel %vm5225, %v5227, %v5223
  %v5229 = vmul.f32 %v5206, %v5228
  %v5230 = vrcp.pop %v5214
  %v5231 = vmul.f32 %v5214, %v5230
  %v5232 = vsub.f32 1.0, %v5231
  %v5233 = vmul.f32 %v5230, %v5232
  %v5234 = vadd.f32 %v5230, %v5233
  %vm5235 = vweird.f32 %v5214
  %vm5236 = vweird.f32 %v5230
  %vm5237 = vmor %vm5235, %vm5236
  %v5238 = vsel %vm5237, %v5230, %v5234
  %v5239 = vand.u32 2147483647, %v5214
  %vm5240 = vcmp.eq.f32.partialorder %v5239, 8.507059e+37
  %v5241 = vand.u32 %v5214, 2147483648
  %v5242 = vor.u32 1.1754944e-38, %v5241
  %v5243 = vsel %vm5240, %v5242, %v5238
  %v5244 = vmul.f32 %v5208, %v5243
  %v5246 = vsel %vm370, %v4917, 0
  %v5249 = vsel %vm370, %v5229, 0
  %v5252 = vsel %vm370, %v5244, 0
  %5254 = vmatpush.xpose.msra.mxu0 0.0
  %5255 = vmatpush.xpose.msra.mxu0 0.0
  %5256 = vmatpush.xpose.msra.mxu0 0.0
  %5257 = vmatpush.xpose.msra.mxu0 0.0
  %5258 = vmatpush.xpose.msra.mxu0 0.0
  %5259 = vmatpush.xpose.msra.mxu0 0.0
  %5260 = vmatpush.xpose.msra.mxu0 0.0
  %5261 = vmatpush.xpose.msra.mxu0 0.0
  %5262 = vmatpush.xpose.msra.mxu0 0.0
  %5263 = vmatpush.xpose.msra.mxu0 0.0
  %5264 = vmatpush.xpose.msra.mxu0 0.0
  %5265 = vmatpush.xpose.msra.mxu0 0.0
  %5266 = vmatpush.xpose.msra.mxu0 0.0
  %5267 = vmatpush.xpose.msra.mxu0 0.0
  %5268 = vmatpush.xpose.msra.mxu0 %v5252
  %5269 = vmatpush.xpose.msra.mxu0 %v5249
  %5270 = vmatmul.f32.gmra.mxu0 %v5246
  %v5271 = vpop.f32.mrf.mxu0
  %v5272 = vadd.f32 0.0, %v5271
  %5273 = vdwg.mxu0
  %5274 = vrot.lane.b32.xlu0 %v4724, 120
  %v5275 = vpop.permute.xlu0 %5274
  %5276 = vrot.lane.b32.xlu0 %v4725, 120
  %v5277 = vpop.permute.xlu0 %5276
  %5278 = vrot.lane.b32.xlu0 %v4726, 120
  %v5279 = vpop.permute.xlu0 %5278
  %5280 = vrot.lane.b32.xlu0 %v4727, 120
  %v5281 = vpop.permute.xlu0 %5280
  %v5282 = vsel %vm336, %v5275, 0
  %v5284 = vsel %vm336, %v5277, 0
  %v5286 = vsel %vm336, %v5279, 0
  %v5288 = vsel %vm336, %v5281, 0
  %5290 = vmatpush.msra.mxu0 0.0
  %5291 = vmatpush.msra.mxu0 0.0
  %5292 = vmatpush.msra.mxu0 0.0
  %5293 = vmatpush.msra.mxu0 0.0
  %5294 = vmatpush.msra.mxu0 0.0
  %5295 = vmatpush.msra.mxu0 0.0
  %5296 = vmatpush.msra.mxu0 0.0
  %5297 = vmatpush.msra.mxu0 0.0
  %5298 = vmatpush.msra.mxu0 0.0
  %5299 = vmatpush.msra.mxu0 0.0
  %5300 = vmatpush.msra.mxu0 0.0
  %5301 = vmatpush.msra.mxu0 0.0
  %5302 = vmatpush.msra.mxu0 0.0
  %5303 = vmatpush.msra.mxu0 0.0
  %5304 = vmatpush.msra.mxu0 0.0
  %5305 = vmatpush.msra.mxu0 %v5272
  %5306 = vmatmul.f32.gmra.mxu0 %v5282
  %v5307 = vpop.f32.mrf.mxu0
  %v5308 = vadd.f32 0.0, %v5307
  %5309 = vmatmul.f32.gmra.mxu0 %v5284
  %v5310 = vpop.f32.mrf.mxu0
  %v5311 = vadd.f32 0.0, %v5310
  %5312 = vmatmul.f32.gmra.mxu0 %v5286
  %v5313 = vpop.f32.mrf.mxu0
  %v5314 = vadd.f32 0.0, %v5313
  %5315 = vmatmul.f32.gmra.mxu0 %v5288
  %v5316 = vpop.f32.mrf.mxu0
  %v5317 = vadd.f32 0.0, %v5316
  %5318 = vdwg.mxu0
  %v5319 = vadd.f32 %v5128, %v5308
  %v5320 = vadd.f32 %v5129, %v5311
  %v5321 = vadd.f32 %v5130, %v5314
  %v5322 = vadd.f32 %v5131, %v5317
  %5323 = vxpose.xlu0.b32.start [1/16] %v4896, 128
  %5324 = vxpose.xlu0.b32.cont [2/16] 0.0, 128
  %5325 = vxpose.xlu0.b32.cont [3/16] 0.0, 128
  %5326 = vxpose.xlu0.b32.cont [4/16] 0.0, 128
  %5327 = vxpose.xlu0.b32.cont [5/16] 0.0, 128
  %5328 = vxpose.xlu0.b32.cont [6/16] 0.0, 128
  %5329 = vxpose.xlu0.b32.cont [7/16] 0.0, 128
  %5330 = vxpose.xlu0.b32.cont [8/16] 0.0, 128
  %5331 = vxpose.xlu0.b32.cont [9/16] 0.0, 128
  %5332 = vxpose.xlu0.b32.cont [10/16] 0.0, 128
  %5333 = vxpose.xlu0.b32.cont [11/16] 0.0, 128
  %5334 = vxpose.xlu0.b32.cont [12/16] 0.0, 128
  %5335 = vxpose.xlu0.b32.cont [13/16] 0.0, 128
  %5336 = vxpose.xlu0.b32.cont [14/16] 0.0, 128
  %5337 = vxpose.xlu0.b32.cont [15/16] 0.0, 128
  %5338 = vxpose.xlu0.b32.end [16/16] 0.0, 128
  %v5339 = vpop.trf.xlu0
  %v5340 = vpop.trf.xlu0
  %v5341 = vpop.trf.xlu0
  %v5342 = vpop.trf.xlu0
  %v5343 = vpop.trf.xlu0
  %v5344 = vpop.trf.xlu0
  %v5345 = vpop.trf.xlu0
  %v5346 = vpop.trf.xlu0
  %v5347 = vpop.trf.xlu0
  %v5348 = vpop.trf.xlu0
  %v5349 = vpop.trf.xlu0
  %v5350 = vpop.trf.xlu0
  %v5351 = vpop.trf.xlu0
  %v5352 = vpop.trf.xlu0
  %v5353 = vpop.trf.xlu0
  %v5354 = vpop.trf.xlu0
  %v5356 = vsel %vm336, %v5339, 0
  %v5359 = vsel %vm336, %v5340, 0
  %5361 = vmatpush.msra.mxu0 0.0
  %5362 = vmatpush.msra.mxu0 0.0
  %5363 = vmatpush.msra.mxu0 0.0
  %5364 = vmatpush.msra.mxu0 0.0
  %5365 = vmatpush.msra.mxu0 0.0
  %5366 = vmatpush.msra.mxu0 0.0
  %5367 = vmatpush.msra.mxu0 0.0
  %5368 = vmatpush.msra.mxu0 0.0
  %5369 = vmatpush.msra.mxu0 0.0
  %5370 = vmatpush.msra.mxu0 0.0
  %5371 = vmatpush.msra.mxu0 0.0
  %5372 = vmatpush.msra.mxu0 0.0
  %5373 = vmatpush.msra.mxu0 0.0
  %5374 = vmatpush.msra.mxu0 0.0
  %5375 = vmatpush.msra.mxu0 0.0
  %5376 = vmatpush.msra.mxu0 %v4908
  %5377 = vmatmul.f32.gmra.mxu0 %v5356
  %v5378 = vpop.f32.mrf.mxu0
  %v5379 = vadd.f32 0.0, %v5378
  %5380 = vmatmul.f32.gmra.mxu0 %v5359
  %v5381 = vpop.f32.mrf.mxu0
  %v5382 = vadd.f32 0.0, %v5381
  %5383 = vdwg.mxu0
  %v5384 = vmul.f32 %v5379, 0.35355338
  %v5385 = vmul.f32 %v5382, 0.35355338
  %v5386 = vadd.f32 %v5384, %v4710
  %v5387 = vadd.f32 %v5385, %v4711
  %v5388 = vsel %vm370, %v5386, -inf
  %5389 = vmax.xlane.f32.xlu0 %v5388
  %v5390 = vpop.xlane.xlu0 %5389
  %v5391 = vsel %vm370, %v5387, -inf
  %5392 = vmax.xlane.f32.xlu0 %v5391
  %v5393 = vpop.xlane.xlu0 %5392
  %v5394 = vsub.f32 %v5386, %v5390
  %v5395 = vsub.f32 %v5387, %v5393
  %v5396 = vmul.f32 %v5394, 1.442695
  %v5397 = vpow.pop %v5396
  %v5398 = vmul.f32 %v5395, 1.442695
  %v5399 = vpow.pop %v5398
  %v5400 = vsel %vm370, %v5397, 0.0
  %5401 = vadd.xlane.f32.xlu0 %v5400
  %v5402 = vpop.xlane.xlu0 %5401
  %v5403 = vsel %vm370, %v5399, 0.0
  %5404 = vadd.xlane.f32.xlu0 %v5403
  %v5405 = vpop.xlane.xlu0 %5404
  %v5406 = vrcp.pop %v5402
  %v5407 = vmul.f32 %v5402, %v5406
  %v5408 = vsub.f32 1.0, %v5407
  %v5409 = vmul.f32 %v5406, %v5408
  %v5410 = vadd.f32 %v5406, %v5409
  %vm5411 = vweird.f32 %v5402
  %vm5412 = vweird.f32 %v5406
  %vm5413 = vmor %vm5411, %vm5412
  %v5414 = vsel %vm5413, %v5406, %v5410
  %v5415 = vand.u32 2147483647, %v5402
  %vm5416 = vcmp.eq.f32.partialorder %v5415, 8.507059e+37
  %v5417 = vand.u32 %v5402, 2147483648
  %v5418 = vor.u32 1.1754944e-38, %v5417
  %v5419 = vsel %vm5416, %v5418, %v5414
  %v5420 = vmul.f32 %v5397, %v5419
  %v5421 = vrcp.pop %v5405
  %v5422 = vmul.f32 %v5405, %v5421
  %v5423 = vsub.f32 1.0, %v5422
  %v5424 = vmul.f32 %v5421, %v5423
  %v5425 = vadd.f32 %v5421, %v5424
  %vm5426 = vweird.f32 %v5405
  %vm5427 = vweird.f32 %v5421
  %vm5428 = vmor %vm5426, %vm5427
  %v5429 = vsel %vm5428, %v5421, %v5425
  %v5430 = vand.u32 2147483647, %v5405
  %vm5431 = vcmp.eq.f32.partialorder %v5430, 8.507059e+37
  %v5432 = vand.u32 %v5405, 2147483648
  %v5433 = vor.u32 1.1754944e-38, %v5432
  %v5434 = vsel %vm5431, %v5433, %v5429
  %v5435 = vmul.f32 %v5399, %v5434
  %v5437 = vsel %vm370, %v4920, 0
  %v5440 = vsel %vm370, %v5420, 0
  %v5443 = vsel %vm370, %v5435, 0
  %5445 = vmatpush.xpose.msra.mxu0 0.0
  %5446 = vmatpush.xpose.msra.mxu0 0.0
  %5447 = vmatpush.xpose.msra.mxu0 0.0
  %5448 = vmatpush.xpose.msra.mxu0 0.0
  %5449 = vmatpush.xpose.msra.mxu0 0.0
  %5450 = vmatpush.xpose.msra.mxu0 0.0
  %5451 = vmatpush.xpose.msra.mxu0 0.0
  %5452 = vmatpush.xpose.msra.mxu0 0.0
  %5453 = vmatpush.xpose.msra.mxu0 0.0
  %5454 = vmatpush.xpose.msra.mxu0 0.0
  %5455 = vmatpush.xpose.msra.mxu0 0.0
  %5456 = vmatpush.xpose.msra.mxu0 0.0
  %5457 = vmatpush.xpose.msra.mxu0 0.0
  %5458 = vmatpush.xpose.msra.mxu0 0.0
  %5459 = vmatpush.xpose.msra.mxu0 %v5443
  %5460 = vmatpush.xpose.msra.mxu0 %v5440
  %5461 = vmatmul.f32.gmra.mxu0 %v5437
  %v5462 = vpop.f32.mrf.mxu0
  %v5463 = vadd.f32 0.0, %v5462
  %5464 = vdwg.mxu0
  %5465 = vrot.lane.b32.xlu0 %v4724, 112
  %v5466 = vpop.permute.xlu0 %5465
  %5467 = vrot.lane.b32.xlu0 %v4725, 112
  %v5468 = vpop.permute.xlu0 %5467
  %5469 = vrot.lane.b32.xlu0 %v4726, 112
  %v5470 = vpop.permute.xlu0 %5469
  %5471 = vrot.lane.b32.xlu0 %v4727, 112
  %v5472 = vpop.permute.xlu0 %5471
  %v5473 = vsel %vm336, %v5466, 0
  %v5475 = vsel %vm336, %v5468, 0
  %v5477 = vsel %vm336, %v5470, 0
  %v5479 = vsel %vm336, %v5472, 0
  %5481 = vmatpush.msra.mxu0 0.0
  %5482 = vmatpush.msra.mxu0 0.0
  %5483 = vmatpush.msra.mxu0 0.0
  %5484 = vmatpush.msra.mxu0 0.0
  %5485 = vmatpush.msra.mxu0 0.0
  %5486 = vmatpush.msra.mxu0 0.0
  %5487 = vmatpush.msra.mxu0 0.0
  %5488 = vmatpush.msra.mxu0 0.0
  %5489 = vmatpush.msra.mxu0 0.0
  %5490 = vmatpush.msra.mxu0 0.0
  %5491 = vmatpush.msra.mxu0 0.0
  %5492 = vmatpush.msra.mxu0 0.0
  %5493 = vmatpush.msra.mxu0 0.0
  %5494 = vmatpush.msra.mxu0 0.0
  %5495 = vmatpush.msra.mxu0 0.0
  %5496 = vmatpush.msra.mxu0 %v5463
  %5497 = vmatmul.f32.gmra.mxu0 %v5473
  %v5498 = vpop.f32.mrf.mxu0
  %v5499 = vadd.f32 0.0, %v5498
  %5500 = vmatmul.f32.gmra.mxu0 %v5475
  %v5501 = vpop.f32.mrf.mxu0
  %v5502 = vadd.f32 0.0, %v5501
  %5503 = vmatmul.f32.gmra.mxu0 %v5477
  %v5504 = vpop.f32.mrf.mxu0
  %v5505 = vadd.f32 0.0, %v5504
  %5506 = vmatmul.f32.gmra.mxu0 %v5479
  %v5507 = vpop.f32.mrf.mxu0
  %v5508 = vadd.f32 0.0, %v5507
  %5509 = vdwg.mxu0
  %v5510 = vadd.f32 %v5319, %v5499
  %v5511 = vadd.f32 %v5320, %v5502
  %v5512 = vadd.f32 %v5321, %v5505
  %v5513 = vadd.f32 %v5322, %v5508
  %5514 = vxpose.xlu0.b32.start [1/16] %v4899, 128
  %5515 = vxpose.xlu0.b32.cont [2/16] 0.0, 128
  %5516 = vxpose.xlu0.b32.cont [3/16] 0.0, 128
  %5517 = vxpose.xlu0.b32.cont [4/16] 0.0, 128
  %5518 = vxpose.xlu0.b32.cont [5/16] 0.0, 128
  %5519 = vxpose.xlu0.b32.cont [6/16] 0.0, 128
  %5520 = vxpose.xlu0.b32.cont [7/16] 0.0, 128
  %5521 = vxpose.xlu0.b32.cont [8/16] 0.0, 128
  %5522 = vxpose.xlu0.b32.cont [9/16] 0.0, 128
  %5523 = vxpose.xlu0.b32.cont [10/16] 0.0, 128
  %5524 = vxpose.xlu0.b32.cont [11/16] 0.0, 128
  %5525 = vxpose.xlu0.b32.cont [12/16] 0.0, 128
  %5526 = vxpose.xlu0.b32.cont [13/16] 0.0, 128
  %5527 = vxpose.xlu0.b32.cont [14/16] 0.0, 128
  %5528 = vxpose.xlu0.b32.cont [15/16] 0.0, 128
  %5529 = vxpose.xlu0.b32.end [16/16] 0.0, 128
  %v5530 = vpop.trf.xlu0
  %v5531 = vpop.trf.xlu0
  %v5532 = vpop.trf.xlu0
  %v5533 = vpop.trf.xlu0
  %v5534 = vpop.trf.xlu0
  %v5535 = vpop.trf.xlu0
  %v5536 = vpop.trf.xlu0
  %v5537 = vpop.trf.xlu0
  %v5538 = vpop.trf.xlu0
  %v5539 = vpop.trf.xlu0
  %v5540 = vpop.trf.xlu0
  %v5541 = vpop.trf.xlu0
  %v5542 = vpop.trf.xlu0
  %v5543 = vpop.trf.xlu0
  %v5544 = vpop.trf.xlu0
  %v5545 = vpop.trf.xlu0
  %v5547 = vsel %vm336, %v5530, 0
  %v5550 = vsel %vm336, %v5531, 0
  %5552 = vmatpush.msra.mxu0 0.0
  %5553 = vmatpush.msra.mxu0 0.0
  %5554 = vmatpush.msra.mxu0 0.0
  %5555 = vmatpush.msra.mxu0 0.0
  %5556 = vmatpush.msra.mxu0 0.0
  %5557 = vmatpush.msra.mxu0 0.0
  %5558 = vmatpush.msra.mxu0 0.0
  %5559 = vmatpush.msra.mxu0 0.0
  %5560 = vmatpush.msra.mxu0 0.0
  %5561 = vmatpush.msra.mxu0 0.0
  %5562 = vmatpush.msra.mxu0 0.0
  %5563 = vmatpush.msra.mxu0 0.0
  %5564 = vmatpush.msra.mxu0 0.0
  %5565 = vmatpush.msra.mxu0 0.0
  %5566 = vmatpush.msra.mxu0 0.0
  %5567 = vmatpush.msra.mxu0 %v4911
  %5568 = vmatmul.f32.gmra.mxu0 %v5547
  %v5569 = vpop.f32.mrf.mxu0
  %v5570 = vadd.f32 0.0, %v5569
  %5571 = vmatmul.f32.gmra.mxu0 %v5550
  %v5572 = vpop.f32.mrf.mxu0
  %v5573 = vadd.f32 0.0, %v5572
  %5574 = vdwg.mxu0
  %v5575 = vmul.f32 %v5570, 0.35355338
  %v5576 = vmul.f32 %v5573, 0.35355338
  %v5577 = vadd.f32 %v5575, %v4710
  %v5578 = vadd.f32 %v5576, %v4711
  %v5579 = vsel %vm370, %v5577, -inf
  %5580 = vmax.xlane.f32.xlu0 %v5579
  %v5581 = vpop.xlane.xlu0 %5580
  %v5582 = vsel %vm370, %v5578, -inf
  %5583 = vmax.xlane.f32.xlu0 %v5582
  %v5584 = vpop.xlane.xlu0 %5583
  %v5585 = vsub.f32 %v5577, %v5581
  %v5586 = vsub.f32 %v5578, %v5584
  %v5587 = vmul.f32 %v5585, 1.442695
  %v5588 = vpow.pop %v5587
  %v5589 = vmul.f32 %v5586, 1.442695
  %v5590 = vpow.pop %v5589
  %v5591 = vsel %vm370, %v5588, 0.0
  %5592 = vadd.xlane.f32.xlu0 %v5591
  %v5593 = vpop.xlane.xlu0 %5592
  %v5594 = vsel %vm370, %v5590, 0.0
  %5595 = vadd.xlane.f32.xlu0 %v5594
  %v5596 = vpop.xlane.xlu0 %5595
  %v5597 = vrcp.pop %v5593
  %v5598 = vmul.f32 %v5593, %v5597
  %v5599 = vsub.f32 1.0, %v5598
  %v5600 = vmul.f32 %v5597, %v5599
  %v5601 = vadd.f32 %v5597, %v5600
  %vm5602 = vweird.f32 %v5593
  %vm5603 = vweird.f32 %v5597
  %vm5604 = vmor %vm5602, %vm5603
  %v5605 = vsel %vm5604, %v5597, %v5601
  %v5606 = vand.u32 2147483647, %v5593
  %vm5607 = vcmp.eq.f32.partialorder %v5606, 8.507059e+37
  %v5608 = vand.u32 %v5593, 2147483648
  %v5609 = vor.u32 1.1754944e-38, %v5608
  %v5610 = vsel %vm5607, %v5609, %v5605
  %v5611 = vmul.f32 %v5588, %v5610
  %v5612 = vrcp.pop %v5596
  %v5613 = vmul.f32 %v5596, %v5612
  %v5614 = vsub.f32 1.0, %v5613
  %v5615 = vmul.f32 %v5612, %v5614
  %v5616 = vadd.f32 %v5612, %v5615
  %vm5617 = vweird.f32 %v5596
  %vm5618 = vweird.f32 %v5612
  %vm5619 = vmor %vm5617, %vm5618
  %v5620 = vsel %vm5619, %v5612, %v5616
  %v5621 = vand.u32 2147483647, %v5596
  %vm5622 = vcmp.eq.f32.partialorder %v5621, 8.507059e+37
  %v5623 = vand.u32 %v5596, 2147483648
  %v5624 = vor.u32 1.1754944e-38, %v5623
  %v5625 = vsel %vm5622, %v5624, %v5620
  %v5626 = vmul.f32 %v5590, %v5625
  %v5628 = vsel %vm370, %v4923, 0
  %v5631 = vsel %vm370, %v5611, 0
  %v5634 = vsel %vm370, %v5626, 0
  %5636 = vmatpush.xpose.msra.mxu0 0.0
  %5637 = vmatpush.xpose.msra.mxu0 0.0
  %5638 = vmatpush.xpose.msra.mxu0 0.0
  %5639 = vmatpush.xpose.msra.mxu0 0.0
  %5640 = vmatpush.xpose.msra.mxu0 0.0
  %5641 = vmatpush.xpose.msra.mxu0 0.0
  %5642 = vmatpush.xpose.msra.mxu0 0.0
  %5643 = vmatpush.xpose.msra.mxu0 0.0
  %5644 = vmatpush.xpose.msra.mxu0 0.0
  %5645 = vmatpush.xpose.msra.mxu0 0.0
  %5646 = vmatpush.xpose.msra.mxu0 0.0
  %5647 = vmatpush.xpose.msra.mxu0 0.0
  %5648 = vmatpush.xpose.msra.mxu0 0.0
  %5649 = vmatpush.xpose.msra.mxu0 0.0
  %5650 = vmatpush.xpose.msra.mxu0 %v5634
  %5651 = vmatpush.xpose.msra.mxu0 %v5631
  %5652 = vmatmul.f32.gmra.mxu0 %v5628
  %v5653 = vpop.f32.mrf.mxu0
  %v5654 = vadd.f32 0.0, %v5653
  %5655 = vdwg.mxu0
  %5656 = vrot.lane.b32.xlu0 %v4724, 104
  %v5657 = vpop.permute.xlu0 %5656
  %5658 = vrot.lane.b32.xlu0 %v4725, 104
  %v5659 = vpop.permute.xlu0 %5658
  %5660 = vrot.lane.b32.xlu0 %v4726, 104
  %v5661 = vpop.permute.xlu0 %5660
  %5662 = vrot.lane.b32.xlu0 %v4727, 104
  %v5663 = vpop.permute.xlu0 %5662
  %v5664 = vsel %vm336, %v5657, 0
  %v5666 = vsel %vm336, %v5659, 0
  %v5668 = vsel %vm336, %v5661, 0
  %v5670 = vsel %vm336, %v5663, 0
  %5672 = vmatpush.msra.mxu0 0.0
  %5673 = vmatpush.msra.mxu0 0.0
  %5674 = vmatpush.msra.mxu0 0.0
  %5675 = vmatpush.msra.mxu0 0.0
  %5676 = vmatpush.msra.mxu0 0.0
  %5677 = vmatpush.msra.mxu0 0.0
  %5678 = vmatpush.msra.mxu0 0.0
  %5679 = vmatpush.msra.mxu0 0.0
  %5680 = vmatpush.msra.mxu0 0.0
  %5681 = vmatpush.msra.mxu0 0.0
  %5682 = vmatpush.msra.mxu0 0.0
  %5683 = vmatpush.msra.mxu0 0.0
  %5684 = vmatpush.msra.mxu0 0.0
  %5685 = vmatpush.msra.mxu0 0.0
  %5686 = vmatpush.msra.mxu0 0.0
  %5687 = vmatpush.msra.mxu0 %v5654
  %5688 = vmatmul.f32.gmra.mxu0 %v5664
  %v5689 = vpop.f32.mrf.mxu0
  %v5690 = vadd.f32 0.0, %v5689
  %5691 = vmatmul.f32.gmra.mxu0 %v5666
  %v5692 = vpop.f32.mrf.mxu0
  %v5693 = vadd.f32 0.0, %v5692
  %5694 = vmatmul.f32.gmra.mxu0 %v5668
  %v5695 = vpop.f32.mrf.mxu0
  %v5696 = vadd.f32 0.0, %v5695
  %5697 = vmatmul.f32.gmra.mxu0 %v5670
  %v5698 = vpop.f32.mrf.mxu0
  %v5699 = vadd.f32 0.0, %v5698
  %5700 = vdwg.mxu0
  %v5701 = vadd.f32 %v5510, %v5690
  %v5702 = vadd.f32 %v5511, %v5693
  %v5703 = vadd.f32 %v5512, %v5696
  %v5704 = vadd.f32 %v5513, %v5699
  %v5706 = vsel %vm214, %v4736, 0
  %v5709 = vsel %vm214, %v4737, 0
  %v5712 = vsel %vm214, %v4738, 0
  %v5715 = vsel %vm214, %v4739, 0
  %v5718 = vsel %vm214, %v4740, 0
  %v5721 = vsel %vm214, %v4741, 0
  %v5724 = vsel %vm214, %v4742, 0
  %v5727 = vsel %vm214, %v4743, 0
  %5729 = vmatpush.msra.mxu0 0.0
  %5730 = vmatpush.msra.mxu0 0.0
  %5731 = vmatpush.msra.mxu0 0.0
  %5732 = vmatpush.msra.mxu0 0.0
  %5733 = vmatpush.msra.mxu0 0.0
  %5734 = vmatpush.msra.mxu0 0.0
  %5735 = vmatpush.msra.mxu0 0.0
  %5736 = vmatpush.msra.mxu0 0.0
  %5737 = vmatpush.msra.mxu0 0.0
  %5738 = vmatpush.msra.mxu0 0.0
  %5739 = vmatpush.msra.mxu0 0.0
  %5740 = vmatpush.msra.mxu0 0.0
  %5741 = vmatpush.msra.mxu0 %v5704
  %5742 = vmatpush.msra.mxu0 %v5703
  %5743 = vmatpush.msra.mxu0 %v5702
  %5744 = vmatpush.msra.mxu0 %v5701
  %5745 = vmatmul.f32.gmra.mxu0 %v5706
  %v5746 = vpop.f32.mrf.mxu0
  %v5747 = vadd.f32 0.0, %v5746
  %5748 = vmatmul.f32.gmra.mxu0 %v5709
  %v5749 = vpop.f32.mrf.mxu0
  %v5750 = vadd.f32 0.0, %v5749
  %5751 = vmatmul.f32.gmra.mxu0 %v5712
  %v5752 = vpop.f32.mrf.mxu0
  %v5753 = vadd.f32 0.0, %v5752
  %5754 = vmatmul.f32.gmra.mxu0 %v5715
  %v5755 = vpop.f32.mrf.mxu0
  %v5756 = vadd.f32 0.0, %v5755
  %5757 = vmatmul.f32.gmra.mxu0 %v5718
  %v5758 = vpop.f32.mrf.mxu0
  %v5759 = vadd.f32 0.0, %v5758
  %5760 = vmatmul.f32.gmra.mxu0 %v5721
  %v5761 = vpop.f32.mrf.mxu0
  %v5762 = vadd.f32 0.0, %v5761
  %5763 = vmatmul.f32.gmra.mxu0 %v5724
  %v5764 = vpop.f32.mrf.mxu0
  %v5765 = vadd.f32 0.0, %v5764
  %5766 = vmatmul.f32.gmra.mxu0 %v5727
  %v5767 = vpop.f32.mrf.mxu0
  %v5768 = vadd.f32 0.0, %v5767
  %5769 = vdwg.mxu0
  %v5771 = vsel %vm214, %v4728, 0
  %v5774 = vsel %vm214, %v4729, 0
  %v5777 = vsel %vm214, %v4730, 0
  %v5780 = vsel %vm214, %v4731, 0
  %v5783 = vsel %vm214, %v4732, 0
  %v5786 = vsel %vm214, %v4733, 0
  %v5789 = vsel %vm214, %v4734, 0
  %v5792 = vsel %vm214, %v4735, 0
  %5794 = vmatpush.msra.mxu0 0.0
  %5795 = vmatpush.msra.mxu0 0.0
  %5796 = vmatpush.msra.mxu0 0.0
  %5797 = vmatpush.msra.mxu0 0.0
  %5798 = vmatpush.msra.mxu0 0.0
  %5799 = vmatpush.msra.mxu0 0.0
  %5800 = vmatpush.msra.mxu0 0.0
  %5801 = vmatpush.msra.mxu0 0.0
  %5802 = vmatpush.msra.mxu0 0.0
  %5803 = vmatpush.msra.mxu0 0.0
  %5804 = vmatpush.msra.mxu0 0.0
  %5805 = vmatpush.msra.mxu0 0.0
  %5806 = vmatpush.msra.mxu0 %v3751
  %5807 = vmatpush.msra.mxu0 %v3750
  %5808 = vmatpush.msra.mxu0 %v3749
  %5809 = vmatpush.msra.mxu0 %v3748
  %5810 = vmatmul.f32.gmra.mxu0 %v5771
  %v5811 = vpop.f32.mrf.mxu0
  %v5812 = vadd.f32 %v5747, %v5811
  %5813 = vmatmul.f32.gmra.mxu0 %v5774
  %v5814 = vpop.f32.mrf.mxu0
  %v5815 = vadd.f32 %v5750, %v5814
  %5816 = vmatmul.f32.gmra.mxu0 %v5777
  %v5817 = vpop.f32.mrf.mxu0
  %v5818 = vadd.f32 %v5753, %v5817
  %5819 = vmatmul.f32.gmra.mxu0 %v5780
  %v5820 = vpop.f32.mrf.mxu0
  %v5821 = vadd.f32 %v5756, %v5820
  %5822 = vmatmul.f32.gmra.mxu0 %v5783
  %v5823 = vpop.f32.mrf.mxu0
  %v5824 = vadd.f32 %v5759, %v5823
  %5825 = vmatmul.f32.gmra.mxu0 %v5786
  %v5826 = vpop.f32.mrf.mxu0
  %v5827 = vadd.f32 %v5762, %v5826
  %5828 = vmatmul.f32.gmra.mxu0 %v5789
  %v5829 = vpop.f32.mrf.mxu0
  %v5830 = vadd.f32 %v5765, %v5829
  %5831 = vmatmul.f32.gmra.mxu0 %v5792
  %v5832 = vpop.f32.mrf.mxu0
  %v5833 = vadd.f32 %v5768, %v5832
  %5834 = vdwg.mxu0
  %5836 = vset.pattern.permute.xlu0 0
  %5837 = vperm.xlu0 %5836, %v4760
  %v5838 = vpop.permute.xlu0 %5837
  %5841 = vset.pattern.permute.xlu0 0
  %5842 = vperm.xlu0 %5841, %v4761
  %v5843 = vpop.permute.xlu0 %5842
  %5846 = vset.pattern.permute.xlu0 0
  %5847 = vperm.xlu0 %5846, %v4762
  %v5848 = vpop.permute.xlu0 %5847
  %5851 = vset.pattern.permute.xlu0 0
  %5852 = vperm.xlu0 %5851, %v4763
  %v5853 = vpop.permute.xlu0 %5852
  %5856 = vset.pattern.permute.xlu0 0
  %5857 = vperm.xlu0 %5856, %v4764
  %v5858 = vpop.permute.xlu0 %5857
  %5861 = vset.pattern.permute.xlu0 0
  %5862 = vperm.xlu0 %5861, %v4765
  %v5863 = vpop.permute.xlu0 %5862
  %5866 = vset.pattern.permute.xlu0 0
  %5867 = vperm.xlu0 %5866, %v4766
  %v5868 = vpop.permute.xlu0 %5867
  %5871 = vset.pattern.permute.xlu0 0
  %5872 = vperm.xlu0 %5871, %v4767
  %v5873 = vpop.permute.xlu0 %5872
  %v5875 = vadd.f32 %v5812, %v5838
  %v5876 = vadd.f32 %v5815, %v5843
  %v5877 = vadd.f32 %v5818, %v5848
  %v5878 = vadd.f32 %v5821, %v5853
  %v5879 = vadd.f32 %v5824, %v5858
  %v5880 = vadd.f32 %v5827, %v5863
  %v5881 = vadd.f32 %v5830, %v5868
  %v5882 = vadd.f32 %v5833, %v5873
  %v5883 = vmax.f32 %v5875, 0.0
  %v5884 = vmax.f32 %v5876, 0.0
  %v5885 = vmax.f32 %v5877, 0.0
  %v5886 = vmax.f32 %v5878, 0.0
  %v5887 = vmax.f32 %v5879, 0.0
  %v5888 = vmax.f32 %v5880, 0.0
  %v5889 = vmax.f32 %v5881, 0.0
  %v5890 = vmax.f32 %v5882, 0.0
  %5892 = vset.pattern.permute.xlu0 0
  %5893 = vperm.xlu0 %5892, %v4768
  %v5894 = vpop.permute.xlu0 %5893
  %5897 = vset.pattern.permute.xlu0 0
  %5898 = vperm.xlu0 %5897, %v4769
  %v5899 = vpop.permute.xlu0 %5898
  %5902 = vset.pattern.permute.xlu0 0
  %5903 = vperm.xlu0 %5902, %v4770
  %v5904 = vpop.permute.xlu0 %5903
  %5907 = vset.pattern.permute.xlu0 0
  %5908 = vperm.xlu0 %5907, %v4771
  %v5909 = vpop.permute.xlu0 %5908
  %v5912 = vsel %vm1292, %v4772, 0
  %v5915 = vsel %vm1292, %v4773, 0
  %v5918 = vsel %vm1292, %v4774, 0
  %v5921 = vsel %vm1292, %v4775, 0
  %5923 = vmatpush.msra.mxu0 0.0
  %5924 = vmatpush.msra.mxu0 0.0
  %5925 = vmatpush.msra.mxu0 0.0
  %5926 = vmatpush.msra.mxu0 0.0
  %5927 = vmatpush.msra.mxu0 0.0
  %5928 = vmatpush.msra.mxu0 0.0
  %5929 = vmatpush.msra.mxu0 0.0
  %5930 = vmatpush.msra.mxu0 0.0
  %5931 = vmatpush.msra.mxu0 %v5890
  %5932 = vmatpush.msra.mxu0 %v5889
  %5933 = vmatpush.msra.mxu0 %v5888
  %5934 = vmatpush.msra.mxu0 %v5887
  %5935 = vmatpush.msra.mxu0 %v5886
  %5936 = vmatpush.msra.mxu0 %v5885
  %5937 = vmatpush.msra.mxu0 %v5884
  %5938 = vmatpush.msra.mxu0 %v5883
  %5939 = vmatmul.f32.gmra.mxu0 %v5912
  %v5940 = vpop.f32.mrf.mxu0
  %v5941 = vadd.f32 %v5894, %v5940
  %5942 = vmatmul.f32.gmra.mxu0 %v5915
  %v5943 = vpop.f32.mrf.mxu0
  %v5944 = vadd.f32 %v5899, %v5943
  %5945 = vmatmul.f32.gmra.mxu0 %v5918
  %v5946 = vpop.f32.mrf.mxu0
  %v5947 = vadd.f32 %v5904, %v5946
  %5948 = vmatmul.f32.gmra.mxu0 %v5921
  %v5949 = vpop.f32.mrf.mxu0
  %v5950 = vadd.f32 %v5909, %v5949
  %5951 = vdwg.mxu0
  %v5952 = vadd.f32 %v3748, %v5941
  %v5953 = vadd.f32 %v3749, %v5944
  %v5954 = vadd.f32 %v3750, %v5947
  %v5955 = vadd.f32 %v3751, %v5950
  %v5956 = vld [vmem:[%s5] sm:$0xff]
  %v5957 = vld [vmem:[%s5 + $0x8] sm:$0xff]
  %v5958 = vld [vmem:[%s5 + $0x10] sm:$0xff]
  %v5959 = vld [vmem:[%s5 + $0x18] sm:$0xff]
  %v5960 = vld [vmem:[%s20] sm:$0xff]
  %v5961 = vld [vmem:[%s20 + $0x8] sm:$0xff]
  %v5962 = vld [vmem:[%s20 + $0x10] sm:$0xff]
  %v5963 = vld [vmem:[%s20 + $0x18] sm:$0xff]
  %v5964 = vld [vmem:[%s20 + $0x20] sm:$0xff]
  %v5965 = vld [vmem:[%s20 + $0x28] sm:$0xff]
  %v5966 = vld [vmem:[%s20 + $0x30] sm:$0xff]
  %v5967 = vld [vmem:[%s20 + $0x38] sm:$0xff]
  %v5968 = vld [vmem:[%s20 + $0x40] sm:$0xff]
  %v5969 = vld [vmem:[%s20 + $0x48] sm:$0xff]
  %v5970 = vld [vmem:[%s20 + $0x50] sm:$0xff]
  %v5971 = vld [vmem:[%s20 + $0x58] sm:$0xff]
  %v5972 = vld [vmem:[%s20 + $0x60] sm:$0xff]
  %v5973 = vld [vmem:[%s20 + $0x68] sm:$0xff]
  %v5974 = vld [vmem:[%s20 + $0x70] sm:$0xff]
  %v5975 = vld [vmem:[%s20 + $0x78] sm:$0xff]
  %v5976 = vld [vmem:[%s20 + $0x80] sm:$0xff]
  %v5977 = vld [vmem:[%s20 + $0x88] sm:$0xff]
  %v5978 = vld [vmem:[%s20 + $0x90] sm:$0xff]
  %v5979 = vld [vmem:[%s20 + $0x98] sm:$0xff]
  %v5980 = vld [vmem:[%s20 + $0xa0] sm:$0xff]
  %v5981 = vld [vmem:[%s20 + $0xa8] sm:$0xff]
  %v5982 = vld [vmem:[%s20 + $0xb0] sm:$0xff]
  %v5983 = vld [vmem:[%s20 + $0xb8] sm:$0xff]
  %v5984 = vld [vmem:[%s20 + $0xc0] sm:$0xff]
  %v5985 = vld [vmem:[%s20 + $0xc8] sm:$0xff]
  %v5986 = vld [vmem:[%s20 + $0xd0] sm:$0xff]
  %v5987 = vld [vmem:[%s20 + $0xd8] sm:$0xff]
  %v5988 = vld [vmem:[%s20 + $0xe0] sm:$0xff]
  %v5989 = vld [vmem:[%s20 + $0xe8] sm:$0xff]
  %v5990 = vld [vmem:[%s20 + $0xf0] sm:$0xff]
  %v5991 = vld [vmem:[%s20 + $0xf8] sm:$0xff]
  %v5992 = vld [vmem:[%s21] sm:$0xff]
  %v5993 = vld [vmem:[%s21 + $0x8] sm:$0xff]
  %v5994 = vld [vmem:[%s21 + $0x10] sm:$0xff]
  %v5995 = vld [vmem:[%s21 + $0x18] sm:$0xff]
  %v5996 = vld [vmem:[%s21 + $0x20] sm:$0xff]
  %v5997 = vld [vmem:[%s21 + $0x28] sm:$0xff]
  %v5998 = vld [vmem:[%s21 + $0x30] sm:$0xff]
  %v5999 = vld [vmem:[%s21 + $0x38] sm:$0xff]
  %v6000 = vld [vmem:[%s21 + $0x40] sm:$0xff]
  %v6001 = vld [vmem:[%s21 + $0x48] sm:$0xff]
  %v6002 = vld [vmem:[%s21 + $0x50] sm:$0xff]
  %v6003 = vld [vmem:[%s21 + $0x58] sm:$0xff]
  %v6004 = vld [vmem:[%s21 + $0x60] sm:$0xff]
  %v6005 = vld [vmem:[%s21 + $0x68] sm:$0xff]
  %v6006 = vld [vmem:[%s21 + $0x70] sm:$0xff]
  %v6007 = vld [vmem:[%s21 + $0x78] sm:$0xff]
  %v6008 = vld [vmem:[%s21 + $0x80] sm:$0xff]
  %v6009 = vld [vmem:[%s21 + $0x88] sm:$0xff]
  %v6010 = vld [vmem:[%s21 + $0x90] sm:$0xff]
  %v6011 = vld [vmem:[%s21 + $0x98] sm:$0xff]
  %v6012 = vld [vmem:[%s21 + $0xa0] sm:$0xff]
  %v6013 = vld [vmem:[%s21 + $0xa8] sm:$0xff]
  %v6014 = vld [vmem:[%s21 + $0xb0] sm:$0xff]
  %v6015 = vld [vmem:[%s21 + $0xb8] sm:$0xff]
  %v6016 = vld [vmem:[%s21 + $0xc0] sm:$0xff]
  %v6017 = vld [vmem:[%s21 + $0xc8] sm:$0xff]
  %v6018 = vld [vmem:[%s21 + $0xd0] sm:$0xff]
  %v6019 = vld [vmem:[%s21 + $0xd8] sm:$0xff]
  %v6020 = vld [vmem:[%s22] sm:$0xff]
  %v6021 = vld [vmem:[%s22 + $0x8] sm:$0xff]
  %v6022 = vld [vmem:[%s22 + $0x10] sm:$0xff]
  %v6023 = vld [vmem:[%s22 + $0x18] sm:$0xff]
  %6025 = vset.pattern.permute.xlu0 0
  %6026 = vperm.xlu0 %6025, %v5992
  %v6027 = vpop.permute.xlu0 %6026
  %6030 = vset.pattern.permute.xlu0 0
  %6031 = vperm.xlu0 %6030, %v5993
  %v6032 = vpop.permute.xlu0 %6031
  %6035 = vset.pattern.permute.xlu0 0
  %6036 = vperm.xlu0 %6035, %v5994
  %v6037 = vpop.permute.xlu0 %6036
  %6040 = vset.pattern.permute.xlu0 0
  %6041 = vperm.xlu0 %6040, %v5995
  %v6042 = vpop.permute.xlu0 %6041
  %6045 = vset.pattern.permute.xlu0 0
  %6046 = vperm.xlu0 %6045, %v5996
  %v6047 = vpop.permute.xlu0 %6046
  %6050 = vset.pattern.permute.xlu0 0
  %6051 = vperm.xlu0 %6050, %v5997
  %v6052 = vpop.permute.xlu0 %6051
  %6055 = vset.pattern.permute.xlu0 0
  %6056 = vperm.xlu0 %6055, %v5998
  %v6057 = vpop.permute.xlu0 %6056
  %6060 = vset.pattern.permute.xlu0 0
  %6061 = vperm.xlu0 %6060, %v5999
  %v6062 = vpop.permute.xlu0 %6061
  %6065 = vset.pattern.permute.xlu0 0
  %6066 = vperm.xlu0 %6065, %v6000
  %v6067 = vpop.permute.xlu0 %6066
  %6070 = vset.pattern.permute.xlu0 0
  %6071 = vperm.xlu0 %6070, %v6001
  %v6072 = vpop.permute.xlu0 %6071
  %6075 = vset.pattern.permute.xlu0 0
  %6076 = vperm.xlu0 %6075, %v6002
  %v6077 = vpop.permute.xlu0 %6076
  %6080 = vset.pattern.permute.xlu0 0
  %6081 = vperm.xlu0 %6080, %v6003
  %v6082 = vpop.permute.xlu0 %6081
  %v6085 = vsel %vm214, %v5960, 0
  %v6088 = vsel %vm214, %v5961, 0
  %v6091 = vsel %vm214, %v5962, 0
  %v6094 = vsel %vm214, %v5963, 0
  %v6097 = vsel %vm214, %v5964, 0
  %v6100 = vsel %vm214, %v5965, 0
  %v6103 = vsel %vm214, %v5966, 0
  %v6106 = vsel %vm214, %v5967, 0
  %v6109 = vsel %vm214, %v5968, 0
  %v6112 = vsel %vm214, %v5969, 0
  %v6115 = vsel %vm214, %v5970, 0
  %v6118 = vsel %vm214, %v5971, 0
  %6120 = vmatpush.msra.mxu0 0.0
  %6121 = vmatpush.msra.mxu0 0.0
  %6122 = vmatpush.msra.mxu0 0.0
  %6123 = vmatpush.msra.mxu0 0.0
  %6124 = vmatpush.msra.mxu0 0.0
  %6125 = vmatpush.msra.mxu0 0.0
  %6126 = vmatpush.msra.mxu0 0.0
  %6127 = vmatpush.msra.mxu0 0.0
  %6128 = vmatpush.msra.mxu0 0.0
  %6129 = vmatpush.msra.mxu0 0.0
  %6130 = vmatpush.msra.mxu0 0.0
  %6131 = vmatpush.msra.mxu0 0.0
  %6132 = vmatpush.msra.mxu0 %v4709
  %6133 = vmatpush.msra.mxu0 %v4708
  %6134 = vmatpush.msra.mxu0 %v4707
  %6135 = vmatpush.msra.mxu0 %v4706
  %6136 = vmatmul.f32.gmra.mxu0 %v6085
  %v6137 = vpop.f32.mrf.mxu0
  %v6138 = vadd.f32 %v6027, %v6137
  %6139 = vmatmul.f32.gmra.mxu0 %v6088
  %v6140 = vpop.f32.mrf.mxu0
  %v6141 = vadd.f32 %v6032, %v6140
  %6142 = vmatmul.f32.gmra.mxu0 %v6091
  %v6143 = vpop.f32.mrf.mxu0
  %v6144 = vadd.f32 %v6037, %v6143
  %6145 = vmatmul.f32.gmra.mxu0 %v6094
  %v6146 = vpop.f32.mrf.mxu0
  %v6147 = vadd.f32 %v6042, %v6146
  %6148 = vmatmul.f32.gmra.mxu0 %v6097
  %v6149 = vpop.f32.mrf.mxu0
  %v6150 = vadd.f32 %v6047, %v6149
  %6151 = vmatmul.f32.gmra.mxu0 %v6100
  %v6152 = vpop.f32.mrf.mxu0
  %v6153 = vadd.f32 %v6052, %v6152
  %6154 = vmatmul.f32.gmra.mxu0 %v6103
  %v6155 = vpop.f32.mrf.mxu0
  %v6156 = vadd.f32 %v6057, %v6155
  %6157 = vmatmul.f32.gmra.mxu0 %v6106
  %v6158 = vpop.f32.mrf.mxu0
  %v6159 = vadd.f32 %v6062, %v6158
  %6160 = vmatmul.f32.gmra.mxu0 %v6109
  %v6161 = vpop.f32.mrf.mxu0
  %v6162 = vadd.f32 %v6067, %v6161
  %6163 = vmatmul.f32.gmra.mxu0 %v6112
  %v6164 = vpop.f32.mrf.mxu0
  %v6165 = vadd.f32 %v6072, %v6164
  %6166 = vmatmul.f32.gmra.mxu0 %v6115
  %v6167 = vpop.f32.mrf.mxu0
  %v6168 = vadd.f32 %v6077, %v6167
  %6169 = vmatmul.f32.gmra.mxu0 %v6118
  %v6170 = vpop.f32.mrf.mxu0
  %v6171 = vadd.f32 %v6082, %v6170
  %6172 = vdwg.mxu0
  %6173 = vxpose.xlu0.b32.start [1/16] %v6138, 128
  %6174 = vxpose.xlu0.b32.cont [2/16] 0.0, 128
  %6175 = vxpose.xlu0.b32.cont [3/16] 0.0, 128
  %6176 = vxpose.xlu0.b32.cont [4/16] 0.0, 128
  %6177 = vxpose.xlu0.b32.cont [5/16] 0.0, 128
  %6178 = vxpose.xlu0.b32.cont [6/16] 0.0, 128
  %6179 = vxpose.xlu0.b32.cont [7/16] 0.0, 128
  %6180 = vxpose.xlu0.b32.cont [8/16] 0.0, 128
  %6181 = vxpose.xlu0.b32.cont [9/16] 0.0, 128
  %6182 = vxpose.xlu0.b32.cont [10/16] 0.0, 128
  %6183 = vxpose.xlu0.b32.cont [11/16] 0.0, 128
  %6184 = vxpose.xlu0.b32.cont [12/16] 0.0, 128
  %6185 = vxpose.xlu0.b32.cont [13/16] 0.0, 128
  %6186 = vxpose.xlu0.b32.cont [14/16] 0.0, 128
  %6187 = vxpose.xlu0.b32.cont [15/16] 0.0, 128
  %6188 = vxpose.xlu0.b32.end [16/16] 0.0, 128
  %v6189 = vpop.trf.xlu0
  %v6190 = vpop.trf.xlu0
  %v6191 = vpop.trf.xlu0
  %v6192 = vpop.trf.xlu0
  %v6193 = vpop.trf.xlu0
  %v6194 = vpop.trf.xlu0
  %v6195 = vpop.trf.xlu0
  %v6196 = vpop.trf.xlu0
  %v6197 = vpop.trf.xlu0
  %v6198 = vpop.trf.xlu0
  %v6199 = vpop.trf.xlu0
  %v6200 = vpop.trf.xlu0
  %v6201 = vpop.trf.xlu0
  %v6202 = vpop.trf.xlu0
  %v6203 = vpop.trf.xlu0
  %v6204 = vpop.trf.xlu0
  %v6206 = vsel %vm336, %v6189, 0
  %v6209 = vsel %vm336, %v6190, 0
  %v6212 = vsel %vm336, %v6191, 0
  %v6215 = vsel %vm336, %v6192, 0
  %6217 = vmatpush.msra.mxu0 0.0
  %6218 = vmatpush.msra.mxu0 0.0
  %6219 = vmatpush.msra.mxu0 0.0
  %6220 = vmatpush.msra.mxu0 0.0
  %6221 = vmatpush.msra.mxu0 0.0
  %6222 = vmatpush.msra.mxu0 0.0
  %6223 = vmatpush.msra.mxu0 0.0
  %6224 = vmatpush.msra.mxu0 0.0
  %6225 = vmatpush.msra.mxu0 0.0
  %6226 = vmatpush.msra.mxu0 0.0
  %6227 = vmatpush.msra.mxu0 0.0
  %6228 = vmatpush.msra.mxu0 0.0
  %6229 = vmatpush.msra.mxu0 0.0
  %6230 = vmatpush.msra.mxu0 0.0
  %6231 = vmatpush.msra.mxu0 0.0
  %6232 = vmatpush.msra.mxu0 %v6150
  %6233 = vmatmul.f32.gmra.mxu0 %v6206
  %v6234 = vpop.f32.mrf.mxu0
  %v6235 = vadd.f32 0.0, %v6234
  %6236 = vmatmul.f32.gmra.mxu0 %v6209
  %v6237 = vpop.f32.mrf.mxu0
  %v6238 = vadd.f32 0.0, %v6237
  %6239 = vmatmul.f32.gmra.mxu0 %v6212
  %v6240 = vpop.f32.mrf.mxu0
  %v6241 = vadd.f32 0.0, %v6240
  %6242 = vmatmul.f32.gmra.mxu0 %v6215
  %v6243 = vpop.f32.mrf.mxu0
  %v6244 = vadd.f32 0.0, %v6243
  %6245 = vdwg.mxu0
  %v6246 = vmul.f32 %v6235, 0.35355338
  %v6247 = vmul.f32 %v6238, 0.35355338
  %v6248 = vmul.f32 %v6241, 0.35355338
  %v6249 = vmul.f32 %v6244, 0.35355338
  %v6250 = vadd.f32 %v6246, %v5956
  %v6251 = vadd.f32 %v6247, %v5957
  %v6252 = vadd.f32 %v6248, %v5958
  %v6253 = vadd.f32 %v6249, %v5959
  %v6254 = vsel %vm214, %v6250, -inf
  %6255 = vmax.xlane.f32.xlu0 %v6254
  %v6256 = vpop.xlane.xlu0 %6255
  %v6257 = vsel %vm214, %v6251, -inf
  %6258 = vmax.xlane.f32.xlu0 %v6257
  %v6259 = vpop.xlane.xlu0 %6258
  %v6260 = vsel %vm214, %v6252, -inf
  %6261 = vmax.xlane.f32.xlu0 %v6260
  %v6262 = vpop.xlane.xlu0 %6261
  %v6263 = vsel %vm214, %v6253, -inf
  %6264 = vmax.xlane.f32.xlu0 %v6263
  %v6265 = vpop.xlane.xlu0 %6264
  %v6266 = vsub.f32 %v6250, %v6256
  %v6267 = vsub.f32 %v6251, %v6259
  %v6268 = vsub.f32 %v6252, %v6262
  %v6269 = vsub.f32 %v6253, %v6265
  %v6270 = vmul.f32 %v6266, 1.442695
  %v6271 = vpow.pop %v6270
  %v6272 = vmul.f32 %v6267, 1.442695
  %v6273 = vpow.pop %v6272
  %v6274 = vmul.f32 %v6268, 1.442695
  %v6275 = vpow.pop %v6274
  %v6276 = vmul.f32 %v6269, 1.442695
  %v6277 = vpow.pop %v6276
  %v6278 = vsel %vm214, %v6271, 0.0
  %6279 = vadd.xlane.f32.xlu0 %v6278
  %v6280 = vpop.xlane.xlu0 %6279
  %v6281 = vsel %vm214, %v6273, 0.0
  %6282 = vadd.xlane.f32.xlu0 %v6281
  %v6283 = vpop.xlane.xlu0 %6282
  %v6284 = vsel %vm214, %v6275, 0.0
  %6285 = vadd.xlane.f32.xlu0 %v6284
  %v6286 = vpop.xlane.xlu0 %6285
  %v6287 = vsel %vm214, %v6277, 0.0
  %6288 = vadd.xlane.f32.xlu0 %v6287
  %v6289 = vpop.xlane.xlu0 %6288
  %v6290 = vrcp.pop %v6280
  %v6291 = vmul.f32 %v6280, %v6290
  %v6292 = vsub.f32 1.0, %v6291
  %v6293 = vmul.f32 %v6290, %v6292
  %v6294 = vadd.f32 %v6290, %v6293
  %vm6295 = vweird.f32 %v6280
  %vm6296 = vweird.f32 %v6290
  %vm6297 = vmor %vm6295, %vm6296
  %v6298 = vsel %vm6297, %v6290, %v6294
  %v6299 = vand.u32 2147483647, %v6280
  %vm6300 = vcmp.eq.f32.partialorder %v6299, 8.507059e+37
  %v6301 = vand.u32 %v6280, 2147483648
  %v6302 = vor.u32 1.1754944e-38, %v6301
  %v6303 = vsel %vm6300, %v6302, %v6298
  %v6304 = vmul.f32 %v6271, %v6303
  %v6305 = vrcp.pop %v6283
  %v6306 = vmul.f32 %v6283, %v6305
  %v6307 = vsub.f32 1.0, %v6306
  %v6308 = vmul.f32 %v6305, %v6307
  %v6309 = vadd.f32 %v6305, %v6308
  %vm6310 = vweird.f32 %v6283
  %vm6311 = vweird.f32 %v6305
  %vm6312 = vmor %vm6310, %vm6311
  %v6313 = vsel %vm6312, %v6305, %v6309
  %v6314 = vand.u32 2147483647, %v6283
  %vm6315 = vcmp.eq.f32.partialorder %v6314, 8.507059e+37
  %v6316 = vand.u32 %v6283, 2147483648
  %v6317 = vor.u32 1.1754944e-38, %v6316
  %v6318 = vsel %vm6315, %v6317, %v6313
  %v6319 = vmul.f32 %v6273, %v6318
  %v6320 = vrcp.pop %v6286
  %v6321 = vmul.f32 %v6286, %v6320
  %v6322 = vsub.f32 1.0, %v6321
  %v6323 = vmul.f32 %v6320, %v6322
  %v6324 = vadd.f32 %v6320, %v6323
  %vm6325 = vweird.f32 %v6286
  %vm6326 = vweird.f32 %v6320
  %vm6327 = vmor %vm6325, %vm6326
  %v6328 = vsel %vm6327, %v6320, %v6324
  %v6329 = vand.u32 2147483647, %v6286
  %vm6330 = vcmp.eq.f32.partialorder %v6329, 8.507059e+37
  %v6331 = vand.u32 %v6286, 2147483648
  %v6332 = vor.u32 1.1754944e-38, %v6331
  %v6333 = vsel %vm6330, %v6332, %v6328
  %v6334 = vmul.f32 %v6275, %v6333
  %v6335 = vrcp.pop %v6289
  %v6336 = vmul.f32 %v6289, %v6335
  %v6337 = vsub.f32 1.0, %v6336
  %v6338 = vmul.f32 %v6335, %v6337
  %v6339 = vadd.f32 %v6335, %v6338
  %vm6340 = vweird.f32 %v6289
  %vm6341 = vweird.f32 %v6335
  %vm6342 = vmor %vm6340, %vm6341
  %v6343 = vsel %vm6342, %v6335, %v6339
  %v6344 = vand.u32 2147483647, %v6289
  %vm6345 = vcmp.eq.f32.partialorder %v6344, 8.507059e+37
  %v6346 = vand.u32 %v6289, 2147483648
  %v6347 = vor.u32 1.1754944e-38, %v6346
  %v6348 = vsel %vm6345, %v6347, %v6343
  %v6349 = vmul.f32 %v6277, %v6348
  %v6351 = vsel %vm214, %v6162, 0
  %v6354 = vsel %vm214, %v6304, 0
  %v6357 = vsel %vm214, %v6319, 0
  %v6360 = vsel %vm214, %v6334, 0
  %v6363 = vsel %vm214, %v6349, 0
  %6365 = vmatpush.xpose.msra.mxu0 0.0
  %6366 = vmatpush.xpose.msra.mxu0 0.0
  %6367 = vmatpush.xpose.msra.mxu0 0.0
  %6368 = vmatpush.xpose.msra.mxu0 0.0
  %6369 = vmatpush.xpose.msra.mxu0 0.0
  %6370 = vmatpush.xpose.msra.mxu0 0.0
  %6371 = vmatpush.xpose.msra.mxu0 0.0
  %6372 = vmatpush.xpose.msra.mxu0 0.0
  %6373 = vmatpush.xpose.msra.mxu0 0.0
  %6374 = vmatpush.xpose.msra.mxu0 0.0
  %6375 = vmatpush.xpose.msra.mxu0 0.0
  %6376 = vmatpush.xpose.msra.mxu0 0.0
  %6377 = vmatpush.xpose.msra.mxu0 %v6363
  %6378 = vmatpush.xpose.msra.mxu0 %v6360
  %6379 = vmatpush.xpose.msra.mxu0 %v6357
  %6380 = vmatpush.xpose.msra.mxu0 %v6354
  %6381 = vmatmul.f32.gmra.mxu0 %v6351
  %v6382 = vpop.f32.mrf.mxu0
  %v6383 = vadd.f32 0.0, %v6382
  %6384 = vdwg.mxu0
  %v6386 = vsel %vm336, %v5972, 0
  %v6389 = vsel %vm336, %v5973, 0
  %v6392 = vsel %vm336, %v5974, 0
  %v6395 = vsel %vm336, %v5975, 0
  %6397 = vmatpush.msra.mxu0 0.0
  %6398 = vmatpush.msra.mxu0 0.0
  %6399 = vmatpush.msra.mxu0 0.0
  %6400 = vmatpush.msra.mxu0 0.0
  %6401 = vmatpush.msra.mxu0 0.0
  %6402 = vmatpush.msra.mxu0 0.0
  %6403 = vmatpush.msra.mxu0 0.0
  %6404 = vmatpush.msra.mxu0 0.0
  %6405 = vmatpush.msra.mxu0 0.0
  %6406 = vmatpush.msra.mxu0 0.0
  %6407 = vmatpush.msra.mxu0 0.0
  %6408 = vmatpush.msra.mxu0 0.0
  %6409 = vmatpush.msra.mxu0 0.0
  %6410 = vmatpush.msra.mxu0 0.0
  %6411 = vmatpush.msra.mxu0 0.0
  %6412 = vmatpush.msra.mxu0 %v6383
  %6413 = vmatmul.f32.gmra.mxu0 %v6386
  %v6414 = vpop.f32.mrf.mxu0
  %v6415 = vadd.f32 0.0, %v6414
  %6416 = vmatmul.f32.gmra.mxu0 %v6389
  %v6417 = vpop.f32.mrf.mxu0
  %v6418 = vadd.f32 0.0, %v6417
  %6419 = vmatmul.f32.gmra.mxu0 %v6392
  %v6420 = vpop.f32.mrf.mxu0
  %v6421 = vadd.f32 0.0, %v6420
  %6422 = vmatmul.f32.gmra.mxu0 %v6395
  %v6423 = vpop.f32.mrf.mxu0
  %v6424 = vadd.f32 0.0, %v6423
  %6425 = vdwg.mxu0
  %6427 = vset.pattern.permute.xlu0 0
  %6428 = vperm.xlu0 %6427, %v6004
  %v6429 = vpop.permute.xlu0 %6428
  %6432 = vset.pattern.permute.xlu0 0
  %6433 = vperm.xlu0 %6432, %v6005
  %v6434 = vpop.permute.xlu0 %6433
  %6437 = vset.pattern.permute.xlu0 0
  %6438 = vperm.xlu0 %6437, %v6006
  %v6439 = vpop.permute.xlu0 %6438
  %6442 = vset.pattern.permute.xlu0 0
  %6443 = vperm.xlu0 %6442, %v6007
  %v6444 = vpop.permute.xlu0 %6443
  %v6446 = vadd.f32 %v6429, %v6415
  %v6447 = vadd.f32 %v6434, %v6418
  %v6448 = vadd.f32 %v6439, %v6421
  %v6449 = vadd.f32 %v6444, %v6424
  %6450 = vxpose.xlu0.b32.start [1/16] %v6141, 128
  %6451 = vxpose.xlu0.b32.cont [2/16] 0.0, 128
  %6452 = vxpose.xlu0.b32.cont [3/16] 0.0, 128
  %6453 = vxpose.xlu0.b32.cont [4/16] 0.0, 128
  %6454 = vxpose.xlu0.b32.cont [5/16] 0.0, 128
  %6455 = vxpose.xlu0.b32.cont [6/16] 0.0, 128
  %6456 = vxpose.xlu0.b32.cont [7/16] 0.0, 128
  %6457 = vxpose.xlu0.b32.cont [8/16] 0.0, 128
  %6458 = vxpose.xlu0.b32.cont [9/16] 0.0, 128
  %6459 = vxpose.xlu0.b32.cont [10/16] 0.0, 128
  %6460 = vxpose.xlu0.b32.cont [11/16] 0.0, 128
  %6461 = vxpose.xlu0.b32.cont [12/16] 0.0, 128
  %6462 = vxpose.xlu0.b32.cont [13/16] 0.0, 128
  %6463 = vxpose.xlu0.b32.cont [14/16] 0.0, 128
  %6464 = vxpose.xlu0.b32.cont [15/16] 0.0, 128
  %6465 = vxpose.xlu0.b32.end [16/16] 0.0, 128
  %v6466 = vpop.trf.xlu0
  %v6467 = vpop.trf.xlu0
  %v6468 = vpop.trf.xlu0
  %v6469 = vpop.trf.xlu0
  %v6470 = vpop.trf.xlu0
  %v6471 = vpop.trf.xlu0
  %v6472 = vpop.trf.xlu0
  %v6473 = vpop.trf.xlu0
  %v6474 = vpop.trf.xlu0
  %v6475 = vpop.trf.xlu0
  %v6476 = vpop.trf.xlu0
  %v6477 = vpop.trf.xlu0
  %v6478 = vpop.trf.xlu0
  %v6479 = vpop.trf.xlu0
  %v6480 = vpop.trf.xlu0
  %v6481 = vpop.trf.xlu0
  %v6483 = vsel %vm336, %v6466, 0
  %v6486 = vsel %vm336, %v6467, 0
  %v6489 = vsel %vm336, %v6468, 0
  %v6492 = vsel %vm336, %v6469, 0
  %6494 = vmatpush.msra.mxu0 0.0
  %6495 = vmatpush.msra.mxu0 0.0
  %6496 = vmatpush.msra.mxu0 0.0
  %6497 = vmatpush.msra.mxu0 0.0
  %6498 = vmatpush.msra.mxu0 0.0
  %6499 = vmatpush.msra.mxu0 0.0
  %6500 = vmatpush.msra.mxu0 0.0
  %6501 = vmatpush.msra.mxu0 0.0
  %6502 = vmatpush.msra.mxu0 0.0
  %6503 = vmatpush.msra.mxu0 0.0
  %6504 = vmatpush.msra.mxu0 0.0
  %6505 = vmatpush.msra.mxu0 0.0
  %6506 = vmatpush.msra.mxu0 0.0
  %6507 = vmatpush.msra.mxu0 0.0
  %6508 = vmatpush.msra.mxu0 0.0
  %6509 = vmatpush.msra.mxu0 %v6153
  %6510 = vmatmul.f32.gmra.mxu0 %v6483
  %v6511 = vpop.f32.mrf.mxu0
  %v6512 = vadd.f32 0.0, %v6511
  %6513 = vmatmul.f32.gmra.mxu0 %v6486
  %v6514 = vpop.f32.mrf.mxu0
  %v6515 = vadd.f32 0.0, %v6514
  %6516 = vmatmul.f32.gmra.mxu0 %v6489
  %v6517 = vpop.f32.mrf.mxu0
  %v6518 = vadd.f32 0.0, %v6517
  %6519 = vmatmul.f32.gmra.mxu0 %v6492
  %v6520 = vpop.f32.mrf.mxu0
  %v6521 = vadd.f32 0.0, %v6520
  %6522 = vdwg.mxu0
  %v6523 = vmul.f32 %v6512, 0.35355338
  %v6524 = vmul.f32 %v6515, 0.35355338
  %v6525 = vmul.f32 %v6518, 0.35355338
  %v6526 = vmul.f32 %v6521, 0.35355338
  %v6527 = vadd.f32 %v6523, %v5956
  %v6528 = vadd.f32 %v6524, %v5957
  %v6529 = vadd.f32 %v6525, %v5958
  %v6530 = vadd.f32 %v6526, %v5959
  %v6531 = vsel %vm214, %v6527, -inf
  %6532 = vmax.xlane.f32.xlu0 %v6531
  %v6533 = vpop.xlane.xlu0 %6532
  %v6534 = vsel %vm214, %v6528, -inf
  %6535 = vmax.xlane.f32.xlu0 %v6534
  %v6536 = vpop.xlane.xlu0 %6535
  %v6537 = vsel %vm214, %v6529, -inf
  %6538 = vmax.xlane.f32.xlu0 %v6537
  %v6539 = vpop.xlane.xlu0 %6538
  %v6540 = vsel %vm214, %v6530, -inf
  %6541 = vmax.xlane.f32.xlu0 %v6540
  %v6542 = vpop.xlane.xlu0 %6541
  %v6543 = vsub.f32 %v6527, %v6533
  %v6544 = vsub.f32 %v6528, %v6536
  %v6545 = vsub.f32 %v6529, %v6539
  %v6546 = vsub.f32 %v6530, %v6542
  %v6547 = vmul.f32 %v6543, 1.442695
  %v6548 = vpow.pop %v6547
  %v6549 = vmul.f32 %v6544, 1.442695
  %v6550 = vpow.pop %v6549
  %v6551 = vmul.f32 %v6545, 1.442695
  %v6552 = vpow.pop %v6551
  %v6553 = vmul.f32 %v6546, 1.442695
  %v6554 = vpow.pop %v6553
  %v6555 = vsel %vm214, %v6548, 0.0
  %6556 = vadd.xlane.f32.xlu0 %v6555
  %v6557 = vpop.xlane.xlu0 %6556
  %v6558 = vsel %vm214, %v6550, 0.0
  %6559 = vadd.xlane.f32.xlu0 %v6558
  %v6560 = vpop.xlane.xlu0 %6559
  %v6561 = vsel %vm214, %v6552, 0.0
  %6562 = vadd.xlane.f32.xlu0 %v6561
  %v6563 = vpop.xlane.xlu0 %6562
  %v6564 = vsel %vm214, %v6554, 0.0
  %6565 = vadd.xlane.f32.xlu0 %v6564
  %v6566 = vpop.xlane.xlu0 %6565
  %v6567 = vrcp.pop %v6557
  %v6568 = vmul.f32 %v6557, %v6567
  %v6569 = vsub.f32 1.0, %v6568
  %v6570 = vmul.f32 %v6567, %v6569
  %v6571 = vadd.f32 %v6567, %v6570
  %vm6572 = vweird.f32 %v6557
  %vm6573 = vweird.f32 %v6567
  %vm6574 = vmor %vm6572, %vm6573
  %v6575 = vsel %vm6574, %v6567, %v6571
  %v6576 = vand.u32 2147483647, %v6557
  %vm6577 = vcmp.eq.f32.partialorder %v6576, 8.507059e+37
  %v6578 = vand.u32 %v6557, 2147483648
  %v6579 = vor.u32 1.1754944e-38, %v6578
  %v6580 = vsel %vm6577, %v6579, %v6575
  %v6581 = vmul.f32 %v6548, %v6580
  %v6582 = vrcp.pop %v6560
  %v6583 = vmul.f32 %v6560, %v6582
  %v6584 = vsub.f32 1.0, %v6583
  %v6585 = vmul.f32 %v6582, %v6584
  %v6586 = vadd.f32 %v6582, %v6585
  %vm6587 = vweird.f32 %v6560
  %vm6588 = vweird.f32 %v6582
  %vm6589 = vmor %vm6587, %vm6588
  %v6590 = vsel %vm6589, %v6582, %v6586
  %v6591 = vand.u32 2147483647, %v6560
  %vm6592 = vcmp.eq.f32.partialorder %v6591, 8.507059e+37
  %v6593 = vand.u32 %v6560, 2147483648
  %v6594 = vor.u32 1.1754944e-38, %v6593
  %v6595 = vsel %vm6592, %v6594, %v6590
  %v6596 = vmul.f32 %v6550, %v6595
  %v6597 = vrcp.pop %v6563
  %v6598 = vmul.f32 %v6563, %v6597
  %v6599 = vsub.f32 1.0, %v6598
  %v6600 = vmul.f32 %v6597, %v6599
  %v6601 = vadd.f32 %v6597, %v6600
  %vm6602 = vweird.f32 %v6563
  %vm6603 = vweird.f32 %v6597
  %vm6604 = vmor %vm6602, %vm6603
  %v6605 = vsel %vm6604, %v6597, %v6601
  %v6606 = vand.u32 2147483647, %v6563
  %vm6607 = vcmp.eq.f32.partialorder %v6606, 8.507059e+37
  %v6608 = vand.u32 %v6563, 2147483648
  %v6609 = vor.u32 1.1754944e-38, %v6608
  %v6610 = vsel %vm6607, %v6609, %v6605
  %v6611 = vmul.f32 %v6552, %v6610
  %v6612 = vrcp.pop %v6566
  %v6613 = vmul.f32 %v6566, %v6612
  %v6614 = vsub.f32 1.0, %v6613
  %v6615 = vmul.f32 %v6612, %v6614
  %v6616 = vadd.f32 %v6612, %v6615
  %vm6617 = vweird.f32 %v6566
  %vm6618 = vweird.f32 %v6612
  %vm6619 = vmor %vm6617, %vm6618
  %v6620 = vsel %vm6619, %v6612, %v6616
  %v6621 = vand.u32 2147483647, %v6566
  %vm6622 = vcmp.eq.f32.partialorder %v6621, 8.507059e+37
  %v6623 = vand.u32 %v6566, 2147483648
  %v6624 = vor.u32 1.1754944e-38, %v6623
  %v6625 = vsel %vm6622, %v6624, %v6620
  %v6626 = vmul.f32 %v6554, %v6625
  %v6628 = vsel %vm214, %v6165, 0
  %v6631 = vsel %vm214, %v6581, 0
  %v6634 = vsel %vm214, %v6596, 0
  %v6637 = vsel %vm214, %v6611, 0
  %v6640 = vsel %vm214, %v6626, 0
  %6642 = vmatpush.xpose.msra.mxu0 0.0
  %6643 = vmatpush.xpose.msra.mxu0 0.0
  %6644 = vmatpush.xpose.msra.mxu0 0.0
  %6645 = vmatpush.xpose.msra.mxu0 0.0
  %6646 = vmatpush.xpose.msra.mxu0 0.0
  %6647 = vmatpush.xpose.msra.mxu0 0.0
  %6648 = vmatpush.xpose.msra.mxu0 0.0
  %6649 = vmatpush.xpose.msra.mxu0 0.0
  %6650 = vmatpush.xpose.msra.mxu0 0.0
  %6651 = vmatpush.xpose.msra.mxu0 0.0
  %6652 = vmatpush.xpose.msra.mxu0 0.0
  %6653 = vmatpush.xpose.msra.mxu0 0.0
  %6654 = vmatpush.xpose.msra.mxu0 %v6640
  %6655 = vmatpush.xpose.msra.mxu0 %v6637
  %6656 = vmatpush.xpose.msra.mxu0 %v6634
  %6657 = vmatpush.xpose.msra.mxu0 %v6631
  %6658 = vmatmul.f32.gmra.mxu0 %v6628
  %v6659 = vpop.f32.mrf.mxu0
  %v6660 = vadd.f32 0.0, %v6659
  %6661 = vdwg.mxu0
  %6662 = vrot.lane.b32.xlu0 %v5972, 120
  %v6663 = vpop.permute.xlu0 %6662
  %6664 = vrot.lane.b32.xlu0 %v5973, 120
  %v6665 = vpop.permute.xlu0 %6664
  %6666 = vrot.lane.b32.xlu0 %v5974, 120
  %v6667 = vpop.permute.xlu0 %6666
  %6668 = vrot.lane.b32.xlu0 %v5975, 120
  %v6669 = vpop.permute.xlu0 %6668
  %v6670 = vsel %vm336, %v6663, 0
  %v6672 = vsel %vm336, %v6665, 0
  %v6674 = vsel %vm336, %v6667, 0
  %v6676 = vsel %vm336, %v6669, 0
  %6678 = vmatpush.msra.mxu0 0.0
  %6679 = vmatpush.msra.mxu0 0.0
  %6680 = vmatpush.msra.mxu0 0.0
  %6681 = vmatpush.msra.mxu0 0.0
  %6682 = vmatpush.msra.mxu0 0.0
  %6683 = vmatpush.msra.mxu0 0.0
  %6684 = vmatpush.msra.mxu0 0.0
  %6685 = vmatpush.msra.mxu0 0.0
  %6686 = vmatpush.msra.mxu0 0.0
  %6687 = vmatpush.msra.mxu0 0.0
  %6688 = vmatpush.msra.mxu0 0.0
  %6689 = vmatpush.msra.mxu0 0.0
  %6690 = vmatpush.msra.mxu0 0.0
  %6691 = vmatpush.msra.mxu0 0.0
  %6692 = vmatpush.msra.mxu0 0.0
  %6693 = vmatpush.msra.mxu0 %v6660
  %6694 = vmatmul.f32.gmra.mxu0 %v6670
  %v6695 = vpop.f32.mrf.mxu0
  %v6696 = vadd.f32 0.0, %v6695
  %6697 = vmatmul.f32.gmra.mxu0 %v6672
  %v6698 = vpop.f32.mrf.mxu0
  %v6699 = vadd.f32 0.0, %v6698
  %6700 = vmatmul.f32.gmra.mxu0 %v6674
  %v6701 = vpop.f32.mrf.mxu0
  %v6702 = vadd.f32 0.0, %v6701
  %6703 = vmatmul.f32.gmra.mxu0 %v6676
  %v6704 = vpop.f32.mrf.mxu0
  %v6705 = vadd.f32 0.0, %v6704
  %6706 = vdwg.mxu0
  %v6707 = vadd.f32 %v6446, %v6696
  %v6708 = vadd.f32 %v6447, %v6699
  %v6709 = vadd.f32 %v6448, %v6702
  %v6710 = vadd.f32 %v6449, %v6705
  %6711 = vxpose.xlu0.b32.start [1/16] %v6144, 128
  %6712 = vxpose.xlu0.b32.cont [2/16] 0.0, 128
  %6713 = vxpose.xlu0.b32.cont [3/16] 0.0, 128
  %6714 = vxpose.xlu0.b32.cont [4/16] 0.0, 128
  %6715 = vxpose.xlu0.b32.cont [5/16] 0.0, 128
  %6716 = vxpose.xlu0.b32.cont [6/16] 0.0, 128
  %6717 = vxpose.xlu0.b32.cont [7/16] 0.0, 128
  %6718 = vxpose.xlu0.b32.cont [8/16] 0.0, 128
  %6719 = vxpose.xlu0.b32.cont [9/16] 0.0, 128
  %6720 = vxpose.xlu0.b32.cont [10/16] 0.0, 128
  %6721 = vxpose.xlu0.b32.cont [11/16] 0.0, 128
  %6722 = vxpose.xlu0.b32.cont [12/16] 0.0, 128
  %6723 = vxpose.xlu0.b32.cont [13/16] 0.0, 128
  %6724 = vxpose.xlu0.b32.cont [14/16] 0.0, 128
  %6725 = vxpose.xlu0.b32.cont [15/16] 0.0, 128
  %6726 = vxpose.xlu0.b32.end [16/16] 0.0, 128
  %v6727 = vpop.trf.xlu0
  %v6728 = vpop.trf.xlu0
  %v6729 = vpop.trf.xlu0
  %v6730 = vpop.trf.xlu0
  %v6731 = vpop.trf.xlu0
  %v6732 = vpop.trf.xlu0
  %v6733 = vpop.trf.xlu0
  %v6734 = vpop.trf.xlu0
  %v6735 = vpop.trf.xlu0
  %v6736 = vpop.trf.xlu0
  %v6737 = vpop.trf.xlu0
  %v6738 = vpop.trf.xlu0
  %v6739 = vpop.trf.xlu0
  %v6740 = vpop.trf.xlu0
  %v6741 = vpop.trf.xlu0
  %v6742 = vpop.trf.xlu0
  %v6744 = vsel %vm336, %v6727, 0
  %v6747 = vsel %vm336, %v6728, 0
  %v6750 = vsel %vm336, %v6729, 0
  %v6753 = vsel %vm336, %v6730, 0
  %6755 = vmatpush.msra.mxu0 0.0
  %6756 = vmatpush.msra.mxu0 0.0
  %6757 = vmatpush.msra.mxu0 0.0
  %6758 = vmatpush.msra.mxu0 0.0
  %6759 = vmatpush.msra.mxu0 0.0
  %6760 = vmatpush.msra.mxu0 0.0
  %6761 = vmatpush.msra.mxu0 0.0
  %6762 = vmatpush.msra.mxu0 0.0
  %6763 = vmatpush.msra.mxu0 0.0
  %6764 = vmatpush.msra.mxu0 0.0
  %6765 = vmatpush.msra.mxu0 0.0
  %6766 = vmatpush.msra.mxu0 0.0
  %6767 = vmatpush.msra.mxu0 0.0
  %6768 = vmatpush.msra.mxu0 0.0
  %6769 = vmatpush.msra.mxu0 0.0
  %6770 = vmatpush.msra.mxu0 %v6156
  %6771 = vmatmul.f32.gmra.mxu0 %v6744
  %v6772 = vpop.f32.mrf.mxu0
  %v6773 = vadd.f32 0.0, %v6772
  %6774 = vmatmul.f32.gmra.mxu0 %v6747
  %v6775 = vpop.f32.mrf.mxu0
  %v6776 = vadd.f32 0.0, %v6775
  %6777 = vmatmul.f32.gmra.mxu0 %v6750
  %v6778 = vpop.f32.mrf.mxu0
  %v6779 = vadd.f32 0.0, %v6778
  %6780 = vmatmul.f32.gmra.mxu0 %v6753
  %v6781 = vpop.f32.mrf.mxu0
  %v6782 = vadd.f32 0.0, %v6781
  %6783 = vdwg.mxu0
  %v6784 = vmul.f32 %v6773, 0.35355338
  %v6785 = vmul.f32 %v6776, 0.35355338
  %v6786 = vmul.f32 %v6779, 0.35355338
  %v6787 = vmul.f32 %v6782, 0.35355338
  %v6788 = vadd.f32 %v6784, %v5956
  %v6789 = vadd.f32 %v6785, %v5957
  %v6790 = vadd.f32 %v6786, %v5958
  %v6791 = vadd.f32 %v6787, %v5959
  %v6792 = vsel %vm214, %v6788, -inf
  %6793 = vmax.xlane.f32.xlu0 %v6792
  %v6794 = vpop.xlane.xlu0 %6793
  %v6795 = vsel %vm214, %v6789, -inf
  %6796 = vmax.xlane.f32.xlu0 %v6795
  %v6797 = vpop.xlane.xlu0 %6796
  %v6798 = vsel %vm214, %v6790, -inf
  %6799 = vmax.xlane.f32.xlu0 %v6798
  %v6800 = vpop.xlane.xlu0 %6799
  %v6801 = vsel %vm214, %v6791, -inf
  %6802 = vmax.xlane.f32.xlu0 %v6801
  %v6803 = vpop.xlane.xlu0 %6802
  %v6804 = vsub.f32 %v6788, %v6794
  %v6805 = vsub.f32 %v6789, %v6797
  %v6806 = vsub.f32 %v6790, %v6800
  %v6807 = vsub.f32 %v6791, %v6803
  %v6808 = vmul.f32 %v6804, 1.442695
  %v6809 = vpow.pop %v6808
  %v6810 = vmul.f32 %v6805, 1.442695
  %v6811 = vpow.pop %v6810
  %v6812 = vmul.f32 %v6806, 1.442695
  %v6813 = vpow.pop %v6812
  %v6814 = vmul.f32 %v6807, 1.442695
  %v6815 = vpow.pop %v6814
  %v6816 = vsel %vm214, %v6809, 0.0
  %6817 = vadd.xlane.f32.xlu0 %v6816
  %v6818 = vpop.xlane.xlu0 %6817
  %v6819 = vsel %vm214, %v6811, 0.0
  %6820 = vadd.xlane.f32.xlu0 %v6819
  %v6821 = vpop.xlane.xlu0 %6820
  %v6822 = vsel %vm214, %v6813, 0.0
  %6823 = vadd.xlane.f32.xlu0 %v6822
  %v6824 = vpop.xlane.xlu0 %6823
  %v6825 = vsel %vm214, %v6815, 0.0
  %6826 = vadd.xlane.f32.xlu0 %v6825
  %v6827 = vpop.xlane.xlu0 %6826
  %v6828 = vrcp.pop %v6818
  %v6829 = vmul.f32 %v6818, %v6828
  %v6830 = vsub.f32 1.0, %v6829
  %v6831 = vmul.f32 %v6828, %v6830
  %v6832 = vadd.f32 %v6828, %v6831
  %vm6833 = vweird.f32 %v6818
  %vm6834 = vweird.f32 %v6828
  %vm6835 = vmor %vm6833, %vm6834
  %v6836 = vsel %vm6835, %v6828, %v6832
  %v6837 = vand.u32 2147483647, %v6818
  %vm6838 = vcmp.eq.f32.partialorder %v6837, 8.507059e+37
  %v6839 = vand.u32 %v6818, 2147483648
  %v6840 = vor.u32 1.1754944e-38, %v6839
  %v6841 = vsel %vm6838, %v6840, %v6836
  %v6842 = vmul.f32 %v6809, %v6841
  %v6843 = vrcp.pop %v6821
  %v6844 = vmul.f32 %v6821, %v6843
  %v6845 = vsub.f32 1.0, %v6844
  %v6846 = vmul.f32 %v6843, %v6845
  %v6847 = vadd.f32 %v6843, %v6846
  %vm6848 = vweird.f32 %v6821
  %vm6849 = vweird.f32 %v6843
  %vm6850 = vmor %vm6848, %vm6849
  %v6851 = vsel %vm6850, %v6843, %v6847
  %v6852 = vand.u32 2147483647, %v6821
  %vm6853 = vcmp.eq.f32.partialorder %v6852, 8.507059e+37
  %v6854 = vand.u32 %v6821, 2147483648
  %v6855 = vor.u32 1.1754944e-38, %v6854
  %v6856 = vsel %vm6853, %v6855, %v6851
  %v6857 = vmul.f32 %v6811, %v6856
  %v6858 = vrcp.pop %v6824
  %v6859 = vmul.f32 %v6824, %v6858
  %v6860 = vsub.f32 1.0, %v6859
  %v6861 = vmul.f32 %v6858, %v6860
  %v6862 = vadd.f32 %v6858, %v6861
  %vm6863 = vweird.f32 %v6824
  %vm6864 = vweird.f32 %v6858
  %vm6865 = vmor %vm6863, %vm6864
  %v6866 = vsel %vm6865, %v6858, %v6862
  %v6867 = vand.u32 2147483647, %v6824
  %vm6868 = vcmp.eq.f32.partialorder %v6867, 8.507059e+37
  %v6869 = vand.u32 %v6824, 2147483648
  %v6870 = vor.u32 1.1754944e-38, %v6869
  %v6871 = vsel %vm6868, %v6870, %v6866
  %v6872 = vmul.f32 %v6813, %v6871
  %v6873 = vrcp.pop %v6827
  %v6874 = vmul.f32 %v6827, %v6873
  %v6875 = vsub.f32 1.0, %v6874
  %v6876 = vmul.f32 %v6873, %v6875
  %v6877 = vadd.f32 %v6873, %v6876
  %vm6878 = vweird.f32 %v6827
  %vm6879 = vweird.f32 %v6873
  %vm6880 = vmor %vm6878, %vm6879
  %v6881 = vsel %vm6880, %v6873, %v6877
  %v6882 = vand.u32 2147483647, %v6827
  %vm6883 = vcmp.eq.f32.partialorder %v6882, 8.507059e+37
  %v6884 = vand.u32 %v6827, 2147483648
  %v6885 = vor.u32 1.1754944e-38, %v6884
  %v6886 = vsel %vm6883, %v6885, %v6881
  %v6887 = vmul.f32 %v6815, %v6886
  %v6889 = vsel %vm214, %v6168, 0
  %v6892 = vsel %vm214, %v6842, 0
  %v6895 = vsel %vm214, %v6857, 0
  %v6898 = vsel %vm214, %v6872, 0
  %v6901 = vsel %vm214, %v6887, 0
  %6903 = vmatpush.xpose.msra.mxu0 0.0
  %6904 = vmatpush.xpose.msra.mxu0 0.0
  %6905 = vmatpush.xpose.msra.mxu0 0.0
  %6906 = vmatpush.xpose.msra.mxu0 0.0
  %6907 = vmatpush.xpose.msra.mxu0 0.0
  %6908 = vmatpush.xpose.msra.mxu0 0.0
  %6909 = vmatpush.xpose.msra.mxu0 0.0
  %6910 = vmatpush.xpose.msra.mxu0 0.0
  %6911 = vmatpush.xpose.msra.mxu0 0.0
  %6912 = vmatpush.xpose.msra.mxu0 0.0
  %6913 = vmatpush.xpose.msra.mxu0 0.0
  %6914 = vmatpush.xpose.msra.mxu0 0.0
  %6915 = vmatpush.xpose.msra.mxu0 %v6901
  %6916 = vmatpush.xpose.msra.mxu0 %v6898
  %6917 = vmatpush.xpose.msra.mxu0 %v6895
  %6918 = vmatpush.xpose.msra.mxu0 %v6892
  %6919 = vmatmul.f32.gmra.mxu0 %v6889
  %v6920 = vpop.f32.mrf.mxu0
  %v6921 = vadd.f32 0.0, %v6920
  %6922 = vdwg.mxu0
  %6923 = vrot.lane.b32.xlu0 %v5972, 112
  %v6924 = vpop.permute.xlu0 %6923
  %6925 = vrot.lane.b32.xlu0 %v5973, 112
  %v6926 = vpop.permute.xlu0 %6925
  %6927 = vrot.lane.b32.xlu0 %v5974, 112
  %v6928 = vpop.permute.xlu0 %6927
  %6929 = vrot.lane.b32.xlu0 %v5975, 112
  %v6930 = vpop.permute.xlu0 %6929
  %v6931 = vsel %vm336, %v6924, 0
  %v6933 = vsel %vm336, %v6926, 0
  %v6935 = vsel %vm336, %v6928, 0
  %v6937 = vsel %vm336, %v6930, 0
  %6939 = vmatpush.msra.mxu0 0.0
  %6940 = vmatpush.msra.mxu0 0.0
  %6941 = vmatpush.msra.mxu0 0.0
  %6942 = vmatpush.msra.mxu0 0.0
  %6943 = vmatpush.msra.mxu0 0.0
  %6944 = vmatpush.msra.mxu0 0.0
  %6945 = vmatpush.msra.mxu0 0.0
  %6946 = vmatpush.msra.mxu0 0.0
  %6947 = vmatpush.msra.mxu0 0.0
  %6948 = vmatpush.msra.mxu0 0.0
  %6949 = vmatpush.msra.mxu0 0.0
  %6950 = vmatpush.msra.mxu0 0.0
  %6951 = vmatpush.msra.mxu0 0.0
  %6952 = vmatpush.msra.mxu0 0.0
  %6953 = vmatpush.msra.mxu0 0.0
  %6954 = vmatpush.msra.mxu0 %v6921
  %6955 = vmatmul.f32.gmra.mxu0 %v6931
  %v6956 = vpop.f32.mrf.mxu0
  %v6957 = vadd.f32 0.0, %v6956
  %6958 = vmatmul.f32.gmra.mxu0 %v6933
  %v6959 = vpop.f32.mrf.mxu0
  %v6960 = vadd.f32 0.0, %v6959
  %6961 = vmatmul.f32.gmra.mxu0 %v6935
  %v6962 = vpop.f32.mrf.mxu0
  %v6963 = vadd.f32 0.0, %v6962
  %6964 = vmatmul.f32.gmra.mxu0 %v6937
  %v6965 = vpop.f32.mrf.mxu0
  %v6966 = vadd.f32 0.0, %v6965
  %6967 = vdwg.mxu0
  %v6968 = vadd.f32 %v6707, %v6957
  %v6969 = vadd.f32 %v6708, %v6960
  %v6970 = vadd.f32 %v6709, %v6963
  %v6971 = vadd.f32 %v6710, %v6966
  %6972 = vxpose.xlu0.b32.start [1/16] %v6147, 128
  %6973 = vxpose.xlu0.b32.cont [2/16] 0.0, 128
  %6974 = vxpose.xlu0.b32.cont [3/16] 0.0, 128
  %6975 = vxpose.xlu0.b32.cont [4/16] 0.0, 128
  %6976 = vxpose.xlu0.b32.cont [5/16] 0.0, 128
  %6977 = vxpose.xlu0.b32.cont [6/16] 0.0, 128
  %6978 = vxpose.xlu0.b32.cont [7/16] 0.0, 128
  %6979 = vxpose.xlu0.b32.cont [8/16] 0.0, 128
  %6980 = vxpose.xlu0.b32.cont [9/16] 0.0, 128
  %6981 = vxpose.xlu0.b32.cont [10/16] 0.0, 128
  %6982 = vxpose.xlu0.b32.cont [11/16] 0.0, 128
  %6983 = vxpose.xlu0.b32.cont [12/16] 0.0, 128
  %6984 = vxpose.xlu0.b32.cont [13/16] 0.0, 128
  %6985 = vxpose.xlu0.b32.cont [14/16] 0.0, 128
  %6986 = vxpose.xlu0.b32.cont [15/16] 0.0, 128
  %6987 = vxpose.xlu0.b32.end [16/16] 0.0, 128
  %v6988 = vpop.trf.xlu0
  %v6989 = vpop.trf.xlu0
  %v6990 = vpop.trf.xlu0
  %v6991 = vpop.trf.xlu0
  %v6992 = vpop.trf.xlu0
  %v6993 = vpop.trf.xlu0
  %v6994 = vpop.trf.xlu0
  %v6995 = vpop.trf.xlu0
  %v6996 = vpop.trf.xlu0
  %v6997 = vpop.trf.xlu0
  %v6998 = vpop.trf.xlu0
  %v6999 = vpop.trf.xlu0
  %v7000 = vpop.trf.xlu0
  %v7001 = vpop.trf.xlu0
  %v7002 = vpop.trf.xlu0
  %v7003 = vpop.trf.xlu0
  %v7005 = vsel %vm336, %v6988, 0
  %v7008 = vsel %vm336, %v6989, 0
  %v7011 = vsel %vm336, %v6990, 0
  %v7014 = vsel %vm336, %v6991, 0
  %7016 = vmatpush.msra.mxu0 0.0
  %7017 = vmatpush.msra.mxu0 0.0
  %7018 = vmatpush.msra.mxu0 0.0
  %7019 = vmatpush.msra.mxu0 0.0
  %7020 = vmatpush.msra.mxu0 0.0
  %7021 = vmatpush.msra.mxu0 0.0
  %7022 = vmatpush.msra.mxu0 0.0
  %7023 = vmatpush.msra.mxu0 0.0
  %7024 = vmatpush.msra.mxu0 0.0
  %7025 = vmatpush.msra.mxu0 0.0
  %7026 = vmatpush.msra.mxu0 0.0
  %7027 = vmatpush.msra.mxu0 0.0
  %7028 = vmatpush.msra.mxu0 0.0
  %7029 = vmatpush.msra.mxu0 0.0
  %7030 = vmatpush.msra.mxu0 0.0
  %7031 = vmatpush.msra.mxu0 %v6159
  %7032 = vmatmul.f32.gmra.mxu0 %v7005
  %v7033 = vpop.f32.mrf.mxu0
  %v7034 = vadd.f32 0.0, %v7033
  %7035 = vmatmul.f32.gmra.mxu0 %v7008
  %v7036 = vpop.f32.mrf.mxu0
  %v7037 = vadd.f32 0.0, %v7036
  %7038 = vmatmul.f32.gmra.mxu0 %v7011
  %v7039 = vpop.f32.mrf.mxu0
  %v7040 = vadd.f32 0.0, %v7039
  %7041 = vmatmul.f32.gmra.mxu0 %v7014
  %v7042 = vpop.f32.mrf.mxu0
  %v7043 = vadd.f32 0.0, %v7042
  %7044 = vdwg.mxu0
  %v7045 = vmul.f32 %v7034, 0.35355338
  %v7046 = vmul.f32 %v7037, 0.35355338
  %v7047 = vmul.f32 %v7040, 0.35355338
  %v7048 = vmul.f32 %v7043, 0.35355338
  %v7049 = vadd.f32 %v7045, %v5956
  %v7050 = vadd.f32 %v7046, %v5957
  %v7051 = vadd.f32 %v7047, %v5958
  %v7052 = vadd.f32 %v7048, %v5959
  %v7053 = vsel %vm214, %v7049, -inf
  %7054 = vmax.xlane.f32.xlu0 %v7053
  %v7055 = vpop.xlane.xlu0 %7054
  %v7056 = vsel %vm214, %v7050, -inf
  %7057 = vmax.xlane.f32.xlu0 %v7056
  %v7058 = vpop.xlane.xlu0 %7057
  %v7059 = vsel %vm214, %v7051, -inf
  %7060 = vmax.xlane.f32.xlu0 %v7059
  %v7061 = vpop.xlane.xlu0 %7060
  %v7062 = vsel %vm214, %v7052, -inf
  %7063 = vmax.xlane.f32.xlu0 %v7062
  %v7064 = vpop.xlane.xlu0 %7063
  %v7065 = vsub.f32 %v7049, %v7055
  %v7066 = vsub.f32 %v7050, %v7058
  %v7067 = vsub.f32 %v7051, %v7061
  %v7068 = vsub.f32 %v7052, %v7064
  %v7069 = vmul.f32 %v7065, 1.442695
  %v7070 = vpow.pop %v7069
  %v7071 = vmul.f32 %v7066, 1.442695
  %v7072 = vpow.pop %v7071
  %v7073 = vmul.f32 %v7067, 1.442695
  %v7074 = vpow.pop %v7073
  %v7075 = vmul.f32 %v7068, 1.442695
  %v7076 = vpow.pop %v7075
  %v7077 = vsel %vm214, %v7070, 0.0
  %7078 = vadd.xlane.f32.xlu0 %v7077
  %v7079 = vpop.xlane.xlu0 %7078
  %v7080 = vsel %vm214, %v7072, 0.0
  %7081 = vadd.xlane.f32.xlu0 %v7080
  %v7082 = vpop.xlane.xlu0 %7081
  %v7083 = vsel %vm214, %v7074, 0.0
  %7084 = vadd.xlane.f32.xlu0 %v7083
  %v7085 = vpop.xlane.xlu0 %7084
  %v7086 = vsel %vm214, %v7076, 0.0
  %7087 = vadd.xlane.f32.xlu0 %v7086
  %v7088 = vpop.xlane.xlu0 %7087
  %v7089 = vrcp.pop %v7079
  %v7090 = vmul.f32 %v7079, %v7089
  %v7091 = vsub.f32 1.0, %v7090
  %v7092 = vmul.f32 %v7089, %v7091
  %v7093 = vadd.f32 %v7089, %v7092
  %vm7094 = vweird.f32 %v7079
  %vm7095 = vweird.f32 %v7089
  %vm7096 = vmor %vm7094, %vm7095
  %v7097 = vsel %vm7096, %v7089, %v7093
  %v7098 = vand.u32 2147483647, %v7079
  %vm7099 = vcmp.eq.f32.partialorder %v7098, 8.507059e+37
  %v7100 = vand.u32 %v7079, 2147483648
  %v7101 = vor.u32 1.1754944e-38, %v7100
  %v7102 = vsel %vm7099, %v7101, %v7097
  %v7103 = vmul.f32 %v7070, %v7102
  %v7104 = vrcp.pop %v7082
  %v7105 = vmul.f32 %v7082, %v7104
  %v7106 = vsub.f32 1.0, %v7105
  %v7107 = vmul.f32 %v7104, %v7106
  %v7108 = vadd.f32 %v7104, %v7107
  %vm7109 = vweird.f32 %v7082
  %vm7110 = vweird.f32 %v7104
  %vm7111 = vmor %vm7109, %vm7110
  %v7112 = vsel %vm7111, %v7104, %v7108
  %v7113 = vand.u32 2147483647, %v7082
  %vm7114 = vcmp.eq.f32.partialorder %v7113, 8.507059e+37
  %v7115 = vand.u32 %v7082, 2147483648
  %v7116 = vor.u32 1.1754944e-38, %v7115
  %v7117 = vsel %vm7114, %v7116, %v7112
  %v7118 = vmul.f32 %v7072, %v7117
  %v7119 = vrcp.pop %v7085
  %v7120 = vmul.f32 %v7085, %v7119
  %v7121 = vsub.f32 1.0, %v7120
  %v7122 = vmul.f32 %v7119, %v7121
  %v7123 = vadd.f32 %v7119, %v7122
  %vm7124 = vweird.f32 %v7085
  %vm7125 = vweird.f32 %v7119
  %vm7126 = vmor %vm7124, %vm7125
  %v7127 = vsel %vm7126, %v7119, %v7123
  %v7128 = vand.u32 2147483647, %v7085
  %vm7129 = vcmp.eq.f32.partialorder %v7128, 8.507059e+37
  %v7130 = vand.u32 %v7085, 2147483648
  %v7131 = vor.u32 1.1754944e-38, %v7130
  %v7132 = vsel %vm7129, %v7131, %v7127
  %v7133 = vmul.f32 %v7074, %v7132
  %v7134 = vrcp.pop %v7088
  %v7135 = vmul.f32 %v7088, %v7134
  %v7136 = vsub.f32 1.0, %v7135
  %v7137 = vmul.f32 %v7134, %v7136
  %v7138 = vadd.f32 %v7134, %v7137
  %vm7139 = vweird.f32 %v7088
  %vm7140 = vweird.f32 %v7134
  %vm7141 = vmor %vm7139, %vm7140
  %v7142 = vsel %vm7141, %v7134, %v7138
  %v7143 = vand.u32 2147483647, %v7088
  %vm7144 = vcmp.eq.f32.partialorder %v7143, 8.507059e+37
  %v7145 = vand.u32 %v7088, 2147483648
  %v7146 = vor.u32 1.1754944e-38, %v7145
  %v7147 = vsel %vm7144, %v7146, %v7142
  %v7148 = vmul.f32 %v7076, %v7147
  %v7150 = vsel %vm214, %v6171, 0
  %v7153 = vsel %vm214, %v7103, 0
  %v7156 = vsel %vm214, %v7118, 0
  %v7159 = vsel %vm214, %v7133, 0
  %v7162 = vsel %vm214, %v7148, 0
  %7164 = vmatpush.xpose.msra.mxu0 0.0
  %7165 = vmatpush.xpose.msra.mxu0 0.0
  %7166 = vmatpush.xpose.msra.mxu0 0.0
  %7167 = vmatpush.xpose.msra.mxu0 0.0
  %7168 = vmatpush.xpose.msra.mxu0 0.0
  %7169 = vmatpush.xpose.msra.mxu0 0.0
  %7170 = vmatpush.xpose.msra.mxu0 0.0
  %7171 = vmatpush.xpose.msra.mxu0 0.0
  %7172 = vmatpush.xpose.msra.mxu0 0.0
  %7173 = vmatpush.xpose.msra.mxu0 0.0
  %7174 = vmatpush.xpose.msra.mxu0 0.0
  %7175 = vmatpush.xpose.msra.mxu0 0.0
  %7176 = vmatpush.xpose.msra.mxu0 %v7162
  %7177 = vmatpush.xpose.msra.mxu0 %v7159
  %7178 = vmatpush.xpose.msra.mxu0 %v7156
  %7179 = vmatpush.xpose.msra.mxu0 %v7153
  %7180 = vmatmul.f32.gmra.mxu0 %v7150
  %v7181 = vpop.f32.mrf.mxu0
  %v7182 = vadd.f32 0.0, %v7181
  %7183 = vdwg.mxu0
  %7184 = vrot.lane.b32.xlu0 %v5972, 104
  %v7185 = vpop.permute.xlu0 %7184
  %7186 = vrot.lane.b32.xlu0 %v5973, 104
  %v7187 = vpop.permute.xlu0 %7186
  %7188 = vrot.lane.b32.xlu0 %v5974, 104
  %v7189 = vpop.permute.xlu0 %7188
  %7190 = vrot.lane.b32.xlu0 %v5975, 104
  %v7191 = vpop.permute.xlu0 %7190
  %v7192 = vsel %vm336, %v7185, 0
  %v7194 = vsel %vm336, %v7187, 0
  %v7196 = vsel %vm336, %v7189, 0
  %v7198 = vsel %vm336, %v7191, 0
  %7200 = vmatpush.msra.mxu0 0.0
  %7201 = vmatpush.msra.mxu0 0.0
  %7202 = vmatpush.msra.mxu0 0.0
  %7203 = vmatpush.msra.mxu0 0.0
  %7204 = vmatpush.msra.mxu0 0.0
  %7205 = vmatpush.msra.mxu0 0.0
  %7206 = vmatpush.msra.mxu0 0.0
  %7207 = vmatpush.msra.mxu0 0.0
  %7208 = vmatpush.msra.mxu0 0.0
  %7209 = vmatpush.msra.mxu0 0.0
  %7210 = vmatpush.msra.mxu0 0.0
  %7211 = vmatpush.msra.mxu0 0.0
  %7212 = vmatpush.msra.mxu0 0.0
  %7213 = vmatpush.msra.mxu0 0.0
  %7214 = vmatpush.msra.mxu0 0.0
  %7215 = vmatpush.msra.mxu0 %v7182
  %7216 = vmatmul.f32.gmra.mxu0 %v7192
  %v7217 = vpop.f32.mrf.mxu0
  %v7218 = vadd.f32 0.0, %v7217
  %7219 = vmatmul.f32.gmra.mxu0 %v7194
  %v7220 = vpop.f32.mrf.mxu0
  %v7221 = vadd.f32 0.0, %v7220
  %7222 = vmatmul.f32.gmra.mxu0 %v7196
  %v7223 = vpop.f32.mrf.mxu0
  %v7224 = vadd.f32 0.0, %v7223
  %7225 = vmatmul.f32.gmra.mxu0 %v7198
  %v7226 = vpop.f32.mrf.mxu0
  %v7227 = vadd.f32 0.0, %v7226
  %7228 = vdwg.mxu0
  %v7229 = vadd.f32 %v6968, %v7218
  %v7230 = vadd.f32 %v6969, %v7221
  %v7231 = vadd.f32 %v6970, %v7224
  %v7232 = vadd.f32 %v6971, %v7227
  %v7234 = vsel %vm214, %v5984, 0
  %v7237 = vsel %vm214, %v5985, 0
  %v7240 = vsel %vm214, %v5986, 0
  %v7243 = vsel %vm214, %v5987, 0
  %v7246 = vsel %vm214, %v5988, 0
  %v7249 = vsel %vm214, %v5989, 0
  %v7252 = vsel %vm214, %v5990, 0
  %v7255 = vsel %vm214, %v5991, 0
  %7257 = vmatpush.msra.mxu0 0.0
  %7258 = vmatpush.msra.mxu0 0.0
  %7259 = vmatpush.msra.mxu0 0.0
  %7260 = vmatpush.msra.mxu0 0.0
  %7261 = vmatpush.msra.mxu0 0.0
  %7262 = vmatpush.msra.mxu0 0.0
  %7263 = vmatpush.msra.mxu0 0.0
  %7264 = vmatpush.msra.mxu0 0.0
  %7265 = vmatpush.msra.mxu0 0.0
  %7266 = vmatpush.msra.mxu0 0.0
  %7267 = vmatpush.msra.mxu0 0.0
  %7268 = vmatpush.msra.mxu0 0.0
  %7269 = vmatpush.msra.mxu0 %v7232
  %7270 = vmatpush.msra.mxu0 %v7231
  %7271 = vmatpush.msra.mxu0 %v7230
  %7272 = vmatpush.msra.mxu0 %v7229
  %7273 = vmatmul.f32.gmra.mxu0 %v7234
  %v7274 = vpop.f32.mrf.mxu0
  %v7275 = vadd.f32 0.0, %v7274
  %7276 = vmatmul.f32.gmra.mxu0 %v7237
  %v7277 = vpop.f32.mrf.mxu0
  %v7278 = vadd.f32 0.0, %v7277
  %7279 = vmatmul.f32.gmra.mxu0 %v7240
  %v7280 = vpop.f32.mrf.mxu0
  %v7281 = vadd.f32 0.0, %v7280
  %7282 = vmatmul.f32.gmra.mxu0 %v7243
  %v7283 = vpop.f32.mrf.mxu0
  %v7284 = vadd.f32 0.0, %v7283
  %7285 = vmatmul.f32.gmra.mxu0 %v7246
  %v7286 = vpop.f32.mrf.mxu0
  %v7287 = vadd.f32 0.0, %v7286
  %7288 = vmatmul.f32.gmra.mxu0 %v7249
  %v7289 = vpop.f32.mrf.mxu0
  %v7290 = vadd.f32 0.0, %v7289
  %7291 = vmatmul.f32.gmra.mxu0 %v7252
  %v7292 = vpop.f32.mrf.mxu0
  %v7293 = vadd.f32 0.0, %v7292
  %7294 = vmatmul.f32.gmra.mxu0 %v7255
  %v7295 = vpop.f32.mrf.mxu0
  %v7296 = vadd.f32 0.0, %v7295
  %7297 = vdwg.mxu0
  %v7299 = vsel %vm214, %v5976, 0
  %v7302 = vsel %vm214, %v5977, 0
  %v7305 = vsel %vm214, %v5978, 0
  %v7308 = vsel %vm214, %v5979, 0
  %v7311 = vsel %vm214, %v5980, 0
  %v7314 = vsel %vm214, %v5981, 0
  %v7317 = vsel %vm214, %v5982, 0
  %v7320 = vsel %vm214, %v5983, 0
  %7322 = vmatpush.msra.mxu0 0.0
  %7323 = vmatpush.msra.mxu0 0.0
  %7324 = vmatpush.msra.mxu0 0.0
  %7325 = vmatpush.msra.mxu0 0.0
  %7326 = vmatpush.msra.mxu0 0.0
  %7327 = vmatpush.msra.mxu0 0.0
  %7328 = vmatpush.msra.mxu0 0.0
  %7329 = vmatpush.msra.mxu0 0.0
  %7330 = vmatpush.msra.mxu0 0.0
  %7331 = vmatpush.msra.mxu0 0.0
  %7332 = vmatpush.msra.mxu0 0.0
  %7333 = vmatpush.msra.mxu0 0.0
  %7334 = vmatpush.msra.mxu0 %v4709
  %7335 = vmatpush.msra.mxu0 %v4708
  %7336 = vmatpush.msra.mxu0 %v4707
  %7337 = vmatpush.msra.mxu0 %v4706
  %7338 = vmatmul.f32.gmra.mxu0 %v7299
  %v7339 = vpop.f32.mrf.mxu0
  %v7340 = vadd.f32 %v7275, %v7339
  %7341 = vmatmul.f32.gmra.mxu0 %v7302
  %v7342 = vpop.f32.mrf.mxu0
  %v7343 = vadd.f32 %v7278, %v7342
  %7344 = vmatmul.f32.gmra.mxu0 %v7305
  %v7345 = vpop.f32.mrf.mxu0
  %v7346 = vadd.f32 %v7281, %v7345
  %7347 = vmatmul.f32.gmra.mxu0 %v7308
  %v7348 = vpop.f32.mrf.mxu0
  %v7349 = vadd.f32 %v7284, %v7348
  %7350 = vmatmul.f32.gmra.mxu0 %v7311
  %v7351 = vpop.f32.mrf.mxu0
  %v7352 = vadd.f32 %v7287, %v7351
  %7353 = vmatmul.f32.gmra.mxu0 %v7314
  %v7354 = vpop.f32.mrf.mxu0
  %v7355 = vadd.f32 %v7290, %v7354
  %7356 = vmatmul.f32.gmra.mxu0 %v7317
  %v7357 = vpop.f32.mrf.mxu0
  %v7358 = vadd.f32 %v7293, %v7357
  %7359 = vmatmul.f32.gmra.mxu0 %v7320
  %v7360 = vpop.f32.mrf.mxu0
  %v7361 = vadd.f32 %v7296, %v7360
  %7362 = vdwg.mxu0
  %7364 = vset.pattern.permute.xlu0 0
  %7365 = vperm.xlu0 %7364, %v6008
  %v7366 = vpop.permute.xlu0 %7365
  %7369 = vset.pattern.permute.xlu0 0
  %7370 = vperm.xlu0 %7369, %v6009
  %v7371 = vpop.permute.xlu0 %7370
  %7374 = vset.pattern.permute.xlu0 0
  %7375 = vperm.xlu0 %7374, %v6010
  %v7376 = vpop.permute.xlu0 %7375
  %7379 = vset.pattern.permute.xlu0 0
  %7380 = vperm.xlu0 %7379, %v6011
  %v7381 = vpop.permute.xlu0 %7380
  %7384 = vset.pattern.permute.xlu0 0
  %7385 = vperm.xlu0 %7384, %v6012
  %v7386 = vpop.permute.xlu0 %7385
  %7389 = vset.pattern.permute.xlu0 0
  %7390 = vperm.xlu0 %7389, %v6013
  %v7391 = vpop.permute.xlu0 %7390
  %7394 = vset.pattern.permute.xlu0 0
  %7395 = vperm.xlu0 %7394, %v6014
  %v7396 = vpop.permute.xlu0 %7395
  %7399 = vset.pattern.permute.xlu0 0
  %7400 = vperm.xlu0 %7399, %v6015
  %v7401 = vpop.permute.xlu0 %7400
  %v7403 = vadd.f32 %v7340, %v7366
  %v7404 = vadd.f32 %v7343, %v7371
  %v7405 = vadd.f32 %v7346, %v7376
  %v7406 = vadd.f32 %v7349, %v7381
  %v7407 = vadd.f32 %v7352, %v7386
  %v7408 = vadd.f32 %v7355, %v7391
  %v7409 = vadd.f32 %v7358, %v7396
  %v7410 = vadd.f32 %v7361, %v7401
  %v7411 = vmax.f32 %v7403, 0.0
  %v7412 = vmax.f32 %v7404, 0.0
  %v7413 = vmax.f32 %v7405, 0.0
  %v7414 = vmax.f32 %v7406, 0.0
  %v7415 = vmax.f32 %v7407, 0.0
  %v7416 = vmax.f32 %v7408, 0.0
  %v7417 = vmax.f32 %v7409, 0.0
  %v7418 = vmax.f32 %v7410, 0.0
  %7420 = vset.pattern.permute.xlu0 0
  %7421 = vperm.xlu0 %7420, %v6016
  %v7422 = vpop.permute.xlu0 %7421
  %7425 = vset.pattern.permute.xlu0 0
  %7426 = vperm.xlu0 %7425, %v6017
  %v7427 = vpop.permute.xlu0 %7426
  %7430 = vset.pattern.permute.xlu0 0
  %7431 = vperm.xlu0 %7430, %v6018
  %v7432 = vpop.permute.xlu0 %7431
  %7435 = vset.pattern.permute.xlu0 0
  %7436 = vperm.xlu0 %7435, %v6019
  %v7437 = vpop.permute.xlu0 %7436
  %v7440 = vsel %vm1292, %v6020, 0
  %v7443 = vsel %vm1292, %v6021, 0
  %v7446 = vsel %vm1292, %v6022, 0
  %v7449 = vsel %vm1292, %v6023, 0
  %7451 = vmatpush.msra.mxu0 0.0
  %7452 = vmatpush.msra.mxu0 0.0
  %7453 = vmatpush.msra.mxu0 0.0
  %7454 = vmatpush.msra.mxu0 0.0
  %7455 = vmatpush.msra.mxu0 0.0
  %7456 = vmatpush.msra.mxu0 0.0
  %7457 = vmatpush.msra.mxu0 0.0
  %7458 = vmatpush.msra.mxu0 0.0
  %7459 = vmatpush.msra.mxu0 %v7418
  %7460 = vmatpush.msra.mxu0 %v7417
  %7461 = vmatpush.msra.mxu0 %v7416
  %7462 = vmatpush.msra.mxu0 %v7415
  %7463 = vmatpush.msra.mxu0 %v7414
  %7464 = vmatpush.msra.mxu0 %v7413
  %7465 = vmatpush.msra.mxu0 %v7412
  %7466 = vmatpush.msra.mxu0 %v7411
  %7467 = vmatmul.f32.gmra.mxu0 %v7440
  %v7468 = vpop.f32.mrf.mxu0
  %v7469 = vadd.f32 %v7422, %v7468
  %7470 = vmatmul.f32.gmra.mxu0 %v7443
  %v7471 = vpop.f32.mrf.mxu0
  %v7472 = vadd.f32 %v7427, %v7471
  %7473 = vmatmul.f32.gmra.mxu0 %v7446
  %v7474 = vpop.f32.mrf.mxu0
  %v7475 = vadd.f32 %v7432, %v7474
  %7476 = vmatmul.f32.gmra.mxu0 %v7449
  %v7477 = vpop.f32.mrf.mxu0
  %v7478 = vadd.f32 %v7437, %v7477
  %7479 = vdwg.mxu0
  %v7480 = vadd.f32 %v4706, %v7469
  %v7481 = vadd.f32 %v4707, %v7472
  %v7482 = vadd.f32 %v4708, %v7475
  %v7483 = vadd.f32 %v4709, %v7478
  %v7484 = vld [vmem:[%s23] sm:$0xff]
  %v7485 = vld [vmem:[%s23 + $0x8] sm:$0xff]
  %v7486 = vld [vmem:[%s23 + $0x10] sm:$0xff]
  %v7487 = vld [vmem:[%s23 + $0x18] sm:$0xff]
  %v7488 = vld [vmem:[%s23 + $0x20] sm:$0xff]
  %v7489 = vld [vmem:[%s23 + $0x28] sm:$0xff]
  %v7490 = vld [vmem:[%s23 + $0x30] sm:$0xff]
  %v7491 = vld [vmem:[%s23 + $0x38] sm:$0xff]
  %v7492 = vld [vmem:[%s23 + $0x40] sm:$0xff]
  %v7493 = vld [vmem:[%s23 + $0x48] sm:$0xff]
  %v7494 = vld [vmem:[%s23 + $0x50] sm:$0xff]
  %v7495 = vld [vmem:[%s23 + $0x58] sm:$0xff]
  %v7496 = vld [vmem:[%s23 + $0x60] sm:$0xff]
  %v7497 = vld [vmem:[%s24] sm:$0xff]
  %v7498 = vld [vmem:[%s24 + $0x8] sm:$0xff]
  %v7499 = vld [vmem:[%s24 + $0x10] sm:$0xff]
  %v7500 = vld [vmem:[%s24 + $0x18] sm:$0xff]
  %v7501 = vld [vmem:[%s24 + $0x20] sm:$0xff]
  %v7502 = vld [vmem:[%s3] sm:$0xff]
  %v7503 = vld [vmem:[%s3 + $0x8] sm:$0xff]
  %v7504 = vld [vmem:[%s3 + $0x10] sm:$0xff]
  %v7505 = vld [vmem:[%s3 + $0x18] sm:$0xff]
  %v7506 = vld [vmem:[%s3 + $0x20] sm:$0xff]
  %v7507 = vld [vmem:[%s3 + $0x28] sm:$0xff]
  %v7508 = vld [vmem:[%s3 + $0x30] sm:$0xff]
  %v7509 = vld [vmem:[%s3 + $0x38] sm:$0xff]
  %v7510 = vld [vmem:[%s10] sm:$0xff]
  %v7511 = vld [vmem:[%s10 + $0x8] sm:$0xff]
  %v7512 = vld [vmem:[%s10 + $0x10] sm:$0xff]
  %v7513 = vld [vmem:[%s10 + $0x18] sm:$0xff]
  %v7514 = vld [vmem:[%s10 + $0x20] sm:$0xff]
  %v7515 = vld [vmem:[%s10 + $0x28] sm:$0xff]
  %v7516 = vld [vmem:[%s10 + $0x30] sm:$0xff]
  %v7517 = vld [vmem:[%s10 + $0x38] sm:$0xff]
  %v7518 = vld [vmem:[%s11] sm:$0xff]
  %v7519 = vld [vmem:[%s11 + $0x8] sm:$0xff]
  %v7520 = vld [vmem:[%s11 + $0x10] sm:$0xff]
  %v7521 = vld [vmem:[%s11 + $0x18] sm:$0xff]
  %v7523 = vsel %vm214, %v7484, 0
  %v7526 = vsel %vm214, %v7485, 0
  %v7529 = vsel %vm214, %v7486, 0
  %v7532 = vsel %vm214, %v7487, 0
  %7534 = vmatpush.msra.mxu0 0.0
  %7535 = vmatpush.msra.mxu0 0.0
  %7536 = vmatpush.msra.mxu0 0.0
  %7537 = vmatpush.msra.mxu0 0.0
  %7538 = vmatpush.msra.mxu0 0.0
  %7539 = vmatpush.msra.mxu0 0.0
  %7540 = vmatpush.msra.mxu0 0.0
  %7541 = vmatpush.msra.mxu0 0.0
  %7542 = vmatpush.msra.mxu0 0.0
  %7543 = vmatpush.msra.mxu0 0.0
  %7544 = vmatpush.msra.mxu0 0.0
  %7545 = vmatpush.msra.mxu0 0.0
  %7546 = vmatpush.msra.mxu0 %v7483
  %7547 = vmatpush.msra.mxu0 %v7482
  %7548 = vmatpush.msra.mxu0 %v7481
  %7549 = vmatpush.msra.mxu0 %v7480
  %7550 = vmatmul.f32.gmra.mxu0 %v7523
  %v7551 = vpop.f32.mrf.mxu0
  %v7552 = vadd.f32 0.0, %v7551
  %7553 = vmatmul.f32.gmra.mxu0 %v7526
  %v7554 = vpop.f32.mrf.mxu0
  %v7555 = vadd.f32 0.0, %v7554
  %7556 = vmatmul.f32.gmra.mxu0 %v7529
  %v7557 = vpop.f32.mrf.mxu0
  %v7558 = vadd.f32 0.0, %v7557
  %7559 = vmatmul.f32.gmra.mxu0 %v7532
  %v7560 = vpop.f32.mrf.mxu0
  %v7561 = vadd.f32 0.0, %v7560
  %7562 = vdwg.mxu0
  %v7564 = vsel %vm214, %v7488, 0
  %v7567 = vsel %vm214, %v7489, 0
  %v7570 = vsel %vm214, %v7490, 0
  %v7573 = vsel %vm214, %v7491, 0
  %7575 = vmatpush.msra.mxu0 0.0
  %7576 = vmatpush.msra.mxu0 0.0
  %7577 = vmatpush.msra.mxu0 0.0
  %7578 = vmatpush.msra.mxu0 0.0
  %7579 = vmatpush.msra.mxu0 0.0
  %7580 = vmatpush.msra.mxu0 0.0
  %7581 = vmatpush.msra.mxu0 0.0
  %7582 = vmatpush.msra.mxu0 0.0
  %7583 = vmatpush.msra.mxu0 0.0
  %7584 = vmatpush.msra.mxu0 0.0
  %7585 = vmatpush.msra.mxu0 0.0
  %7586 = vmatpush.msra.mxu0 0.0
  %7587 = vmatpush.msra.mxu0 %v5955
  %7588 = vmatpush.msra.mxu0 %v5954
  %7589 = vmatpush.msra.mxu0 %v5953
  %7590 = vmatpush.msra.mxu0 %v5952
  %7591 = vmatmul.f32.gmra.mxu0 %v7564
  %v7592 = vpop.f32.mrf.mxu0
  %v7593 = vadd.f32 0.0, %v7592
  %7594 = vmatmul.f32.gmra.mxu0 %v7567
  %v7595 = vpop.f32.mrf.mxu0
  %v7596 = vadd.f32 0.0, %v7595
  %7597 = vmatmul.f32.gmra.mxu0 %v7570
  %v7598 = vpop.f32.mrf.mxu0
  %v7599 = vadd.f32 0.0, %v7598
  %7600 = vmatmul.f32.gmra.mxu0 %v7573
  %v7601 = vpop.f32.mrf.mxu0
  %v7602 = vadd.f32 0.0, %v7601
  %7603 = vdwg.mxu0
  %v7605 = vsel %vm214, %v7552, 0
  %v7608 = vsel %vm214, %v7555, 0
  %v7611 = vsel %vm214, %v7558, 0
  %v7614 = vsel %vm214, %v7561, 0
  %7616 = vmatpush.msra.mxu0 0.0
  %7617 = vmatpush.msra.mxu0 0.0
  %7618 = vmatpush.msra.mxu0 0.0
  %7619 = vmatpush.msra.mxu0 0.0
  %7620 = vmatpush.msra.mxu0 0.0
  %7621 = vmatpush.msra.mxu0 0.0
  %7622 = vmatpush.msra.mxu0 0.0
  %7623 = vmatpush.msra.mxu0 0.0
  %7624 = vmatpush.msra.mxu0 0.0
  %7625 = vmatpush.msra.mxu0 0.0
  %7626 = vmatpush.msra.mxu0 0.0
  %7627 = vmatpush.msra.mxu0 0.0
  %7628 = vmatpush.msra.mxu0 %v7516
  %7629 = vmatpush.msra.mxu0 %v7514
  %7630 = vmatpush.msra.mxu0 %v7512
  %7631 = vmatpush.msra.mxu0 %v7510
  %7632 = vmatmul.f32.gmra.mxu0 %v7605
  %v7633 = vpop.f32.mrf.mxu0
  %v7634 = vadd.f32 0.0, %v7633
  %7635 = vmatmul.f32.gmra.mxu0 %v7608
  %v7636 = vpop.f32.mrf.mxu0
  %v7637 = vadd.f32 0.0, %v7636
  %7638 = vmatmul.f32.gmra.mxu0 %v7611
  %v7639 = vpop.f32.mrf.mxu0
  %v7640 = vadd.f32 0.0, %v7639
  %7641 = vmatmul.f32.gmra.mxu0 %v7614
  %v7642 = vpop.f32.mrf.mxu0
  %v7643 = vadd.f32 0.0, %v7642
  %7644 = vdwg.mxu0
  %7645 = vmatpush.msra.mxu0 0.0
  %7646 = vmatpush.msra.mxu0 0.0
  %7647 = vmatpush.msra.mxu0 0.0
  %7648 = vmatpush.msra.mxu0 0.0
  %7649 = vmatpush.msra.mxu0 0.0
  %7650 = vmatpush.msra.mxu0 0.0
  %7651 = vmatpush.msra.mxu0 0.0
  %7652 = vmatpush.msra.mxu0 0.0
  %7653 = vmatpush.msra.mxu0 0.0
  %7654 = vmatpush.msra.mxu0 0.0
  %7655 = vmatpush.msra.mxu0 0.0
  %7656 = vmatpush.msra.mxu0 0.0
  %7657 = vmatpush.msra.mxu0 %v7517
  %7658 = vmatpush.msra.mxu0 %v7515
  %7659 = vmatpush.msra.mxu0 %v7513
  %7660 = vmatpush.msra.mxu0 %v7511
  %7661 = vmatmul.f32.gmra.mxu0 %v7605
  %v7662 = vpop.f32.mrf.mxu0
  %v7663 = vadd.f32 0.0, %v7662
  %7664 = vmatmul.f32.gmra.mxu0 %v7608
  %v7665 = vpop.f32.mrf.mxu0
  %v7666 = vadd.f32 0.0, %v7665
  %7667 = vmatmul.f32.gmra.mxu0 %v7611
  %v7668 = vpop.f32.mrf.mxu0
  %v7669 = vadd.f32 0.0, %v7668
  %7670 = vmatmul.f32.gmra.mxu0 %v7614
  %v7671 = vpop.f32.mrf.mxu0
  %v7672 = vadd.f32 0.0, %v7671
  %7673 = vdwg.mxu0
  %v7675 = vsel %vm214, %v7492, 0
  %v7678 = vsel %vm214, %v7493, 0
  %v7681 = vsel %vm214, %v7494, 0
  %v7684 = vsel %vm214, %v7495, 0
  %7686 = vmatpush.msra.mxu0 0.0
  %7687 = vmatpush.msra.mxu0 0.0
  %7688 = vmatpush.msra.mxu0 0.0
  %7689 = vmatpush.msra.mxu0 0.0
  %7690 = vmatpush.msra.mxu0 0.0
  %7691 = vmatpush.msra.mxu0 0.0
  %7692 = vmatpush.msra.mxu0 0.0
  %7693 = vmatpush.msra.mxu0 0.0
  %7694 = vmatpush.msra.mxu0 0.0
  %7695 = vmatpush.msra.mxu0 0.0
  %7696 = vmatpush.msra.mxu0 0.0
  %7697 = vmatpush.msra.mxu0 0.0
  %7698 = vmatpush.msra.mxu0 %v7508
  %7699 = vmatpush.msra.mxu0 %v7506
  %7700 = vmatpush.msra.mxu0 %v7504
  %7701 = vmatpush.msra.mxu0 %v7502
  %7702 = vmatmul.f32.gmra.mxu0 %v7675
  %v7703 = vpop.f32.mrf.mxu0
  %v7704 = vadd.f32 %v7634, %v7703
  %7705 = vmatmul.f32.gmra.mxu0 %v7678
  %v7706 = vpop.f32.mrf.mxu0
  %v7707 = vadd.f32 %v7637, %v7706
  %7708 = vmatmul.f32.gmra.mxu0 %v7681
  %v7709 = vpop.f32.mrf.mxu0
  %v7710 = vadd.f32 %v7640, %v7709
  %7711 = vmatmul.f32.gmra.mxu0 %v7684
  %v7712 = vpop.f32.mrf.mxu0
  %v7713 = vadd.f32 %v7643, %v7712
  %7714 = vdwg.mxu0
  %7715 = vmatpush.msra.mxu0 0.0
  %7716 = vmatpush.msra.mxu0 0.0
  %7717 = vmatpush.msra.mxu0 0.0
  %7718 = vmatpush.msra.mxu0 0.0
  %7719 = vmatpush.msra.mxu0 0.0
  %7720 = vmatpush.msra.mxu0 0.0
  %7721 = vmatpush.msra.mxu0 0.0
  %7722 = vmatpush.msra.mxu0 0.0
  %7723 = vmatpush.msra.mxu0 0.0
  %7724 = vmatpush.msra.mxu0 0.0
  %7725 = vmatpush.msra.mxu0 0.0
  %7726 = vmatpush.msra.mxu0 0.0
  %7727 = vmatpush.msra.mxu0 %v7509
  %7728 = vmatpush.msra.mxu0 %v7507
  %7729 = vmatpush.msra.mxu0 %v7505
  %7730 = vmatpush.msra.mxu0 %v7503
  %7731 = vmatmul.f32.gmra.mxu0 %v7675
  %v7732 = vpop.f32.mrf.mxu0
  %v7733 = vadd.f32 %v7663, %v7732
  %7734 = vmatmul.f32.gmra.mxu0 %v7678
  %v7735 = vpop.f32.mrf.mxu0
  %v7736 = vadd.f32 %v7666, %v7735
  %7737 = vmatmul.f32.gmra.mxu0 %v7681
  %v7738 = vpop.f32.mrf.mxu0
  %v7739 = vadd.f32 %v7669, %v7738
  %7740 = vmatmul.f32.gmra.mxu0 %v7684
  %v7741 = vpop.f32.mrf.mxu0
  %v7742 = vadd.f32 %v7672, %v7741
  %7743 = vdwg.mxu0
  %v7745 = vsel %vm370, %v7593, 0
  %v7748 = vsel %vm370, %v7596, 0
  %v7751 = vsel %vm370, %v7599, 0
  %v7754 = vsel %vm370, %v7602, 0
  %7756 = vmatpush.msra.mxu0 0.0
  %7757 = vmatpush.msra.mxu0 0.0
  %7758 = vmatpush.msra.mxu0 0.0
  %7759 = vmatpush.msra.mxu0 0.0
  %7760 = vmatpush.msra.mxu0 0.0
  %7761 = vmatpush.msra.mxu0 0.0
  %7762 = vmatpush.msra.mxu0 0.0
  %7763 = vmatpush.msra.mxu0 0.0
  %7764 = vmatpush.msra.mxu0 0.0
  %7765 = vmatpush.msra.mxu0 0.0
  %7766 = vmatpush.msra.mxu0 0.0
  %7767 = vmatpush.msra.mxu0 0.0
  %7768 = vmatpush.msra.mxu0 0.0
  %7769 = vmatpush.msra.mxu0 0.0
  %7770 = vmatpush.msra.mxu0 %v7520
  %7771 = vmatpush.msra.mxu0 %v7518
  %7772 = vmatmul.f32.gmra.mxu0 %v7745
  %v7773 = vpop.f32.mrf.mxu0
  %v7774 = vadd.f32 0.0, %v7773
  %7775 = vmatmul.f32.gmra.mxu0 %v7748
  %v7776 = vpop.f32.mrf.mxu0
  %v7777 = vadd.f32 0.0, %v7776
  %7778 = vmatmul.f32.gmra.mxu0 %v7751
  %v7779 = vpop.f32.mrf.mxu0
  %v7780 = vadd.f32 0.0, %v7779
  %7781 = vmatmul.f32.gmra.mxu0 %v7754
  %v7782 = vpop.f32.mrf.mxu0
  %v7783 = vadd.f32 0.0, %v7782
  %7784 = vdwg.mxu0
  %7785 = vmatpush.msra.mxu0 0.0
  %7786 = vmatpush.msra.mxu0 0.0
  %7787 = vmatpush.msra.mxu0 0.0
  %7788 = vmatpush.msra.mxu0 0.0
  %7789 = vmatpush.msra.mxu0 0.0
  %7790 = vmatpush.msra.mxu0 0.0
  %7791 = vmatpush.msra.mxu0 0.0
  %7792 = vmatpush.msra.mxu0 0.0
  %7793 = vmatpush.msra.mxu0 0.0
  %7794 = vmatpush.msra.mxu0 0.0
  %7795 = vmatpush.msra.mxu0 0.0
  %7796 = vmatpush.msra.mxu0 0.0
  %7797 = vmatpush.msra.mxu0 0.0
  %7798 = vmatpush.msra.mxu0 0.0
  %7799 = vmatpush.msra.mxu0 %v7521
  %7800 = vmatpush.msra.mxu0 %v7519
  %7801 = vmatmul.f32.gmra.mxu0 %v7745
  %v7802 = vpop.f32.mrf.mxu0
  %v7803 = vadd.f32 0.0, %v7802
  %7804 = vmatmul.f32.gmra.mxu0 %v7748
  %v7805 = vpop.f32.mrf.mxu0
  %v7806 = vadd.f32 0.0, %v7805
  %7807 = vmatmul.f32.gmra.mxu0 %v7751
  %v7808 = vpop.f32.mrf.mxu0
  %v7809 = vadd.f32 0.0, %v7808
  %7810 = vmatmul.f32.gmra.mxu0 %v7754
  %v7811 = vpop.f32.mrf.mxu0
  %v7812 = vadd.f32 0.0, %v7811
  %7813 = vdwg.mxu0
  %v7814 = vadd.f32 %v7704, %v7774
  %v7815 = vadd.f32 %v7733, %v7803
  %v7816 = vadd.f32 %v7707, %v7777
  %v7817 = vadd.f32 %v7736, %v7806
  %v7818 = vadd.f32 %v7710, %v7780
  %v7819 = vadd.f32 %v7739, %v7809
  %v7820 = vadd.f32 %v7713, %v7783
  %v7821 = vadd.f32 %v7742, %v7812
  %7823 = vset.pattern.permute.xlu0 0
  %7824 = vperm.xlu0 %7823, %v7497
  %v7825 = vpop.permute.xlu0 %7824
  %7828 = vset.pattern.permute.xlu0 0
  %7829 = vperm.xlu0 %7828, %v7498
  %v7830 = vpop.permute.xlu0 %7829
  %7833 = vset.pattern.permute.xlu0 0
  %7834 = vperm.xlu0 %7833, %v7499
  %v7835 = vpop.permute.xlu0 %7834
  %7838 = vset.pattern.permute.xlu0 0
  %7839 = vperm.xlu0 %7838, %v7500
  %v7840 = vpop.permute.xlu0 %7839
  %v7842 = vadd.f32 %v7814, %v7825
  %v7843 = vadd.f32 %v7815, %v7825
  %v7844 = vadd.f32 %v7816, %v7830
  %v7845 = vadd.f32 %v7817, %v7830
  %v7846 = vadd.f32 %v7818, %v7835
  %v7847 = vadd.f32 %v7819, %v7835
  %v7848 = vadd.f32 %v7820, %v7840
  %v7849 = vadd.f32 %v7821, %v7840
  %v7850 = vmax.f32 %v7842, 0.0
  %v7851 = vmax.f32 %v7843, 0.0
  %v7852 = vmax.f32 %v7844, 0.0
  %v7853 = vmax.f32 %v7845, 0.0
  %v7854 = vmax.f32 %v7846, 0.0
  %v7855 = vmax.f32 %v7847, 0.0
  %v7856 = vmax.f32 %v7848, 0.0
  %v7857 = vmax.f32 %v7849, 0.0
  %7859 = vset.pattern.permute.xlu0 0
  %7860 = vperm.xlu0 %7859, %v7501
  %v7861 = vpop.permute.xlu0 %7860
  %v7864 = vsel %vm214, %v7496, 0
  %7866 = vmatpush.msra.mxu0 0.0
  %7867 = vmatpush.msra.mxu0 0.0
  %7868 = vmatpush.msra.mxu0 0.0
  %7869 = vmatpush.msra.mxu0 0.0
  %7870 = vmatpush.msra.mxu0 0.0
  %7871 = vmatpush.msra.mxu0 0.0
  %7872 = vmatpush.msra.mxu0 0.0
  %7873 = vmatpush.msra.mxu0 0.0
  %7874 = vmatpush.msra.mxu0 0.0
  %7875 = vmatpush.msra.mxu0 0.0
  %7876 = vmatpush.msra.mxu0 0.0
  %7877 = vmatpush.msra.mxu0 0.0
  %7878 = vmatpush.msra.mxu0 %v7856
  %7879 = vmatpush.msra.mxu0 %v7854
  %7880 = vmatpush.msra.mxu0 %v7852
  %7881 = vmatpush.msra.mxu0 %v7850
  %7882 = vmatmul.f32.gmra.mxu0 %v7864
  %v7883 = vpop.f32.mrf.mxu0
  %v7884 = vadd.f32 %v7861, %v7883
  %7885 = vdwg.mxu0
  %7886 = vmatpush.msra.mxu0 0.0
  %7887 = vmatpush.msra.mxu0 0.0
  %7888 = vmatpush.msra.mxu0 0.0
  %7889 = vmatpush.msra.mxu0 0.0
  %7890 = vmatpush.msra.mxu0 0.0
  %7891 = vmatpush.msra.mxu0 0.0
  %7892 = vmatpush.msra.mxu0 0.0
  %7893 = vmatpush.msra.mxu0 0.0
  %7894 = vmatpush.msra.mxu0 0.0
  %7895 = vmatpush.msra.mxu0 0.0
  %7896 = vmatpush.msra.mxu0 0.0
  %7897 = vmatpush.msra.mxu0 0.0
  %7898 = vmatpush.msra.mxu0 %v7857
  %7899 = vmatpush.msra.mxu0 %v7855
  %7900 = vmatpush.msra.mxu0 %v7853
  %7901 = vmatpush.msra.mxu0 %v7851
  %7902 = vmatmul.f32.gmra.mxu0 %v7864
  %v7903 = vpop.f32.mrf.mxu0
  %v7904 = vadd.f32 %v7861, %v7903
  %7905 = vdwg.mxu0
  %v7908 = vrot.slane %v7904, 7
  %vm7909 = vcmask 1040384
  %v7910 = vsel %vm7909, %v7884, %v7908
  %v7912 = vlaneseq
  %vm7913 = vcmp.ge.s32.totalorder %v7912, 0
  %vm7914 = vcmp.lt.s32.totalorder %v7912, 256
  %vm7915 = vmand %vm7913, %vm7914
  %7916 = vst.msk [vmem:[%s25] sm:$0x3] %vm7915, %v7910
  // Predicated region
  $region102: #{gnn_forward.1} parent=0 // pred_check
    _
  $region103: #{gnn_forward.1} parent=0 // pred_check_branch
    %7918 = sbr.rel (0) target = $region105
  $region104: #{gnn_forward.1} parent=0 // pred_region
    _
  $region105: #{gnn_forward.1} parent=0 // pred_fallthru
    _
  // Predicated region
  $region106: #{gnn_forward.1} parent=0 // pred_check
    _
  $region107: #{gnn_forward.1} parent=0 // pred_check_branch
    %7920 = sbr.rel (0) target = $region109
  $region108: #{gnn_forward.1} parent=0 // pred_region
    _
  $region109: #{gnn_forward.1} parent=0 // pred_fallthru
    _

</llo_original>
